<compile_context>
chip_gen: v5e
topology: v5e:2x2
jax: 0.10.0
libtpu: 0.0.40
codegen_flags: <defaults>
</compile_context>

<pallas_src>
import functools
import math

import jax
import jax.numpy as jnp
from jax.experimental import pallas as pl
from jax.experimental.pallas import tpu as pltpu  # noqa: F401  (TPU backend assumed)


# ----------------------------------------------------------------------------------
# Parameter construction (deterministic, synthetic)
# ----------------------------------------------------------------------------------
def _conv_params(key, cin, cout, k, bias=True):
    k1, k2 = jax.random.split(key)
    bound = 1.0 / math.sqrt(cin * k)
    w = jax.random.uniform(k1, (cout, cin, k), jnp.float32, -bound, bound)
    b = jax.random.uniform(k2, (cout,), jnp.float32, -bound, bound) if bias else None
    return w, b


def build_params(key, in_channels, samples_per_batch, layer_sizes, num_output_convblocks=2):
    lstm_channel_size = 20
    hidden_size_multiplier = 4
    if len(layer_sizes) % 2 == 0:
        raise ValueError("The number of layers must be odd.")
    keys = iter(jax.random.split(key, 64))
    params = {}

    params["first"] = _conv_params(next(keys), in_channels, layer_sizes[0], 3)
    output_sizes = [layer_sizes[0]]
    time_dim = samples_per_batch
    for i in range(len(layer_sizes) // 2):
        cin = sum(output_sizes)
        cout = layer_sizes[i + 1]
        output_sizes.append(cout)
        params[f"down_{i}"] = _conv_params(next(keys), cin, cout, 3)
        time_dim = math.ceil(time_dim / 2)

    params["lstm_conv_w"], _ = _conv_params(
        next(keys), layer_sizes[len(layer_sizes) // 2], lstm_channel_size, 4, bias=False
    )
    lstm_input_size = math.ceil(time_dim / 16)
    hidden = hidden_size_multiplier * lstm_input_size
    kih, khh, kbi, kbh = jax.random.split(next(keys), 4)
    bound = 1.0 / math.sqrt(hidden)
    params["lstm"] = (
        jax.random.uniform(kih, (4 * hidden, lstm_input_size), jnp.float32, -bound, bound),
        jax.random.uniform(khh, (4 * hidden, hidden), jnp.float32, -bound, bound),
        jax.random.uniform(kbi, (4 * hidden,), jnp.float32, -bound, bound),
        jax.random.uniform(kbh, (4 * hidden,), jnp.float32, -bound, bound),
    )
    output_sizes.append(lstm_channel_size)

    L = len(layer_sizes)
    for i in range(L // 2 - 1):
        cin = sum(output_sizes)
        cout = layer_sizes[L // 2 + i + 1]
        output_sizes.append(cout)
        params[f"up_{i}"] = _conv_params(next(keys), cin, cout, 3)

    cin = sum(output_sizes)
    for j in range(num_output_convblocks):
        params[f"out_cb_{j}"] = _conv_params(next(keys), cin, cin, 3)
    params["out_final"] = _conv_params(next(keys), cin, layer_sizes[-1], 1)
    return params


# ----------------------------------------------------------------------------------
# Fused forward pass (mirrors ClarificationDenseLSTM.forward) — one Pallas kernel
# ----------------------------------------------------------------------------------
def clarification_dense_lstm_forward(params, initial_x, layer_sizes,
                                     num_output_convblocks=2, invert=False):
    ls = list(layer_sizes)
    if len(ls) % 2 == 0:
        raise ValueError("The number of layers must be odd.")
    n_down = len(ls) // 2
    n_up = n_down - 1
    lstm_channel_size = 20
    hidden_mult = 4

    x2d = initial_x[0].astype(jnp.float32)            # (Cin, T); batch must be 1
    t0 = x2d.shape[1]

    # ---- static shape plan (mirrors the PyTorch module) --------------------------
    t_cur = t0
    out_chs = [ls[0]]
    down_block_chs, down_t = [], []
    for i in range(n_down):
        down_block_chs.append(list(out_chs))
        down_t.append(t_cur)
        t_cur = -(-t_cur // 2)                        # ceil(t / 2)
        out_chs.append(ls[i + 1])
    t_mid = t_cur
    t_lstm = (t_mid - 4) // 16 + 1                    # lstm_conv: k=4, stride=16, pad=0
    lstm_input_size = math.ceil(t_mid / 16)           # nn.LSTM input_size (== t_lstm here)
    hidden = hidden_mult * lstm_input_size
    out_chs.append(lstm_channel_size)
    up_block_chs, up_t = [], []
    for i in range(n_up):
        up_block_chs.append(list(out_chs))
        up_t.append(t_cur)
        t_cur = 2 * t_cur
        out_chs.append(ls[n_down + i + 1])
    final_block_chs = list(out_chs)
    t_final = t_cur
    c_cat = sum(final_block_chs)
    c_out = ls[-1]
    c_out_pad = ((c_out + 7) // 8) * 8                # sublane-aligned final store

    # ---- operand list: input + transposed / pre-sliced weights -------------------
    ops = []

    def _add(a):
        ops.append(a)
        return len(ops) - 1

    def _w3(w):                                       # (Cout, Cin, 3) -> (3, Cout, Cin)
        return jnp.transpose(w, (2, 0, 1))

    def _split_w3(w, block_chs):                      # split Cin into skip blocks
        ids, off = [], 0
        for cb in block_chs:
            ids.append(_add(_w3(w[:, off:off + cb, :])))
            off += cb
        return ids

    x_id = _add(x2d)

    wf, bf = params["first"]
    first_w = [_add(_w3(wf))]
    first_b = _add(bf.reshape(-1, 1))

    down_w, down_b = [], []
    for i in range(n_down):
        w, b = params[f"down_{i}"]
        down_w.append(_split_w3(w, down_block_chs[i]))
        down_b.append(_add(b.reshape(-1, 1)))

    lconv_w = _add(jnp.transpose(params["lstm_conv_w"], (2, 0, 1)))   # (4, 20, c_mid)
    w_ih, w_hh, b_ih, b_hh = params["lstm"]
    lstm_wih = _add(jnp.transpose(w_ih))              # (input, 4H)
    lstm_whh = _add(jnp.transpose(w_hh))              # (H, 4H)
    lstm_b = _add((b_ih + b_hh).reshape(1, -1))       # (1, 4H)

    up_w, up_b = [], []
    for i in range(n_up):
        w, b = params[f"up_{i}"]
        up_w.append(_split_w3(w, up_block_chs[i]))
        up_b.append(_add(b.reshape(-1, 1)))

    cb_w, cb_b = [], []
    for j in range(num_output_convblocks):
        w, b = params[f"out_cb_{j}"]
        cb_w.append(_split_w3(w, final_block_chs if j == 0 else [c_cat]))
        cb_b.append(_add(b.reshape(-1, 1)))

    wfin, bfin = params["out_final"]
    wfin_m = jnp.pad(wfin.reshape(c_out, c_cat), ((0, c_out_pad - c_out), (0, 0)))
    bfin_c = jnp.pad(bfin.reshape(-1, 1), ((0, c_out_pad - c_out), (0, 0)))
    fin_chs = final_block_chs if num_output_convblocks == 0 else [c_cat]
    fin_w, off = [], 0
    for cbk in fin_chs:
        fin_w.append(_add(wfin_m[:, off:off + cbk]))
        off += cbk
    fin_b = _add(bfin_c)

    # ---- the fused kernel: everything stays in VMEM ------------------------------
    def kernel(*refs):
        out_ref = refs[-1]
        sel_cache = {}

        def mm(a, b):
            if a.shape[1] == 1:                       # K == 1: exact broadcast outer product
                return a * b
            return jnp.dot(a, b, preferred_element_type=jnp.float32)

        def sel(key, rows, cols, cond):               # 0/1 selection matrix, built once per key
            if key not in sel_cache:
                r = jax.lax.broadcasted_iota(jnp.int32, (rows, cols), 0)
                c = jax.lax.broadcasted_iota(jnp.int32, (rows, cols), 1)
                sel_cache[key] = jnp.where(cond(r, c), 1.0, 0.0).astype(jnp.float32)
            return sel_cache[key]

        def shift_prev(x):                            # out[:, t] = x[:, t-1], 0 at t == 0
            t = x.shape[1]
            return mm(x, sel(("prev", t), t, t, lambda i, j: i + 1 == j))

        def shift_next(x):                            # out[:, t] = x[:, t+1], 0 at t == T-1
            t = x.shape[1]
            return mm(x, sel(("next", t), t, t, lambda i, j: i == j + 1))

        def interp(x, t_out):                         # F.interpolate(mode='nearest')
            t_in = x.shape[1]
            if t_in == t_out:
                return x
            s = sel(("interp", t_in, t_out), t_in, t_out,
                    lambda i, j: (i * t_out <= j * t_in) & (j * t_in < (i + 1) * t_out))
            return mm(x, s)

        def maxpool2(x):                              # MaxPool1d(2) (ceil-style tail)
            t = x.shape[1]
            pm = jnp.maximum(x, shift_next(x))        # inputs are ReLU outputs (>=0), so the
                                                      # zero tail column is harmless for odd t
            return mm(pm, sel(("pool", t), t, (t + 1) // 2, lambda i, j: i == 2 * j))

        def conv3(blocks, w_ids, b_id, relu=True):
            # Conv1d(k=3, pad=1) of a channel-concatenation, decomposed per skip block:
            #   y = shift_prev(sum_b W_b0 @ x_b) + sum_b W_b1 @ x_b + shift_next(sum_b W_b2 @ x_b) + bias
            a0 = a1 = a2 = None
            for xb, wid in zip(blocks, w_ids):
                wr = refs[wid]                        # (3, Cout, Cb)
                y0, y1, y2 = mm(wr[0], xb), mm(wr[1], xb), mm(wr[2], xb)
                a0 = y0 if a0 is None else a0 + y0
                a1 = y1 if a1 is None else a1 + y1
                a2 = y2 if a2 is None else a2 + y2
            y = shift_prev(a0) + a1 + shift_next(a2) + refs[b_id][...]
            return jnp.maximum(y, 0.0) if relu else y

        # first layer (ConvBlock1D)
        x = conv3([refs[x_id][...]], first_w, first_b)
        outputs = [x]

        # down path: interpolate skips -> (concat) -> MaxPool1d(2) -> ConvBlock1D
        for i in range(n_down):
            blocks = [maxpool2(interp(o, down_t[i])) for o in outputs]
            x = conv3(blocks, down_w[i], down_b[i])
            outputs.append(x)

        # LSTM branch: Conv1d(k=4, stride=16, no bias) via stride-16 selection gathers
        wlc = refs[lconv_w]
        t_mid_ = x.shape[1]
        acc = None
        for k in range(4):
            gsel = sel(("lconv", t_mid_, k), t_mid_, t_lstm,
                       lambda i, j, k=k: i == 16 * j + k)
            term = mm(wlc[k], mm(x, gsel))
            acc = term if acc is None else acc + term
        lstm_in = acc                                 # (seq = 20, input = t_lstm)

        # LSTM (PyTorch gate order i, f, g, o); input projection hoisted out of the loop
        gates_x = mm(lstm_in, refs[lstm_wih][...]) + refs[lstm_b][...]   # (seq, 4H)
        whh_t = refs[lstm_whh][...]
        h = jnp.zeros((1, hidden), jnp.float32)
        c = jnp.zeros((1, hidden), jnp.float32)
        hs = []
        for s in range(lstm_channel_size):
            gates = gates_x[s:s + 1, :] + mm(h, whh_t)
            i_g = jax.nn.sigmoid(gates[:, 0:hidden])
            f_g = jax.nn.sigmoid(gates[:, hidden:2 * hidden])
            g_g = jnp.tanh(gates[:, 2 * hidden:3 * hidden])
            o_g = jax.nn.sigmoid(gates[:, 3 * hidden:4 * hidden])
            c = f_g * c + i_g * g_g
            h = o_g * jnp.tanh(c)
            hs.append(h)
        row = jax.lax.broadcasted_iota(jnp.int32, (lstm_channel_size, hidden), 0)
        lstm_out = jnp.zeros((lstm_channel_size, hidden), jnp.float32)
        for s in range(lstm_channel_size):            # single bulk value, no per-step stores
            lstm_out = lstm_out + jnp.where(row == s, hs[s], 0.0)
        outputs.append(lstm_out)

        # up path: interpolate skips -> (concat) -> Upsample(x2, nearest) -> ConvBlock1D
        for i in range(n_up):
            blocks = [interp(interp(o, up_t[i]), 2 * up_t[i]) for o in outputs]
            x = conv3(blocks, up_w[i], up_b[i])
            outputs.append(x)

        # out layer: interpolate skips -> (concat) -> ConvBlock1D * n -> Conv1d(k=1)
        y_blocks = [interp(o, t_final) for o in outputs]
        for j in range(num_output_convblocks):
            y_blocks = [conv3(y_blocks, cb_w[j], cb_b[j])]
        acc = None
        for xb, wid in zip(y_blocks, fin_w):
            term = mm(refs[wid][...], xb)
            acc = term if acc is None else acc + term
        out_ref[...] = acc + refs[fin_b][...]

    y_pad = pl.pallas_call(
        kernel,
        out_shape=jax.ShapeDtypeStruct((c_out_pad, t_final), jnp.float32),
    )(*ops)

    y = y_pad[:c_out]                                 # drop sublane padding
    if y.shape[0] == 1:                               # x.squeeze(0).squeeze(0) with N == 1
        y = y[0]
    if invert:
        y = initial_x - y
    return y


# ----------------------------------------------------------------------------------
if __name__ == "__main__":
    key = jax.random.PRNGKey(0)
    kp, kx = jax.random.split(key)

    in_channels = 1
    samples_per_batch = 256
    layer_sizes = [8, 12, 16, 12, 1]     # odd length; 2 downs, 1 up, final out_channels=1
    num_output_convblocks = 2

    params = build_params(kp, in_channels, samples_per_batch, layer_sizes,
                          num_output_convblocks)
    initial_x = jax.random.normal(kx, (1, in_channels, samples_per_batch), jnp.float32)

    fwd = jax.jit(functools.partial(
        clarification_dense_lstm_forward,
        layer_sizes=layer_sizes,
        num_output_convblocks=num_output_convblocks,
        invert=False,
    ))
    out = fwd(params, initial_x)
    jax.block_until_ready(out)
    assert out.ndim == 1
    print("KERNEL_OK")
</pallas_src>

<mosaic_0001>
module attributes {stable_mosaic.version = 11 : i64} {
  func.func @kernel(%arg0: memref<1x256xf32, #tpu.memory_space<vmem>>, %arg1: memref<3x8x1xf32, #tpu.memory_space<vmem>>, %arg2: memref<8x1xf32, #tpu.memory_space<vmem>>, %arg3: memref<3x12x8xf32, #tpu.memory_space<vmem>>, %arg4: memref<12x1xf32, #tpu.memory_space<vmem>>, %arg5: memref<3x16x8xf32, #tpu.memory_space<vmem>>, %arg6: memref<3x16x12xf32, #tpu.memory_space<vmem>>, %arg7: memref<16x1xf32, #tpu.memory_space<vmem>>, %arg8: memref<4x20x16xf32, #tpu.memory_space<vmem>>, %arg9: memref<4x64xf32, #tpu.memory_space<vmem>>, %arg10: memref<16x64xf32, #tpu.memory_space<vmem>>, %arg11: memref<1x64xf32, #tpu.memory_space<vmem>>, %arg12: memref<3x12x8xf32, #tpu.memory_space<vmem>>, %arg13: memref<3x12x12xf32, #tpu.memory_space<vmem>>, %arg14: memref<3x12x16xf32, #tpu.memory_space<vmem>>, %arg15: memref<3x12x20xf32, #tpu.memory_space<vmem>>, %arg16: memref<12x1xf32, #tpu.memory_space<vmem>>, %arg17: memref<3x68x8xf32, #tpu.memory_space<vmem>>, %arg18: memref<3x68x12xf32, #tpu.memory_space<vmem>>, %arg19: memref<3x68x16xf32, #tpu.memory_space<vmem>>, %arg20: memref<3x68x20xf32, #tpu.memory_space<vmem>>, %arg21: memref<3x68x12xf32, #tpu.memory_space<vmem>>, %arg22: memref<68x1xf32, #tpu.memory_space<vmem>>, %arg23: memref<3x68x68xf32, #tpu.memory_space<vmem>>, %arg24: memref<68x1xf32, #tpu.memory_space<vmem>>, %arg25: memref<8x68xf32, #tpu.memory_space<vmem>>, %arg26: memref<8x1xf32, #tpu.memory_space<vmem>>, %arg27: memref<8x128xf32, #tpu.memory_space<vmem>>) attributes {dimension_semantics = [], scalar_prefetch = 0 : i64, scratch_operands = 0 : i64, tpu.core_type = #tpu.core_type<tc>} {
    %c0 = arith.constant 0 : index
    %c0_0 = arith.constant 0 : index
    %0 = vector.load %arg0[%c0, %c0_0] : memref<1x256xf32, #tpu.memory_space<vmem>>, vector<1x256xf32>
    %c0_1 = arith.constant 0 : index
    %c0_2 = arith.constant 0 : index
    %c0_3 = arith.constant 0 : index
    %1 = vector.load %arg1[%c0_1, %c0_2, %c0_3] : memref<3x8x1xf32, #tpu.memory_space<vmem>>, vector<1x8x1xf32>
    %2 = vector.shape_cast %1 : vector<1x8x1xf32> to vector<8x1xf32>
    %3 = vector.broadcast %2 : vector<8x1xf32> to vector<8x256xf32>
    %4 = vector.broadcast %0 : vector<1x256xf32> to vector<8x256xf32>
    %5 = arith.mulf %3, %4 : vector<8x256xf32>
    %c1 = arith.constant 1 : index
    %c0_4 = arith.constant 0 : index
    %c0_5 = arith.constant 0 : index
    %6 = vector.load %arg1[%c1, %c0_4, %c0_5] : memref<3x8x1xf32, #tpu.memory_space<vmem>>, vector<1x8x1xf32>
    %7 = vector.shape_cast %6 : vector<1x8x1xf32> to vector<8x1xf32>
    %8 = vector.broadcast %7 : vector<8x1xf32> to vector<8x256xf32>
    %9 = vector.broadcast %0 : vector<1x256xf32> to vector<8x256xf32>
    %10 = arith.mulf %8, %9 : vector<8x256xf32>
    %c2 = arith.constant 2 : index
    %c0_6 = arith.constant 0 : index
    %c0_7 = arith.constant 0 : index
    %11 = vector.load %arg1[%c2, %c0_6, %c0_7] : memref<3x8x1xf32, #tpu.memory_space<vmem>>, vector<1x8x1xf32>
    %12 = vector.shape_cast %11 : vector<1x8x1xf32> to vector<8x1xf32>
    %13 = vector.broadcast %12 : vector<8x1xf32> to vector<8x256xf32>
    %14 = vector.broadcast %0 : vector<1x256xf32> to vector<8x256xf32>
    %15 = arith.mulf %13, %14 : vector<8x256xf32>
    %16 = tpu.iota {dimensions = array<i32: 0>} : vector<256x256xi32>
    %17 = tpu.iota {dimensions = array<i32: 1>} : vector<256x256xi32>
    %c1_i32 = arith.constant 1 : i32
    %18 = vector.broadcast %c1_i32 : i32 to vector<256x256xi32>
    %19 = arith.addi %16, %18 : vector<256x256xi32>
    %20 = arith.cmpi eq, %19, %17 : vector<256x256xi32>
    %cst = arith.constant 1.000000e+00 : f32
    %cst_8 = arith.constant 0.000000e+00 : f32
    %21 = vector.broadcast %cst : f32 to vector<256x256xf32>
    %22 = vector.broadcast %cst_8 : f32 to vector<256x256xf32>
    %23 = arith.select %20, %21, %22 : vector<256x256xi1>, vector<256x256xf32>
    %cst_9 = arith.constant dense<0.000000e+00> : vector<8x256xf32>
    %24 = tpu.matmul %5, %23, %cst_9 {dimension_numbers = #tpu.dot_dimension_numbers<[1], [0], [0], [1], [0, 0, 1, 1], [], []>} : vector<8x256xf32>, vector<256x256xf32>, vector<8x256xf32> -> vector<8x256xf32>
    %25 = arith.addf %24, %10 : vector<8x256xf32>
    %26 = tpu.iota {dimensions = array<i32: 0>} : vector<256x256xi32>
    %27 = tpu.iota {dimensions = array<i32: 1>} : vector<256x256xi32>
    %c1_i32_10 = arith.constant 1 : i32
    %28 = vector.broadcast %c1_i32_10 : i32 to vector<256x256xi32>
    %29 = arith.addi %27, %28 : vector<256x256xi32>
    %30 = arith.cmpi eq, %26, %29 : vector<256x256xi32>
    %cst_11 = arith.constant 1.000000e+00 : f32
    %cst_12 = arith.constant 0.000000e+00 : f32
    %31 = vector.broadcast %cst_11 : f32 to vector<256x256xf32>
    %32 = vector.broadcast %cst_12 : f32 to vector<256x256xf32>
    %33 = arith.select %30, %31, %32 : vector<256x256xi1>, vector<256x256xf32>
    %cst_13 = arith.constant dense<0.000000e+00> : vector<8x256xf32>
    %34 = tpu.matmul %15, %33, %cst_13 {dimension_numbers = #tpu.dot_dimension_numbers<[1], [0], [0], [1], [0, 0, 1, 1], [], []>} : vector<8x256xf32>, vector<256x256xf32>, vector<8x256xf32> -> vector<8x256xf32>
    %35 = arith.addf %25, %34 : vector<8x256xf32>
    %c0_14 = arith.constant 0 : index
    %c0_15 = arith.constant 0 : index
    %36 = vector.load %arg2[%c0_14, %c0_15] : memref<8x1xf32, #tpu.memory_space<vmem>>, vector<8x1xf32>
    %37 = vector.broadcast %36 : vector<8x1xf32> to vector<8x256xf32>
    %38 = arith.addf %35, %37 : vector<8x256xf32>
    %cst_16 = arith.constant 0.000000e+00 : f32
    %39 = vector.broadcast %cst_16 : f32 to vector<8x256xf32>
    %40 = arith.maximumf %38, %39 : vector<8x256xf32>
    %cst_17 = arith.constant dense<0.000000e+00> : vector<8x256xf32>
    %41 = tpu.matmul %40, %33, %cst_17 {dimension_numbers = #tpu.dot_dimension_numbers<[1], [0], [0], [1], [0, 0, 1, 1], [], []>} : vector<8x256xf32>, vector<256x256xf32>, vector<8x256xf32> -> vector<8x256xf32>
    %42 = arith.maximumf %40, %41 : vector<8x256xf32>
    %43 = tpu.iota {dimensions = array<i32: 0>} : vector<256x128xi32>
    %44 = tpu.iota {dimensions = array<i32: 1>} : vector<256x128xi32>
    %c2_i32 = arith.constant 2 : i32
    %45 = vector.broadcast %c2_i32 : i32 to vector<256x128xi32>
    %46 = arith.muli %45, %44 : vector<256x128xi32>
    %47 = arith.cmpi eq, %43, %46 : vector<256x128xi32>
    %cst_18 = arith.constant 1.000000e+00 : f32
    %cst_19 = arith.constant 0.000000e+00 : f32
    %48 = vector.broadcast %cst_18 : f32 to vector<256x128xf32>
    %49 = vector.broadcast %cst_19 : f32 to vector<256x128xf32>
    %50 = arith.select %47, %48, %49 : vector<256x128xi1>, vector<256x128xf32>
    %cst_20 = arith.constant dense<0.000000e+00> : vector<8x128xf32>
    %51 = tpu.matmul %42, %50, %cst_20 {dimension_numbers = #tpu.dot_dimension_numbers<[1], [0], [0], [1], [0, 0, 1, 1], [], []>} : vector<8x256xf32>, vector<256x128xf32>, vector<8x128xf32> -> vector<8x128xf32>
    %c0_21 = arith.constant 0 : index
    %c0_22 = arith.constant 0 : index
    %c0_23 = arith.constant 0 : index
    %52 = vector.load %arg3[%c0_21, %c0_22, %c0_23] : memref<3x12x8xf32, #tpu.memory_space<vmem>>, vector<1x12x8xf32>
    %53 = vector.shape_cast %52 : vector<1x12x8xf32> to vector<12x8xf32>
    %cst_24 = arith.constant dense<0.000000e+00> : vector<12x128xf32>
    %54 = tpu.matmul %53, %51, %cst_24 {dimension_numbers = #tpu.dot_dimension_numbers<[1], [0], [0], [1], [0, 0, 1, 1], [], []>} : vector<12x8xf32>, vector<8x128xf32>, vector<12x128xf32> -> vector<12x128xf32>
    %c1_25 = arith.constant 1 : index
    %c0_26 = arith.constant 0 : index
    %c0_27 = arith.constant 0 : index
    %55 = vector.load %arg3[%c1_25, %c0_26, %c0_27] : memref<3x12x8xf32, #tpu.memory_space<vmem>>, vector<1x12x8xf32>
    %56 = vector.shape_cast %55 : vector<1x12x8xf32> to vector<12x8xf32>
    %cst_28 = arith.constant dense<0.000000e+00> : vector<12x128xf32>
    %57 = tpu.matmul %56, %51, %cst_28 {dimension_numbers = #tpu.dot_dimension_numbers<[1], [0], [0], [1], [0, 0, 1, 1], [], []>} : vector<12x8xf32>, vector<8x128xf32>, vector<12x128xf32> -> vector<12x128xf32>
    %c2_29 = arith.constant 2 : index
    %c0_30 = arith.constant 0 : index
    %c0_31 = arith.constant 0 : index
    %58 = vector.load %arg3[%c2_29, %c0_30, %c0_31] : memref<3x12x8xf32, #tpu.memory_space<vmem>>, vector<1x12x8xf32>
    %59 = vector.shape_cast %58 : vector<1x12x8xf32> to vector<12x8xf32>
    %cst_32 = arith.constant dense<0.000000e+00> : vector<12x128xf32>
    %60 = tpu.matmul %59, %51, %cst_32 {dimension_numbers = #tpu.dot_dimension_numbers<[1], [0], [0], [1], [0, 0, 1, 1], [], []>} : vector<12x8xf32>, vector<8x128xf32>, vector<12x128xf32> -> vector<12x128xf32>
    %61 = tpu.iota {dimensions = array<i32: 0>} : vector<128x128xi32>
    %62 = tpu.iota {dimensions = array<i32: 1>} : vector<128x128xi32>
    %c1_i32_33 = arith.constant 1 : i32
    %63 = vector.broadcast %c1_i32_33 : i32 to vector<128x128xi32>
    %64 = arith.addi %61, %63 : vector<128x128xi32>
    %65 = arith.cmpi eq, %64, %62 : vector<128x128xi32>
    %cst_34 = arith.constant 1.000000e+00 : f32
    %cst_35 = arith.constant 0.000000e+00 : f32
    %66 = vector.broadcast %cst_34 : f32 to vector<128x128xf32>
    %67 = vector.broadcast %cst_35 : f32 to vector<128x128xf32>
    %68 = arith.select %65, %66, %67 : vector<128x128xi1>, vector<128x128xf32>
    %cst_36 = arith.constant dense<0.000000e+00> : vector<12x128xf32>
    %69 = tpu.matmul %54, %68, %cst_36 {dimension_numbers = #tpu.dot_dimension_numbers<[1], [0], [0], [1], [0, 0, 1, 1], [], []>} : vector<12x128xf32>, vector<128x128xf32>, vector<12x128xf32> -> vector<12x128xf32>
    %70 = arith.addf %69, %57 : vector<12x128xf32>
    %71 = tpu.iota {dimensions = array<i32: 0>} : vector<128x128xi32>
    %72 = tpu.iota {dimensions = array<i32: 1>} : vector<128x128xi32>
    %c1_i32_37 = arith.constant 1 : i32
    %73 = vector.broadcast %c1_i32_37 : i32 to vector<128x128xi32>
    %74 = arith.addi %72, %73 : vector<128x128xi32>
    %75 = arith.cmpi eq, %71, %74 : vector<128x128xi32>
    %cst_38 = arith.constant 1.000000e+00 : f32
    %cst_39 = arith.constant 0.000000e+00 : f32
    %76 = vector.broadcast %cst_38 : f32 to vector<128x128xf32>
    %77 = vector.broadcast %cst_39 : f32 to vector<128x128xf32>
    %78 = arith.select %75, %76, %77 : vector<128x128xi1>, vector<128x128xf32>
    %cst_40 = arith.constant dense<0.000000e+00> : vector<12x128xf32>
    %79 = tpu.matmul %60, %78, %cst_40 {dimension_numbers = #tpu.dot_dimension_numbers<[1], [0], [0], [1], [0, 0, 1, 1], [], []>} : vector<12x128xf32>, vector<128x128xf32>, vector<12x128xf32> -> vector<12x128xf32>
    %80 = arith.addf %70, %79 : vector<12x128xf32>
    %c0_41 = arith.constant 0 : index
    %c0_42 = arith.constant 0 : index
    %81 = vector.load %arg4[%c0_41, %c0_42] : memref<12x1xf32, #tpu.memory_space<vmem>>, vector<12x1xf32>
    %82 = vector.broadcast %81 : vector<12x1xf32> to vector<12x128xf32>
    %83 = arith.addf %80, %82 : vector<12x128xf32>
    %cst_43 = arith.constant 0.000000e+00 : f32
    %84 = vector.broadcast %cst_43 : f32 to vector<12x128xf32>
    %85 = arith.maximumf %83, %84 : vector<12x128xf32>
    %86 = tpu.iota {dimensions = array<i32: 0>} : vector<256x128xi32>
    %87 = tpu.iota {dimensions = array<i32: 1>} : vector<256x128xi32>
    %c128_i32 = arith.constant 128 : i32
    %88 = vector.broadcast %c128_i32 : i32 to vector<256x128xi32>
    %89 = arith.muli %86, %88 : vector<256x128xi32>
    %c256_i32 = arith.constant 256 : i32
    %90 = vector.broadcast %c256_i32 : i32 to vector<256x128xi32>
    %91 = arith.muli %87, %90 : vector<256x128xi32>
    %92 = arith.cmpi sle, %89, %91 : vector<256x128xi32>
    %c256_i32_44 = arith.constant 256 : i32
    %93 = vector.broadcast %c256_i32_44 : i32 to vector<256x128xi32>
    %94 = arith.muli %87, %93 : vector<256x128xi32>
    %c1_i32_45 = arith.constant 1 : i32
    %95 = vector.broadcast %c1_i32_45 : i32 to vector<256x128xi32>
    %96 = arith.addi %86, %95 : vector<256x128xi32>
    %c128_i32_46 = arith.constant 128 : i32
    %97 = vector.broadcast %c128_i32_46 : i32 to vector<256x128xi32>
    %98 = arith.muli %96, %97 : vector<256x128xi32>
    %99 = arith.cmpi slt, %94, %98 : vector<256x128xi32>
    %100 = arith.andi %92, %99 : vector<256x128xi1>
    %cst_47 = arith.constant 1.000000e+00 : f32
    %cst_48 = arith.constant 0.000000e+00 : f32
    %101 = vector.broadcast %cst_47 : f32 to vector<256x128xf32>
    %102 = vector.broadcast %cst_48 : f32 to vector<256x128xf32>
    %103 = arith.select %100, %101, %102 : vector<256x128xi1>, vector<256x128xf32>
    %cst_49 = arith.constant dense<0.000000e+00> : vector<8x128xf32>
    %104 = tpu.matmul %40, %103, %cst_49 {dimension_numbers = #tpu.dot_dimension_numbers<[1], [0], [0], [1], [0, 0, 1, 1], [], []>} : vector<8x256xf32>, vector<256x128xf32>, vector<8x128xf32> -> vector<8x128xf32>
    %cst_50 = arith.constant dense<0.000000e+00> : vector<8x128xf32>
    %105 = tpu.matmul %104, %78, %cst_50 {dimension_numbers = #tpu.dot_dimension_numbers<[1], [0], [0], [1], [0, 0, 1, 1], [], []>} : vector<8x128xf32>, vector<128x128xf32>, vector<8x128xf32> -> vector<8x128xf32>
    %106 = arith.maximumf %104, %105 : vector<8x128xf32>
    %107 = tpu.iota {dimensions = array<i32: 0>} : vector<128x64xi32>
    %108 = tpu.iota {dimensions = array<i32: 1>} : vector<128x64xi32>
    %c2_i32_51 = arith.constant 2 : i32
    %109 = vector.broadcast %c2_i32_51 : i32 to vector<128x64xi32>
    %110 = arith.muli %109, %108 : vector<128x64xi32>
    %111 = arith.cmpi eq, %107, %110 : vector<128x64xi32>
    %cst_52 = arith.constant 1.000000e+00 : f32
    %cst_53 = arith.constant 0.000000e+00 : f32
    %112 = vector.broadcast %cst_52 : f32 to vector<128x64xf32>
    %113 = vector.broadcast %cst_53 : f32 to vector<128x64xf32>
    %114 = arith.select %111, %112, %113 : vector<128x64xi1>, vector<128x64xf32>
    %cst_54 = arith.constant dense<0.000000e+00> : vector<8x64xf32>
    %115 = tpu.matmul %106, %114, %cst_54 {dimension_numbers = #tpu.dot_dimension_numbers<[1], [0], [0], [1], [0, 0, 1, 1], [], []>} : vector<8x128xf32>, vector<128x64xf32>, vector<8x64xf32> -> vector<8x64xf32>
    %cst_55 = arith.constant dense<0.000000e+00> : vector<12x128xf32>
    %116 = tpu.matmul %85, %78, %cst_55 {dimension_numbers = #tpu.dot_dimension_numbers<[1], [0], [0], [1], [0, 0, 1, 1], [], []>} : vector<12x128xf32>, vector<128x128xf32>, vector<12x128xf32> -> vector<12x128xf32>
    %117 = arith.maximumf %85, %116 : vector<12x128xf32>
    %cst_56 = arith.constant dense<0.000000e+00> : vector<12x64xf32>
    %118 = tpu.matmul %117, %114, %cst_56 {dimension_numbers = #tpu.dot_dimension_numbers<[1], [0], [0], [1], [0, 0, 1, 1], [], []>} : vector<12x128xf32>, vector<128x64xf32>, vector<12x64xf32> -> vector<12x64xf32>
    %c0_57 = arith.constant 0 : index
    %c0_58 = arith.constant 0 : index
    %c0_59 = arith.constant 0 : index
    %119 = vector.load %arg5[%c0_57, %c0_58, %c0_59] : memref<3x16x8xf32, #tpu.memory_space<vmem>>, vector<1x16x8xf32>
    %120 = vector.shape_cast %119 : vector<1x16x8xf32> to vector<16x8xf32>
    %cst_60 = arith.constant dense<0.000000e+00> : vector<16x64xf32>
    %121 = tpu.matmul %120, %115, %cst_60 {dimension_numbers = #tpu.dot_dimension_numbers<[1], [0], [0], [1], [0, 0, 1, 1], [], []>} : vector<16x8xf32>, vector<8x64xf32>, vector<16x64xf32> -> vector<16x64xf32>
    %c1_61 = arith.constant 1 : index
    %c0_62 = arith.constant 0 : index
    %c0_63 = arith.constant 0 : index
    %122 = vector.load %arg5[%c1_61, %c0_62, %c0_63] : memref<3x16x8xf32, #tpu.memory_space<vmem>>, vector<1x16x8xf32>
    %123 = vector.shape_cast %122 : vector<1x16x8xf32> to vector<16x8xf32>
    %cst_64 = arith.constant dense<0.000000e+00> : vector<16x64xf32>
    %124 = tpu.matmul %123, %115, %cst_64 {dimension_numbers = #tpu.dot_dimension_numbers<[1], [0], [0], [1], [0, 0, 1, 1], [], []>} : vector<16x8xf32>, vector<8x64xf32>, vector<16x64xf32> -> vector<16x64xf32>
    %c2_65 = arith.constant 2 : index
    %c0_66 = arith.constant 0 : index
    %c0_67 = arith.constant 0 : index
    %125 = vector.load %arg5[%c2_65, %c0_66, %c0_67] : memref<3x16x8xf32, #tpu.memory_space<vmem>>, vector<1x16x8xf32>
    %126 = vector.shape_cast %125 : vector<1x16x8xf32> to vector<16x8xf32>
    %cst_68 = arith.constant dense<0.000000e+00> : vector<16x64xf32>
    %127 = tpu.matmul %126, %115, %cst_68 {dimension_numbers = #tpu.dot_dimension_numbers<[1], [0], [0], [1], [0, 0, 1, 1], [], []>} : vector<16x8xf32>, vector<8x64xf32>, vector<16x64xf32> -> vector<16x64xf32>
    %c0_69 = arith.constant 0 : index
    %c0_70 = arith.constant 0 : index
    %c0_71 = arith.constant 0 : index
    %128 = vector.load %arg6[%c0_69, %c0_70, %c0_71] : memref<3x16x12xf32, #tpu.memory_space<vmem>>, vector<1x16x12xf32>
    %129 = vector.shape_cast %128 : vector<1x16x12xf32> to vector<16x12xf32>
    %cst_72 = arith.constant dense<0.000000e+00> : vector<16x64xf32>
    %130 = tpu.matmul %129, %118, %cst_72 {dimension_numbers = #tpu.dot_dimension_numbers<[1], [0], [0], [1], [0, 0, 1, 1], [], []>} : vector<16x12xf32>, vector<12x64xf32>, vector<16x64xf32> -> vector<16x64xf32>
    %c1_73 = arith.constant 1 : index
    %c0_74 = arith.constant 0 : index
    %c0_75 = arith.constant 0 : index
    %131 = vector.load %arg6[%c1_73, %c0_74, %c0_75] : memref<3x16x12xf32, #tpu.memory_space<vmem>>, vector<1x16x12xf32>
    %132 = vector.shape_cast %131 : vector<1x16x12xf32> to vector<16x12xf32>
    %cst_76 = arith.constant dense<0.000000e+00> : vector<16x64xf32>
    %133 = tpu.matmul %132, %118, %cst_76 {dimension_numbers = #tpu.dot_dimension_numbers<[1], [0], [0], [1], [0, 0, 1, 1], [], []>} : vector<16x12xf32>, vector<12x64xf32>, vector<16x64xf32> -> vector<16x64xf32>
    %c2_77 = arith.constant 2 : index
    %c0_78 = arith.constant 0 : index
    %c0_79 = arith.constant 0 : index
    %134 = vector.load %arg6[%c2_77, %c0_78, %c0_79] : memref<3x16x12xf32, #tpu.memory_space<vmem>>, vector<1x16x12xf32>
    %135 = vector.shape_cast %134 : vector<1x16x12xf32> to vector<16x12xf32>
    %cst_80 = arith.constant dense<0.000000e+00> : vector<16x64xf32>
    %136 = tpu.matmul %135, %118, %cst_80 {dimension_numbers = #tpu.dot_dimension_numbers<[1], [0], [0], [1], [0, 0, 1, 1], [], []>} : vector<16x12xf32>, vector<12x64xf32>, vector<16x64xf32> -> vector<16x64xf32>
    %137 = arith.addf %121, %130 : vector<16x64xf32>
    %138 = arith.addf %124, %133 : vector<16x64xf32>
    %139 = arith.addf %127, %136 : vector<16x64xf32>
    %140 = tpu.iota {dimensions = array<i32: 0>} : vector<64x64xi32>
    %141 = tpu.iota {dimensions = array<i32: 1>} : vector<64x64xi32>
    %c1_i32_81 = arith.constant 1 : i32
    %142 = vector.broadcast %c1_i32_81 : i32 to vector<64x64xi32>
    %143 = arith.addi %140, %142 : vector<64x64xi32>
    %144 = arith.cmpi eq, %143, %141 : vector<64x64xi32>
    %cst_82 = arith.constant 1.000000e+00 : f32
    %cst_83 = arith.constant 0.000000e+00 : f32
    %145 = vector.broadcast %cst_82 : f32 to vector<64x64xf32>
    %146 = vector.broadcast %cst_83 : f32 to vector<64x64xf32>
    %147 = arith.select %144, %145, %146 : vector<64x64xi1>, vector<64x64xf32>
    %cst_84 = arith.constant dense<0.000000e+00> : vector<16x64xf32>
    %148 = tpu.matmul %137, %147, %cst_84 {dimension_numbers = #tpu.dot_dimension_numbers<[1], [0], [0], [1], [0, 0, 1, 1], [], []>} : vector<16x64xf32>, vector<64x64xf32>, vector<16x64xf32> -> vector<16x64xf32>
    %149 = arith.addf %148, %138 : vector<16x64xf32>
    %150 = tpu.iota {dimensions = array<i32: 0>} : vector<64x64xi32>
    %151 = tpu.iota {dimensions = array<i32: 1>} : vector<64x64xi32>
    %c1_i32_85 = arith.constant 1 : i32
    %152 = vector.broadcast %c1_i32_85 : i32 to vector<64x64xi32>
    %153 = arith.addi %151, %152 : vector<64x64xi32>
    %154 = arith.cmpi eq, %150, %153 : vector<64x64xi32>
    %cst_86 = arith.constant 1.000000e+00 : f32
    %cst_87 = arith.constant 0.000000e+00 : f32
    %155 = vector.broadcast %cst_86 : f32 to vector<64x64xf32>
    %156 = vector.broadcast %cst_87 : f32 to vector<64x64xf32>
    %157 = arith.select %154, %155, %156 : vector<64x64xi1>, vector<64x64xf32>
    %cst_88 = arith.constant dense<0.000000e+00> : vector<16x64xf32>
    %158 = tpu.matmul %139, %157, %cst_88 {dimension_numbers = #tpu.dot_dimension_numbers<[1], [0], [0], [1], [0, 0, 1, 1], [], []>} : vector<16x64xf32>, vector<64x64xf32>, vector<16x64xf32> -> vector<16x64xf32>
    %159 = arith.addf %149, %158 : vector<16x64xf32>
    %c0_89 = arith.constant 0 : index
    %c0_90 = arith.constant 0 : index
    %160 = vector.load %arg7[%c0_89, %c0_90] : memref<16x1xf32, #tpu.memory_space<vmem>>, vector<16x1xf32>
    %161 = vector.broadcast %160 : vector<16x1xf32> to vector<16x64xf32>
    %162 = arith.addf %159, %161 : vector<16x64xf32>
    %cst_91 = arith.constant 0.000000e+00 : f32
    %163 = vector.broadcast %cst_91 : f32 to vector<16x64xf32>
    %164 = arith.maximumf %162, %163 : vector<16x64xf32>
    %165 = tpu.iota {dimensions = array<i32: 0>} : vector<64x4xi32>
    %166 = tpu.iota {dimensions = array<i32: 1>} : vector<64x4xi32>
    %c16_i32 = arith.constant 16 : i32
    %167 = vector.broadcast %c16_i32 : i32 to vector<64x4xi32>
    %168 = arith.muli %167, %166 : vector<64x4xi32>
    %c0_i32 = arith.constant 0 : i32
    %169 = vector.broadcast %c0_i32 : i32 to vector<64x4xi32>
    %170 = arith.addi %168, %169 : vector<64x4xi32>
    %171 = arith.cmpi eq, %165, %170 : vector<64x4xi32>
    %cst_92 = arith.constant 1.000000e+00 : f32
    %cst_93 = arith.constant 0.000000e+00 : f32
    %172 = vector.broadcast %cst_92 : f32 to vector<64x4xf32>
    %173 = vector.broadcast %cst_93 : f32 to vector<64x4xf32>
    %174 = arith.select %171, %172, %173 : vector<64x4xi1>, vector<64x4xf32>
    %c0_94 = arith.constant 0 : index
    %c0_95 = arith.constant 0 : index
    %c0_96 = arith.constant 0 : index
    %175 = vector.load %arg8[%c0_94, %c0_95, %c0_96] : memref<4x20x16xf32, #tpu.memory_space<vmem>>, vector<1x20x16xf32>
    %176 = vector.shape_cast %175 : vector<1x20x16xf32> to vector<20x16xf32>
    %cst_97 = arith.constant dense<0.000000e+00> : vector<16x4xf32>
    %177 = tpu.matmul %164, %174, %cst_97 {dimension_numbers = #tpu.dot_dimension_numbers<[1], [0], [0], [1], [0, 0, 1, 1], [], []>} : vector<16x64xf32>, vector<64x4xf32>, vector<16x4xf32> -> vector<16x4xf32>
    %cst_98 = arith.constant dense<0.000000e+00> : vector<20x4xf32>
    %178 = tpu.matmul %176, %177, %cst_98 {dimension_numbers = #tpu.dot_dimension_numbers<[1], [0], [0], [1], [0, 0, 1, 1], [], []>} : vector<20x16xf32>, vector<16x4xf32>, vector<20x4xf32> -> vector<20x4xf32>
    %179 = tpu.iota {dimensions = array<i32: 0>} : vector<64x4xi32>
    %180 = tpu.iota {dimensions = array<i32: 1>} : vector<64x4xi32>
    %c16_i32_99 = arith.constant 16 : i32
    %181 = vector.broadcast %c16_i32_99 : i32 to vector<64x4xi32>
    %182 = arith.muli %181, %180 : vector<64x4xi32>
    %c1_i32_100 = arith.constant 1 : i32
    %183 = vector.broadcast %c1_i32_100 : i32 to vector<64x4xi32>
    %184 = arith.addi %182, %183 : vector<64x4xi32>
    %185 = arith.cmpi eq, %179, %184 : vector<64x4xi32>
    %cst_101 = arith.constant 1.000000e+00 : f32
    %cst_102 = arith.constant 0.000000e+00 : f32
    %186 = vector.broadcast %cst_101 : f32 to vector<64x4xf32>
    %187 = vector.broadcast %cst_102 : f32 to vector<64x4xf32>
    %188 = arith.select %185, %186, %187 : vector<64x4xi1>, vector<64x4xf32>
    %c1_103 = arith.constant 1 : index
    %c0_104 = arith.constant 0 : index
    %c0_105 = arith.constant 0 : index
    %189 = vector.load %arg8[%c1_103, %c0_104, %c0_105] : memref<4x20x16xf32, #tpu.memory_space<vmem>>, vector<1x20x16xf32>
    %190 = vector.shape_cast %189 : vector<1x20x16xf32> to vector<20x16xf32>
    %cst_106 = arith.constant dense<0.000000e+00> : vector<16x4xf32>
    %191 = tpu.matmul %164, %188, %cst_106 {dimension_numbers = #tpu.dot_dimension_numbers<[1], [0], [0], [1], [0, 0, 1, 1], [], []>} : vector<16x64xf32>, vector<64x4xf32>, vector<16x4xf32> -> vector<16x4xf32>
    %cst_107 = arith.constant dense<0.000000e+00> : vector<20x4xf32>
    %192 = tpu.matmul %190, %191, %cst_107 {dimension_numbers = #tpu.dot_dimension_numbers<[1], [0], [0], [1], [0, 0, 1, 1], [], []>} : vector<20x16xf32>, vector<16x4xf32>, vector<20x4xf32> -> vector<20x4xf32>
    %193 = arith.addf %178, %192 : vector<20x4xf32>
    %194 = tpu.iota {dimensions = array<i32: 0>} : vector<64x4xi32>
    %195 = tpu.iota {dimensions = array<i32: 1>} : vector<64x4xi32>
    %c16_i32_108 = arith.constant 16 : i32
    %196 = vector.broadcast %c16_i32_108 : i32 to vector<64x4xi32>
    %197 = arith.muli %196, %195 : vector<64x4xi32>
    %c2_i32_109 = arith.constant 2 : i32
    %198 = vector.broadcast %c2_i32_109 : i32 to vector<64x4xi32>
    %199 = arith.addi %197, %198 : vector<64x4xi32>
    %200 = arith.cmpi eq, %194, %199 : vector<64x4xi32>
    %cst_110 = arith.constant 1.000000e+00 : f32
    %cst_111 = arith.constant 0.000000e+00 : f32
    %201 = vector.broadcast %cst_110 : f32 to vector<64x4xf32>
    %202 = vector.broadcast %cst_111 : f32 to vector<64x4xf32>
    %203 = arith.select %200, %201, %202 : vector<64x4xi1>, vector<64x4xf32>
    %c2_112 = arith.constant 2 : index
    %c0_113 = arith.constant 0 : index
    %c0_114 = arith.constant 0 : index
    %204 = vector.load %arg8[%c2_112, %c0_113, %c0_114] : memref<4x20x16xf32, #tpu.memory_space<vmem>>, vector<1x20x16xf32>
    %205 = vector.shape_cast %204 : vector<1x20x16xf32> to vector<20x16xf32>
    %cst_115 = arith.constant dense<0.000000e+00> : vector<16x4xf32>
    %206 = tpu.matmul %164, %203, %cst_115 {dimension_numbers = #tpu.dot_dimension_numbers<[1], [0], [0], [1], [0, 0, 1, 1], [], []>} : vector<16x64xf32>, vector<64x4xf32>, vector<16x4xf32> -> vector<16x4xf32>
    %cst_116 = arith.constant dense<0.000000e+00> : vector<20x4xf32>
    %207 = tpu.matmul %205, %206, %cst_116 {dimension_numbers = #tpu.dot_dimension_numbers<[1], [0], [0], [1], [0, 0, 1, 1], [], []>} : vector<20x16xf32>, vector<16x4xf32>, vector<20x4xf32> -> vector<20x4xf32>
    %208 = arith.addf %193, %207 : vector<20x4xf32>
    %209 = tpu.iota {dimensions = array<i32: 0>} : vector<64x4xi32>
    %210 = tpu.iota {dimensions = array<i32: 1>} : vector<64x4xi32>
    %c16_i32_117 = arith.constant 16 : i32
    %211 = vector.broadcast %c16_i32_117 : i32 to vector<64x4xi32>
    %212 = arith.muli %211, %210 : vector<64x4xi32>
    %c3_i32 = arith.constant 3 : i32
    %213 = vector.broadcast %c3_i32 : i32 to vector<64x4xi32>
    %214 = arith.addi %212, %213 : vector<64x4xi32>
    %215 = arith.cmpi eq, %209, %214 : vector<64x4xi32>
    %cst_118 = arith.constant 1.000000e+00 : f32
    %cst_119 = arith.constant 0.000000e+00 : f32
    %216 = vector.broadcast %cst_118 : f32 to vector<64x4xf32>
    %217 = vector.broadcast %cst_119 : f32 to vector<64x4xf32>
    %218 = arith.select %215, %216, %217 : vector<64x4xi1>, vector<64x4xf32>
    %c3 = arith.constant 3 : index
    %c0_120 = arith.constant 0 : index
    %c0_121 = arith.constant 0 : index
    %219 = vector.load %arg8[%c3, %c0_120, %c0_121] : memref<4x20x16xf32, #tpu.memory_space<vmem>>, vector<1x20x16xf32>
    %220 = vector.shape_cast %219 : vector<1x20x16xf32> to vector<20x16xf32>
    %cst_122 = arith.constant dense<0.000000e+00> : vector<16x4xf32>
    %221 = tpu.matmul %164, %218, %cst_122 {dimension_numbers = #tpu.dot_dimension_numbers<[1], [0], [0], [1], [0, 0, 1, 1], [], []>} : vector<16x64xf32>, vector<64x4xf32>, vector<16x4xf32> -> vector<16x4xf32>
    %cst_123 = arith.constant dense<0.000000e+00> : vector<20x4xf32>
    %222 = tpu.matmul %220, %221, %cst_123 {dimension_numbers = #tpu.dot_dimension_numbers<[1], [0], [0], [1], [0, 0, 1, 1], [], []>} : vector<20x16xf32>, vector<16x4xf32>, vector<20x4xf32> -> vector<20x4xf32>
    %223 = arith.addf %208, %222 : vector<20x4xf32>
    %c0_124 = arith.constant 0 : index
    %c0_125 = arith.constant 0 : index
    %224 = vector.load %arg9[%c0_124, %c0_125] : memref<4x64xf32, #tpu.memory_space<vmem>>, vector<4x64xf32>
    %cst_126 = arith.constant dense<0.000000e+00> : vector<20x64xf32>
    %225 = tpu.matmul %223, %224, %cst_126 {dimension_numbers = #tpu.dot_dimension_numbers<[1], [0], [0], [1], [0, 0, 1, 1], [], []>} : vector<20x4xf32>, vector<4x64xf32>, vector<20x64xf32> -> vector<20x64xf32>
    %c0_127 = arith.constant 0 : index
    %c0_128 = arith.constant 0 : index
    %226 = vector.load %arg11[%c0_127, %c0_128] : memref<1x64xf32, #tpu.memory_space<vmem>>, vector<1x64xf32>
    %227 = vector.broadcast %226 : vector<1x64xf32> to vector<20x64xf32>
    %228 = arith.addf %225, %227 : vector<20x64xf32>
    %c0_129 = arith.constant 0 : index
    %c0_130 = arith.constant 0 : index
    %229 = vector.load %arg10[%c0_129, %c0_130] : memref<16x64xf32, #tpu.memory_space<vmem>>, vector<16x64xf32>
    %cst_131 = arith.constant 0.000000e+00 : f32
    %230 = vector.broadcast %cst_131 : f32 to vector<1x16xf32>
    %cst_132 = arith.constant 0.000000e+00 : f32
    %231 = vector.broadcast %cst_132 : f32 to vector<1x16xf32>
    %232 = vector.extract_strided_slice %228 {offsets = [0, 0], sizes = [1, 64], strides = [1, 1]} : vector<20x64xf32> to vector<1x64xf32>
    %cst_133 = arith.constant dense<0.000000e+00> : vector<1x64xf32>
    %233 = tpu.matmul %230, %229, %cst_133 {dimension_numbers = #tpu.dot_dimension_numbers<[1], [0], [0], [1], [0, 0, 1, 1], [], []>} : vector<1x16xf32>, vector<16x64xf32>, vector<1x64xf32> -> vector<1x64xf32>
    %234 = arith.addf %232, %233 : vector<1x64xf32>
    %235 = vector.extract_strided_slice %234 {offsets = [0, 0], sizes = [1, 16], strides = [1, 1]} : vector<1x64xf32> to vector<1x16xf32>
    %236 = arith.negf %235 : vector<1x16xf32>
    %237 = math.exp %236 : vector<1x16xf32>
    %cst_134 = arith.constant 1.000000e+00 : f32
    %238 = vector.broadcast %cst_134 : f32 to vector<1x16xf32>
    %239 = arith.addf %238, %237 : vector<1x16xf32>
    %240 = arith.divf %238, %239 : vector<1x16xf32>
    %241 = vector.extract_strided_slice %234 {offsets = [0, 16], sizes = [1, 16], strides = [1, 1]} : vector<1x64xf32> to vector<1x16xf32>
    %242 = arith.negf %241 : vector<1x16xf32>
    %243 = math.exp %242 : vector<1x16xf32>
    %cst_135 = arith.constant 1.000000e+00 : f32
    %244 = vector.broadcast %cst_135 : f32 to vector<1x16xf32>
    %245 = arith.addf %244, %243 : vector<1x16xf32>
    %246 = arith.divf %244, %245 : vector<1x16xf32>
    %247 = vector.extract_strided_slice %234 {offsets = [0, 32], sizes = [1, 16], strides = [1, 1]} : vector<1x64xf32> to vector<1x16xf32>
    %248 = math.tanh %247 : vector<1x16xf32>
    %249 = vector.extract_strided_slice %234 {offsets = [0, 48], sizes = [1, 16], strides = [1, 1]} : vector<1x64xf32> to vector<1x16xf32>
    %250 = arith.negf %249 : vector<1x16xf32>
    %251 = math.exp %250 : vector<1x16xf32>
    %cst_136 = arith.constant 1.000000e+00 : f32
    %252 = vector.broadcast %cst_136 : f32 to vector<1x16xf32>
    %253 = arith.addf %252, %251 : vector<1x16xf32>
    %254 = arith.divf %252, %253 : vector<1x16xf32>
    %255 = arith.mulf %246, %231 : vector<1x16xf32>
    %256 = arith.mulf %240, %248 : vector<1x16xf32>
    %257 = arith.addf %255, %256 : vector<1x16xf32>
    %258 = math.tanh %257 : vector<1x16xf32>
    %259 = arith.mulf %254, %258 : vector<1x16xf32>
    %260 = vector.extract_strided_slice %228 {offsets = [1, 0], sizes = [1, 64], strides = [1, 1]} : vector<20x64xf32> to vector<1x64xf32>
    %cst_137 = arith.constant dense<0.000000e+00> : vector<1x64xf32>
    %261 = tpu.matmul %259, %229, %cst_137 {dimension_numbers = #tpu.dot_dimension_numbers<[1], [0], [0], [1], [0, 0, 1, 1], [], []>} : vector<1x16xf32>, vector<16x64xf32>, vector<1x64xf32> -> vector<1x64xf32>
    %262 = arith.addf %260, %261 : vector<1x64xf32>
    %263 = vector.extract_strided_slice %262 {offsets = [0, 0], sizes = [1, 16], strides = [1, 1]} : vector<1x64xf32> to vector<1x16xf32>
    %264 = arith.negf %263 : vector<1x16xf32>
    %265 = math.exp %264 : vector<1x16xf32>
    %cst_138 = arith.constant 1.000000e+00 : f32
    %266 = vector.broadcast %cst_138 : f32 to vector<1x16xf32>
    %267 = arith.addf %266, %265 : vector<1x16xf32>
    %268 = arith.divf %266, %267 : vector<1x16xf32>
    %269 = vector.extract_strided_slice %262 {offsets = [0, 16], sizes = [1, 16], strides = [1, 1]} : vector<1x64xf32> to vector<1x16xf32>
    %270 = arith.negf %269 : vector<1x16xf32>
    %271 = math.exp %270 : vector<1x16xf32>
    %cst_139 = arith.constant 1.000000e+00 : f32
    %272 = vector.broadcast %cst_139 : f32 to vector<1x16xf32>
    %273 = arith.addf %272, %271 : vector<1x16xf32>
    %274 = arith.divf %272, %273 : vector<1x16xf32>
    %275 = vector.extract_strided_slice %262 {offsets = [0, 32], sizes = [1, 16], strides = [1, 1]} : vector<1x64xf32> to vector<1x16xf32>
    %276 = math.tanh %275 : vector<1x16xf32>
    %277 = vector.extract_strided_slice %262 {offsets = [0, 48], sizes = [1, 16], strides = [1, 1]} : vector<1x64xf32> to vector<1x16xf32>
    %278 = arith.negf %277 : vector<1x16xf32>
    %279 = math.exp %278 : vector<1x16xf32>
    %cst_140 = arith.constant 1.000000e+00 : f32
    %280 = vector.broadcast %cst_140 : f32 to vector<1x16xf32>
    %281 = arith.addf %280, %279 : vector<1x16xf32>
    %282 = arith.divf %280, %281 : vector<1x16xf32>
    %283 = arith.mulf %274, %257 : vector<1x16xf32>
    %284 = arith.mulf %268, %276 : vector<1x16xf32>
    %285 = arith.addf %283, %284 : vector<1x16xf32>
    %286 = math.tanh %285 : vector<1x16xf32>
    %287 = arith.mulf %282, %286 : vector<1x16xf32>
    %288 = vector.extract_strided_slice %228 {offsets = [2, 0], sizes = [1, 64], strides = [1, 1]} : vector<20x64xf32> to vector<1x64xf32>
    %cst_141 = arith.constant dense<0.000000e+00> : vector<1x64xf32>
    %289 = tpu.matmul %287, %229, %cst_141 {dimension_numbers = #tpu.dot_dimension_numbers<[1], [0], [0], [1], [0, 0, 1, 1], [], []>} : vector<1x16xf32>, vector<16x64xf32>, vector<1x64xf32> -> vector<1x64xf32>
    %290 = arith.addf %288, %289 : vector<1x64xf32>
    %291 = vector.extract_strided_slice %290 {offsets = [0, 0], sizes = [1, 16], strides = [1, 1]} : vector<1x64xf32> to vector<1x16xf32>
    %292 = arith.negf %291 : vector<1x16xf32>
    %293 = math.exp %292 : vector<1x16xf32>
    %cst_142 = arith.constant 1.000000e+00 : f32
    %294 = vector.broadcast %cst_142 : f32 to vector<1x16xf32>
    %295 = arith.addf %294, %293 : vector<1x16xf32>
    %296 = arith.divf %294, %295 : vector<1x16xf32>
    %297 = vector.extract_strided_slice %290 {offsets = [0, 16], sizes = [1, 16], strides = [1, 1]} : vector<1x64xf32> to vector<1x16xf32>
    %298 = arith.negf %297 : vector<1x16xf32>
    %299 = math.exp %298 : vector<1x16xf32>
    %cst_143 = arith.constant 1.000000e+00 : f32
    %300 = vector.broadcast %cst_143 : f32 to vector<1x16xf32>
    %301 = arith.addf %300, %299 : vector<1x16xf32>
    %302 = arith.divf %300, %301 : vector<1x16xf32>
    %303 = vector.extract_strided_slice %290 {offsets = [0, 32], sizes = [1, 16], strides = [1, 1]} : vector<1x64xf32> to vector<1x16xf32>
    %304 = math.tanh %303 : vector<1x16xf32>
    %305 = vector.extract_strided_slice %290 {offsets = [0, 48], sizes = [1, 16], strides = [1, 1]} : vector<1x64xf32> to vector<1x16xf32>
    %306 = arith.negf %305 : vector<1x16xf32>
    %307 = math.exp %306 : vector<1x16xf32>
    %cst_144 = arith.constant 1.000000e+00 : f32
    %308 = vector.broadcast %cst_144 : f32 to vector<1x16xf32>
    %309 = arith.addf %308, %307 : vector<1x16xf32>
    %310 = arith.divf %308, %309 : vector<1x16xf32>
    %311 = arith.mulf %302, %285 : vector<1x16xf32>
    %312 = arith.mulf %296, %304 : vector<1x16xf32>
    %313 = arith.addf %311, %312 : vector<1x16xf32>
    %314 = math.tanh %313 : vector<1x16xf32>
    %315 = arith.mulf %310, %314 : vector<1x16xf32>
    %316 = vector.extract_strided_slice %228 {offsets = [3, 0], sizes = [1, 64], strides = [1, 1]} : vector<20x64xf32> to vector<1x64xf32>
    %cst_145 = arith.constant dense<0.000000e+00> : vector<1x64xf32>
    %317 = tpu.matmul %315, %229, %cst_145 {dimension_numbers = #tpu.dot_dimension_numbers<[1], [0], [0], [1], [0, 0, 1, 1], [], []>} : vector<1x16xf32>, vector<16x64xf32>, vector<1x64xf32> -> vector<1x64xf32>
    %318 = arith.addf %316, %317 : vector<1x64xf32>
    %319 = vector.extract_strided_slice %318 {offsets = [0, 0], sizes = [1, 16], strides = [1, 1]} : vector<1x64xf32> to vector<1x16xf32>
    %320 = arith.negf %319 : vector<1x16xf32>
    %321 = math.exp %320 : vector<1x16xf32>
    %cst_146 = arith.constant 1.000000e+00 : f32
    %322 = vector.broadcast %cst_146 : f32 to vector<1x16xf32>
    %323 = arith.addf %322, %321 : vector<1x16xf32>
    %324 = arith.divf %322, %323 : vector<1x16xf32>
    %325 = vector.extract_strided_slice %318 {offsets = [0, 16], sizes = [1, 16], strides = [1, 1]} : vector<1x64xf32> to vector<1x16xf32>
    %326 = arith.negf %325 : vector<1x16xf32>
    %327 = math.exp %326 : vector<1x16xf32>
    %cst_147 = arith.constant 1.000000e+00 : f32
    %328 = vector.broadcast %cst_147 : f32 to vector<1x16xf32>
    %329 = arith.addf %328, %327 : vector<1x16xf32>
    %330 = arith.divf %328, %329 : vector<1x16xf32>
    %331 = vector.extract_strided_slice %318 {offsets = [0, 32], sizes = [1, 16], strides = [1, 1]} : vector<1x64xf32> to vector<1x16xf32>
    %332 = math.tanh %331 : vector<1x16xf32>
    %333 = vector.extract_strided_slice %318 {offsets = [0, 48], sizes = [1, 16], strides = [1, 1]} : vector<1x64xf32> to vector<1x16xf32>
    %334 = arith.negf %333 : vector<1x16xf32>
    %335 = math.exp %334 : vector<1x16xf32>
    %cst_148 = arith.constant 1.000000e+00 : f32
    %336 = vector.broadcast %cst_148 : f32 to vector<1x16xf32>
    %337 = arith.addf %336, %335 : vector<1x16xf32>
    %338 = arith.divf %336, %337 : vector<1x16xf32>
    %339 = arith.mulf %330, %313 : vector<1x16xf32>
    %340 = arith.mulf %324, %332 : vector<1x16xf32>
    %341 = arith.addf %339, %340 : vector<1x16xf32>
    %342 = math.tanh %341 : vector<1x16xf32>
    %343 = arith.mulf %338, %342 : vector<1x16xf32>
    %344 = vector.extract_strided_slice %228 {offsets = [4, 0], sizes = [1, 64], strides = [1, 1]} : vector<20x64xf32> to vector<1x64xf32>
    %cst_149 = arith.constant dense<0.000000e+00> : vector<1x64xf32>
    %345 = tpu.matmul %343, %229, %cst_149 {dimension_numbers = #tpu.dot_dimension_numbers<[1], [0], [0], [1], [0, 0, 1, 1], [], []>} : vector<1x16xf32>, vector<16x64xf32>, vector<1x64xf32> -> vector<1x64xf32>
    %346 = arith.addf %344, %345 : vector<1x64xf32>
    %347 = vector.extract_strided_slice %346 {offsets = [0, 0], sizes = [1, 16], strides = [1, 1]} : vector<1x64xf32> to vector<1x16xf32>
    %348 = arith.negf %347 : vector<1x16xf32>
    %349 = math.exp %348 : vector<1x16xf32>
    %cst_150 = arith.constant 1.000000e+00 : f32
    %350 = vector.broadcast %cst_150 : f32 to vector<1x16xf32>
    %351 = arith.addf %350, %349 : vector<1x16xf32>
    %352 = arith.divf %350, %351 : vector<1x16xf32>
    %353 = vector.extract_strided_slice %346 {offsets = [0, 16], sizes = [1, 16], strides = [1, 1]} : vector<1x64xf32> to vector<1x16xf32>
    %354 = arith.negf %353 : vector<1x16xf32>
    %355 = math.exp %354 : vector<1x16xf32>
    %cst_151 = arith.constant 1.000000e+00 : f32
    %356 = vector.broadcast %cst_151 : f32 to vector<1x16xf32>
    %357 = arith.addf %356, %355 : vector<1x16xf32>
    %358 = arith.divf %356, %357 : vector<1x16xf32>
    %359 = vector.extract_strided_slice %346 {offsets = [0, 32], sizes = [1, 16], strides = [1, 1]} : vector<1x64xf32> to vector<1x16xf32>
    %360 = math.tanh %359 : vector<1x16xf32>
    %361 = vector.extract_strided_slice %346 {offsets = [0, 48], sizes = [1, 16], strides = [1, 1]} : vector<1x64xf32> to vector<1x16xf32>
    %362 = arith.negf %361 : vector<1x16xf32>
    %363 = math.exp %362 : vector<1x16xf32>
    %cst_152 = arith.constant 1.000000e+00 : f32
    %364 = vector.broadcast %cst_152 : f32 to vector<1x16xf32>
    %365 = arith.addf %364, %363 : vector<1x16xf32>
    %366 = arith.divf %364, %365 : vector<1x16xf32>
    %367 = arith.mulf %358, %341 : vector<1x16xf32>
    %368 = arith.mulf %352, %360 : vector<1x16xf32>
    %369 = arith.addf %367, %368 : vector<1x16xf32>
    %370 = math.tanh %369 : vector<1x16xf32>
    %371 = arith.mulf %366, %370 : vector<1x16xf32>
    %372 = vector.extract_strided_slice %228 {offsets = [5, 0], sizes = [1, 64], strides = [1, 1]} : vector<20x64xf32> to vector<1x64xf32>
    %cst_153 = arith.constant dense<0.000000e+00> : vector<1x64xf32>
    %373 = tpu.matmul %371, %229, %cst_153 {dimension_numbers = #tpu.dot_dimension_numbers<[1], [0], [0], [1], [0, 0, 1, 1], [], []>} : vector<1x16xf32>, vector<16x64xf32>, vector<1x64xf32> -> vector<1x64xf32>
    %374 = arith.addf %372, %373 : vector<1x64xf32>
    %375 = vector.extract_strided_slice %374 {offsets = [0, 0], sizes = [1, 16], strides = [1, 1]} : vector<1x64xf32> to vector<1x16xf32>
    %376 = arith.negf %375 : vector<1x16xf32>
    %377 = math.exp %376 : vector<1x16xf32>
    %cst_154 = arith.constant 1.000000e+00 : f32
    %378 = vector.broadcast %cst_154 : f32 to vector<1x16xf32>
    %379 = arith.addf %378, %377 : vector<1x16xf32>
    %380 = arith.divf %378, %379 : vector<1x16xf32>
    %381 = vector.extract_strided_slice %374 {offsets = [0, 16], sizes = [1, 16], strides = [1, 1]} : vector<1x64xf32> to vector<1x16xf32>
    %382 = arith.negf %381 : vector<1x16xf32>
    %383 = math.exp %382 : vector<1x16xf32>
    %cst_155 = arith.constant 1.000000e+00 : f32
    %384 = vector.broadcast %cst_155 : f32 to vector<1x16xf32>
    %385 = arith.addf %384, %383 : vector<1x16xf32>
    %386 = arith.divf %384, %385 : vector<1x16xf32>
    %387 = vector.extract_strided_slice %374 {offsets = [0, 32], sizes = [1, 16], strides = [1, 1]} : vector<1x64xf32> to vector<1x16xf32>
    %388 = math.tanh %387 : vector<1x16xf32>
    %389 = vector.extract_strided_slice %374 {offsets = [0, 48], sizes = [1, 16], strides = [1, 1]} : vector<1x64xf32> to vector<1x16xf32>
    %390 = arith.negf %389 : vector<1x16xf32>
    %391 = math.exp %390 : vector<1x16xf32>
    %cst_156 = arith.constant 1.000000e+00 : f32
    %392 = vector.broadcast %cst_156 : f32 to vector<1x16xf32>
    %393 = arith.addf %392, %391 : vector<1x16xf32>
    %394 = arith.divf %392, %393 : vector<1x16xf32>
    %395 = arith.mulf %386, %369 : vector<1x16xf32>
    %396 = arith.mulf %380, %388 : vector<1x16xf32>
    %397 = arith.addf %395, %396 : vector<1x16xf32>
    %398 = math.tanh %397 : vector<1x16xf32>
    %399 = arith.mulf %394, %398 : vector<1x16xf32>
    %400 = vector.extract_strided_slice %228 {offsets = [6, 0], sizes = [1, 64], strides = [1, 1]} : vector<20x64xf32> to vector<1x64xf32>
    %cst_157 = arith.constant dense<0.000000e+00> : vector<1x64xf32>
    %401 = tpu.matmul %399, %229, %cst_157 {dimension_numbers = #tpu.dot_dimension_numbers<[1], [0], [0], [1], [0, 0, 1, 1], [], []>} : vector<1x16xf32>, vector<16x64xf32>, vector<1x64xf32> -> vector<1x64xf32>
    %402 = arith.addf %400, %401 : vector<1x64xf32>
    %403 = vector.extract_strided_slice %402 {offsets = [0, 0], sizes = [1, 16], strides = [1, 1]} : vector<1x64xf32> to vector<1x16xf32>
    %404 = arith.negf %403 : vector<1x16xf32>
    %405 = math.exp %404 : vector<1x16xf32>
    %cst_158 = arith.constant 1.000000e+00 : f32
    %406 = vector.broadcast %cst_158 : f32 to vector<1x16xf32>
    %407 = arith.addf %406, %405 : vector<1x16xf32>
    %408 = arith.divf %406, %407 : vector<1x16xf32>
    %409 = vector.extract_strided_slice %402 {offsets = [0, 16], sizes = [1, 16], strides = [1, 1]} : vector<1x64xf32> to vector<1x16xf32>
    %410 = arith.negf %409 : vector<1x16xf32>
    %411 = math.exp %410 : vector<1x16xf32>
    %cst_159 = arith.constant 1.000000e+00 : f32
    %412 = vector.broadcast %cst_159 : f32 to vector<1x16xf32>
    %413 = arith.addf %412, %411 : vector<1x16xf32>
    %414 = arith.divf %412, %413 : vector<1x16xf32>
    %415 = vector.extract_strided_slice %402 {offsets = [0, 32], sizes = [1, 16], strides = [1, 1]} : vector<1x64xf32> to vector<1x16xf32>
    %416 = math.tanh %415 : vector<1x16xf32>
    %417 = vector.extract_strided_slice %402 {offsets = [0, 48], sizes = [1, 16], strides = [1, 1]} : vector<1x64xf32> to vector<1x16xf32>
    %418 = arith.negf %417 : vector<1x16xf32>
    %419 = math.exp %418 : vector<1x16xf32>
    %cst_160 = arith.constant 1.000000e+00 : f32
    %420 = vector.broadcast %cst_160 : f32 to vector<1x16xf32>
    %421 = arith.addf %420, %419 : vector<1x16xf32>
    %422 = arith.divf %420, %421 : vector<1x16xf32>
    %423 = arith.mulf %414, %397 : vector<1x16xf32>
    %424 = arith.mulf %408, %416 : vector<1x16xf32>
    %425 = arith.addf %423, %424 : vector<1x16xf32>
    %426 = math.tanh %425 : vector<1x16xf32>
    %427 = arith.mulf %422, %426 : vector<1x16xf32>
    %428 = vector.extract_strided_slice %228 {offsets = [7, 0], sizes = [1, 64], strides = [1, 1]} : vector<20x64xf32> to vector<1x64xf32>
    %cst_161 = arith.constant dense<0.000000e+00> : vector<1x64xf32>
    %429 = tpu.matmul %427, %229, %cst_161 {dimension_numbers = #tpu.dot_dimension_numbers<[1], [0], [0], [1], [0, 0, 1, 1], [], []>} : vector<1x16xf32>, vector<16x64xf32>, vector<1x64xf32> -> vector<1x64xf32>
    %430 = arith.addf %428, %429 : vector<1x64xf32>
    %431 = vector.extract_strided_slice %430 {offsets = [0, 0], sizes = [1, 16], strides = [1, 1]} : vector<1x64xf32> to vector<1x16xf32>
    %432 = arith.negf %431 : vector<1x16xf32>
    %433 = math.exp %432 : vector<1x16xf32>
    %cst_162 = arith.constant 1.000000e+00 : f32
    %434 = vector.broadcast %cst_162 : f32 to vector<1x16xf32>
    %435 = arith.addf %434, %433 : vector<1x16xf32>
    %436 = arith.divf %434, %435 : vector<1x16xf32>
    %437 = vector.extract_strided_slice %430 {offsets = [0, 16], sizes = [1, 16], strides = [1, 1]} : vector<1x64xf32> to vector<1x16xf32>
    %438 = arith.negf %437 : vector<1x16xf32>
    %439 = math.exp %438 : vector<1x16xf32>
    %cst_163 = arith.constant 1.000000e+00 : f32
    %440 = vector.broadcast %cst_163 : f32 to vector<1x16xf32>
    %441 = arith.addf %440, %439 : vector<1x16xf32>
    %442 = arith.divf %440, %441 : vector<1x16xf32>
    %443 = vector.extract_strided_slice %430 {offsets = [0, 32], sizes = [1, 16], strides = [1, 1]} : vector<1x64xf32> to vector<1x16xf32>
    %444 = math.tanh %443 : vector<1x16xf32>
    %445 = vector.extract_strided_slice %430 {offsets = [0, 48], sizes = [1, 16], strides = [1, 1]} : vector<1x64xf32> to vector<1x16xf32>
    %446 = arith.negf %445 : vector<1x16xf32>
    %447 = math.exp %446 : vector<1x16xf32>
    %cst_164 = arith.constant 1.000000e+00 : f32
    %448 = vector.broadcast %cst_164 : f32 to vector<1x16xf32>
    %449 = arith.addf %448, %447 : vector<1x16xf32>
    %450 = arith.divf %448, %449 : vector<1x16xf32>
    %451 = arith.mulf %442, %425 : vector<1x16xf32>
    %452 = arith.mulf %436, %444 : vector<1x16xf32>
    %453 = arith.addf %451, %452 : vector<1x16xf32>
    %454 = math.tanh %453 : vector<1x16xf32>
    %455 = arith.mulf %450, %454 : vector<1x16xf32>
    %456 = vector.extract_strided_slice %228 {offsets = [8, 0], sizes = [1, 64], strides = [1, 1]} : vector<20x64xf32> to vector<1x64xf32>
    %cst_165 = arith.constant dense<0.000000e+00> : vector<1x64xf32>
    %457 = tpu.matmul %455, %229, %cst_165 {dimension_numbers = #tpu.dot_dimension_numbers<[1], [0], [0], [1], [0, 0, 1, 1], [], []>} : vector<1x16xf32>, vector<16x64xf32>, vector<1x64xf32> -> vector<1x64xf32>
    %458 = arith.addf %456, %457 : vector<1x64xf32>
    %459 = vector.extract_strided_slice %458 {offsets = [0, 0], sizes = [1, 16], strides = [1, 1]} : vector<1x64xf32> to vector<1x16xf32>
    %460 = arith.negf %459 : vector<1x16xf32>
    %461 = math.exp %460 : vector<1x16xf32>
    %cst_166 = arith.constant 1.000000e+00 : f32
    %462 = vector.broadcast %cst_166 : f32 to vector<1x16xf32>
    %463 = arith.addf %462, %461 : vector<1x16xf32>
    %464 = arith.divf %462, %463 : vector<1x16xf32>
    %465 = vector.extract_strided_slice %458 {offsets = [0, 16], sizes = [1, 16], strides = [1, 1]} : vector<1x64xf32> to vector<1x16xf32>
    %466 = arith.negf %465 : vector<1x16xf32>
    %467 = math.exp %466 : vector<1x16xf32>
    %cst_167 = arith.constant 1.000000e+00 : f32
    %468 = vector.broadcast %cst_167 : f32 to vector<1x16xf32>
    %469 = arith.addf %468, %467 : vector<1x16xf32>
    %470 = arith.divf %468, %469 : vector<1x16xf32>
    %471 = vector.extract_strided_slice %458 {offsets = [0, 32], sizes = [1, 16], strides = [1, 1]} : vector<1x64xf32> to vector<1x16xf32>
    %472 = math.tanh %471 : vector<1x16xf32>
    %473 = vector.extract_strided_slice %458 {offsets = [0, 48], sizes = [1, 16], strides = [1, 1]} : vector<1x64xf32> to vector<1x16xf32>
    %474 = arith.negf %473 : vector<1x16xf32>
    %475 = math.exp %474 : vector<1x16xf32>
    %cst_168 = arith.constant 1.000000e+00 : f32
    %476 = vector.broadcast %cst_168 : f32 to vector<1x16xf32>
    %477 = arith.addf %476, %475 : vector<1x16xf32>
    %478 = arith.divf %476, %477 : vector<1x16xf32>
    %479 = arith.mulf %470, %453 : vector<1x16xf32>
    %480 = arith.mulf %464, %472 : vector<1x16xf32>
    %481 = arith.addf %479, %480 : vector<1x16xf32>
    %482 = math.tanh %481 : vector<1x16xf32>
    %483 = arith.mulf %478, %482 : vector<1x16xf32>
    %484 = vector.extract_strided_slice %228 {offsets = [9, 0], sizes = [1, 64], strides = [1, 1]} : vector<20x64xf32> to vector<1x64xf32>
    %cst_169 = arith.constant dense<0.000000e+00> : vector<1x64xf32>
    %485 = tpu.matmul %483, %229, %cst_169 {dimension_numbers = #tpu.dot_dimension_numbers<[1], [0], [0], [1], [0, 0, 1, 1], [], []>} : vector<1x16xf32>, vector<16x64xf32>, vector<1x64xf32> -> vector<1x64xf32>
    %486 = arith.addf %484, %485 : vector<1x64xf32>
    %487 = vector.extract_strided_slice %486 {offsets = [0, 0], sizes = [1, 16], strides = [1, 1]} : vector<1x64xf32> to vector<1x16xf32>
    %488 = arith.negf %487 : vector<1x16xf32>
    %489 = math.exp %488 : vector<1x16xf32>
    %cst_170 = arith.constant 1.000000e+00 : f32
    %490 = vector.broadcast %cst_170 : f32 to vector<1x16xf32>
    %491 = arith.addf %490, %489 : vector<1x16xf32>
    %492 = arith.divf %490, %491 : vector<1x16xf32>
    %493 = vector.extract_strided_slice %486 {offsets = [0, 16], sizes = [1, 16], strides = [1, 1]} : vector<1x64xf32> to vector<1x16xf32>
    %494 = arith.negf %493 : vector<1x16xf32>
    %495 = math.exp %494 : vector<1x16xf32>
    %cst_171 = arith.constant 1.000000e+00 : f32
    %496 = vector.broadcast %cst_171 : f32 to vector<1x16xf32>
    %497 = arith.addf %496, %495 : vector<1x16xf32>
    %498 = arith.divf %496, %497 : vector<1x16xf32>
    %499 = vector.extract_strided_slice %486 {offsets = [0, 32], sizes = [1, 16], strides = [1, 1]} : vector<1x64xf32> to vector<1x16xf32>
    %500 = math.tanh %499 : vector<1x16xf32>
    %501 = vector.extract_strided_slice %486 {offsets = [0, 48], sizes = [1, 16], strides = [1, 1]} : vector<1x64xf32> to vector<1x16xf32>
    %502 = arith.negf %501 : vector<1x16xf32>
    %503 = math.exp %502 : vector<1x16xf32>
    %cst_172 = arith.constant 1.000000e+00 : f32
    %504 = vector.broadcast %cst_172 : f32 to vector<1x16xf32>
    %505 = arith.addf %504, %503 : vector<1x16xf32>
    %506 = arith.divf %504, %505 : vector<1x16xf32>
    %507 = arith.mulf %498, %481 : vector<1x16xf32>
    %508 = arith.mulf %492, %500 : vector<1x16xf32>
    %509 = arith.addf %507, %508 : vector<1x16xf32>
    %510 = math.tanh %509 : vector<1x16xf32>
    %511 = arith.mulf %506, %510 : vector<1x16xf32>
    %512 = vector.extract_strided_slice %228 {offsets = [10, 0], sizes = [1, 64], strides = [1, 1]} : vector<20x64xf32> to vector<1x64xf32>
    %cst_173 = arith.constant dense<0.000000e+00> : vector<1x64xf32>
    %513 = tpu.matmul %511, %229, %cst_173 {dimension_numbers = #tpu.dot_dimension_numbers<[1], [0], [0], [1], [0, 0, 1, 1], [], []>} : vector<1x16xf32>, vector<16x64xf32>, vector<1x64xf32> -> vector<1x64xf32>
    %514 = arith.addf %512, %513 : vector<1x64xf32>
    %515 = vector.extract_strided_slice %514 {offsets = [0, 0], sizes = [1, 16], strides = [1, 1]} : vector<1x64xf32> to vector<1x16xf32>
    %516 = arith.negf %515 : vector<1x16xf32>
    %517 = math.exp %516 : vector<1x16xf32>
    %cst_174 = arith.constant 1.000000e+00 : f32
    %518 = vector.broadcast %cst_174 : f32 to vector<1x16xf32>
    %519 = arith.addf %518, %517 : vector<1x16xf32>
    %520 = arith.divf %518, %519 : vector<1x16xf32>
    %521 = vector.extract_strided_slice %514 {offsets = [0, 16], sizes = [1, 16], strides = [1, 1]} : vector<1x64xf32> to vector<1x16xf32>
    %522 = arith.negf %521 : vector<1x16xf32>
    %523 = math.exp %522 : vector<1x16xf32>
    %cst_175 = arith.constant 1.000000e+00 : f32
    %524 = vector.broadcast %cst_175 : f32 to vector<1x16xf32>
    %525 = arith.addf %524, %523 : vector<1x16xf32>
    %526 = arith.divf %524, %525 : vector<1x16xf32>
    %527 = vector.extract_strided_slice %514 {offsets = [0, 32], sizes = [1, 16], strides = [1, 1]} : vector<1x64xf32> to vector<1x16xf32>
    %528 = math.tanh %527 : vector<1x16xf32>
    %529 = vector.extract_strided_slice %514 {offsets = [0, 48], sizes = [1, 16], strides = [1, 1]} : vector<1x64xf32> to vector<1x16xf32>
    %530 = arith.negf %529 : vector<1x16xf32>
    %531 = math.exp %530 : vector<1x16xf32>
    %cst_176 = arith.constant 1.000000e+00 : f32
    %532 = vector.broadcast %cst_176 : f32 to vector<1x16xf32>
    %533 = arith.addf %532, %531 : vector<1x16xf32>
    %534 = arith.divf %532, %533 : vector<1x16xf32>
    %535 = arith.mulf %526, %509 : vector<1x16xf32>
    %536 = arith.mulf %520, %528 : vector<1x16xf32>
    %537 = arith.addf %535, %536 : vector<1x16xf32>
    %538 = math.tanh %537 : vector<1x16xf32>
    %539 = arith.mulf %534, %538 : vector<1x16xf32>
    %540 = vector.extract_strided_slice %228 {offsets = [11, 0], sizes = [1, 64], strides = [1, 1]} : vector<20x64xf32> to vector<1x64xf32>
    %cst_177 = arith.constant dense<0.000000e+00> : vector<1x64xf32>
    %541 = tpu.matmul %539, %229, %cst_177 {dimension_numbers = #tpu.dot_dimension_numbers<[1], [0], [0], [1], [0, 0, 1, 1], [], []>} : vector<1x16xf32>, vector<16x64xf32>, vector<1x64xf32> -> vector<1x64xf32>
    %542 = arith.addf %540, %541 : vector<1x64xf32>
    %543 = vector.extract_strided_slice %542 {offsets = [0, 0], sizes = [1, 16], strides = [1, 1]} : vector<1x64xf32> to vector<1x16xf32>
    %544 = arith.negf %543 : vector<1x16xf32>
    %545 = math.exp %544 : vector<1x16xf32>
    %cst_178 = arith.constant 1.000000e+00 : f32
    %546 = vector.broadcast %cst_178 : f32 to vector<1x16xf32>
    %547 = arith.addf %546, %545 : vector<1x16xf32>
    %548 = arith.divf %546, %547 : vector<1x16xf32>
    %549 = vector.extract_strided_slice %542 {offsets = [0, 16], sizes = [1, 16], strides = [1, 1]} : vector<1x64xf32> to vector<1x16xf32>
    %550 = arith.negf %549 : vector<1x16xf32>
    %551 = math.exp %550 : vector<1x16xf32>
    %cst_179 = arith.constant 1.000000e+00 : f32
    %552 = vector.broadcast %cst_179 : f32 to vector<1x16xf32>
    %553 = arith.addf %552, %551 : vector<1x16xf32>
    %554 = arith.divf %552, %553 : vector<1x16xf32>
    %555 = vector.extract_strided_slice %542 {offsets = [0, 32], sizes = [1, 16], strides = [1, 1]} : vector<1x64xf32> to vector<1x16xf32>
    %556 = math.tanh %555 : vector<1x16xf32>
    %557 = vector.extract_strided_slice %542 {offsets = [0, 48], sizes = [1, 16], strides = [1, 1]} : vector<1x64xf32> to vector<1x16xf32>
    %558 = arith.negf %557 : vector<1x16xf32>
    %559 = math.exp %558 : vector<1x16xf32>
    %cst_180 = arith.constant 1.000000e+00 : f32
    %560 = vector.broadcast %cst_180 : f32 to vector<1x16xf32>
    %561 = arith.addf %560, %559 : vector<1x16xf32>
    %562 = arith.divf %560, %561 : vector<1x16xf32>
    %563 = arith.mulf %554, %537 : vector<1x16xf32>
    %564 = arith.mulf %548, %556 : vector<1x16xf32>
    %565 = arith.addf %563, %564 : vector<1x16xf32>
    %566 = math.tanh %565 : vector<1x16xf32>
    %567 = arith.mulf %562, %566 : vector<1x16xf32>
    %568 = vector.extract_strided_slice %228 {offsets = [12, 0], sizes = [1, 64], strides = [1, 1]} : vector<20x64xf32> to vector<1x64xf32>
    %cst_181 = arith.constant dense<0.000000e+00> : vector<1x64xf32>
    %569 = tpu.matmul %567, %229, %cst_181 {dimension_numbers = #tpu.dot_dimension_numbers<[1], [0], [0], [1], [0, 0, 1, 1], [], []>} : vector<1x16xf32>, vector<16x64xf32>, vector<1x64xf32> -> vector<1x64xf32>
    %570 = arith.addf %568, %569 : vector<1x64xf32>
    %571 = vector.extract_strided_slice %570 {offsets = [0, 0], sizes = [1, 16], strides = [1, 1]} : vector<1x64xf32> to vector<1x16xf32>
    %572 = arith.negf %571 : vector<1x16xf32>
    %573 = math.exp %572 : vector<1x16xf32>
    %cst_182 = arith.constant 1.000000e+00 : f32
    %574 = vector.broadcast %cst_182 : f32 to vector<1x16xf32>
    %575 = arith.addf %574, %573 : vector<1x16xf32>
    %576 = arith.divf %574, %575 : vector<1x16xf32>
    %577 = vector.extract_strided_slice %570 {offsets = [0, 16], sizes = [1, 16], strides = [1, 1]} : vector<1x64xf32> to vector<1x16xf32>
    %578 = arith.negf %577 : vector<1x16xf32>
    %579 = math.exp %578 : vector<1x16xf32>
    %cst_183 = arith.constant 1.000000e+00 : f32
    %580 = vector.broadcast %cst_183 : f32 to vector<1x16xf32>
    %581 = arith.addf %580, %579 : vector<1x16xf32>
    %582 = arith.divf %580, %581 : vector<1x16xf32>
    %583 = vector.extract_strided_slice %570 {offsets = [0, 32], sizes = [1, 16], strides = [1, 1]} : vector<1x64xf32> to vector<1x16xf32>
    %584 = math.tanh %583 : vector<1x16xf32>
    %585 = vector.extract_strided_slice %570 {offsets = [0, 48], sizes = [1, 16], strides = [1, 1]} : vector<1x64xf32> to vector<1x16xf32>
    %586 = arith.negf %585 : vector<1x16xf32>
    %587 = math.exp %586 : vector<1x16xf32>
    %cst_184 = arith.constant 1.000000e+00 : f32
    %588 = vector.broadcast %cst_184 : f32 to vector<1x16xf32>
    %589 = arith.addf %588, %587 : vector<1x16xf32>
    %590 = arith.divf %588, %589 : vector<1x16xf32>
    %591 = arith.mulf %582, %565 : vector<1x16xf32>
    %592 = arith.mulf %576, %584 : vector<1x16xf32>
    %593 = arith.addf %591, %592 : vector<1x16xf32>
    %594 = math.tanh %593 : vector<1x16xf32>
    %595 = arith.mulf %590, %594 : vector<1x16xf32>
    %596 = vector.extract_strided_slice %228 {offsets = [13, 0], sizes = [1, 64], strides = [1, 1]} : vector<20x64xf32> to vector<1x64xf32>
    %cst_185 = arith.constant dense<0.000000e+00> : vector<1x64xf32>
    %597 = tpu.matmul %595, %229, %cst_185 {dimension_numbers = #tpu.dot_dimension_numbers<[1], [0], [0], [1], [0, 0, 1, 1], [], []>} : vector<1x16xf32>, vector<16x64xf32>, vector<1x64xf32> -> vector<1x64xf32>
    %598 = arith.addf %596, %597 : vector<1x64xf32>
    %599 = vector.extract_strided_slice %598 {offsets = [0, 0], sizes = [1, 16], strides = [1, 1]} : vector<1x64xf32> to vector<1x16xf32>
    %600 = arith.negf %599 : vector<1x16xf32>
    %601 = math.exp %600 : vector<1x16xf32>
    %cst_186 = arith.constant 1.000000e+00 : f32
    %602 = vector.broadcast %cst_186 : f32 to vector<1x16xf32>
    %603 = arith.addf %602, %601 : vector<1x16xf32>
    %604 = arith.divf %602, %603 : vector<1x16xf32>
    %605 = vector.extract_strided_slice %598 {offsets = [0, 16], sizes = [1, 16], strides = [1, 1]} : vector<1x64xf32> to vector<1x16xf32>
    %606 = arith.negf %605 : vector<1x16xf32>
    %607 = math.exp %606 : vector<1x16xf32>
    %cst_187 = arith.constant 1.000000e+00 : f32
    %608 = vector.broadcast %cst_187 : f32 to vector<1x16xf32>
    %609 = arith.addf %608, %607 : vector<1x16xf32>
    %610 = arith.divf %608, %609 : vector<1x16xf32>
    %611 = vector.extract_strided_slice %598 {offsets = [0, 32], sizes = [1, 16], strides = [1, 1]} : vector<1x64xf32> to vector<1x16xf32>
    %612 = math.tanh %611 : vector<1x16xf32>
    %613 = vector.extract_strided_slice %598 {offsets = [0, 48], sizes = [1, 16], strides = [1, 1]} : vector<1x64xf32> to vector<1x16xf32>
    %614 = arith.negf %613 : vector<1x16xf32>
    %615 = math.exp %614 : vector<1x16xf32>
    %cst_188 = arith.constant 1.000000e+00 : f32
    %616 = vector.broadcast %cst_188 : f32 to vector<1x16xf32>
    %617 = arith.addf %616, %615 : vector<1x16xf32>
    %618 = arith.divf %616, %617 : vector<1x16xf32>
    %619 = arith.mulf %610, %593 : vector<1x16xf32>
    %620 = arith.mulf %604, %612 : vector<1x16xf32>
    %621 = arith.addf %619, %620 : vector<1x16xf32>
    %622 = math.tanh %621 : vector<1x16xf32>
    %623 = arith.mulf %618, %622 : vector<1x16xf32>
    %624 = vector.extract_strided_slice %228 {offsets = [14, 0], sizes = [1, 64], strides = [1, 1]} : vector<20x64xf32> to vector<1x64xf32>
    %cst_189 = arith.constant dense<0.000000e+00> : vector<1x64xf32>
    %625 = tpu.matmul %623, %229, %cst_189 {dimension_numbers = #tpu.dot_dimension_numbers<[1], [0], [0], [1], [0, 0, 1, 1], [], []>} : vector<1x16xf32>, vector<16x64xf32>, vector<1x64xf32> -> vector<1x64xf32>
    %626 = arith.addf %624, %625 : vector<1x64xf32>
    %627 = vector.extract_strided_slice %626 {offsets = [0, 0], sizes = [1, 16], strides = [1, 1]} : vector<1x64xf32> to vector<1x16xf32>
    %628 = arith.negf %627 : vector<1x16xf32>
    %629 = math.exp %628 : vector<1x16xf32>
    %cst_190 = arith.constant 1.000000e+00 : f32
    %630 = vector.broadcast %cst_190 : f32 to vector<1x16xf32>
    %631 = arith.addf %630, %629 : vector<1x16xf32>
    %632 = arith.divf %630, %631 : vector<1x16xf32>
    %633 = vector.extract_strided_slice %626 {offsets = [0, 16], sizes = [1, 16], strides = [1, 1]} : vector<1x64xf32> to vector<1x16xf32>
    %634 = arith.negf %633 : vector<1x16xf32>
    %635 = math.exp %634 : vector<1x16xf32>
    %cst_191 = arith.constant 1.000000e+00 : f32
    %636 = vector.broadcast %cst_191 : f32 to vector<1x16xf32>
    %637 = arith.addf %636, %635 : vector<1x16xf32>
    %638 = arith.divf %636, %637 : vector<1x16xf32>
    %639 = vector.extract_strided_slice %626 {offsets = [0, 32], sizes = [1, 16], strides = [1, 1]} : vector<1x64xf32> to vector<1x16xf32>
    %640 = math.tanh %639 : vector<1x16xf32>
    %641 = vector.extract_strided_slice %626 {offsets = [0, 48], sizes = [1, 16], strides = [1, 1]} : vector<1x64xf32> to vector<1x16xf32>
    %642 = arith.negf %641 : vector<1x16xf32>
    %643 = math.exp %642 : vector<1x16xf32>
    %cst_192 = arith.constant 1.000000e+00 : f32
    %644 = vector.broadcast %cst_192 : f32 to vector<1x16xf32>
    %645 = arith.addf %644, %643 : vector<1x16xf32>
    %646 = arith.divf %644, %645 : vector<1x16xf32>
    %647 = arith.mulf %638, %621 : vector<1x16xf32>
    %648 = arith.mulf %632, %640 : vector<1x16xf32>
    %649 = arith.addf %647, %648 : vector<1x16xf32>
    %650 = math.tanh %649 : vector<1x16xf32>
    %651 = arith.mulf %646, %650 : vector<1x16xf32>
    %652 = vector.extract_strided_slice %228 {offsets = [15, 0], sizes = [1, 64], strides = [1, 1]} : vector<20x64xf32> to vector<1x64xf32>
    %cst_193 = arith.constant dense<0.000000e+00> : vector<1x64xf32>
    %653 = tpu.matmul %651, %229, %cst_193 {dimension_numbers = #tpu.dot_dimension_numbers<[1], [0], [0], [1], [0, 0, 1, 1], [], []>} : vector<1x16xf32>, vector<16x64xf32>, vector<1x64xf32> -> vector<1x64xf32>
    %654 = arith.addf %652, %653 : vector<1x64xf32>
    %655 = vector.extract_strided_slice %654 {offsets = [0, 0], sizes = [1, 16], strides = [1, 1]} : vector<1x64xf32> to vector<1x16xf32>
    %656 = arith.negf %655 : vector<1x16xf32>
    %657 = math.exp %656 : vector<1x16xf32>
    %cst_194 = arith.constant 1.000000e+00 : f32
    %658 = vector.broadcast %cst_194 : f32 to vector<1x16xf32>
    %659 = arith.addf %658, %657 : vector<1x16xf32>
    %660 = arith.divf %658, %659 : vector<1x16xf32>
    %661 = vector.extract_strided_slice %654 {offsets = [0, 16], sizes = [1, 16], strides = [1, 1]} : vector<1x64xf32> to vector<1x16xf32>
    %662 = arith.negf %661 : vector<1x16xf32>
    %663 = math.exp %662 : vector<1x16xf32>
    %cst_195 = arith.constant 1.000000e+00 : f32
    %664 = vector.broadcast %cst_195 : f32 to vector<1x16xf32>
    %665 = arith.addf %664, %663 : vector<1x16xf32>
    %666 = arith.divf %664, %665 : vector<1x16xf32>
    %667 = vector.extract_strided_slice %654 {offsets = [0, 32], sizes = [1, 16], strides = [1, 1]} : vector<1x64xf32> to vector<1x16xf32>
    %668 = math.tanh %667 : vector<1x16xf32>
    %669 = vector.extract_strided_slice %654 {offsets = [0, 48], sizes = [1, 16], strides = [1, 1]} : vector<1x64xf32> to vector<1x16xf32>
    %670 = arith.negf %669 : vector<1x16xf32>
    %671 = math.exp %670 : vector<1x16xf32>
    %cst_196 = arith.constant 1.000000e+00 : f32
    %672 = vector.broadcast %cst_196 : f32 to vector<1x16xf32>
    %673 = arith.addf %672, %671 : vector<1x16xf32>
    %674 = arith.divf %672, %673 : vector<1x16xf32>
    %675 = arith.mulf %666, %649 : vector<1x16xf32>
    %676 = arith.mulf %660, %668 : vector<1x16xf32>
    %677 = arith.addf %675, %676 : vector<1x16xf32>
    %678 = math.tanh %677 : vector<1x16xf32>
    %679 = arith.mulf %674, %678 : vector<1x16xf32>
    %680 = vector.extract_strided_slice %228 {offsets = [16, 0], sizes = [1, 64], strides = [1, 1]} : vector<20x64xf32> to vector<1x64xf32>
    %cst_197 = arith.constant dense<0.000000e+00> : vector<1x64xf32>
    %681 = tpu.matmul %679, %229, %cst_197 {dimension_numbers = #tpu.dot_dimension_numbers<[1], [0], [0], [1], [0, 0, 1, 1], [], []>} : vector<1x16xf32>, vector<16x64xf32>, vector<1x64xf32> -> vector<1x64xf32>
    %682 = arith.addf %680, %681 : vector<1x64xf32>
    %683 = vector.extract_strided_slice %682 {offsets = [0, 0], sizes = [1, 16], strides = [1, 1]} : vector<1x64xf32> to vector<1x16xf32>
    %684 = arith.negf %683 : vector<1x16xf32>
    %685 = math.exp %684 : vector<1x16xf32>
    %cst_198 = arith.constant 1.000000e+00 : f32
    %686 = vector.broadcast %cst_198 : f32 to vector<1x16xf32>
    %687 = arith.addf %686, %685 : vector<1x16xf32>
    %688 = arith.divf %686, %687 : vector<1x16xf32>
    %689 = vector.extract_strided_slice %682 {offsets = [0, 16], sizes = [1, 16], strides = [1, 1]} : vector<1x64xf32> to vector<1x16xf32>
    %690 = arith.negf %689 : vector<1x16xf32>
    %691 = math.exp %690 : vector<1x16xf32>
    %cst_199 = arith.constant 1.000000e+00 : f32
    %692 = vector.broadcast %cst_199 : f32 to vector<1x16xf32>
    %693 = arith.addf %692, %691 : vector<1x16xf32>
    %694 = arith.divf %692, %693 : vector<1x16xf32>
    %695 = vector.extract_strided_slice %682 {offsets = [0, 32], sizes = [1, 16], strides = [1, 1]} : vector<1x64xf32> to vector<1x16xf32>
    %696 = math.tanh %695 : vector<1x16xf32>
    %697 = vector.extract_strided_slice %682 {offsets = [0, 48], sizes = [1, 16], strides = [1, 1]} : vector<1x64xf32> to vector<1x16xf32>
    %698 = arith.negf %697 : vector<1x16xf32>
    %699 = math.exp %698 : vector<1x16xf32>
    %cst_200 = arith.constant 1.000000e+00 : f32
    %700 = vector.broadcast %cst_200 : f32 to vector<1x16xf32>
    %701 = arith.addf %700, %699 : vector<1x16xf32>
    %702 = arith.divf %700, %701 : vector<1x16xf32>
    %703 = arith.mulf %694, %677 : vector<1x16xf32>
    %704 = arith.mulf %688, %696 : vector<1x16xf32>
    %705 = arith.addf %703, %704 : vector<1x16xf32>
    %706 = math.tanh %705 : vector<1x16xf32>
    %707 = arith.mulf %702, %706 : vector<1x16xf32>
    %708 = vector.extract_strided_slice %228 {offsets = [17, 0], sizes = [1, 64], strides = [1, 1]} : vector<20x64xf32> to vector<1x64xf32>
    %cst_201 = arith.constant dense<0.000000e+00> : vector<1x64xf32>
    %709 = tpu.matmul %707, %229, %cst_201 {dimension_numbers = #tpu.dot_dimension_numbers<[1], [0], [0], [1], [0, 0, 1, 1], [], []>} : vector<1x16xf32>, vector<16x64xf32>, vector<1x64xf32> -> vector<1x64xf32>
    %710 = arith.addf %708, %709 : vector<1x64xf32>
    %711 = vector.extract_strided_slice %710 {offsets = [0, 0], sizes = [1, 16], strides = [1, 1]} : vector<1x64xf32> to vector<1x16xf32>
    %712 = arith.negf %711 : vector<1x16xf32>
    %713 = math.exp %712 : vector<1x16xf32>
    %cst_202 = arith.constant 1.000000e+00 : f32
    %714 = vector.broadcast %cst_202 : f32 to vector<1x16xf32>
    %715 = arith.addf %714, %713 : vector<1x16xf32>
    %716 = arith.divf %714, %715 : vector<1x16xf32>
    %717 = vector.extract_strided_slice %710 {offsets = [0, 16], sizes = [1, 16], strides = [1, 1]} : vector<1x64xf32> to vector<1x16xf32>
    %718 = arith.negf %717 : vector<1x16xf32>
    %719 = math.exp %718 : vector<1x16xf32>
    %cst_203 = arith.constant 1.000000e+00 : f32
    %720 = vector.broadcast %cst_203 : f32 to vector<1x16xf32>
    %721 = arith.addf %720, %719 : vector<1x16xf32>
    %722 = arith.divf %720, %721 : vector<1x16xf32>
    %723 = vector.extract_strided_slice %710 {offsets = [0, 32], sizes = [1, 16], strides = [1, 1]} : vector<1x64xf32> to vector<1x16xf32>
    %724 = math.tanh %723 : vector<1x16xf32>
    %725 = vector.extract_strided_slice %710 {offsets = [0, 48], sizes = [1, 16], strides = [1, 1]} : vector<1x64xf32> to vector<1x16xf32>
    %726 = arith.negf %725 : vector<1x16xf32>
    %727 = math.exp %726 : vector<1x16xf32>
    %cst_204 = arith.constant 1.000000e+00 : f32
    %728 = vector.broadcast %cst_204 : f32 to vector<1x16xf32>
    %729 = arith.addf %728, %727 : vector<1x16xf32>
    %730 = arith.divf %728, %729 : vector<1x16xf32>
    %731 = arith.mulf %722, %705 : vector<1x16xf32>
    %732 = arith.mulf %716, %724 : vector<1x16xf32>
    %733 = arith.addf %731, %732 : vector<1x16xf32>
    %734 = math.tanh %733 : vector<1x16xf32>
    %735 = arith.mulf %730, %734 : vector<1x16xf32>
    %736 = vector.extract_strided_slice %228 {offsets = [18, 0], sizes = [1, 64], strides = [1, 1]} : vector<20x64xf32> to vector<1x64xf32>
    %cst_205 = arith.constant dense<0.000000e+00> : vector<1x64xf32>
    %737 = tpu.matmul %735, %229, %cst_205 {dimension_numbers = #tpu.dot_dimension_numbers<[1], [0], [0], [1], [0, 0, 1, 1], [], []>} : vector<1x16xf32>, vector<16x64xf32>, vector<1x64xf32> -> vector<1x64xf32>
    %738 = arith.addf %736, %737 : vector<1x64xf32>
    %739 = vector.extract_strided_slice %738 {offsets = [0, 0], sizes = [1, 16], strides = [1, 1]} : vector<1x64xf32> to vector<1x16xf32>
    %740 = arith.negf %739 : vector<1x16xf32>
    %741 = math.exp %740 : vector<1x16xf32>
    %cst_206 = arith.constant 1.000000e+00 : f32
    %742 = vector.broadcast %cst_206 : f32 to vector<1x16xf32>
    %743 = arith.addf %742, %741 : vector<1x16xf32>
    %744 = arith.divf %742, %743 : vector<1x16xf32>
    %745 = vector.extract_strided_slice %738 {offsets = [0, 16], sizes = [1, 16], strides = [1, 1]} : vector<1x64xf32> to vector<1x16xf32>
    %746 = arith.negf %745 : vector<1x16xf32>
    %747 = math.exp %746 : vector<1x16xf32>
    %cst_207 = arith.constant 1.000000e+00 : f32
    %748 = vector.broadcast %cst_207 : f32 to vector<1x16xf32>
    %749 = arith.addf %748, %747 : vector<1x16xf32>
    %750 = arith.divf %748, %749 : vector<1x16xf32>
    %751 = vector.extract_strided_slice %738 {offsets = [0, 32], sizes = [1, 16], strides = [1, 1]} : vector<1x64xf32> to vector<1x16xf32>
    %752 = math.tanh %751 : vector<1x16xf32>
    %753 = vector.extract_strided_slice %738 {offsets = [0, 48], sizes = [1, 16], strides = [1, 1]} : vector<1x64xf32> to vector<1x16xf32>
    %754 = arith.negf %753 : vector<1x16xf32>
    %755 = math.exp %754 : vector<1x16xf32>
    %cst_208 = arith.constant 1.000000e+00 : f32
    %756 = vector.broadcast %cst_208 : f32 to vector<1x16xf32>
    %757 = arith.addf %756, %755 : vector<1x16xf32>
    %758 = arith.divf %756, %757 : vector<1x16xf32>
    %759 = arith.mulf %750, %733 : vector<1x16xf32>
    %760 = arith.mulf %744, %752 : vector<1x16xf32>
    %761 = arith.addf %759, %760 : vector<1x16xf32>
    %762 = math.tanh %761 : vector<1x16xf32>
    %763 = arith.mulf %758, %762 : vector<1x16xf32>
    %764 = vector.extract_strided_slice %228 {offsets = [19, 0], sizes = [1, 64], strides = [1, 1]} : vector<20x64xf32> to vector<1x64xf32>
    %cst_209 = arith.constant dense<0.000000e+00> : vector<1x64xf32>
    %765 = tpu.matmul %763, %229, %cst_209 {dimension_numbers = #tpu.dot_dimension_numbers<[1], [0], [0], [1], [0, 0, 1, 1], [], []>} : vector<1x16xf32>, vector<16x64xf32>, vector<1x64xf32> -> vector<1x64xf32>
    %766 = arith.addf %764, %765 : vector<1x64xf32>
    %767 = vector.extract_strided_slice %766 {offsets = [0, 0], sizes = [1, 16], strides = [1, 1]} : vector<1x64xf32> to vector<1x16xf32>
    %768 = arith.negf %767 : vector<1x16xf32>
    %769 = math.exp %768 : vector<1x16xf32>
    %cst_210 = arith.constant 1.000000e+00 : f32
    %770 = vector.broadcast %cst_210 : f32 to vector<1x16xf32>
    %771 = arith.addf %770, %769 : vector<1x16xf32>
    %772 = arith.divf %770, %771 : vector<1x16xf32>
    %773 = vector.extract_strided_slice %766 {offsets = [0, 16], sizes = [1, 16], strides = [1, 1]} : vector<1x64xf32> to vector<1x16xf32>
    %774 = arith.negf %773 : vector<1x16xf32>
    %775 = math.exp %774 : vector<1x16xf32>
    %cst_211 = arith.constant 1.000000e+00 : f32
    %776 = vector.broadcast %cst_211 : f32 to vector<1x16xf32>
    %777 = arith.addf %776, %775 : vector<1x16xf32>
    %778 = arith.divf %776, %777 : vector<1x16xf32>
    %779 = vector.extract_strided_slice %766 {offsets = [0, 32], sizes = [1, 16], strides = [1, 1]} : vector<1x64xf32> to vector<1x16xf32>
    %780 = math.tanh %779 : vector<1x16xf32>
    %781 = vector.extract_strided_slice %766 {offsets = [0, 48], sizes = [1, 16], strides = [1, 1]} : vector<1x64xf32> to vector<1x16xf32>
    %782 = arith.negf %781 : vector<1x16xf32>
    %783 = math.exp %782 : vector<1x16xf32>
    %cst_212 = arith.constant 1.000000e+00 : f32
    %784 = vector.broadcast %cst_212 : f32 to vector<1x16xf32>
    %785 = arith.addf %784, %783 : vector<1x16xf32>
    %786 = arith.divf %784, %785 : vector<1x16xf32>
    %787 = arith.mulf %778, %761 : vector<1x16xf32>
    %788 = arith.mulf %772, %780 : vector<1x16xf32>
    %789 = arith.addf %787, %788 : vector<1x16xf32>
    %790 = math.tanh %789 : vector<1x16xf32>
    %791 = arith.mulf %786, %790 : vector<1x16xf32>
    %792 = tpu.iota {dimensions = array<i32: 0>} : vector<20x16xi32>
    %cst_213 = arith.constant 0.000000e+00 : f32
    %793 = vector.broadcast %cst_213 : f32 to vector<20x16xf32>
    %c0_i32_214 = arith.constant 0 : i32
    %794 = vector.broadcast %c0_i32_214 : i32 to vector<20x16xi32>
    %795 = arith.cmpi eq, %792, %794 : vector<20x16xi32>
    %cst_215 = arith.constant 0.000000e+00 : f32
    %796 = vector.shape_cast %259 : vector<1x16xf32> to vector<1x16xf32>
    %797 = vector.broadcast %796 : vector<1x16xf32> to vector<20x16xf32>
    %798 = vector.broadcast %cst_215 : f32 to vector<20x16xf32>
    %799 = arith.select %795, %797, %798 : vector<20x16xi1>, vector<20x16xf32>
    %800 = arith.addf %793, %799 : vector<20x16xf32>
    %c1_i32_216 = arith.constant 1 : i32
    %801 = vector.broadcast %c1_i32_216 : i32 to vector<20x16xi32>
    %802 = arith.cmpi eq, %792, %801 : vector<20x16xi32>
    %cst_217 = arith.constant 0.000000e+00 : f32
    %803 = vector.shape_cast %287 : vector<1x16xf32> to vector<1x16xf32>
    %804 = vector.broadcast %803 : vector<1x16xf32> to vector<20x16xf32>
    %805 = vector.broadcast %cst_217 : f32 to vector<20x16xf32>
    %806 = arith.select %802, %804, %805 : vector<20x16xi1>, vector<20x16xf32>
    %807 = arith.addf %800, %806 : vector<20x16xf32>
    %c2_i32_218 = arith.constant 2 : i32
    %808 = vector.broadcast %c2_i32_218 : i32 to vector<20x16xi32>
    %809 = arith.cmpi eq, %792, %808 : vector<20x16xi32>
    %cst_219 = arith.constant 0.000000e+00 : f32
    %810 = vector.shape_cast %315 : vector<1x16xf32> to vector<1x16xf32>
    %811 = vector.broadcast %810 : vector<1x16xf32> to vector<20x16xf32>
    %812 = vector.broadcast %cst_219 : f32 to vector<20x16xf32>
    %813 = arith.select %809, %811, %812 : vector<20x16xi1>, vector<20x16xf32>
    %814 = arith.addf %807, %813 : vector<20x16xf32>
    %c3_i32_220 = arith.constant 3 : i32
    %815 = vector.broadcast %c3_i32_220 : i32 to vector<20x16xi32>
    %816 = arith.cmpi eq, %792, %815 : vector<20x16xi32>
    %cst_221 = arith.constant 0.000000e+00 : f32
    %817 = vector.shape_cast %343 : vector<1x16xf32> to vector<1x16xf32>
    %818 = vector.broadcast %817 : vector<1x16xf32> to vector<20x16xf32>
    %819 = vector.broadcast %cst_221 : f32 to vector<20x16xf32>
    %820 = arith.select %816, %818, %819 : vector<20x16xi1>, vector<20x16xf32>
    %821 = arith.addf %814, %820 : vector<20x16xf32>
    %c4_i32 = arith.constant 4 : i32
    %822 = vector.broadcast %c4_i32 : i32 to vector<20x16xi32>
    %823 = arith.cmpi eq, %792, %822 : vector<20x16xi32>
    %cst_222 = arith.constant 0.000000e+00 : f32
    %824 = vector.shape_cast %371 : vector<1x16xf32> to vector<1x16xf32>
    %825 = vector.broadcast %824 : vector<1x16xf32> to vector<20x16xf32>
    %826 = vector.broadcast %cst_222 : f32 to vector<20x16xf32>
    %827 = arith.select %823, %825, %826 : vector<20x16xi1>, vector<20x16xf32>
    %828 = arith.addf %821, %827 : vector<20x16xf32>
    %c5_i32 = arith.constant 5 : i32
    %829 = vector.broadcast %c5_i32 : i32 to vector<20x16xi32>
    %830 = arith.cmpi eq, %792, %829 : vector<20x16xi32>
    %cst_223 = arith.constant 0.000000e+00 : f32
    %831 = vector.shape_cast %399 : vector<1x16xf32> to vector<1x16xf32>
    %832 = vector.broadcast %831 : vector<1x16xf32> to vector<20x16xf32>
    %833 = vector.broadcast %cst_223 : f32 to vector<20x16xf32>
    %834 = arith.select %830, %832, %833 : vector<20x16xi1>, vector<20x16xf32>
    %835 = arith.addf %828, %834 : vector<20x16xf32>
    %c6_i32 = arith.constant 6 : i32
    %836 = vector.broadcast %c6_i32 : i32 to vector<20x16xi32>
    %837 = arith.cmpi eq, %792, %836 : vector<20x16xi32>
    %cst_224 = arith.constant 0.000000e+00 : f32
    %838 = vector.shape_cast %427 : vector<1x16xf32> to vector<1x16xf32>
    %839 = vector.broadcast %838 : vector<1x16xf32> to vector<20x16xf32>
    %840 = vector.broadcast %cst_224 : f32 to vector<20x16xf32>
    %841 = arith.select %837, %839, %840 : vector<20x16xi1>, vector<20x16xf32>
    %842 = arith.addf %835, %841 : vector<20x16xf32>
    %c7_i32 = arith.constant 7 : i32
    %843 = vector.broadcast %c7_i32 : i32 to vector<20x16xi32>
    %844 = arith.cmpi eq, %792, %843 : vector<20x16xi32>
    %cst_225 = arith.constant 0.000000e+00 : f32
    %845 = vector.shape_cast %455 : vector<1x16xf32> to vector<1x16xf32>
    %846 = vector.broadcast %845 : vector<1x16xf32> to vector<20x16xf32>
    %847 = vector.broadcast %cst_225 : f32 to vector<20x16xf32>
    %848 = arith.select %844, %846, %847 : vector<20x16xi1>, vector<20x16xf32>
    %849 = arith.addf %842, %848 : vector<20x16xf32>
    %c8_i32 = arith.constant 8 : i32
    %850 = vector.broadcast %c8_i32 : i32 to vector<20x16xi32>
    %851 = arith.cmpi eq, %792, %850 : vector<20x16xi32>
    %cst_226 = arith.constant 0.000000e+00 : f32
    %852 = vector.shape_cast %483 : vector<1x16xf32> to vector<1x16xf32>
    %853 = vector.broadcast %852 : vector<1x16xf32> to vector<20x16xf32>
    %854 = vector.broadcast %cst_226 : f32 to vector<20x16xf32>
    %855 = arith.select %851, %853, %854 : vector<20x16xi1>, vector<20x16xf32>
    %856 = arith.addf %849, %855 : vector<20x16xf32>
    %c9_i32 = arith.constant 9 : i32
    %857 = vector.broadcast %c9_i32 : i32 to vector<20x16xi32>
    %858 = arith.cmpi eq, %792, %857 : vector<20x16xi32>
    %cst_227 = arith.constant 0.000000e+00 : f32
    %859 = vector.shape_cast %511 : vector<1x16xf32> to vector<1x16xf32>
    %860 = vector.broadcast %859 : vector<1x16xf32> to vector<20x16xf32>
    %861 = vector.broadcast %cst_227 : f32 to vector<20x16xf32>
    %862 = arith.select %858, %860, %861 : vector<20x16xi1>, vector<20x16xf32>
    %863 = arith.addf %856, %862 : vector<20x16xf32>
    %c10_i32 = arith.constant 10 : i32
    %864 = vector.broadcast %c10_i32 : i32 to vector<20x16xi32>
    %865 = arith.cmpi eq, %792, %864 : vector<20x16xi32>
    %cst_228 = arith.constant 0.000000e+00 : f32
    %866 = vector.shape_cast %539 : vector<1x16xf32> to vector<1x16xf32>
    %867 = vector.broadcast %866 : vector<1x16xf32> to vector<20x16xf32>
    %868 = vector.broadcast %cst_228 : f32 to vector<20x16xf32>
    %869 = arith.select %865, %867, %868 : vector<20x16xi1>, vector<20x16xf32>
    %870 = arith.addf %863, %869 : vector<20x16xf32>
    %c11_i32 = arith.constant 11 : i32
    %871 = vector.broadcast %c11_i32 : i32 to vector<20x16xi32>
    %872 = arith.cmpi eq, %792, %871 : vector<20x16xi32>
    %cst_229 = arith.constant 0.000000e+00 : f32
    %873 = vector.shape_cast %567 : vector<1x16xf32> to vector<1x16xf32>
    %874 = vector.broadcast %873 : vector<1x16xf32> to vector<20x16xf32>
    %875 = vector.broadcast %cst_229 : f32 to vector<20x16xf32>
    %876 = arith.select %872, %874, %875 : vector<20x16xi1>, vector<20x16xf32>
    %877 = arith.addf %870, %876 : vector<20x16xf32>
    %c12_i32 = arith.constant 12 : i32
    %878 = vector.broadcast %c12_i32 : i32 to vector<20x16xi32>
    %879 = arith.cmpi eq, %792, %878 : vector<20x16xi32>
    %cst_230 = arith.constant 0.000000e+00 : f32
    %880 = vector.shape_cast %595 : vector<1x16xf32> to vector<1x16xf32>
    %881 = vector.broadcast %880 : vector<1x16xf32> to vector<20x16xf32>
    %882 = vector.broadcast %cst_230 : f32 to vector<20x16xf32>
    %883 = arith.select %879, %881, %882 : vector<20x16xi1>, vector<20x16xf32>
    %884 = arith.addf %877, %883 : vector<20x16xf32>
    %c13_i32 = arith.constant 13 : i32
    %885 = vector.broadcast %c13_i32 : i32 to vector<20x16xi32>
    %886 = arith.cmpi eq, %792, %885 : vector<20x16xi32>
    %cst_231 = arith.constant 0.000000e+00 : f32
    %887 = vector.shape_cast %623 : vector<1x16xf32> to vector<1x16xf32>
    %888 = vector.broadcast %887 : vector<1x16xf32> to vector<20x16xf32>
    %889 = vector.broadcast %cst_231 : f32 to vector<20x16xf32>
    %890 = arith.select %886, %888, %889 : vector<20x16xi1>, vector<20x16xf32>
    %891 = arith.addf %884, %890 : vector<20x16xf32>
    %c14_i32 = arith.constant 14 : i32
    %892 = vector.broadcast %c14_i32 : i32 to vector<20x16xi32>
    %893 = arith.cmpi eq, %792, %892 : vector<20x16xi32>
    %cst_232 = arith.constant 0.000000e+00 : f32
    %894 = vector.shape_cast %651 : vector<1x16xf32> to vector<1x16xf32>
    %895 = vector.broadcast %894 : vector<1x16xf32> to vector<20x16xf32>
    %896 = vector.broadcast %cst_232 : f32 to vector<20x16xf32>
    %897 = arith.select %893, %895, %896 : vector<20x16xi1>, vector<20x16xf32>
    %898 = arith.addf %891, %897 : vector<20x16xf32>
    %c15_i32 = arith.constant 15 : i32
    %899 = vector.broadcast %c15_i32 : i32 to vector<20x16xi32>
    %900 = arith.cmpi eq, %792, %899 : vector<20x16xi32>
    %cst_233 = arith.constant 0.000000e+00 : f32
    %901 = vector.shape_cast %679 : vector<1x16xf32> to vector<1x16xf32>
    %902 = vector.broadcast %901 : vector<1x16xf32> to vector<20x16xf32>
    %903 = vector.broadcast %cst_233 : f32 to vector<20x16xf32>
    %904 = arith.select %900, %902, %903 : vector<20x16xi1>, vector<20x16xf32>
    %905 = arith.addf %898, %904 : vector<20x16xf32>
    %c16_i32_234 = arith.constant 16 : i32
    %906 = vector.broadcast %c16_i32_234 : i32 to vector<20x16xi32>
    %907 = arith.cmpi eq, %792, %906 : vector<20x16xi32>
    %cst_235 = arith.constant 0.000000e+00 : f32
    %908 = vector.shape_cast %707 : vector<1x16xf32> to vector<1x16xf32>
    %909 = vector.broadcast %908 : vector<1x16xf32> to vector<20x16xf32>
    %910 = vector.broadcast %cst_235 : f32 to vector<20x16xf32>
    %911 = arith.select %907, %909, %910 : vector<20x16xi1>, vector<20x16xf32>
    %912 = arith.addf %905, %911 : vector<20x16xf32>
    %c17_i32 = arith.constant 17 : i32
    %913 = vector.broadcast %c17_i32 : i32 to vector<20x16xi32>
    %914 = arith.cmpi eq, %792, %913 : vector<20x16xi32>
    %cst_236 = arith.constant 0.000000e+00 : f32
    %915 = vector.shape_cast %735 : vector<1x16xf32> to vector<1x16xf32>
    %916 = vector.broadcast %915 : vector<1x16xf32> to vector<20x16xf32>
    %917 = vector.broadcast %cst_236 : f32 to vector<20x16xf32>
    %918 = arith.select %914, %916, %917 : vector<20x16xi1>, vector<20x16xf32>
    %919 = arith.addf %912, %918 : vector<20x16xf32>
    %c18_i32 = arith.constant 18 : i32
    %920 = vector.broadcast %c18_i32 : i32 to vector<20x16xi32>
    %921 = arith.cmpi eq, %792, %920 : vector<20x16xi32>
    %cst_237 = arith.constant 0.000000e+00 : f32
    %922 = vector.shape_cast %763 : vector<1x16xf32> to vector<1x16xf32>
    %923 = vector.broadcast %922 : vector<1x16xf32> to vector<20x16xf32>
    %924 = vector.broadcast %cst_237 : f32 to vector<20x16xf32>
    %925 = arith.select %921, %923, %924 : vector<20x16xi1>, vector<20x16xf32>
    %926 = arith.addf %919, %925 : vector<20x16xf32>
    %c19_i32 = arith.constant 19 : i32
    %927 = vector.broadcast %c19_i32 : i32 to vector<20x16xi32>
    %928 = arith.cmpi eq, %792, %927 : vector<20x16xi32>
    %cst_238 = arith.constant 0.000000e+00 : f32
    %929 = vector.shape_cast %791 : vector<1x16xf32> to vector<1x16xf32>
    %930 = vector.broadcast %929 : vector<1x16xf32> to vector<20x16xf32>
    %931 = vector.broadcast %cst_238 : f32 to vector<20x16xf32>
    %932 = arith.select %928, %930, %931 : vector<20x16xi1>, vector<20x16xf32>
    %933 = arith.addf %926, %932 : vector<20x16xf32>
    %934 = tpu.iota {dimensions = array<i32: 0>} : vector<256x64xi32>
    %935 = tpu.iota {dimensions = array<i32: 1>} : vector<256x64xi32>
    %c64_i32 = arith.constant 64 : i32
    %936 = vector.broadcast %c64_i32 : i32 to vector<256x64xi32>
    %937 = arith.muli %934, %936 : vector<256x64xi32>
    %c256_i32_239 = arith.constant 256 : i32
    %938 = vector.broadcast %c256_i32_239 : i32 to vector<256x64xi32>
    %939 = arith.muli %935, %938 : vector<256x64xi32>
    %940 = arith.cmpi sle, %937, %939 : vector<256x64xi32>
    %c256_i32_240 = arith.constant 256 : i32
    %941 = vector.broadcast %c256_i32_240 : i32 to vector<256x64xi32>
    %942 = arith.muli %935, %941 : vector<256x64xi32>
    %c1_i32_241 = arith.constant 1 : i32
    %943 = vector.broadcast %c1_i32_241 : i32 to vector<256x64xi32>
    %944 = arith.addi %934, %943 : vector<256x64xi32>
    %c64_i32_242 = arith.constant 64 : i32
    %945 = vector.broadcast %c64_i32_242 : i32 to vector<256x64xi32>
    %946 = arith.muli %944, %945 : vector<256x64xi32>
    %947 = arith.cmpi slt, %942, %946 : vector<256x64xi32>
    %948 = arith.andi %940, %947 : vector<256x64xi1>
    %cst_243 = arith.constant 1.000000e+00 : f32
    %cst_244 = arith.constant 0.000000e+00 : f32
    %949 = vector.broadcast %cst_243 : f32 to vector<256x64xf32>
    %950 = vector.broadcast %cst_244 : f32 to vector<256x64xf32>
    %951 = arith.select %948, %949, %950 : vector<256x64xi1>, vector<256x64xf32>
    %cst_245 = arith.constant dense<0.000000e+00> : vector<8x64xf32>
    %952 = tpu.matmul %40, %951, %cst_245 {dimension_numbers = #tpu.dot_dimension_numbers<[1], [0], [0], [1], [0, 0, 1, 1], [], []>} : vector<8x256xf32>, vector<256x64xf32>, vector<8x64xf32> -> vector<8x64xf32>
    %953 = tpu.iota {dimensions = array<i32: 0>} : vector<64x128xi32>
    %954 = tpu.iota {dimensions = array<i32: 1>} : vector<64x128xi32>
    %c128_i32_246 = arith.constant 128 : i32
    %955 = vector.broadcast %c128_i32_246 : i32 to vector<64x128xi32>
    %956 = arith.muli %953, %955 : vector<64x128xi32>
    %c64_i32_247 = arith.constant 64 : i32
    %957 = vector.broadcast %c64_i32_247 : i32 to vector<64x128xi32>
    %958 = arith.muli %954, %957 : vector<64x128xi32>
    %959 = arith.cmpi sle, %956, %958 : vector<64x128xi32>
    %c64_i32_248 = arith.constant 64 : i32
    %960 = vector.broadcast %c64_i32_248 : i32 to vector<64x128xi32>
    %961 = arith.muli %954, %960 : vector<64x128xi32>
    %c1_i32_249 = arith.constant 1 : i32
    %962 = vector.broadcast %c1_i32_249 : i32 to vector<64x128xi32>
    %963 = arith.addi %953, %962 : vector<64x128xi32>
    %c128_i32_250 = arith.constant 128 : i32
    %964 = vector.broadcast %c128_i32_250 : i32 to vector<64x128xi32>
    %965 = arith.muli %963, %964 : vector<64x128xi32>
    %966 = arith.cmpi slt, %961, %965 : vector<64x128xi32>
    %967 = arith.andi %959, %966 : vector<64x128xi1>
    %cst_251 = arith.constant 1.000000e+00 : f32
    %cst_252 = arith.constant 0.000000e+00 : f32
    %968 = vector.broadcast %cst_251 : f32 to vector<64x128xf32>
    %969 = vector.broadcast %cst_252 : f32 to vector<64x128xf32>
    %970 = arith.select %967, %968, %969 : vector<64x128xi1>, vector<64x128xf32>
    %cst_253 = arith.constant dense<0.000000e+00> : vector<8x128xf32>
    %971 = tpu.matmul %952, %970, %cst_253 {dimension_numbers = #tpu.dot_dimension_numbers<[1], [0], [0], [1], [0, 0, 1, 1], [], []>} : vector<8x64xf32>, vector<64x128xf32>, vector<8x128xf32> -> vector<8x128xf32>
    %972 = tpu.iota {dimensions = array<i32: 0>} : vector<128x64xi32>
    %973 = tpu.iota {dimensions = array<i32: 1>} : vector<128x64xi32>
    %c64_i32_254 = arith.constant 64 : i32
    %974 = vector.broadcast %c64_i32_254 : i32 to vector<128x64xi32>
    %975 = arith.muli %972, %974 : vector<128x64xi32>
    %c128_i32_255 = arith.constant 128 : i32
    %976 = vector.broadcast %c128_i32_255 : i32 to vector<128x64xi32>
    %977 = arith.muli %973, %976 : vector<128x64xi32>
    %978 = arith.cmpi sle, %975, %977 : vector<128x64xi32>
    %c128_i32_256 = arith.constant 128 : i32
    %979 = vector.broadcast %c128_i32_256 : i32 to vector<128x64xi32>
    %980 = arith.muli %973, %979 : vector<128x64xi32>
    %c1_i32_257 = arith.constant 1 : i32
    %981 = vector.broadcast %c1_i32_257 : i32 to vector<128x64xi32>
    %982 = arith.addi %972, %981 : vector<128x64xi32>
    %c64_i32_258 = arith.constant 64 : i32
    %983 = vector.broadcast %c64_i32_258 : i32 to vector<128x64xi32>
    %984 = arith.muli %982, %983 : vector<128x64xi32>
    %985 = arith.cmpi slt, %980, %984 : vector<128x64xi32>
    %986 = arith.andi %978, %985 : vector<128x64xi1>
    %cst_259 = arith.constant 1.000000e+00 : f32
    %cst_260 = arith.constant 0.000000e+00 : f32
    %987 = vector.broadcast %cst_259 : f32 to vector<128x64xf32>
    %988 = vector.broadcast %cst_260 : f32 to vector<128x64xf32>
    %989 = arith.select %986, %987, %988 : vector<128x64xi1>, vector<128x64xf32>
    %cst_261 = arith.constant dense<0.000000e+00> : vector<12x64xf32>
    %990 = tpu.matmul %85, %989, %cst_261 {dimension_numbers = #tpu.dot_dimension_numbers<[1], [0], [0], [1], [0, 0, 1, 1], [], []>} : vector<12x128xf32>, vector<128x64xf32>, vector<12x64xf32> -> vector<12x64xf32>
    %cst_262 = arith.constant dense<0.000000e+00> : vector<12x128xf32>
    %991 = tpu.matmul %990, %970, %cst_262 {dimension_numbers = #tpu.dot_dimension_numbers<[1], [0], [0], [1], [0, 0, 1, 1], [], []>} : vector<12x64xf32>, vector<64x128xf32>, vector<12x128xf32> -> vector<12x128xf32>
    %cst_263 = arith.constant dense<0.000000e+00> : vector<16x128xf32>
    %992 = tpu.matmul %164, %970, %cst_263 {dimension_numbers = #tpu.dot_dimension_numbers<[1], [0], [0], [1], [0, 0, 1, 1], [], []>} : vector<16x64xf32>, vector<64x128xf32>, vector<16x128xf32> -> vector<16x128xf32>
    %993 = tpu.iota {dimensions = array<i32: 0>} : vector<16x64xi32>
    %994 = tpu.iota {dimensions = array<i32: 1>} : vector<16x64xi32>
    %c64_i32_264 = arith.constant 64 : i32
    %995 = vector.broadcast %c64_i32_264 : i32 to vector<16x64xi32>
    %996 = arith.muli %993, %995 : vector<16x64xi32>
    %c16_i32_265 = arith.constant 16 : i32
    %997 = vector.broadcast %c16_i32_265 : i32 to vector<16x64xi32>
    %998 = arith.muli %994, %997 : vector<16x64xi32>
    %999 = arith.cmpi sle, %996, %998 : vector<16x64xi32>
    %c16_i32_266 = arith.constant 16 : i32
    %1000 = vector.broadcast %c16_i32_266 : i32 to vector<16x64xi32>
    %1001 = arith.muli %994, %1000 : vector<16x64xi32>
    %c1_i32_267 = arith.constant 1 : i32
    %1002 = vector.broadcast %c1_i32_267 : i32 to vector<16x64xi32>
    %1003 = arith.addi %993, %1002 : vector<16x64xi32>
    %c64_i32_268 = arith.constant 64 : i32
    %1004 = vector.broadcast %c64_i32_268 : i32 to vector<16x64xi32>
    %1005 = arith.muli %1003, %1004 : vector<16x64xi32>
    %1006 = arith.cmpi slt, %1001, %1005 : vector<16x64xi32>
    %1007 = arith.andi %999, %1006 : vector<16x64xi1>
    %cst_269 = arith.constant 1.000000e+00 : f32
    %cst_270 = arith.constant 0.000000e+00 : f32
    %1008 = vector.broadcast %cst_269 : f32 to vector<16x64xf32>
    %1009 = vector.broadcast %cst_270 : f32 to vector<16x64xf32>
    %1010 = arith.select %1007, %1008, %1009 : vector<16x64xi1>, vector<16x64xf32>
    %cst_271 = arith.constant dense<0.000000e+00> : vector<20x64xf32>
    %1011 = tpu.matmul %933, %1010, %cst_271 {dimension_numbers = #tpu.dot_dimension_numbers<[1], [0], [0], [1], [0, 0, 1, 1], [], []>} : vector<20x16xf32>, vector<16x64xf32>, vector<20x64xf32> -> vector<20x64xf32>
    %cst_272 = arith.constant dense<0.000000e+00> : vector<20x128xf32>
    %1012 = tpu.matmul %1011, %970, %cst_272 {dimension_numbers = #tpu.dot_dimension_numbers<[1], [0], [0], [1], [0, 0, 1, 1], [], []>} : vector<20x64xf32>, vector<64x128xf32>, vector<20x128xf32> -> vector<20x128xf32>
    %c0_273 = arith.constant 0 : index
    %c0_274 = arith.constant 0 : index
    %c0_275 = arith.constant 0 : index
    %1013 = vector.load %arg12[%c0_273, %c0_274, %c0_275] : memref<3x12x8xf32, #tpu.memory_space<vmem>>, vector<1x12x8xf32>
    %1014 = vector.shape_cast %1013 : vector<1x12x8xf32> to vector<12x8xf32>
    %cst_276 = arith.constant dense<0.000000e+00> : vector<12x128xf32>
    %1015 = tpu.matmul %1014, %971, %cst_276 {dimension_numbers = #tpu.dot_dimension_numbers<[1], [0], [0], [1], [0, 0, 1, 1], [], []>} : vector<12x8xf32>, vector<8x128xf32>, vector<12x128xf32> -> vector<12x128xf32>
    %c1_277 = arith.constant 1 : index
    %c0_278 = arith.constant 0 : index
    %c0_279 = arith.constant 0 : index
    %1016 = vector.load %arg12[%c1_277, %c0_278, %c0_279] : memref<3x12x8xf32, #tpu.memory_space<vmem>>, vector<1x12x8xf32>
    %1017 = vector.shape_cast %1016 : vector<1x12x8xf32> to vector<12x8xf32>
    %cst_280 = arith.constant dense<0.000000e+00> : vector<12x128xf32>
    %1018 = tpu.matmul %1017, %971, %cst_280 {dimension_numbers = #tpu.dot_dimension_numbers<[1], [0], [0], [1], [0, 0, 1, 1], [], []>} : vector<12x8xf32>, vector<8x128xf32>, vector<12x128xf32> -> vector<12x128xf32>
    %c2_281 = arith.constant 2 : index
    %c0_282 = arith.constant 0 : index
    %c0_283 = arith.constant 0 : index
    %1019 = vector.load %arg12[%c2_281, %c0_282, %c0_283] : memref<3x12x8xf32, #tpu.memory_space<vmem>>, vector<1x12x8xf32>
    %1020 = vector.shape_cast %1019 : vector<1x12x8xf32> to vector<12x8xf32>
    %cst_284 = arith.constant dense<0.000000e+00> : vector<12x128xf32>
    %1021 = tpu.matmul %1020, %971, %cst_284 {dimension_numbers = #tpu.dot_dimension_numbers<[1], [0], [0], [1], [0, 0, 1, 1], [], []>} : vector<12x8xf32>, vector<8x128xf32>, vector<12x128xf32> -> vector<12x128xf32>
    %c0_285 = arith.constant 0 : index
    %c0_286 = arith.constant 0 : index
    %c0_287 = arith.constant 0 : index
    %1022 = vector.load %arg13[%c0_285, %c0_286, %c0_287] : memref<3x12x12xf32, #tpu.memory_space<vmem>>, vector<1x12x12xf32>
    %1023 = vector.shape_cast %1022 : vector<1x12x12xf32> to vector<12x12xf32>
    %cst_288 = arith.constant dense<0.000000e+00> : vector<12x128xf32>
    %1024 = tpu.matmul %1023, %991, %cst_288 {dimension_numbers = #tpu.dot_dimension_numbers<[1], [0], [0], [1], [0, 0, 1, 1], [], []>} : vector<12x12xf32>, vector<12x128xf32>, vector<12x128xf32> -> vector<12x128xf32>
    %c1_289 = arith.constant 1 : index
    %c0_290 = arith.constant 0 : index
    %c0_291 = arith.constant 0 : index
    %1025 = vector.load %arg13[%c1_289, %c0_290, %c0_291] : memref<3x12x12xf32, #tpu.memory_space<vmem>>, vector<1x12x12xf32>
    %1026 = vector.shape_cast %1025 : vector<1x12x12xf32> to vector<12x12xf32>
    %cst_292 = arith.constant dense<0.000000e+00> : vector<12x128xf32>
    %1027 = tpu.matmul %1026, %991, %cst_292 {dimension_numbers = #tpu.dot_dimension_numbers<[1], [0], [0], [1], [0, 0, 1, 1], [], []>} : vector<12x12xf32>, vector<12x128xf32>, vector<12x128xf32> -> vector<12x128xf32>
    %c2_293 = arith.constant 2 : index
    %c0_294 = arith.constant 0 : index
    %c0_295 = arith.constant 0 : index
    %1028 = vector.load %arg13[%c2_293, %c0_294, %c0_295] : memref<3x12x12xf32, #tpu.memory_space<vmem>>, vector<1x12x12xf32>
    %1029 = vector.shape_cast %1028 : vector<1x12x12xf32> to vector<12x12xf32>
    %cst_296 = arith.constant dense<0.000000e+00> : vector<12x128xf32>
    %1030 = tpu.matmul %1029, %991, %cst_296 {dimension_numbers = #tpu.dot_dimension_numbers<[1], [0], [0], [1], [0, 0, 1, 1], [], []>} : vector<12x12xf32>, vector<12x128xf32>, vector<12x128xf32> -> vector<12x128xf32>
    %1031 = arith.addf %1015, %1024 : vector<12x128xf32>
    %1032 = arith.addf %1018, %1027 : vector<12x128xf32>
    %1033 = arith.addf %1021, %1030 : vector<12x128xf32>
    %c0_297 = arith.constant 0 : index
    %c0_298 = arith.constant 0 : index
    %c0_299 = arith.constant 0 : index
    %1034 = vector.load %arg14[%c0_297, %c0_298, %c0_299] : memref<3x12x16xf32, #tpu.memory_space<vmem>>, vector<1x12x16xf32>
    %1035 = vector.shape_cast %1034 : vector<1x12x16xf32> to vector<12x16xf32>
    %cst_300 = arith.constant dense<0.000000e+00> : vector<12x128xf32>
    %1036 = tpu.matmul %1035, %992, %cst_300 {dimension_numbers = #tpu.dot_dimension_numbers<[1], [0], [0], [1], [0, 0, 1, 1], [], []>} : vector<12x16xf32>, vector<16x128xf32>, vector<12x128xf32> -> vector<12x128xf32>
    %c1_301 = arith.constant 1 : index
    %c0_302 = arith.constant 0 : index
    %c0_303 = arith.constant 0 : index
    %1037 = vector.load %arg14[%c1_301, %c0_302, %c0_303] : memref<3x12x16xf32, #tpu.memory_space<vmem>>, vector<1x12x16xf32>
    %1038 = vector.shape_cast %1037 : vector<1x12x16xf32> to vector<12x16xf32>
    %cst_304 = arith.constant dense<0.000000e+00> : vector<12x128xf32>
    %1039 = tpu.matmul %1038, %992, %cst_304 {dimension_numbers = #tpu.dot_dimension_numbers<[1], [0], [0], [1], [0, 0, 1, 1], [], []>} : vector<12x16xf32>, vector<16x128xf32>, vector<12x128xf32> -> vector<12x128xf32>
    %c2_305 = arith.constant 2 : index
    %c0_306 = arith.constant 0 : index
    %c0_307 = arith.constant 0 : index
    %1040 = vector.load %arg14[%c2_305, %c0_306, %c0_307] : memref<3x12x16xf32, #tpu.memory_space<vmem>>, vector<1x12x16xf32>
    %1041 = vector.shape_cast %1040 : vector<1x12x16xf32> to vector<12x16xf32>
    %cst_308 = arith.constant dense<0.000000e+00> : vector<12x128xf32>
    %1042 = tpu.matmul %1041, %992, %cst_308 {dimension_numbers = #tpu.dot_dimension_numbers<[1], [0], [0], [1], [0, 0, 1, 1], [], []>} : vector<12x16xf32>, vector<16x128xf32>, vector<12x128xf32> -> vector<12x128xf32>
    %1043 = arith.addf %1031, %1036 : vector<12x128xf32>
    %1044 = arith.addf %1032, %1039 : vector<12x128xf32>
    %1045 = arith.addf %1033, %1042 : vector<12x128xf32>
    %c0_309 = arith.constant 0 : index
    %c0_310 = arith.constant 0 : index
    %c0_311 = arith.constant 0 : index
    %1046 = vector.load %arg15[%c0_309, %c0_310, %c0_311] : memref<3x12x20xf32, #tpu.memory_space<vmem>>, vector<1x12x20xf32>
    %1047 = vector.shape_cast %1046 : vector<1x12x20xf32> to vector<12x20xf32>
    %cst_312 = arith.constant dense<0.000000e+00> : vector<12x128xf32>
    %1048 = tpu.matmul %1047, %1012, %cst_312 {dimension_numbers = #tpu.dot_dimension_numbers<[1], [0], [0], [1], [0, 0, 1, 1], [], []>} : vector<12x20xf32>, vector<20x128xf32>, vector<12x128xf32> -> vector<12x128xf32>
    %c1_313 = arith.constant 1 : index
    %c0_314 = arith.constant 0 : index
    %c0_315 = arith.constant 0 : index
    %1049 = vector.load %arg15[%c1_313, %c0_314, %c0_315] : memref<3x12x20xf32, #tpu.memory_space<vmem>>, vector<1x12x20xf32>
    %1050 = vector.shape_cast %1049 : vector<1x12x20xf32> to vector<12x20xf32>
    %cst_316 = arith.constant dense<0.000000e+00> : vector<12x128xf32>
    %1051 = tpu.matmul %1050, %1012, %cst_316 {dimension_numbers = #tpu.dot_dimension_numbers<[1], [0], [0], [1], [0, 0, 1, 1], [], []>} : vector<12x20xf32>, vector<20x128xf32>, vector<12x128xf32> -> vector<12x128xf32>
    %c2_317 = arith.constant 2 : index
    %c0_318 = arith.constant 0 : index
    %c0_319 = arith.constant 0 : index
    %1052 = vector.load %arg15[%c2_317, %c0_318, %c0_319] : memref<3x12x20xf32, #tpu.memory_space<vmem>>, vector<1x12x20xf32>
    %1053 = vector.shape_cast %1052 : vector<1x12x20xf32> to vector<12x20xf32>
    %cst_320 = arith.constant dense<0.000000e+00> : vector<12x128xf32>
    %1054 = tpu.matmul %1053, %1012, %cst_320 {dimension_numbers = #tpu.dot_dimension_numbers<[1], [0], [0], [1], [0, 0, 1, 1], [], []>} : vector<12x20xf32>, vector<20x128xf32>, vector<12x128xf32> -> vector<12x128xf32>
    %1055 = arith.addf %1043, %1048 : vector<12x128xf32>
    %1056 = arith.addf %1044, %1051 : vector<12x128xf32>
    %1057 = arith.addf %1045, %1054 : vector<12x128xf32>
    %cst_321 = arith.constant dense<0.000000e+00> : vector<12x128xf32>
    %1058 = tpu.matmul %1055, %68, %cst_321 {dimension_numbers = #tpu.dot_dimension_numbers<[1], [0], [0], [1], [0, 0, 1, 1], [], []>} : vector<12x128xf32>, vector<128x128xf32>, vector<12x128xf32> -> vector<12x128xf32>
    %1059 = arith.addf %1058, %1056 : vector<12x128xf32>
    %cst_322 = arith.constant dense<0.000000e+00> : vector<12x128xf32>
    %1060 = tpu.matmul %1057, %78, %cst_322 {dimension_numbers = #tpu.dot_dimension_numbers<[1], [0], [0], [1], [0, 0, 1, 1], [], []>} : vector<12x128xf32>, vector<128x128xf32>, vector<12x128xf32> -> vector<12x128xf32>
    %1061 = arith.addf %1059, %1060 : vector<12x128xf32>
    %c0_323 = arith.constant 0 : index
    %c0_324 = arith.constant 0 : index
    %1062 = vector.load %arg16[%c0_323, %c0_324] : memref<12x1xf32, #tpu.memory_space<vmem>>, vector<12x1xf32>
    %1063 = vector.broadcast %1062 : vector<12x1xf32> to vector<12x128xf32>
    %1064 = arith.addf %1061, %1063 : vector<12x128xf32>
    %cst_325 = arith.constant 0.000000e+00 : f32
    %1065 = vector.broadcast %cst_325 : f32 to vector<12x128xf32>
    %1066 = arith.maximumf %1064, %1065 : vector<12x128xf32>
    %cst_326 = arith.constant dense<0.000000e+00> : vector<8x128xf32>
    %1067 = tpu.matmul %40, %103, %cst_326 {dimension_numbers = #tpu.dot_dimension_numbers<[1], [0], [0], [1], [0, 0, 1, 1], [], []>} : vector<8x256xf32>, vector<256x128xf32>, vector<8x128xf32> -> vector<8x128xf32>
    %cst_327 = arith.constant dense<0.000000e+00> : vector<16x128xf32>
    %1068 = tpu.matmul %164, %970, %cst_327 {dimension_numbers = #tpu.dot_dimension_numbers<[1], [0], [0], [1], [0, 0, 1, 1], [], []>} : vector<16x64xf32>, vector<64x128xf32>, vector<16x128xf32> -> vector<16x128xf32>
    %1069 = tpu.iota {dimensions = array<i32: 0>} : vector<16x128xi32>
    %1070 = tpu.iota {dimensions = array<i32: 1>} : vector<16x128xi32>
    %c128_i32_328 = arith.constant 128 : i32
    %1071 = vector.broadcast %c128_i32_328 : i32 to vector<16x128xi32>
    %1072 = arith.muli %1069, %1071 : vector<16x128xi32>
    %c16_i32_329 = arith.constant 16 : i32
    %1073 = vector.broadcast %c16_i32_329 : i32 to vector<16x128xi32>
    %1074 = arith.muli %1070, %1073 : vector<16x128xi32>
    %1075 = arith.cmpi sle, %1072, %1074 : vector<16x128xi32>
    %c16_i32_330 = arith.constant 16 : i32
    %1076 = vector.broadcast %c16_i32_330 : i32 to vector<16x128xi32>
    %1077 = arith.muli %1070, %1076 : vector<16x128xi32>
    %c1_i32_331 = arith.constant 1 : i32
    %1078 = vector.broadcast %c1_i32_331 : i32 to vector<16x128xi32>
    %1079 = arith.addi %1069, %1078 : vector<16x128xi32>
    %c128_i32_332 = arith.constant 128 : i32
    %1080 = vector.broadcast %c128_i32_332 : i32 to vector<16x128xi32>
    %1081 = arith.muli %1079, %1080 : vector<16x128xi32>
    %1082 = arith.cmpi slt, %1077, %1081 : vector<16x128xi32>
    %1083 = arith.andi %1075, %1082 : vector<16x128xi1>
    %cst_333 = arith.constant 1.000000e+00 : f32
    %cst_334 = arith.constant 0.000000e+00 : f32
    %1084 = vector.broadcast %cst_333 : f32 to vector<16x128xf32>
    %1085 = vector.broadcast %cst_334 : f32 to vector<16x128xf32>
    %1086 = arith.select %1083, %1084, %1085 : vector<16x128xi1>, vector<16x128xf32>
    %cst_335 = arith.constant dense<0.000000e+00> : vector<20x128xf32>
    %1087 = tpu.matmul %933, %1086, %cst_335 {dimension_numbers = #tpu.dot_dimension_numbers<[1], [0], [0], [1], [0, 0, 1, 1], [], []>} : vector<20x16xf32>, vector<16x128xf32>, vector<20x128xf32> -> vector<20x128xf32>
    %c0_336 = arith.constant 0 : index
    %c0_337 = arith.constant 0 : index
    %c0_338 = arith.constant 0 : index
    %1088 = vector.load %arg17[%c0_336, %c0_337, %c0_338] : memref<3x68x8xf32, #tpu.memory_space<vmem>>, vector<1x68x8xf32>
    %1089 = vector.shape_cast %1088 : vector<1x68x8xf32> to vector<68x8xf32>
    %cst_339 = arith.constant dense<0.000000e+00> : vector<68x128xf32>
    %1090 = tpu.matmul %1089, %1067, %cst_339 {dimension_numbers = #tpu.dot_dimension_numbers<[1], [0], [0], [1], [0, 0, 1, 1], [], []>} : vector<68x8xf32>, vector<8x128xf32>, vector<68x128xf32> -> vector<68x128xf32>
    %c1_340 = arith.constant 1 : index
    %c0_341 = arith.constant 0 : index
    %c0_342 = arith.constant 0 : index
    %1091 = vector.load %arg17[%c1_340, %c0_341, %c0_342] : memref<3x68x8xf32, #tpu.memory_space<vmem>>, vector<1x68x8xf32>
    %1092 = vector.shape_cast %1091 : vector<1x68x8xf32> to vector<68x8xf32>
    %cst_343 = arith.constant dense<0.000000e+00> : vector<68x128xf32>
    %1093 = tpu.matmul %1092, %1067, %cst_343 {dimension_numbers = #tpu.dot_dimension_numbers<[1], [0], [0], [1], [0, 0, 1, 1], [], []>} : vector<68x8xf32>, vector<8x128xf32>, vector<68x128xf32> -> vector<68x128xf32>
    %c2_344 = arith.constant 2 : index
    %c0_345 = arith.constant 0 : index
    %c0_346 = arith.constant 0 : index
    %1094 = vector.load %arg17[%c2_344, %c0_345, %c0_346] : memref<3x68x8xf32, #tpu.memory_space<vmem>>, vector<1x68x8xf32>
    %1095 = vector.shape_cast %1094 : vector<1x68x8xf32> to vector<68x8xf32>
    %cst_347 = arith.constant dense<0.000000e+00> : vector<68x128xf32>
    %1096 = tpu.matmul %1095, %1067, %cst_347 {dimension_numbers = #tpu.dot_dimension_numbers<[1], [0], [0], [1], [0, 0, 1, 1], [], []>} : vector<68x8xf32>, vector<8x128xf32>, vector<68x128xf32> -> vector<68x128xf32>
    %c0_348 = arith.constant 0 : index
    %c0_349 = arith.constant 0 : index
    %c0_350 = arith.constant 0 : index
    %1097 = vector.load %arg18[%c0_348, %c0_349, %c0_350] : memref<3x68x12xf32, #tpu.memory_space<vmem>>, vector<1x68x12xf32>
    %1098 = vector.shape_cast %1097 : vector<1x68x12xf32> to vector<68x12xf32>
    %cst_351 = arith.constant dense<0.000000e+00> : vector<68x128xf32>
    %1099 = tpu.matmul %1098, %85, %cst_351 {dimension_numbers = #tpu.dot_dimension_numbers<[1], [0], [0], [1], [0, 0, 1, 1], [], []>} : vector<68x12xf32>, vector<12x128xf32>, vector<68x128xf32> -> vector<68x128xf32>
    %c1_352 = arith.constant 1 : index
    %c0_353 = arith.constant 0 : index
    %c0_354 = arith.constant 0 : index
    %1100 = vector.load %arg18[%c1_352, %c0_353, %c0_354] : memref<3x68x12xf32, #tpu.memory_space<vmem>>, vector<1x68x12xf32>
    %1101 = vector.shape_cast %1100 : vector<1x68x12xf32> to vector<68x12xf32>
    %cst_355 = arith.constant dense<0.000000e+00> : vector<68x128xf32>
    %1102 = tpu.matmul %1101, %85, %cst_355 {dimension_numbers = #tpu.dot_dimension_numbers<[1], [0], [0], [1], [0, 0, 1, 1], [], []>} : vector<68x12xf32>, vector<12x128xf32>, vector<68x128xf32> -> vector<68x128xf32>
    %c2_356 = arith.constant 2 : index
    %c0_357 = arith.constant 0 : index
    %c0_358 = arith.constant 0 : index
    %1103 = vector.load %arg18[%c2_356, %c0_357, %c0_358] : memref<3x68x12xf32, #tpu.memory_space<vmem>>, vector<1x68x12xf32>
    %1104 = vector.shape_cast %1103 : vector<1x68x12xf32> to vector<68x12xf32>
    %cst_359 = arith.constant dense<0.000000e+00> : vector<68x128xf32>
    %1105 = tpu.matmul %1104, %85, %cst_359 {dimension_numbers = #tpu.dot_dimension_numbers<[1], [0], [0], [1], [0, 0, 1, 1], [], []>} : vector<68x12xf32>, vector<12x128xf32>, vector<68x128xf32> -> vector<68x128xf32>
    %1106 = arith.addf %1090, %1099 : vector<68x128xf32>
    %1107 = arith.addf %1093, %1102 : vector<68x128xf32>
    %1108 = arith.addf %1096, %1105 : vector<68x128xf32>
    %c0_360 = arith.constant 0 : index
    %c0_361 = arith.constant 0 : index
    %c0_362 = arith.constant 0 : index
    %1109 = vector.load %arg19[%c0_360, %c0_361, %c0_362] : memref<3x68x16xf32, #tpu.memory_space<vmem>>, vector<1x68x16xf32>
    %1110 = vector.shape_cast %1109 : vector<1x68x16xf32> to vector<68x16xf32>
    %cst_363 = arith.constant dense<0.000000e+00> : vector<68x128xf32>
    %1111 = tpu.matmul %1110, %1068, %cst_363 {dimension_numbers = #tpu.dot_dimension_numbers<[1], [0], [0], [1], [0, 0, 1, 1], [], []>} : vector<68x16xf32>, vector<16x128xf32>, vector<68x128xf32> -> vector<68x128xf32>
    %c1_364 = arith.constant 1 : index
    %c0_365 = arith.constant 0 : index
    %c0_366 = arith.constant 0 : index
    %1112 = vector.load %arg19[%c1_364, %c0_365, %c0_366] : memref<3x68x16xf32, #tpu.memory_space<vmem>>, vector<1x68x16xf32>
    %1113 = vector.shape_cast %1112 : vector<1x68x16xf32> to vector<68x16xf32>
    %cst_367 = arith.constant dense<0.000000e+00> : vector<68x128xf32>
    %1114 = tpu.matmul %1113, %1068, %cst_367 {dimension_numbers = #tpu.dot_dimension_numbers<[1], [0], [0], [1], [0, 0, 1, 1], [], []>} : vector<68x16xf32>, vector<16x128xf32>, vector<68x128xf32> -> vector<68x128xf32>
    %c2_368 = arith.constant 2 : index
    %c0_369 = arith.constant 0 : index
    %c0_370 = arith.constant 0 : index
    %1115 = vector.load %arg19[%c2_368, %c0_369, %c0_370] : memref<3x68x16xf32, #tpu.memory_space<vmem>>, vector<1x68x16xf32>
    %1116 = vector.shape_cast %1115 : vector<1x68x16xf32> to vector<68x16xf32>
    %cst_371 = arith.constant dense<0.000000e+00> : vector<68x128xf32>
    %1117 = tpu.matmul %1116, %1068, %cst_371 {dimension_numbers = #tpu.dot_dimension_numbers<[1], [0], [0], [1], [0, 0, 1, 1], [], []>} : vector<68x16xf32>, vector<16x128xf32>, vector<68x128xf32> -> vector<68x128xf32>
    %1118 = arith.addf %1106, %1111 : vector<68x128xf32>
    %1119 = arith.addf %1107, %1114 : vector<68x128xf32>
    %1120 = arith.addf %1108, %1117 : vector<68x128xf32>
    %c0_372 = arith.constant 0 : index
    %c0_373 = arith.constant 0 : index
    %c0_374 = arith.constant 0 : index
    %1121 = vector.load %arg20[%c0_372, %c0_373, %c0_374] : memref<3x68x20xf32, #tpu.memory_space<vmem>>, vector<1x68x20xf32>
    %1122 = vector.shape_cast %1121 : vector<1x68x20xf32> to vector<68x20xf32>
    %cst_375 = arith.constant dense<0.000000e+00> : vector<68x128xf32>
    %1123 = tpu.matmul %1122, %1087, %cst_375 {dimension_numbers = #tpu.dot_dimension_numbers<[1], [0], [0], [1], [0, 0, 1, 1], [], []>} : vector<68x20xf32>, vector<20x128xf32>, vector<68x128xf32> -> vector<68x128xf32>
    %c1_376 = arith.constant 1 : index
    %c0_377 = arith.constant 0 : index
    %c0_378 = arith.constant 0 : index
    %1124 = vector.load %arg20[%c1_376, %c0_377, %c0_378] : memref<3x68x20xf32, #tpu.memory_space<vmem>>, vector<1x68x20xf32>
    %1125 = vector.shape_cast %1124 : vector<1x68x20xf32> to vector<68x20xf32>
    %cst_379 = arith.constant dense<0.000000e+00> : vector<68x128xf32>
    %1126 = tpu.matmul %1125, %1087, %cst_379 {dimension_numbers = #tpu.dot_dimension_numbers<[1], [0], [0], [1], [0, 0, 1, 1], [], []>} : vector<68x20xf32>, vector<20x128xf32>, vector<68x128xf32> -> vector<68x128xf32>
    %c2_380 = arith.constant 2 : index
    %c0_381 = arith.constant 0 : index
    %c0_382 = arith.constant 0 : index
    %1127 = vector.load %arg20[%c2_380, %c0_381, %c0_382] : memref<3x68x20xf32, #tpu.memory_space<vmem>>, vector<1x68x20xf32>
    %1128 = vector.shape_cast %1127 : vector<1x68x20xf32> to vector<68x20xf32>
    %cst_383 = arith.constant dense<0.000000e+00> : vector<68x128xf32>
    %1129 = tpu.matmul %1128, %1087, %cst_383 {dimension_numbers = #tpu.dot_dimension_numbers<[1], [0], [0], [1], [0, 0, 1, 1], [], []>} : vector<68x20xf32>, vector<20x128xf32>, vector<68x128xf32> -> vector<68x128xf32>
    %1130 = arith.addf %1118, %1123 : vector<68x128xf32>
    %1131 = arith.addf %1119, %1126 : vector<68x128xf32>
    %1132 = arith.addf %1120, %1129 : vector<68x128xf32>
    %c0_384 = arith.constant 0 : index
    %c0_385 = arith.constant 0 : index
    %c0_386 = arith.constant 0 : index
    %1133 = vector.load %arg21[%c0_384, %c0_385, %c0_386] : memref<3x68x12xf32, #tpu.memory_space<vmem>>, vector<1x68x12xf32>
    %1134 = vector.shape_cast %1133 : vector<1x68x12xf32> to vector<68x12xf32>
    %cst_387 = arith.constant dense<0.000000e+00> : vector<68x128xf32>
    %1135 = tpu.matmul %1134, %1066, %cst_387 {dimension_numbers = #tpu.dot_dimension_numbers<[1], [0], [0], [1], [0, 0, 1, 1], [], []>} : vector<68x12xf32>, vector<12x128xf32>, vector<68x128xf32> -> vector<68x128xf32>
    %c1_388 = arith.constant 1 : index
    %c0_389 = arith.constant 0 : index
    %c0_390 = arith.constant 0 : index
    %1136 = vector.load %arg21[%c1_388, %c0_389, %c0_390] : memref<3x68x12xf32, #tpu.memory_space<vmem>>, vector<1x68x12xf32>
    %1137 = vector.shape_cast %1136 : vector<1x68x12xf32> to vector<68x12xf32>
    %cst_391 = arith.constant dense<0.000000e+00> : vector<68x128xf32>
    %1138 = tpu.matmul %1137, %1066, %cst_391 {dimension_numbers = #tpu.dot_dimension_numbers<[1], [0], [0], [1], [0, 0, 1, 1], [], []>} : vector<68x12xf32>, vector<12x128xf32>, vector<68x128xf32> -> vector<68x128xf32>
    %c2_392 = arith.constant 2 : index
    %c0_393 = arith.constant 0 : index
    %c0_394 = arith.constant 0 : index
    %1139 = vector.load %arg21[%c2_392, %c0_393, %c0_394] : memref<3x68x12xf32, #tpu.memory_space<vmem>>, vector<1x68x12xf32>
    %1140 = vector.shape_cast %1139 : vector<1x68x12xf32> to vector<68x12xf32>
    %cst_395 = arith.constant dense<0.000000e+00> : vector<68x128xf32>
    %1141 = tpu.matmul %1140, %1066, %cst_395 {dimension_numbers = #tpu.dot_dimension_numbers<[1], [0], [0], [1], [0, 0, 1, 1], [], []>} : vector<68x12xf32>, vector<12x128xf32>, vector<68x128xf32> -> vector<68x128xf32>
    %1142 = arith.addf %1130, %1135 : vector<68x128xf32>
    %1143 = arith.addf %1131, %1138 : vector<68x128xf32>
    %1144 = arith.addf %1132, %1141 : vector<68x128xf32>
    %cst_396 = arith.constant dense<0.000000e+00> : vector<68x128xf32>
    %1145 = tpu.matmul %1142, %68, %cst_396 {dimension_numbers = #tpu.dot_dimension_numbers<[1], [0], [0], [1], [0, 0, 1, 1], [], []>} : vector<68x128xf32>, vector<128x128xf32>, vector<68x128xf32> -> vector<68x128xf32>
    %1146 = arith.addf %1145, %1143 : vector<68x128xf32>
    %cst_397 = arith.constant dense<0.000000e+00> : vector<68x128xf32>
    %1147 = tpu.matmul %1144, %78, %cst_397 {dimension_numbers = #tpu.dot_dimension_numbers<[1], [0], [0], [1], [0, 0, 1, 1], [], []>} : vector<68x128xf32>, vector<128x128xf32>, vector<68x128xf32> -> vector<68x128xf32>
    %1148 = arith.addf %1146, %1147 : vector<68x128xf32>
    %c0_398 = arith.constant 0 : index
    %c0_399 = arith.constant 0 : index
    %1149 = vector.load %arg22[%c0_398, %c0_399] : memref<68x1xf32, #tpu.memory_space<vmem>>, vector<68x1xf32>
    %1150 = vector.broadcast %1149 : vector<68x1xf32> to vector<68x128xf32>
    %1151 = arith.addf %1148, %1150 : vector<68x128xf32>
    %cst_400 = arith.constant 0.000000e+00 : f32
    %1152 = vector.broadcast %cst_400 : f32 to vector<68x128xf32>
    %1153 = arith.maximumf %1151, %1152 : vector<68x128xf32>
    %c0_401 = arith.constant 0 : index
    %c0_402 = arith.constant 0 : index
    %c0_403 = arith.constant 0 : index
    %1154 = vector.load %arg23[%c0_401, %c0_402, %c0_403] : memref<3x68x68xf32, #tpu.memory_space<vmem>>, vector<1x68x68xf32>
    %1155 = vector.shape_cast %1154 : vector<1x68x68xf32> to vector<68x68xf32>
    %cst_404 = arith.constant dense<0.000000e+00> : vector<68x128xf32>
    %1156 = tpu.matmul %1155, %1153, %cst_404 {dimension_numbers = #tpu.dot_dimension_numbers<[1], [0], [0], [1], [0, 0, 1, 1], [], []>} : vector<68x68xf32>, vector<68x128xf32>, vector<68x128xf32> -> vector<68x128xf32>
    %c1_405 = arith.constant 1 : index
    %c0_406 = arith.constant 0 : index
    %c0_407 = arith.constant 0 : index
    %1157 = vector.load %arg23[%c1_405, %c0_406, %c0_407] : memref<3x68x68xf32, #tpu.memory_space<vmem>>, vector<1x68x68xf32>
    %1158 = vector.shape_cast %1157 : vector<1x68x68xf32> to vector<68x68xf32>
    %cst_408 = arith.constant dense<0.000000e+00> : vector<68x128xf32>
    %1159 = tpu.matmul %1158, %1153, %cst_408 {dimension_numbers = #tpu.dot_dimension_numbers<[1], [0], [0], [1], [0, 0, 1, 1], [], []>} : vector<68x68xf32>, vector<68x128xf32>, vector<68x128xf32> -> vector<68x128xf32>
    %c2_409 = arith.constant 2 : index
    %c0_410 = arith.constant 0 : index
    %c0_411 = arith.constant 0 : index
    %1160 = vector.load %arg23[%c2_409, %c0_410, %c0_411] : memref<3x68x68xf32, #tpu.memory_space<vmem>>, vector<1x68x68xf32>
    %1161 = vector.shape_cast %1160 : vector<1x68x68xf32> to vector<68x68xf32>
    %cst_412 = arith.constant dense<0.000000e+00> : vector<68x128xf32>
    %1162 = tpu.matmul %1161, %1153, %cst_412 {dimension_numbers = #tpu.dot_dimension_numbers<[1], [0], [0], [1], [0, 0, 1, 1], [], []>} : vector<68x68xf32>, vector<68x128xf32>, vector<68x128xf32> -> vector<68x128xf32>
    %cst_413 = arith.constant dense<0.000000e+00> : vector<68x128xf32>
    %1163 = tpu.matmul %1156, %68, %cst_413 {dimension_numbers = #tpu.dot_dimension_numbers<[1], [0], [0], [1], [0, 0, 1, 1], [], []>} : vector<68x128xf32>, vector<128x128xf32>, vector<68x128xf32> -> vector<68x128xf32>
    %1164 = arith.addf %1163, %1159 : vector<68x128xf32>
    %cst_414 = arith.constant dense<0.000000e+00> : vector<68x128xf32>
    %1165 = tpu.matmul %1162, %78, %cst_414 {dimension_numbers = #tpu.dot_dimension_numbers<[1], [0], [0], [1], [0, 0, 1, 1], [], []>} : vector<68x128xf32>, vector<128x128xf32>, vector<68x128xf32> -> vector<68x128xf32>
    %1166 = arith.addf %1164, %1165 : vector<68x128xf32>
    %c0_415 = arith.constant 0 : index
    %c0_416 = arith.constant 0 : index
    %1167 = vector.load %arg24[%c0_415, %c0_416] : memref<68x1xf32, #tpu.memory_space<vmem>>, vector<68x1xf32>
    %1168 = vector.broadcast %1167 : vector<68x1xf32> to vector<68x128xf32>
    %1169 = arith.addf %1166, %1168 : vector<68x128xf32>
    %cst_417 = arith.constant 0.000000e+00 : f32
    %1170 = vector.broadcast %cst_417 : f32 to vector<68x128xf32>
    %1171 = arith.maximumf %1169, %1170 : vector<68x128xf32>
    %c0_418 = arith.constant 0 : index
    %c0_419 = arith.constant 0 : index
    %1172 = vector.load %arg25[%c0_418, %c0_419] : memref<8x68xf32, #tpu.memory_space<vmem>>, vector<8x68xf32>
    %cst_420 = arith.constant dense<0.000000e+00> : vector<8x128xf32>
    %1173 = tpu.matmul %1172, %1171, %cst_420 {dimension_numbers = #tpu.dot_dimension_numbers<[1], [0], [0], [1], [0, 0, 1, 1], [], []>} : vector<8x68xf32>, vector<68x128xf32>, vector<8x128xf32> -> vector<8x128xf32>
    %c0_421 = arith.constant 0 : index
    %c0_422 = arith.constant 0 : index
    %1174 = vector.load %arg26[%c0_421, %c0_422] : memref<8x1xf32, #tpu.memory_space<vmem>>, vector<8x1xf32>
    %1175 = vector.broadcast %1174 : vector<8x1xf32> to vector<8x128xf32>
    %1176 = arith.addf %1173, %1175 : vector<8x128xf32>
    %c0_423 = arith.constant 0 : index
    %c0_424 = arith.constant 0 : index
    %1177 = vector.load %arg27[%c0_423, %c0_424] : memref<8x128xf32, #tpu.memory_space<vmem>>, vector<8x128xf32>
    tpu.vector_store %arg27[%c0_423, %c0_424], %1176 {strides = array<i32>} : memref<8x128xf32, #tpu.memory_space<vmem>>, vector<8x128xf32>,
    return
  }
}

</mosaic_0001>

<llo_original>
// kernel: clarification_dense_lstm_forward.1
$region0: #{clarification_dense_lstm_forward.1}
  #allocation0 [shape = 'u32[]', space=smem, size = 0x4, offset = 0x4, fixed_abs, tag = 'smem constant byte address 0x4 - core index']
  #allocation1 [shape = 'u32[72,128]{1,0:T(1,128)}', space=vmem, size = 0x9000, scoped, tag = 'internal scratch']
  %s0 = inlined_call_operand.vmem [shape: f32[1,256], index: 0, kind: input, shape index: {}]
  %s1 = inlined_call_operand.vmem [shape: f32[3,8,1], index: 1, kind: input, shape index: {}]
  %s2 = inlined_call_operand.vmem [shape: f32[8,1], index: 2, kind: input, shape index: {}]
  %s3 = inlined_call_operand.vmem [shape: f32[3,12,8], index: 3, kind: input, shape index: {}]
  %s4 = inlined_call_operand.vmem [shape: f32[12,1], index: 4, kind: input, shape index: {}]
  %s5 = inlined_call_operand.vmem [shape: f32[3,16,8], index: 5, kind: input, shape index: {}]
  %s6 = inlined_call_operand.vmem [shape: f32[3,16,12], index: 6, kind: input, shape index: {}]
  %s7 = inlined_call_operand.vmem [shape: f32[16,1], index: 7, kind: input, shape index: {}]
  %s8 = inlined_call_operand.vmem [shape: f32[4,20,16], index: 8, kind: input, shape index: {}]
  %s9 = inlined_call_operand.vmem [shape: f32[4,64], index: 9, kind: input, shape index: {}]
  %s10 = inlined_call_operand.vmem [shape: f32[16,64], index: 10, kind: input, shape index: {}]
  %s11 = inlined_call_operand.vmem [shape: f32[1,64], index: 11, kind: input, shape index: {}]
  %s12 = inlined_call_operand.vmem [shape: f32[3,12,8], index: 12, kind: input, shape index: {}]
  %s13 = inlined_call_operand.vmem [shape: f32[3,12,12], index: 13, kind: input, shape index: {}]
  %s14 = inlined_call_operand.vmem [shape: f32[3,12,16], index: 14, kind: input, shape index: {}]
  %s15 = inlined_call_operand.vmem [shape: f32[3,12,20], index: 15, kind: input, shape index: {}]
  %s16 = inlined_call_operand.vmem [shape: f32[12,1], index: 16, kind: input, shape index: {}]
  %s17 = inlined_call_operand.vmem [shape: f32[3,68,8], index: 17, kind: input, shape index: {}]
  %s18 = inlined_call_operand.vmem [shape: f32[3,68,12], index: 18, kind: input, shape index: {}]
  %s19 = inlined_call_operand.vmem [shape: f32[3,68,16], index: 19, kind: input, shape index: {}]
  %s20 = inlined_call_operand.vmem [shape: f32[3,68,20], index: 20, kind: input, shape index: {}]
  %s21 = inlined_call_operand.vmem [shape: f32[3,68,12], index: 21, kind: input, shape index: {}]
  %s22 = inlined_call_operand.vmem [shape: f32[68,1], index: 22, kind: input, shape index: {}]
  %s23 = inlined_call_operand.vmem [shape: f32[3,68,68], index: 23, kind: input, shape index: {}]
  %s24 = inlined_call_operand.vmem [shape: f32[68,1], index: 24, kind: input, shape index: {}]
  %s25 = inlined_call_operand.vmem [shape: f32[8,68], index: 25, kind: input, shape index: {}]
  %s26 = inlined_call_operand.vmem [shape: f32[8,1], index: 26, kind: input, shape index: {}]
  %s27 = inlined_call_operand.vmem [shape: f32[8,128], index: 27, kind: output, shape index: {}]
  %s28 = sld [smem:[#allocation0]]
  $region118: #{clarification_dense_lstm_forward.1} parent=0
    _
  %s30 = ssub.s32 1, %s28
  %s31 = scalar_select 0, %s30, %s28
  // Predicated region
  $region2: #{clarification_dense_lstm_forward.1} parent=0 // pred_check
    _
  $region3: #{clarification_dense_lstm_forward.1} parent=0 // pred_check_branch
    %33 = sbr.rel (0) target = $region5
  $region4: #{clarification_dense_lstm_forward.1} parent=0 // pred_region
    _
  $region5: #{clarification_dense_lstm_forward.1} parent=0 // pred_fallthru
    _
  // Predicated region
  $region6: #{clarification_dense_lstm_forward.1} parent=0 // pred_check
    _
  $region7: #{clarification_dense_lstm_forward.1} parent=0 // pred_check_branch
    %35 = sbr.rel (0) target = $region9
  $region8: #{clarification_dense_lstm_forward.1} parent=0 // pred_region
    _
  $region9: #{clarification_dense_lstm_forward.1} parent=0 // pred_fallthru
    _
  // Predicated region
  $region10: #{clarification_dense_lstm_forward.1} parent=0 // pred_check
    _
  $region11: #{clarification_dense_lstm_forward.1} parent=0 // pred_check_branch
    %37 = sbr.rel (0) target = $region13
  $region12: #{clarification_dense_lstm_forward.1} parent=0 // pred_region
    _
  $region13: #{clarification_dense_lstm_forward.1} parent=0 // pred_fallthru
    _
  // Predicated region
  $region14: #{clarification_dense_lstm_forward.1} parent=0 // pred_check
    _
  $region15: #{clarification_dense_lstm_forward.1} parent=0 // pred_check_branch
    %39 = sbr.rel (0) target = $region17
  $region16: #{clarification_dense_lstm_forward.1} parent=0 // pred_region
    _
  $region17: #{clarification_dense_lstm_forward.1} parent=0 // pred_fallthru
    _
  // Predicated region
  $region18: #{clarification_dense_lstm_forward.1} parent=0 // pred_check
    _
  $region19: #{clarification_dense_lstm_forward.1} parent=0 // pred_check_branch
    %41 = sbr.rel (0) target = $region21
  $region20: #{clarification_dense_lstm_forward.1} parent=0 // pred_region
    _
  $region21: #{clarification_dense_lstm_forward.1} parent=0 // pred_fallthru
    _
  // Predicated region
  $region22: #{clarification_dense_lstm_forward.1} parent=0 // pred_check
    _
  $region23: #{clarification_dense_lstm_forward.1} parent=0 // pred_check_branch
    %43 = sbr.rel (0) target = $region25
  $region24: #{clarification_dense_lstm_forward.1} parent=0 // pred_region
    _
  $region25: #{clarification_dense_lstm_forward.1} parent=0 // pred_fallthru
    _
  // Predicated region
  $region26: #{clarification_dense_lstm_forward.1} parent=0 // pred_check
    _
  $region27: #{clarification_dense_lstm_forward.1} parent=0 // pred_check_branch
    %45 = sbr.rel (0) target = $region29
  $region28: #{clarification_dense_lstm_forward.1} parent=0 // pred_region
    _
  $region29: #{clarification_dense_lstm_forward.1} parent=0 // pred_fallthru
    _
  // Predicated region
  $region30: #{clarification_dense_lstm_forward.1} parent=0 // pred_check
    _
  $region31: #{clarification_dense_lstm_forward.1} parent=0 // pred_check_branch
    %47 = sbr.rel (0) target = $region33
  $region32: #{clarification_dense_lstm_forward.1} parent=0 // pred_region
    _
  $region33: #{clarification_dense_lstm_forward.1} parent=0 // pred_fallthru
    _
  // Predicated region
  $region34: #{clarification_dense_lstm_forward.1} parent=0 // pred_check
    _
  $region35: #{clarification_dense_lstm_forward.1} parent=0 // pred_check_branch
    %49 = sbr.rel (0) target = $region37
  $region36: #{clarification_dense_lstm_forward.1} parent=0 // pred_region
    _
  $region37: #{clarification_dense_lstm_forward.1} parent=0 // pred_fallthru
    _
  // Predicated region
  $region38: #{clarification_dense_lstm_forward.1} parent=0 // pred_check
    _
  $region39: #{clarification_dense_lstm_forward.1} parent=0 // pred_check_branch
    %51 = sbr.rel (0) target = $region41
  $region40: #{clarification_dense_lstm_forward.1} parent=0 // pred_region
    _
  $region41: #{clarification_dense_lstm_forward.1} parent=0 // pred_fallthru
    _
  // Predicated region
  $region42: #{clarification_dense_lstm_forward.1} parent=0 // pred_check
    _
  $region43: #{clarification_dense_lstm_forward.1} parent=0 // pred_check_branch
    %53 = sbr.rel (0) target = $region45
  $region44: #{clarification_dense_lstm_forward.1} parent=0 // pred_region
    _
  $region45: #{clarification_dense_lstm_forward.1} parent=0 // pred_fallthru
    _
  // Predicated region
  $region46: #{clarification_dense_lstm_forward.1} parent=0 // pred_check
    _
  $region47: #{clarification_dense_lstm_forward.1} parent=0 // pred_check_branch
    %55 = sbr.rel (0) target = $region49
  $region48: #{clarification_dense_lstm_forward.1} parent=0 // pred_region
    _
  $region49: #{clarification_dense_lstm_forward.1} parent=0 // pred_fallthru
    _
  // Predicated region
  $region50: #{clarification_dense_lstm_forward.1} parent=0 // pred_check
    _
  $region51: #{clarification_dense_lstm_forward.1} parent=0 // pred_check_branch
    %57 = sbr.rel (0) target = $region53
  $region52: #{clarification_dense_lstm_forward.1} parent=0 // pred_region
    _
  $region53: #{clarification_dense_lstm_forward.1} parent=0 // pred_fallthru
    _
  // Predicated region
  $region54: #{clarification_dense_lstm_forward.1} parent=0 // pred_check
    _
  $region55: #{clarification_dense_lstm_forward.1} parent=0 // pred_check_branch
    %59 = sbr.rel (0) target = $region57
  $region56: #{clarification_dense_lstm_forward.1} parent=0 // pred_region
    _
  $region57: #{clarification_dense_lstm_forward.1} parent=0 // pred_fallthru
    _
  // Predicated region
  $region58: #{clarification_dense_lstm_forward.1} parent=0 // pred_check
    _
  $region59: #{clarification_dense_lstm_forward.1} parent=0 // pred_check_branch
    %61 = sbr.rel (0) target = $region61
  $region60: #{clarification_dense_lstm_forward.1} parent=0 // pred_region
    _
  $region61: #{clarification_dense_lstm_forward.1} parent=0 // pred_fallthru
    _
  // Predicated region
  $region62: #{clarification_dense_lstm_forward.1} parent=0 // pred_check
    _
  $region63: #{clarification_dense_lstm_forward.1} parent=0 // pred_check_branch
    %63 = sbr.rel (0) target = $region65
  $region64: #{clarification_dense_lstm_forward.1} parent=0 // pred_region
    _
  $region65: #{clarification_dense_lstm_forward.1} parent=0 // pred_fallthru
    _
  // Predicated region
  $region66: #{clarification_dense_lstm_forward.1} parent=0 // pred_check
    _
  $region67: #{clarification_dense_lstm_forward.1} parent=0 // pred_check_branch
    %65 = sbr.rel (0) target = $region69
  $region68: #{clarification_dense_lstm_forward.1} parent=0 // pred_region
    _
  $region69: #{clarification_dense_lstm_forward.1} parent=0 // pred_fallthru
    _
  // Predicated region
  $region70: #{clarification_dense_lstm_forward.1} parent=0 // pred_check
    _
  $region71: #{clarification_dense_lstm_forward.1} parent=0 // pred_check_branch
    %67 = sbr.rel (0) target = $region73
  $region72: #{clarification_dense_lstm_forward.1} parent=0 // pred_region
    _
  $region73: #{clarification_dense_lstm_forward.1} parent=0 // pred_fallthru
    _
  // Predicated region
  $region74: #{clarification_dense_lstm_forward.1} parent=0 // pred_check
    _
  $region75: #{clarification_dense_lstm_forward.1} parent=0 // pred_check_branch
    %69 = sbr.rel (0) target = $region77
  $region76: #{clarification_dense_lstm_forward.1} parent=0 // pred_region
    _
  $region77: #{clarification_dense_lstm_forward.1} parent=0 // pred_fallthru
    _
  // Predicated region
  $region78: #{clarification_dense_lstm_forward.1} parent=0 // pred_check
    _
  $region79: #{clarification_dense_lstm_forward.1} parent=0 // pred_check_branch
    %71 = sbr.rel (0) target = $region81
  $region80: #{clarification_dense_lstm_forward.1} parent=0 // pred_region
    _
  $region81: #{clarification_dense_lstm_forward.1} parent=0 // pred_fallthru
    _
  // Predicated region
  $region82: #{clarification_dense_lstm_forward.1} parent=0 // pred_check
    _
  $region83: #{clarification_dense_lstm_forward.1} parent=0 // pred_check_branch
    %73 = sbr.rel (0) target = $region85
  $region84: #{clarification_dense_lstm_forward.1} parent=0 // pred_region
    _
  $region85: #{clarification_dense_lstm_forward.1} parent=0 // pred_fallthru
    _
  // Predicated region
  $region86: #{clarification_dense_lstm_forward.1} parent=0 // pred_check
    _
  $region87: #{clarification_dense_lstm_forward.1} parent=0 // pred_check_branch
    %75 = sbr.rel (0) target = $region89
  $region88: #{clarification_dense_lstm_forward.1} parent=0 // pred_region
    _
  $region89: #{clarification_dense_lstm_forward.1} parent=0 // pred_fallthru
    _
  // Predicated region
  $region90: #{clarification_dense_lstm_forward.1} parent=0 // pred_check
    _
  $region91: #{clarification_dense_lstm_forward.1} parent=0 // pred_check_branch
    %77 = sbr.rel (0) target = $region93
  $region92: #{clarification_dense_lstm_forward.1} parent=0 // pred_region
    _
  $region93: #{clarification_dense_lstm_forward.1} parent=0 // pred_fallthru
    _
  // Predicated region
  $region94: #{clarification_dense_lstm_forward.1} parent=0 // pred_check
    _
  $region95: #{clarification_dense_lstm_forward.1} parent=0 // pred_check_branch
    %79 = sbr.rel (0) target = $region97
  $region96: #{clarification_dense_lstm_forward.1} parent=0 // pred_region
    _
  $region97: #{clarification_dense_lstm_forward.1} parent=0 // pred_fallthru
    _
  // Predicated region
  $region98: #{clarification_dense_lstm_forward.1} parent=0 // pred_check
    _
  $region99: #{clarification_dense_lstm_forward.1} parent=0 // pred_check_branch
    %81 = sbr.rel (0) target = $region101
  $region100: #{clarification_dense_lstm_forward.1} parent=0 // pred_region
    _
  $region101: #{clarification_dense_lstm_forward.1} parent=0 // pred_fallthru
    _
  // Predicated region
  $region102: #{clarification_dense_lstm_forward.1} parent=0 // pred_check
    _
  $region103: #{clarification_dense_lstm_forward.1} parent=0 // pred_check_branch
    %83 = sbr.rel (0) target = $region105
  $region104: #{clarification_dense_lstm_forward.1} parent=0 // pred_region
    _
  $region105: #{clarification_dense_lstm_forward.1} parent=0 // pred_fallthru
    _
  // Predicated region
  $region106: #{clarification_dense_lstm_forward.1} parent=0 // pred_check
    _
  $region107: #{clarification_dense_lstm_forward.1} parent=0 // pred_check_branch
    %85 = sbr.rel (0) target = $region109
  $region108: #{clarification_dense_lstm_forward.1} parent=0 // pred_region
    _
  $region109: #{clarification_dense_lstm_forward.1} parent=0 // pred_fallthru
    _
  %v86 = vld [vmem:[%s0] sm:$0x3]
  %v87 = vld [vmem:[%s1] sm:$0xff]
  %89 = vset.pattern.permute.xlu0 0
  %90 = vperm.xlu0 %89, %v87
  %v91 = vpop.permute.xlu0 %90
  %v94 = vperm.slane %v86, 0
  %v95 = vperm.slane %v86, 1
  %v98 = vmul.f32 %v91, %v94
  %v99 = vmul.f32 %v91, %v95
  %s100 = scalar_lea.vmem %s1, 8
  %v101 = vld [vmem:[%s100] sm:$0xff]
  %103 = vset.pattern.permute.xlu0 0
  %104 = vperm.xlu0 %103, %v101
  %v105 = vpop.permute.xlu0 %104
  %v107 = vmul.f32 %v105, %v94
  %v108 = vmul.f32 %v105, %v95
  %s109 = scalar_lea.vmem %s1, 16
  %v110 = vld [vmem:[%s109] sm:$0xff]
  %112 = vset.pattern.permute.xlu0 0
  %113 = vperm.xlu0 %112, %v110
  %v114 = vpop.permute.xlu0 %113
  %v116 = vmul.f32 %v114, %v94
  %v117 = vmul.f32 %v114, %v95
  %v118 = vlaneseq
  %v119 = vshrl.u32 %v118, 7
  %v120 = vadd.s32 %v119, 8
  %v121 = vadd.s32 %v119, 16
  %v122 = vadd.s32 %v119, 24
  %v123 = vadd.s32 %v119, 32
  %v124 = vadd.s32 %v119, 40
  %v125 = vadd.s32 %v119, 48
  %v126 = vadd.s32 %v119, 56
  %v127 = vadd.s32 %v119, 64
  %v128 = vadd.s32 %v119, 72
  %v129 = vadd.s32 %v119, 80
  %v130 = vadd.s32 %v119, 88
  %v131 = vadd.s32 %v119, 96
  %v132 = vadd.s32 %v119, 104
  %v133 = vadd.s32 %v119, 112
  %v134 = vadd.s32 %v119, 120
  %v135 = vadd.s32 %v119, 128
  %v136 = vadd.s32 %v119, 136
  %v137 = vadd.s32 %v119, 144
  %v138 = vadd.s32 %v119, 152
  %v139 = vadd.s32 %v119, 160
  %v140 = vadd.s32 %v119, 168
  %v141 = vadd.s32 %v119, 176
  %v142 = vadd.s32 %v119, 184
  %v143 = vadd.s32 %v119, 192
  %v144 = vadd.s32 %v119, 200
  %v145 = vadd.s32 %v119, 208
  %v146 = vadd.s32 %v119, 216
  %v147 = vadd.s32 %v119, 224
  %v148 = vadd.s32 %v119, 232
  %v149 = vadd.s32 %v119, 240
  %v150 = vadd.s32 %v119, 248
  %v151 = vlaneseq
  %v152 = vand.u32 %v151, 127
  %v153 = vadd.s32 %v152, 128
  %v154 = vadd.s32 %v119, 1
  %v155 = vadd.s32 %v120, 1
  %v156 = vadd.s32 %v121, 1
  %v157 = vadd.s32 %v122, 1
  %v158 = vadd.s32 %v123, 1
  %v159 = vadd.s32 %v124, 1
  %v160 = vadd.s32 %v125, 1
  %v161 = vadd.s32 %v126, 1
  %v162 = vadd.s32 %v127, 1
  %v163 = vadd.s32 %v128, 1
  %v164 = vadd.s32 %v129, 1
  %v165 = vadd.s32 %v130, 1
  %v166 = vadd.s32 %v131, 1
  %v167 = vadd.s32 %v132, 1
  %v168 = vadd.s32 %v133, 1
  %v169 = vadd.s32 %v134, 1
  %v170 = vadd.s32 %v135, 1
  %v171 = vadd.s32 %v136, 1
  %v172 = vadd.s32 %v137, 1
  %v173 = vadd.s32 %v138, 1
  %v174 = vadd.s32 %v139, 1
  %v175 = vadd.s32 %v140, 1
  %v176 = vadd.s32 %v141, 1
  %v177 = vadd.s32 %v142, 1
  %v178 = vadd.s32 %v143, 1
  %v179 = vadd.s32 %v144, 1
  %v180 = vadd.s32 %v145, 1
  %v181 = vadd.s32 %v146, 1
  %v182 = vadd.s32 %v147, 1
  %v183 = vadd.s32 %v148, 1
  %v184 = vadd.s32 %v149, 1
  %v185 = vadd.s32 %v150, 1
  %vm186 = vcmp.eq.s32.totalorder %v154, %v152
  %vm187 = vcmp.eq.s32.totalorder %v154, %v153
  %vm188 = vcmp.eq.s32.totalorder %v155, %v152
  %vm189 = vcmp.eq.s32.totalorder %v155, %v153
  %vm190 = vcmp.eq.s32.totalorder %v156, %v152
  %vm191 = vcmp.eq.s32.totalorder %v156, %v153
  %vm192 = vcmp.eq.s32.totalorder %v157, %v152
  %vm193 = vcmp.eq.s32.totalorder %v157, %v153
  %vm194 = vcmp.eq.s32.totalorder %v158, %v152
  %vm195 = vcmp.eq.s32.totalorder %v158, %v153
  %vm196 = vcmp.eq.s32.totalorder %v159, %v152
  %vm197 = vcmp.eq.s32.totalorder %v159, %v153
  %vm198 = vcmp.eq.s32.totalorder %v160, %v152
  %vm199 = vcmp.eq.s32.totalorder %v160, %v153
  %vm200 = vcmp.eq.s32.totalorder %v161, %v152
  %vm201 = vcmp.eq.s32.totalorder %v161, %v153
  %vm202 = vcmp.eq.s32.totalorder %v162, %v152
  %vm203 = vcmp.eq.s32.totalorder %v162, %v153
  %vm204 = vcmp.eq.s32.totalorder %v163, %v152
  %vm205 = vcmp.eq.s32.totalorder %v163, %v153
  %vm206 = vcmp.eq.s32.totalorder %v164, %v152
  %vm207 = vcmp.eq.s32.totalorder %v164, %v153
  %vm208 = vcmp.eq.s32.totalorder %v165, %v152
  %vm209 = vcmp.eq.s32.totalorder %v165, %v153
  %vm210 = vcmp.eq.s32.totalorder %v166, %v152
  %vm211 = vcmp.eq.s32.totalorder %v166, %v153
  %vm212 = vcmp.eq.s32.totalorder %v167, %v152
  %vm213 = vcmp.eq.s32.totalorder %v167, %v153
  %vm214 = vcmp.eq.s32.totalorder %v168, %v152
  %vm215 = vcmp.eq.s32.totalorder %v168, %v153
  %vm216 = vcmp.eq.s32.totalorder %v169, %v152
  %vm217 = vcmp.eq.s32.totalorder %v169, %v153
  %vm218 = vcmp.eq.s32.totalorder %v170, %v152
  %vm219 = vcmp.eq.s32.totalorder %v170, %v153
  %vm220 = vcmp.eq.s32.totalorder %v171, %v152
  %vm221 = vcmp.eq.s32.totalorder %v171, %v153
  %vm222 = vcmp.eq.s32.totalorder %v172, %v152
  %vm223 = vcmp.eq.s32.totalorder %v172, %v153
  %vm224 = vcmp.eq.s32.totalorder %v173, %v152
  %vm225 = vcmp.eq.s32.totalorder %v173, %v153
  %vm226 = vcmp.eq.s32.totalorder %v174, %v152
  %vm227 = vcmp.eq.s32.totalorder %v174, %v153
  %vm228 = vcmp.eq.s32.totalorder %v175, %v152
  %vm229 = vcmp.eq.s32.totalorder %v175, %v153
  %vm230 = vcmp.eq.s32.totalorder %v176, %v152
  %vm231 = vcmp.eq.s32.totalorder %v176, %v153
  %vm232 = vcmp.eq.s32.totalorder %v177, %v152
  %vm233 = vcmp.eq.s32.totalorder %v177, %v153
  %vm234 = vcmp.eq.s32.totalorder %v178, %v152
  %vm235 = vcmp.eq.s32.totalorder %v178, %v153
  %vm236 = vcmp.eq.s32.totalorder %v179, %v152
  %vm237 = vcmp.eq.s32.totalorder %v179, %v153
  %vm238 = vcmp.eq.s32.totalorder %v180, %v152
  %vm239 = vcmp.eq.s32.totalorder %v180, %v153
  %vm240 = vcmp.eq.s32.totalorder %v181, %v152
  %vm241 = vcmp.eq.s32.totalorder %v181, %v153
  %vm242 = vcmp.eq.s32.totalorder %v182, %v152
  %vm243 = vcmp.eq.s32.totalorder %v182, %v153
  %vm244 = vcmp.eq.s32.totalorder %v183, %v152
  %vm245 = vcmp.eq.s32.totalorder %v183, %v153
  %vm246 = vcmp.eq.s32.totalorder %v184, %v152
  %vm247 = vcmp.eq.s32.totalorder %v184, %v153
  %vm248 = vcmp.eq.s32.totalorder %v185, %v152
  %vm249 = vcmp.eq.s32.totalorder %v185, %v153
  %v250 = vsel %vm186, 1.0, 0.0
  %v251 = vsel %vm187, 1.0, 0.0
  %v252 = vsel %vm188, 1.0, 0.0
  %v253 = vsel %vm189, 1.0, 0.0
  %v254 = vsel %vm190, 1.0, 0.0
  %v255 = vsel %vm191, 1.0, 0.0
  %v256 = vsel %vm192, 1.0, 0.0
  %v257 = vsel %vm193, 1.0, 0.0
  %v258 = vsel %vm194, 1.0, 0.0
  %v259 = vsel %vm195, 1.0, 0.0
  %v260 = vsel %vm196, 1.0, 0.0
  %v261 = vsel %vm197, 1.0, 0.0
  %v262 = vsel %vm198, 1.0, 0.0
  %v263 = vsel %vm199, 1.0, 0.0
  %v264 = vsel %vm200, 1.0, 0.0
  %v265 = vsel %vm201, 1.0, 0.0
  %v266 = vsel %vm202, 1.0, 0.0
  %v267 = vsel %vm203, 1.0, 0.0
  %v268 = vsel %vm204, 1.0, 0.0
  %v269 = vsel %vm205, 1.0, 0.0
  %v270 = vsel %vm206, 1.0, 0.0
  %v271 = vsel %vm207, 1.0, 0.0
  %v272 = vsel %vm208, 1.0, 0.0
  %v273 = vsel %vm209, 1.0, 0.0
  %v274 = vsel %vm210, 1.0, 0.0
  %v275 = vsel %vm211, 1.0, 0.0
  %v276 = vsel %vm212, 1.0, 0.0
  %v277 = vsel %vm213, 1.0, 0.0
  %v278 = vsel %vm214, 1.0, 0.0
  %v279 = vsel %vm215, 1.0, 0.0
  %v280 = vsel %vm216, 1.0, 0.0
  %v281 = vsel %vm217, 1.0, 0.0
  %v282 = vsel %vm218, 1.0, 0.0
  %v283 = vsel %vm219, 1.0, 0.0
  %v284 = vsel %vm220, 1.0, 0.0
  %v285 = vsel %vm221, 1.0, 0.0
  %v286 = vsel %vm222, 1.0, 0.0
  %v287 = vsel %vm223, 1.0, 0.0
  %v288 = vsel %vm224, 1.0, 0.0
  %v289 = vsel %vm225, 1.0, 0.0
  %v290 = vsel %vm226, 1.0, 0.0
  %v291 = vsel %vm227, 1.0, 0.0
  %v292 = vsel %vm228, 1.0, 0.0
  %v293 = vsel %vm229, 1.0, 0.0
  %v294 = vsel %vm230, 1.0, 0.0
  %v295 = vsel %vm231, 1.0, 0.0
  %v296 = vsel %vm232, 1.0, 0.0
  %v297 = vsel %vm233, 1.0, 0.0
  %v298 = vsel %vm234, 1.0, 0.0
  %v299 = vsel %vm235, 1.0, 0.0
  %v300 = vsel %vm236, 1.0, 0.0
  %v301 = vsel %vm237, 1.0, 0.0
  %v302 = vsel %vm238, 1.0, 0.0
  %v303 = vsel %vm239, 1.0, 0.0
  %v304 = vsel %vm240, 1.0, 0.0
  %v305 = vsel %vm241, 1.0, 0.0
  %v306 = vsel %vm242, 1.0, 0.0
  %v307 = vsel %vm243, 1.0, 0.0
  %v308 = vsel %vm244, 1.0, 0.0
  %v309 = vsel %vm245, 1.0, 0.0
  %v310 = vsel %vm246, 1.0, 0.0
  %v311 = vsel %vm247, 1.0, 0.0
  %v312 = vsel %vm248, 1.0, 0.0
  %v313 = vsel %vm249, 1.0, 0.0
  %314 = vmatpush.msra.mxu0 %v280
  %315 = vmatpush.msra.mxu0 %v278
  %316 = vmatpush.msra.mxu0 %v276
  %317 = vmatpush.msra.mxu0 %v274
  %318 = vmatpush.msra.mxu0 %v272
  %319 = vmatpush.msra.mxu0 %v270
  %320 = vmatpush.msra.mxu0 %v268
  %321 = vmatpush.msra.mxu0 %v266
  %322 = vmatpush.msra.mxu0 %v264
  %323 = vmatpush.msra.mxu0 %v262
  %324 = vmatpush.msra.mxu0 %v260
  %325 = vmatpush.msra.mxu0 %v258
  %326 = vmatpush.msra.mxu0 %v256
  %327 = vmatpush.msra.mxu0 %v254
  %328 = vmatpush.msra.mxu0 %v252
  %329 = vmatpush.msra.mxu0 %v250
  %330 = vmatmul.f32.gmra.mxu0 %v98
  %v331 = vpop.f32.mrf.mxu0
  %v332 = vadd.f32 %v107, %v331
  %333 = vdwg.mxu0
  %334 = vmatpush.msra.mxu0 %v312
  %335 = vmatpush.msra.mxu0 %v310
  %336 = vmatpush.msra.mxu0 %v308
  %337 = vmatpush.msra.mxu0 %v306
  %338 = vmatpush.msra.mxu0 %v304
  %339 = vmatpush.msra.mxu0 %v302
  %340 = vmatpush.msra.mxu0 %v300
  %341 = vmatpush.msra.mxu0 %v298
  %342 = vmatpush.msra.mxu0 %v296
  %343 = vmatpush.msra.mxu0 %v294
  %344 = vmatpush.msra.mxu0 %v292
  %345 = vmatpush.msra.mxu0 %v290
  %346 = vmatpush.msra.mxu0 %v288
  %347 = vmatpush.msra.mxu0 %v286
  %348 = vmatpush.msra.mxu0 %v284
  %349 = vmatpush.msra.mxu0 %v282
  %350 = vmatmul.f32.gmra.mxu0 %v99
  %v351 = vpop.f32.mrf.mxu0
  %v352 = vadd.f32 %v332, %v351
  %353 = vdwg.mxu0
  %354 = vmatpush.msra.mxu0 %v281
  %355 = vmatpush.msra.mxu0 %v279
  %356 = vmatpush.msra.mxu0 %v277
  %357 = vmatpush.msra.mxu0 %v275
  %358 = vmatpush.msra.mxu0 %v273
  %359 = vmatpush.msra.mxu0 %v271
  %360 = vmatpush.msra.mxu0 %v269
  %361 = vmatpush.msra.mxu0 %v267
  %362 = vmatpush.msra.mxu0 %v265
  %363 = vmatpush.msra.mxu0 %v263
  %364 = vmatpush.msra.mxu0 %v261
  %365 = vmatpush.msra.mxu0 %v259
  %366 = vmatpush.msra.mxu0 %v257
  %367 = vmatpush.msra.mxu0 %v255
  %368 = vmatpush.msra.mxu0 %v253
  %369 = vmatpush.msra.mxu0 %v251
  %370 = vmatmul.f32.gmra.mxu0 %v98
  %v371 = vpop.f32.mrf.mxu0
  %v372 = vadd.f32 %v108, %v371
  %373 = vdwg.mxu0
  %374 = vmatpush.msra.mxu0 %v313
  %375 = vmatpush.msra.mxu0 %v311
  %376 = vmatpush.msra.mxu0 %v309
  %377 = vmatpush.msra.mxu0 %v307
  %378 = vmatpush.msra.mxu0 %v305
  %379 = vmatpush.msra.mxu0 %v303
  %380 = vmatpush.msra.mxu0 %v301
  %381 = vmatpush.msra.mxu0 %v299
  %382 = vmatpush.msra.mxu0 %v297
  %383 = vmatpush.msra.mxu0 %v295
  %384 = vmatpush.msra.mxu0 %v293
  %385 = vmatpush.msra.mxu0 %v291
  %386 = vmatpush.msra.mxu0 %v289
  %387 = vmatpush.msra.mxu0 %v287
  %388 = vmatpush.msra.mxu0 %v285
  %389 = vmatpush.msra.mxu0 %v283
  %390 = vmatmul.f32.gmra.mxu0 %v99
  %v391 = vpop.f32.mrf.mxu0
  %v392 = vadd.f32 %v372, %v391
  %393 = vdwg.mxu0
  %v394 = vadd.s32 %v152, 1
  %v395 = vadd.s32 %v153, 1
  %vm396 = vcmp.eq.s32.totalorder %v119, %v394
  %vm397 = vcmp.eq.s32.totalorder %v119, %v395
  %vm398 = vcmp.eq.s32.totalorder %v120, %v394
  %vm399 = vcmp.eq.s32.totalorder %v120, %v395
  %vm400 = vcmp.eq.s32.totalorder %v121, %v394
  %vm401 = vcmp.eq.s32.totalorder %v121, %v395
  %vm402 = vcmp.eq.s32.totalorder %v122, %v394
  %vm403 = vcmp.eq.s32.totalorder %v122, %v395
  %vm404 = vcmp.eq.s32.totalorder %v123, %v394
  %vm405 = vcmp.eq.s32.totalorder %v123, %v395
  %vm406 = vcmp.eq.s32.totalorder %v124, %v394
  %vm407 = vcmp.eq.s32.totalorder %v124, %v395
  %vm408 = vcmp.eq.s32.totalorder %v125, %v394
  %vm409 = vcmp.eq.s32.totalorder %v125, %v395
  %vm410 = vcmp.eq.s32.totalorder %v126, %v394
  %vm411 = vcmp.eq.s32.totalorder %v126, %v395
  %vm412 = vcmp.eq.s32.totalorder %v127, %v394
  %vm413 = vcmp.eq.s32.totalorder %v127, %v395
  %vm414 = vcmp.eq.s32.totalorder %v128, %v394
  %vm415 = vcmp.eq.s32.totalorder %v128, %v395
  %vm416 = vcmp.eq.s32.totalorder %v129, %v394
  %vm417 = vcmp.eq.s32.totalorder %v129, %v395
  %vm418 = vcmp.eq.s32.totalorder %v130, %v394
  %vm419 = vcmp.eq.s32.totalorder %v130, %v395
  %vm420 = vcmp.eq.s32.totalorder %v131, %v394
  %vm421 = vcmp.eq.s32.totalorder %v131, %v395
  %vm422 = vcmp.eq.s32.totalorder %v132, %v394
  %vm423 = vcmp.eq.s32.totalorder %v132, %v395
  %vm424 = vcmp.eq.s32.totalorder %v133, %v394
  %vm425 = vcmp.eq.s32.totalorder %v133, %v395
  %vm426 = vcmp.eq.s32.totalorder %v134, %v394
  %vm427 = vcmp.eq.s32.totalorder %v134, %v395
  %vm428 = vcmp.eq.s32.totalorder %v135, %v394
  %vm429 = vcmp.eq.s32.totalorder %v135, %v395
  %vm430 = vcmp.eq.s32.totalorder %v136, %v394
  %vm431 = vcmp.eq.s32.totalorder %v136, %v395
  %vm432 = vcmp.eq.s32.totalorder %v137, %v394
  %vm433 = vcmp.eq.s32.totalorder %v137, %v395
  %vm434 = vcmp.eq.s32.totalorder %v138, %v394
  %vm435 = vcmp.eq.s32.totalorder %v138, %v395
  %vm436 = vcmp.eq.s32.totalorder %v139, %v394
  %vm437 = vcmp.eq.s32.totalorder %v139, %v395
  %vm438 = vcmp.eq.s32.totalorder %v140, %v394
  %vm439 = vcmp.eq.s32.totalorder %v140, %v395
  %vm440 = vcmp.eq.s32.totalorder %v141, %v394
  %vm441 = vcmp.eq.s32.totalorder %v141, %v395
  %vm442 = vcmp.eq.s32.totalorder %v142, %v394
  %vm443 = vcmp.eq.s32.totalorder %v142, %v395
  %vm444 = vcmp.eq.s32.totalorder %v143, %v394
  %vm445 = vcmp.eq.s32.totalorder %v143, %v395
  %vm446 = vcmp.eq.s32.totalorder %v144, %v394
  %vm447 = vcmp.eq.s32.totalorder %v144, %v395
  %vm448 = vcmp.eq.s32.totalorder %v145, %v394
  %vm449 = vcmp.eq.s32.totalorder %v145, %v395
  %vm450 = vcmp.eq.s32.totalorder %v146, %v394
  %vm451 = vcmp.eq.s32.totalorder %v146, %v395
  %vm452 = vcmp.eq.s32.totalorder %v147, %v394
  %vm453 = vcmp.eq.s32.totalorder %v147, %v395
  %vm454 = vcmp.eq.s32.totalorder %v148, %v394
  %vm455 = vcmp.eq.s32.totalorder %v148, %v395
  %vm456 = vcmp.eq.s32.totalorder %v149, %v394
  %vm457 = vcmp.eq.s32.totalorder %v149, %v395
  %vm458 = vcmp.eq.s32.totalorder %v150, %v394
  %vm459 = vcmp.eq.s32.totalorder %v150, %v395
  %v460 = vsel %vm396, 1.0, 0.0
  %v461 = vsel %vm397, 1.0, 0.0
  %v462 = vsel %vm398, 1.0, 0.0
  %v463 = vsel %vm399, 1.0, 0.0
  %v464 = vsel %vm400, 1.0, 0.0
  %v465 = vsel %vm401, 1.0, 0.0
  %v466 = vsel %vm402, 1.0, 0.0
  %v467 = vsel %vm403, 1.0, 0.0
  %v468 = vsel %vm404, 1.0, 0.0
  %v469 = vsel %vm405, 1.0, 0.0
  %v470 = vsel %vm406, 1.0, 0.0
  %v471 = vsel %vm407, 1.0, 0.0
  %v472 = vsel %vm408, 1.0, 0.0
  %v473 = vsel %vm409, 1.0, 0.0
  %v474 = vsel %vm410, 1.0, 0.0
  %v475 = vsel %vm411, 1.0, 0.0
  %v476 = vsel %vm412, 1.0, 0.0
  %v477 = vsel %vm413, 1.0, 0.0
  %v478 = vsel %vm414, 1.0, 0.0
  %v479 = vsel %vm415, 1.0, 0.0
  %v480 = vsel %vm416, 1.0, 0.0
  %v481 = vsel %vm417, 1.0, 0.0
  %v482 = vsel %vm418, 1.0, 0.0
  %v483 = vsel %vm419, 1.0, 0.0
  %v484 = vsel %vm420, 1.0, 0.0
  %v485 = vsel %vm421, 1.0, 0.0
  %v486 = vsel %vm422, 1.0, 0.0
  %v487 = vsel %vm423, 1.0, 0.0
  %v488 = vsel %vm424, 1.0, 0.0
  %v489 = vsel %vm425, 1.0, 0.0
  %v490 = vsel %vm426, 1.0, 0.0
  %v491 = vsel %vm427, 1.0, 0.0
  %v492 = vsel %vm428, 1.0, 0.0
  %v493 = vsel %vm429, 1.0, 0.0
  %v494 = vsel %vm430, 1.0, 0.0
  %v495 = vsel %vm431, 1.0, 0.0
  %v496 = vsel %vm432, 1.0, 0.0
  %v497 = vsel %vm433, 1.0, 0.0
  %v498 = vsel %vm434, 1.0, 0.0
  %v499 = vsel %vm435, 1.0, 0.0
  %v500 = vsel %vm436, 1.0, 0.0
  %v501 = vsel %vm437, 1.0, 0.0
  %v502 = vsel %vm438, 1.0, 0.0
  %v503 = vsel %vm439, 1.0, 0.0
  %v504 = vsel %vm440, 1.0, 0.0
  %v505 = vsel %vm441, 1.0, 0.0
  %v506 = vsel %vm442, 1.0, 0.0
  %v507 = vsel %vm443, 1.0, 0.0
  %v508 = vsel %vm444, 1.0, 0.0
  %v509 = vsel %vm445, 1.0, 0.0
  %v510 = vsel %vm446, 1.0, 0.0
  %v511 = vsel %vm447, 1.0, 0.0
  %v512 = vsel %vm448, 1.0, 0.0
  %v513 = vsel %vm449, 1.0, 0.0
  %v514 = vsel %vm450, 1.0, 0.0
  %v515 = vsel %vm451, 1.0, 0.0
  %v516 = vsel %vm452, 1.0, 0.0
  %v517 = vsel %vm453, 1.0, 0.0
  %v518 = vsel %vm454, 1.0, 0.0
  %v519 = vsel %vm455, 1.0, 0.0
  %v520 = vsel %vm456, 1.0, 0.0
  %v521 = vsel %vm457, 1.0, 0.0
  %v522 = vsel %vm458, 1.0, 0.0
  %v523 = vsel %vm459, 1.0, 0.0
  %524 = vmatpush.msra.mxu0 %v490
  %525 = vmatpush.msra.mxu0 %v488
  %526 = vmatpush.msra.mxu0 %v486
  %527 = vmatpush.msra.mxu0 %v484
  %528 = vmatpush.msra.mxu0 %v482
  %529 = vmatpush.msra.mxu0 %v480
  %530 = vmatpush.msra.mxu0 %v478
  %531 = vmatpush.msra.mxu0 %v476
  %532 = vmatpush.msra.mxu0 %v474
  %533 = vmatpush.msra.mxu0 %v472
  %534 = vmatpush.msra.mxu0 %v470
  %535 = vmatpush.msra.mxu0 %v468
  %536 = vmatpush.msra.mxu0 %v466
  %537 = vmatpush.msra.mxu0 %v464
  %538 = vmatpush.msra.mxu0 %v462
  %539 = vmatpush.msra.mxu0 %v460
  %540 = vmatmul.f32.gmra.mxu0 %v116
  %v541 = vpop.f32.mrf.mxu0
  %v542 = vadd.f32 0.0, %v541
  %543 = vdwg.mxu0
  %544 = vmatpush.msra.mxu0 %v522
  %545 = vmatpush.msra.mxu0 %v520
  %546 = vmatpush.msra.mxu0 %v518
  %547 = vmatpush.msra.mxu0 %v516
  %548 = vmatpush.msra.mxu0 %v514
  %549 = vmatpush.msra.mxu0 %v512
  %550 = vmatpush.msra.mxu0 %v510
  %551 = vmatpush.msra.mxu0 %v508
  %552 = vmatpush.msra.mxu0 %v506
  %553 = vmatpush.msra.mxu0 %v504
  %554 = vmatpush.msra.mxu0 %v502
  %555 = vmatpush.msra.mxu0 %v500
  %556 = vmatpush.msra.mxu0 %v498
  %557 = vmatpush.msra.mxu0 %v496
  %558 = vmatpush.msra.mxu0 %v494
  %559 = vmatpush.msra.mxu0 %v492
  %560 = vmatmul.f32.gmra.mxu0 %v117
  %v561 = vpop.f32.mrf.mxu0
  %v562 = vadd.f32 %v542, %v561
  %563 = vdwg.mxu0
  %564 = vmatpush.msra.mxu0 %v491
  %565 = vmatpush.msra.mxu0 %v489
  %566 = vmatpush.msra.mxu0 %v487
  %567 = vmatpush.msra.mxu0 %v485
  %568 = vmatpush.msra.mxu0 %v483
  %569 = vmatpush.msra.mxu0 %v481
  %570 = vmatpush.msra.mxu0 %v479
  %571 = vmatpush.msra.mxu0 %v477
  %572 = vmatpush.msra.mxu0 %v475
  %573 = vmatpush.msra.mxu0 %v473
  %574 = vmatpush.msra.mxu0 %v471
  %575 = vmatpush.msra.mxu0 %v469
  %576 = vmatpush.msra.mxu0 %v467
  %577 = vmatpush.msra.mxu0 %v465
  %578 = vmatpush.msra.mxu0 %v463
  %579 = vmatpush.msra.mxu0 %v461
  %580 = vmatmul.f32.gmra.mxu0 %v116
  %v581 = vpop.f32.mrf.mxu0
  %v582 = vadd.f32 0.0, %v581
  %583 = vdwg.mxu0
  %584 = vmatpush.msra.mxu0 %v523
  %585 = vmatpush.msra.mxu0 %v521
  %586 = vmatpush.msra.mxu0 %v519
  %587 = vmatpush.msra.mxu0 %v517
  %588 = vmatpush.msra.mxu0 %v515
  %589 = vmatpush.msra.mxu0 %v513
  %590 = vmatpush.msra.mxu0 %v511
  %591 = vmatpush.msra.mxu0 %v509
  %592 = vmatpush.msra.mxu0 %v507
  %593 = vmatpush.msra.mxu0 %v505
  %594 = vmatpush.msra.mxu0 %v503
  %595 = vmatpush.msra.mxu0 %v501
  %596 = vmatpush.msra.mxu0 %v499
  %597 = vmatpush.msra.mxu0 %v497
  %598 = vmatpush.msra.mxu0 %v495
  %599 = vmatpush.msra.mxu0 %v493
  %600 = vmatmul.f32.gmra.mxu0 %v117
  %v601 = vpop.f32.mrf.mxu0
  %v602 = vadd.f32 %v582, %v601
  %603 = vdwg.mxu0
  %v604 = vadd.f32 %v352, %v562
  %v605 = vadd.f32 %v392, %v602
  %v606 = vld [vmem:[%s2] sm:$0xff]
  %608 = vset.pattern.permute.xlu0 0
  %609 = vperm.xlu0 %608, %v606
  %v610 = vpop.permute.xlu0 %609
  %v612 = vadd.f32 %v604, %v610
  %v613 = vadd.f32 %v605, %v610
  %v614 = vmax.f32 %v612, 0.0
  %v615 = vmax.f32 %v613, 0.0
  %616 = vmatpush.msra.mxu0 %v490
  %617 = vmatpush.msra.mxu0 %v488
  %618 = vmatpush.msra.mxu0 %v486
  %619 = vmatpush.msra.mxu0 %v484
  %620 = vmatpush.msra.mxu0 %v482
  %621 = vmatpush.msra.mxu0 %v480
  %622 = vmatpush.msra.mxu0 %v478
  %623 = vmatpush.msra.mxu0 %v476
  %624 = vmatpush.msra.mxu0 %v474
  %625 = vmatpush.msra.mxu0 %v472
  %626 = vmatpush.msra.mxu0 %v470
  %627 = vmatpush.msra.mxu0 %v468
  %628 = vmatpush.msra.mxu0 %v466
  %629 = vmatpush.msra.mxu0 %v464
  %630 = vmatpush.msra.mxu0 %v462
  %631 = vmatpush.msra.mxu0 %v460
  %632 = vmatmul.f32.gmra.mxu0 %v614
  %v633 = vpop.f32.mrf.mxu0
  %v634 = vadd.f32 0.0, %v633
  %635 = vdwg.mxu0
  %636 = vmatpush.msra.mxu0 %v522
  %637 = vmatpush.msra.mxu0 %v520
  %638 = vmatpush.msra.mxu0 %v518
  %639 = vmatpush.msra.mxu0 %v516
  %640 = vmatpush.msra.mxu0 %v514
  %641 = vmatpush.msra.mxu0 %v512
  %642 = vmatpush.msra.mxu0 %v510
  %643 = vmatpush.msra.mxu0 %v508
  %644 = vmatpush.msra.mxu0 %v506
  %645 = vmatpush.msra.mxu0 %v504
  %646 = vmatpush.msra.mxu0 %v502
  %647 = vmatpush.msra.mxu0 %v500
  %648 = vmatpush.msra.mxu0 %v498
  %649 = vmatpush.msra.mxu0 %v496
  %650 = vmatpush.msra.mxu0 %v494
  %651 = vmatpush.msra.mxu0 %v492
  %652 = vmatmul.f32.gmra.mxu0 %v615
  %v653 = vpop.f32.mrf.mxu0
  %v654 = vadd.f32 %v634, %v653
  %655 = vdwg.mxu0
  %656 = vmatpush.msra.mxu0 %v491
  %657 = vmatpush.msra.mxu0 %v489
  %658 = vmatpush.msra.mxu0 %v487
  %659 = vmatpush.msra.mxu0 %v485
  %660 = vmatpush.msra.mxu0 %v483
  %661 = vmatpush.msra.mxu0 %v481
  %662 = vmatpush.msra.mxu0 %v479
  %663 = vmatpush.msra.mxu0 %v477
  %664 = vmatpush.msra.mxu0 %v475
  %665 = vmatpush.msra.mxu0 %v473
  %666 = vmatpush.msra.mxu0 %v471
  %667 = vmatpush.msra.mxu0 %v469
  %668 = vmatpush.msra.mxu0 %v467
  %669 = vmatpush.msra.mxu0 %v465
  %670 = vmatpush.msra.mxu0 %v463
  %671 = vmatpush.msra.mxu0 %v461
  %672 = vmatmul.f32.gmra.mxu0 %v614
  %v673 = vpop.f32.mrf.mxu0
  %v674 = vadd.f32 0.0, %v673
  %675 = vdwg.mxu0
  %676 = vmatpush.msra.mxu0 %v523
  %677 = vmatpush.msra.mxu0 %v521
  %678 = vmatpush.msra.mxu0 %v519
  %679 = vmatpush.msra.mxu0 %v517
  %680 = vmatpush.msra.mxu0 %v515
  %681 = vmatpush.msra.mxu0 %v513
  %682 = vmatpush.msra.mxu0 %v511
  %683 = vmatpush.msra.mxu0 %v509
  %684 = vmatpush.msra.mxu0 %v507
  %685 = vmatpush.msra.mxu0 %v505
  %686 = vmatpush.msra.mxu0 %v503
  %687 = vmatpush.msra.mxu0 %v501
  %688 = vmatpush.msra.mxu0 %v499
  %689 = vmatpush.msra.mxu0 %v497
  %690 = vmatpush.msra.mxu0 %v495
  %691 = vmatpush.msra.mxu0 %v493
  %692 = vmatmul.f32.gmra.mxu0 %v615
  %v693 = vpop.f32.mrf.mxu0
  %v694 = vadd.f32 %v674, %v693
  %695 = vdwg.mxu0
  %v696 = vmax.f32 %v614, %v654
  %v697 = vmax.f32 %v615, %v694
  %v698 = vmul.u32 %v152, 2
  %vm699 = vcmp.eq.s32.totalorder %v119, %v698
  %vm700 = vcmp.eq.s32.totalorder %v120, %v698
  %vm701 = vcmp.eq.s32.totalorder %v121, %v698
  %vm702 = vcmp.eq.s32.totalorder %v122, %v698
  %vm703 = vcmp.eq.s32.totalorder %v123, %v698
  %vm704 = vcmp.eq.s32.totalorder %v124, %v698
  %vm705 = vcmp.eq.s32.totalorder %v125, %v698
  %vm706 = vcmp.eq.s32.totalorder %v126, %v698
  %vm707 = vcmp.eq.s32.totalorder %v127, %v698
  %vm708 = vcmp.eq.s32.totalorder %v128, %v698
  %vm709 = vcmp.eq.s32.totalorder %v129, %v698
  %vm710 = vcmp.eq.s32.totalorder %v130, %v698
  %vm711 = vcmp.eq.s32.totalorder %v131, %v698
  %vm712 = vcmp.eq.s32.totalorder %v132, %v698
  %vm713 = vcmp.eq.s32.totalorder %v133, %v698
  %vm714 = vcmp.eq.s32.totalorder %v134, %v698
  %vm715 = vcmp.eq.s32.totalorder %v135, %v698
  %vm716 = vcmp.eq.s32.totalorder %v136, %v698
  %vm717 = vcmp.eq.s32.totalorder %v137, %v698
  %vm718 = vcmp.eq.s32.totalorder %v138, %v698
  %vm719 = vcmp.eq.s32.totalorder %v139, %v698
  %vm720 = vcmp.eq.s32.totalorder %v140, %v698
  %vm721 = vcmp.eq.s32.totalorder %v141, %v698
  %vm722 = vcmp.eq.s32.totalorder %v142, %v698
  %vm723 = vcmp.eq.s32.totalorder %v143, %v698
  %vm724 = vcmp.eq.s32.totalorder %v144, %v698
  %vm725 = vcmp.eq.s32.totalorder %v145, %v698
  %vm726 = vcmp.eq.s32.totalorder %v146, %v698
  %vm727 = vcmp.eq.s32.totalorder %v147, %v698
  %vm728 = vcmp.eq.s32.totalorder %v148, %v698
  %vm729 = vcmp.eq.s32.totalorder %v149, %v698
  %vm730 = vcmp.eq.s32.totalorder %v150, %v698
  %v731 = vsel %vm699, 1.0, 0.0
  %v732 = vsel %vm700, 1.0, 0.0
  %v733 = vsel %vm701, 1.0, 0.0
  %v734 = vsel %vm702, 1.0, 0.0
  %v735 = vsel %vm703, 1.0, 0.0
  %v736 = vsel %vm704, 1.0, 0.0
  %v737 = vsel %vm705, 1.0, 0.0
  %v738 = vsel %vm706, 1.0, 0.0
  %v739 = vsel %vm707, 1.0, 0.0
  %v740 = vsel %vm708, 1.0, 0.0
  %v741 = vsel %vm709, 1.0, 0.0
  %v742 = vsel %vm710, 1.0, 0.0
  %v743 = vsel %vm711, 1.0, 0.0
  %v744 = vsel %vm712, 1.0, 0.0
  %v745 = vsel %vm713, 1.0, 0.0
  %v746 = vsel %vm714, 1.0, 0.0
  %v747 = vsel %vm715, 1.0, 0.0
  %v748 = vsel %vm716, 1.0, 0.0
  %v749 = vsel %vm717, 1.0, 0.0
  %v750 = vsel %vm718, 1.0, 0.0
  %v751 = vsel %vm719, 1.0, 0.0
  %v752 = vsel %vm720, 1.0, 0.0
  %v753 = vsel %vm721, 1.0, 0.0
  %v754 = vsel %vm722, 1.0, 0.0
  %v755 = vsel %vm723, 1.0, 0.0
  %v756 = vsel %vm724, 1.0, 0.0
  %v757 = vsel %vm725, 1.0, 0.0
  %v758 = vsel %vm726, 1.0, 0.0
  %v759 = vsel %vm727, 1.0, 0.0
  %v760 = vsel %vm728, 1.0, 0.0
  %v761 = vsel %vm729, 1.0, 0.0
  %v762 = vsel %vm730, 1.0, 0.0
  %763 = vmatpush.msra.mxu0 %v746
  %764 = vmatpush.msra.mxu0 %v745
  %765 = vmatpush.msra.mxu0 %v744
  %766 = vmatpush.msra.mxu0 %v743
  %767 = vmatpush.msra.mxu0 %v742
  %768 = vmatpush.msra.mxu0 %v741
  %769 = vmatpush.msra.mxu0 %v740
  %770 = vmatpush.msra.mxu0 %v739
  %771 = vmatpush.msra.mxu0 %v738
  %772 = vmatpush.msra.mxu0 %v737
  %773 = vmatpush.msra.mxu0 %v736
  %774 = vmatpush.msra.mxu0 %v735
  %775 = vmatpush.msra.mxu0 %v734
  %776 = vmatpush.msra.mxu0 %v733
  %777 = vmatpush.msra.mxu0 %v732
  %778 = vmatpush.msra.mxu0 %v731
  %779 = vmatmul.f32.gmra.mxu0 %v696
  %v780 = vpop.f32.mrf.mxu0
  %v781 = vadd.f32 0.0, %v780
  %782 = vdwg.mxu0
  %783 = vmatpush.msra.mxu0 %v762
  %784 = vmatpush.msra.mxu0 %v761
  %785 = vmatpush.msra.mxu0 %v760
  %786 = vmatpush.msra.mxu0 %v759
  %787 = vmatpush.msra.mxu0 %v758
  %788 = vmatpush.msra.mxu0 %v757
  %789 = vmatpush.msra.mxu0 %v756
  %790 = vmatpush.msra.mxu0 %v755
  %791 = vmatpush.msra.mxu0 %v754
  %792 = vmatpush.msra.mxu0 %v753
  %793 = vmatpush.msra.mxu0 %v752
  %794 = vmatpush.msra.mxu0 %v751
  %795 = vmatpush.msra.mxu0 %v750
  %796 = vmatpush.msra.mxu0 %v749
  %797 = vmatpush.msra.mxu0 %v748
  %798 = vmatpush.msra.mxu0 %v747
  %799 = vmatmul.f32.gmra.mxu0 %v697
  %v800 = vpop.f32.mrf.mxu0
  %v801 = vadd.f32 %v781, %v800
  %802 = vdwg.mxu0
  %v803 = vld [vmem:[%s3] sm:$0xff]
  %v804 = vld [vmem:[%s3 + $0x8] sm:$0xf]
  %vm805 = vcmask 64512
  %v807 = vsel %vm805, %v803, 0
  %v810 = vsel %vm805, %v804, 0
  %812 = vmatpush.msra.mxu0 0.0
  %813 = vmatpush.msra.mxu0 0.0
  %814 = vmatpush.msra.mxu0 0.0
  %815 = vmatpush.msra.mxu0 0.0
  %816 = vmatpush.msra.mxu0 0.0
  %817 = vmatpush.msra.mxu0 0.0
  %818 = vmatpush.msra.mxu0 0.0
  %819 = vmatpush.msra.mxu0 0.0
  %820 = vmatpush.msra.mxu0 0.0
  %821 = vmatpush.msra.mxu0 0.0
  %822 = vmatpush.msra.mxu0 0.0
  %823 = vmatpush.msra.mxu0 0.0
  %824 = vmatpush.msra.mxu0 0.0
  %825 = vmatpush.msra.mxu0 0.0
  %826 = vmatpush.msra.mxu0 0.0
  %827 = vmatpush.msra.mxu0 %v801
  %828 = vmatmul.f32.gmra.mxu0 %v807
  %v829 = vpop.f32.mrf.mxu0
  %v830 = vadd.f32 0.0, %v829
  %831 = vmatmul.f32.gmra.mxu0 %v810
  %v832 = vpop.f32.mrf.mxu0
  %v833 = vadd.f32 0.0, %v832
  %834 = vdwg.mxu0
  %s835 = scalar_lea.vmem %s3, 16
  %v836 = vld [vmem:[%s835] sm:$0xff]
  %v837 = vld [vmem:[%s835 + $0x8] sm:$0xf]
  %v839 = vsel %vm805, %v836, 0
  %v842 = vsel %vm805, %v837, 0
  %844 = vmatpush.msra.mxu0 0.0
  %845 = vmatpush.msra.mxu0 0.0
  %846 = vmatpush.msra.mxu0 0.0
  %847 = vmatpush.msra.mxu0 0.0
  %848 = vmatpush.msra.mxu0 0.0
  %849 = vmatpush.msra.mxu0 0.0
  %850 = vmatpush.msra.mxu0 0.0
  %851 = vmatpush.msra.mxu0 0.0
  %852 = vmatpush.msra.mxu0 0.0
  %853 = vmatpush.msra.mxu0 0.0
  %854 = vmatpush.msra.mxu0 0.0
  %855 = vmatpush.msra.mxu0 0.0
  %856 = vmatpush.msra.mxu0 0.0
  %857 = vmatpush.msra.mxu0 0.0
  %858 = vmatpush.msra.mxu0 0.0
  %859 = vmatpush.msra.mxu0 %v801
  %860 = vmatmul.f32.gmra.mxu0 %v839
  %v861 = vpop.f32.mrf.mxu0
  %v862 = vadd.f32 0.0, %v861
  %863 = vmatmul.f32.gmra.mxu0 %v842
  %v864 = vpop.f32.mrf.mxu0
  %v865 = vadd.f32 0.0, %v864
  %866 = vdwg.mxu0
  %s867 = scalar_lea.vmem %s3, 32
  %v868 = vld [vmem:[%s867] sm:$0xff]
  %v869 = vld [vmem:[%s867 + $0x8] sm:$0xf]
  %v871 = vsel %vm805, %v868, 0
  %v874 = vsel %vm805, %v869, 0
  %876 = vmatpush.msra.mxu0 0.0
  %877 = vmatpush.msra.mxu0 0.0
  %878 = vmatpush.msra.mxu0 0.0
  %879 = vmatpush.msra.mxu0 0.0
  %880 = vmatpush.msra.mxu0 0.0
  %881 = vmatpush.msra.mxu0 0.0
  %882 = vmatpush.msra.mxu0 0.0
  %883 = vmatpush.msra.mxu0 0.0
  %884 = vmatpush.msra.mxu0 0.0
  %885 = vmatpush.msra.mxu0 0.0
  %886 = vmatpush.msra.mxu0 0.0
  %887 = vmatpush.msra.mxu0 0.0
  %888 = vmatpush.msra.mxu0 0.0
  %889 = vmatpush.msra.mxu0 0.0
  %890 = vmatpush.msra.mxu0 0.0
  %891 = vmatpush.msra.mxu0 %v801
  %892 = vmatmul.f32.gmra.mxu0 %v871
  %v893 = vpop.f32.mrf.mxu0
  %v894 = vadd.f32 0.0, %v893
  %895 = vmatmul.f32.gmra.mxu0 %v874
  %v896 = vpop.f32.mrf.mxu0
  %v897 = vadd.f32 0.0, %v896
  %898 = vdwg.mxu0
  %899 = vmatpush.msra.mxu0 %v280
  %900 = vmatpush.msra.mxu0 %v278
  %901 = vmatpush.msra.mxu0 %v276
  %902 = vmatpush.msra.mxu0 %v274
  %903 = vmatpush.msra.mxu0 %v272
  %904 = vmatpush.msra.mxu0 %v270
  %905 = vmatpush.msra.mxu0 %v268
  %906 = vmatpush.msra.mxu0 %v266
  %907 = vmatpush.msra.mxu0 %v264
  %908 = vmatpush.msra.mxu0 %v262
  %909 = vmatpush.msra.mxu0 %v260
  %910 = vmatpush.msra.mxu0 %v258
  %911 = vmatpush.msra.mxu0 %v256
  %912 = vmatpush.msra.mxu0 %v254
  %913 = vmatpush.msra.mxu0 %v252
  %914 = vmatpush.msra.mxu0 %v250
  %915 = vmatmul.f32.gmra.mxu0 %v830
  %v916 = vpop.f32.mrf.mxu0
  %v917 = vadd.f32 %v862, %v916
  %918 = vmatmul.f32.gmra.mxu0 %v833
  %v919 = vpop.f32.mrf.mxu0
  %v920 = vadd.f32 %v865, %v919
  %921 = vdwg.mxu0
  %922 = vmatpush.msra.mxu0 %v490
  %923 = vmatpush.msra.mxu0 %v488
  %924 = vmatpush.msra.mxu0 %v486
  %925 = vmatpush.msra.mxu0 %v484
  %926 = vmatpush.msra.mxu0 %v482
  %927 = vmatpush.msra.mxu0 %v480
  %928 = vmatpush.msra.mxu0 %v478
  %929 = vmatpush.msra.mxu0 %v476
  %930 = vmatpush.msra.mxu0 %v474
  %931 = vmatpush.msra.mxu0 %v472
  %932 = vmatpush.msra.mxu0 %v470
  %933 = vmatpush.msra.mxu0 %v468
  %934 = vmatpush.msra.mxu0 %v466
  %935 = vmatpush.msra.mxu0 %v464
  %936 = vmatpush.msra.mxu0 %v462
  %937 = vmatpush.msra.mxu0 %v460
  %938 = vmatmul.f32.gmra.mxu0 %v894
  %v939 = vpop.f32.mrf.mxu0
  %v940 = vadd.f32 0.0, %v939
  %941 = vmatmul.f32.gmra.mxu0 %v897
  %v942 = vpop.f32.mrf.mxu0
  %v943 = vadd.f32 0.0, %v942
  %944 = vdwg.mxu0
  %v945 = vadd.f32 %v917, %v940
  %v946 = vadd.f32 %v920, %v943
  %v947 = vld [vmem:[%s4] sm:$0xff]
  %v948 = vld [vmem:[%s4 + $0x8] sm:$0xf]
  %950 = vset.pattern.permute.xlu0 0
  %951 = vperm.xlu0 %950, %v947
  %v952 = vpop.permute.xlu0 %951
  %955 = vset.pattern.permute.xlu0 0
  %956 = vperm.xlu0 %955, %v948
  %v957 = vpop.permute.xlu0 %956
  %v959 = vadd.f32 %v945, %v952
  %v960 = vadd.f32 %v946, %v957
  %v961 = vmax.f32 %v959, 0.0
  %v962 = vmax.f32 %v960, 0.0
  %v963 = vmul.u32 %v119, 128
  %v964 = vmul.u32 %v120, 128
  %v965 = vmul.u32 %v121, 128
  %v966 = vmul.u32 %v122, 128
  %v967 = vmul.u32 %v123, 128
  %v968 = vmul.u32 %v124, 128
  %v969 = vmul.u32 %v125, 128
  %v970 = vmul.u32 %v126, 128
  %v971 = vmul.u32 %v127, 128
  %v972 = vmul.u32 %v128, 128
  %v973 = vmul.u32 %v129, 128
  %v974 = vmul.u32 %v130, 128
  %v975 = vmul.u32 %v131, 128
  %v976 = vmul.u32 %v132, 128
  %v977 = vmul.u32 %v133, 128
  %v978 = vmul.u32 %v134, 128
  %v979 = vmul.u32 %v135, 128
  %v980 = vmul.u32 %v136, 128
  %v981 = vmul.u32 %v137, 128
  %v982 = vmul.u32 %v138, 128
  %v983 = vmul.u32 %v139, 128
  %v984 = vmul.u32 %v140, 128
  %v985 = vmul.u32 %v141, 128
  %v986 = vmul.u32 %v142, 128
  %v987 = vmul.u32 %v143, 128
  %v988 = vmul.u32 %v144, 128
  %v989 = vmul.u32 %v145, 128
  %v990 = vmul.u32 %v146, 128
  %v991 = vmul.u32 %v147, 128
  %v992 = vmul.u32 %v148, 128
  %v993 = vmul.u32 %v149, 128
  %v994 = vmul.u32 %v150, 128
  %v995 = vmul.u32 %v152, 256
  %vm996 = vcmp.le.s32.totalorder %v963, %v995
  %vm997 = vcmp.le.s32.totalorder %v964, %v995
  %vm998 = vcmp.le.s32.totalorder %v965, %v995
  %vm999 = vcmp.le.s32.totalorder %v966, %v995
  %vm1000 = vcmp.le.s32.totalorder %v967, %v995
  %vm1001 = vcmp.le.s32.totalorder %v968, %v995
  %vm1002 = vcmp.le.s32.totalorder %v969, %v995
  %vm1003 = vcmp.le.s32.totalorder %v970, %v995
  %vm1004 = vcmp.le.s32.totalorder %v971, %v995
  %vm1005 = vcmp.le.s32.totalorder %v972, %v995
  %vm1006 = vcmp.le.s32.totalorder %v973, %v995
  %vm1007 = vcmp.le.s32.totalorder %v974, %v995
  %vm1008 = vcmp.le.s32.totalorder %v975, %v995
  %vm1009 = vcmp.le.s32.totalorder %v976, %v995
  %vm1010 = vcmp.le.s32.totalorder %v977, %v995
  %vm1011 = vcmp.le.s32.totalorder %v978, %v995
  %vm1012 = vcmp.le.s32.totalorder %v979, %v995
  %vm1013 = vcmp.le.s32.totalorder %v980, %v995
  %vm1014 = vcmp.le.s32.totalorder %v981, %v995
  %vm1015 = vcmp.le.s32.totalorder %v982, %v995
  %vm1016 = vcmp.le.s32.totalorder %v983, %v995
  %vm1017 = vcmp.le.s32.totalorder %v984, %v995
  %vm1018 = vcmp.le.s32.totalorder %v985, %v995
  %vm1019 = vcmp.le.s32.totalorder %v986, %v995
  %vm1020 = vcmp.le.s32.totalorder %v987, %v995
  %vm1021 = vcmp.le.s32.totalorder %v988, %v995
  %vm1022 = vcmp.le.s32.totalorder %v989, %v995
  %vm1023 = vcmp.le.s32.totalorder %v990, %v995
  %vm1024 = vcmp.le.s32.totalorder %v991, %v995
  %vm1025 = vcmp.le.s32.totalorder %v992, %v995
  %vm1026 = vcmp.le.s32.totalorder %v993, %v995
  %vm1027 = vcmp.le.s32.totalorder %v994, %v995
  %v1028 = vmul.u32 %v154, 128
  %v1029 = vmul.u32 %v155, 128
  %v1030 = vmul.u32 %v156, 128
  %v1031 = vmul.u32 %v157, 128
  %v1032 = vmul.u32 %v158, 128
  %v1033 = vmul.u32 %v159, 128
  %v1034 = vmul.u32 %v160, 128
  %v1035 = vmul.u32 %v161, 128
  %v1036 = vmul.u32 %v162, 128
  %v1037 = vmul.u32 %v163, 128
  %v1038 = vmul.u32 %v164, 128
  %v1039 = vmul.u32 %v165, 128
  %v1040 = vmul.u32 %v166, 128
  %v1041 = vmul.u32 %v167, 128
  %v1042 = vmul.u32 %v168, 128
  %v1043 = vmul.u32 %v169, 128
  %v1044 = vmul.u32 %v170, 128
  %v1045 = vmul.u32 %v171, 128
  %v1046 = vmul.u32 %v172, 128
  %v1047 = vmul.u32 %v173, 128
  %v1048 = vmul.u32 %v174, 128
  %v1049 = vmul.u32 %v175, 128
  %v1050 = vmul.u32 %v176, 128
  %v1051 = vmul.u32 %v177, 128
  %v1052 = vmul.u32 %v178, 128
  %v1053 = vmul.u32 %v179, 128
  %v1054 = vmul.u32 %v180, 128
  %v1055 = vmul.u32 %v181, 128
  %v1056 = vmul.u32 %v182, 128
  %v1057 = vmul.u32 %v183, 128
  %v1058 = vmul.u32 %v184, 128
  %v1059 = vmul.u32 %v185, 128
  %vm1060 = vcmp.lt.s32.totalorder %v995, %v1028
  %vm1061 = vcmp.lt.s32.totalorder %v995, %v1029
  %vm1062 = vcmp.lt.s32.totalorder %v995, %v1030
  %vm1063 = vcmp.lt.s32.totalorder %v995, %v1031
  %vm1064 = vcmp.lt.s32.totalorder %v995, %v1032
  %vm1065 = vcmp.lt.s32.totalorder %v995, %v1033
  %vm1066 = vcmp.lt.s32.totalorder %v995, %v1034
  %vm1067 = vcmp.lt.s32.totalorder %v995, %v1035
  %vm1068 = vcmp.lt.s32.totalorder %v995, %v1036
  %vm1069 = vcmp.lt.s32.totalorder %v995, %v1037
  %vm1070 = vcmp.lt.s32.totalorder %v995, %v1038
  %vm1071 = vcmp.lt.s32.totalorder %v995, %v1039
  %vm1072 = vcmp.lt.s32.totalorder %v995, %v1040
  %vm1073 = vcmp.lt.s32.totalorder %v995, %v1041
  %vm1074 = vcmp.lt.s32.totalorder %v995, %v1042
  %vm1075 = vcmp.lt.s32.totalorder %v995, %v1043
  %vm1076 = vcmp.lt.s32.totalorder %v995, %v1044
  %vm1077 = vcmp.lt.s32.totalorder %v995, %v1045
  %vm1078 = vcmp.lt.s32.totalorder %v995, %v1046
  %vm1079 = vcmp.lt.s32.totalorder %v995, %v1047
  %vm1080 = vcmp.lt.s32.totalorder %v995, %v1048
  %vm1081 = vcmp.lt.s32.totalorder %v995, %v1049
  %vm1082 = vcmp.lt.s32.totalorder %v995, %v1050
  %vm1083 = vcmp.lt.s32.totalorder %v995, %v1051
  %vm1084 = vcmp.lt.s32.totalorder %v995, %v1052
  %vm1085 = vcmp.lt.s32.totalorder %v995, %v1053
  %vm1086 = vcmp.lt.s32.totalorder %v995, %v1054
  %vm1087 = vcmp.lt.s32.totalorder %v995, %v1055
  %vm1088 = vcmp.lt.s32.totalorder %v995, %v1056
  %vm1089 = vcmp.lt.s32.totalorder %v995, %v1057
  %vm1090 = vcmp.lt.s32.totalorder %v995, %v1058
  %vm1091 = vcmp.lt.s32.totalorder %v995, %v1059
  %vm1092 = vmand %vm996, %vm1060
  %vm1093 = vmand %vm997, %vm1061
  %vm1094 = vmand %vm998, %vm1062
  %vm1095 = vmand %vm999, %vm1063
  %vm1096 = vmand %vm1000, %vm1064
  %vm1097 = vmand %vm1001, %vm1065
  %vm1098 = vmand %vm1002, %vm1066
  %vm1099 = vmand %vm1003, %vm1067
  %vm1100 = vmand %vm1004, %vm1068
  %vm1101 = vmand %vm1005, %vm1069
  %vm1102 = vmand %vm1006, %vm1070
  %vm1103 = vmand %vm1007, %vm1071
  %vm1104 = vmand %vm1008, %vm1072
  %vm1105 = vmand %vm1009, %vm1073
  %vm1106 = vmand %vm1010, %vm1074
  %vm1107 = vmand %vm1011, %vm1075
  %vm1108 = vmand %vm1012, %vm1076
  %vm1109 = vmand %vm1013, %vm1077
  %vm1110 = vmand %vm1014, %vm1078
  %vm1111 = vmand %vm1015, %vm1079
  %vm1112 = vmand %vm1016, %vm1080
  %vm1113 = vmand %vm1017, %vm1081
  %vm1114 = vmand %vm1018, %vm1082
  %vm1115 = vmand %vm1019, %vm1083
  %vm1116 = vmand %vm1020, %vm1084
  %vm1117 = vmand %vm1021, %vm1085
  %vm1118 = vmand %vm1022, %vm1086
  %vm1119 = vmand %vm1023, %vm1087
  %vm1120 = vmand %vm1024, %vm1088
  %vm1121 = vmand %vm1025, %vm1089
  %vm1122 = vmand %vm1026, %vm1090
  %vm1123 = vmand %vm1027, %vm1091
  %v1124 = vsel %vm1092, 1.0, 0.0
  %v1125 = vsel %vm1093, 1.0, 0.0
  %v1126 = vsel %vm1094, 1.0, 0.0
  %v1127 = vsel %vm1095, 1.0, 0.0
  %v1128 = vsel %vm1096, 1.0, 0.0
  %v1129 = vsel %vm1097, 1.0, 0.0
  %v1130 = vsel %vm1098, 1.0, 0.0
  %v1131 = vsel %vm1099, 1.0, 0.0
  %v1132 = vsel %vm1100, 1.0, 0.0
  %v1133 = vsel %vm1101, 1.0, 0.0
  %v1134 = vsel %vm1102, 1.0, 0.0
  %v1135 = vsel %vm1103, 1.0, 0.0
  %v1136 = vsel %vm1104, 1.0, 0.0
  %v1137 = vsel %vm1105, 1.0, 0.0
  %v1138 = vsel %vm1106, 1.0, 0.0
  %v1139 = vsel %vm1107, 1.0, 0.0
  %v1140 = vsel %vm1108, 1.0, 0.0
  %v1141 = vsel %vm1109, 1.0, 0.0
  %v1142 = vsel %vm1110, 1.0, 0.0
  %v1143 = vsel %vm1111, 1.0, 0.0
  %v1144 = vsel %vm1112, 1.0, 0.0
  %v1145 = vsel %vm1113, 1.0, 0.0
  %v1146 = vsel %vm1114, 1.0, 0.0
  %v1147 = vsel %vm1115, 1.0, 0.0
  %v1148 = vsel %vm1116, 1.0, 0.0
  %v1149 = vsel %vm1117, 1.0, 0.0
  %v1150 = vsel %vm1118, 1.0, 0.0
  %v1151 = vsel %vm1119, 1.0, 0.0
  %v1152 = vsel %vm1120, 1.0, 0.0
  %v1153 = vsel %vm1121, 1.0, 0.0
  %v1154 = vsel %vm1122, 1.0, 0.0
  %v1155 = vsel %vm1123, 1.0, 0.0
  %1156 = vmatpush.msra.mxu0 %v1139
  %1157 = vmatpush.msra.mxu0 %v1138
  %1158 = vmatpush.msra.mxu0 %v1137
  %1159 = vmatpush.msra.mxu0 %v1136
  %1160 = vmatpush.msra.mxu0 %v1135
  %1161 = vmatpush.msra.mxu0 %v1134
  %1162 = vmatpush.msra.mxu0 %v1133
  %1163 = vmatpush.msra.mxu0 %v1132
  %1164 = vmatpush.msra.mxu0 %v1131
  %1165 = vmatpush.msra.mxu0 %v1130
  %1166 = vmatpush.msra.mxu0 %v1129
  %1167 = vmatpush.msra.mxu0 %v1128
  %1168 = vmatpush.msra.mxu0 %v1127
  %1169 = vmatpush.msra.mxu0 %v1126
  %1170 = vmatpush.msra.mxu0 %v1125
  %1171 = vmatpush.msra.mxu0 %v1124
  %1172 = vmatmul.f32.gmra.mxu0 %v614
  %v1173 = vpop.f32.mrf.mxu0
  %v1174 = vadd.f32 0.0, %v1173
  %1175 = vdwg.mxu0
  %1176 = vmatpush.msra.mxu0 %v1155
  %1177 = vmatpush.msra.mxu0 %v1154
  %1178 = vmatpush.msra.mxu0 %v1153
  %1179 = vmatpush.msra.mxu0 %v1152
  %1180 = vmatpush.msra.mxu0 %v1151
  %1181 = vmatpush.msra.mxu0 %v1150
  %1182 = vmatpush.msra.mxu0 %v1149
  %1183 = vmatpush.msra.mxu0 %v1148
  %1184 = vmatpush.msra.mxu0 %v1147
  %1185 = vmatpush.msra.mxu0 %v1146
  %1186 = vmatpush.msra.mxu0 %v1145
  %1187 = vmatpush.msra.mxu0 %v1144
  %1188 = vmatpush.msra.mxu0 %v1143
  %1189 = vmatpush.msra.mxu0 %v1142
  %1190 = vmatpush.msra.mxu0 %v1141
  %1191 = vmatpush.msra.mxu0 %v1140
  %1192 = vmatmul.f32.gmra.mxu0 %v615
  %v1193 = vpop.f32.mrf.mxu0
  %v1194 = vadd.f32 %v1174, %v1193
  %1195 = vdwg.mxu0
  %1196 = vmatpush.msra.mxu0 %v490
  %1197 = vmatpush.msra.mxu0 %v488
  %1198 = vmatpush.msra.mxu0 %v486
  %1199 = vmatpush.msra.mxu0 %v484
  %1200 = vmatpush.msra.mxu0 %v482
  %1201 = vmatpush.msra.mxu0 %v480
  %1202 = vmatpush.msra.mxu0 %v478
  %1203 = vmatpush.msra.mxu0 %v476
  %1204 = vmatpush.msra.mxu0 %v474
  %1205 = vmatpush.msra.mxu0 %v472
  %1206 = vmatpush.msra.mxu0 %v470
  %1207 = vmatpush.msra.mxu0 %v468
  %1208 = vmatpush.msra.mxu0 %v466
  %1209 = vmatpush.msra.mxu0 %v464
  %1210 = vmatpush.msra.mxu0 %v462
  %1211 = vmatpush.msra.mxu0 %v460
  %1212 = vmatmul.f32.gmra.mxu0 %v1194
  %v1213 = vpop.f32.mrf.mxu0
  %v1214 = vadd.f32 0.0, %v1213
  %1215 = vdwg.mxu0
  %v1216 = vmax.f32 %v1194, %v1214
  %1217 = vmatpush.msra.mxu0 %v746
  %1218 = vmatpush.msra.mxu0 %v745
  %1219 = vmatpush.msra.mxu0 %v744
  %1220 = vmatpush.msra.mxu0 %v743
  %1221 = vmatpush.msra.mxu0 %v742
  %1222 = vmatpush.msra.mxu0 %v741
  %1223 = vmatpush.msra.mxu0 %v740
  %1224 = vmatpush.msra.mxu0 %v739
  %1225 = vmatpush.msra.mxu0 %v738
  %1226 = vmatpush.msra.mxu0 %v737
  %1227 = vmatpush.msra.mxu0 %v736
  %1228 = vmatpush.msra.mxu0 %v735
  %1229 = vmatpush.msra.mxu0 %v734
  %1230 = vmatpush.msra.mxu0 %v733
  %1231 = vmatpush.msra.mxu0 %v732
  %1232 = vmatpush.msra.mxu0 %v731
  %1233 = vmatmul.f32.gmra.mxu0 %v1216
  %v1234 = vpop.f32.mrf.mxu0
  %v1235 = vadd.f32 0.0, %v1234
  %1236 = vdwg.mxu0
  %1237 = vmatpush.msra.mxu0 %v490
  %1238 = vmatpush.msra.mxu0 %v488
  %1239 = vmatpush.msra.mxu0 %v486
  %1240 = vmatpush.msra.mxu0 %v484
  %1241 = vmatpush.msra.mxu0 %v482
  %1242 = vmatpush.msra.mxu0 %v480
  %1243 = vmatpush.msra.mxu0 %v478
  %1244 = vmatpush.msra.mxu0 %v476
  %1245 = vmatpush.msra.mxu0 %v474
  %1246 = vmatpush.msra.mxu0 %v472
  %1247 = vmatpush.msra.mxu0 %v470
  %1248 = vmatpush.msra.mxu0 %v468
  %1249 = vmatpush.msra.mxu0 %v466
  %1250 = vmatpush.msra.mxu0 %v464
  %1251 = vmatpush.msra.mxu0 %v462
  %1252 = vmatpush.msra.mxu0 %v460
  %1253 = vmatmul.f32.gmra.mxu0 %v961
  %v1254 = vpop.f32.mrf.mxu0
  %v1255 = vadd.f32 0.0, %v1254
  %1256 = vmatmul.f32.gmra.mxu0 %v962
  %v1257 = vpop.f32.mrf.mxu0
  %v1258 = vadd.f32 0.0, %v1257
  %1259 = vdwg.mxu0
  %v1260 = vmax.f32 %v961, %v1255
  %v1261 = vmax.f32 %v962, %v1258
  %1262 = vmatpush.msra.mxu0 %v746
  %1263 = vmatpush.msra.mxu0 %v745
  %1264 = vmatpush.msra.mxu0 %v744
  %1265 = vmatpush.msra.mxu0 %v743
  %1266 = vmatpush.msra.mxu0 %v742
  %1267 = vmatpush.msra.mxu0 %v741
  %1268 = vmatpush.msra.mxu0 %v740
  %1269 = vmatpush.msra.mxu0 %v739
  %1270 = vmatpush.msra.mxu0 %v738
  %1271 = vmatpush.msra.mxu0 %v737
  %1272 = vmatpush.msra.mxu0 %v736
  %1273 = vmatpush.msra.mxu0 %v735
  %1274 = vmatpush.msra.mxu0 %v734
  %1275 = vmatpush.msra.mxu0 %v733
  %1276 = vmatpush.msra.mxu0 %v732
  %1277 = vmatpush.msra.mxu0 %v731
  %1278 = vmatmul.f32.gmra.mxu0 %v1260
  %v1279 = vpop.f32.mrf.mxu0
  %v1280 = vadd.f32 0.0, %v1279
  %1281 = vmatmul.f32.gmra.mxu0 %v1261
  %v1282 = vpop.f32.mrf.mxu0
  %v1283 = vadd.f32 0.0, %v1282
  %1284 = vdwg.mxu0
  %v1285 = vld [vmem:[%s5] sm:$0xff]
  %v1286 = vld [vmem:[%s5 + $0x8] sm:$0xff]
  %s1287 = scalar_lea.vmem %s5, 16
  %v1288 = vld [vmem:[%s1287] sm:$0xff]
  %v1289 = vld [vmem:[%s1287 + $0x8] sm:$0xff]
  %s1290 = scalar_lea.vmem %s5, 32
  %v1291 = vld [vmem:[%s1290] sm:$0xff]
  %v1292 = vld [vmem:[%s1290 + $0x8] sm:$0xff]
  %v1293 = vld [vmem:[%s6] sm:$0xff]
  %v1294 = vld [vmem:[%s6 + $0x8] sm:$0xff]
  %vm1295 = vcmask 97280
  %v1297 = vsel %vm1295, %v1293, 0
  %v1300 = vsel %vm1295, %v1294, 0
  %vm1302 = vcmask 1043456
  %v1304 = vsel %vm1302, %v1283, 0
  %1306 = vmatpush.msra.mxu0 0.0
  %1307 = vmatpush.msra.mxu0 0.0
  %1308 = vmatpush.msra.mxu0 0.0
  %1309 = vmatpush.msra.mxu0 0.0
  %1310 = vmatpush.msra.mxu0 0.0
  %1311 = vmatpush.msra.mxu0 0.0
  %1312 = vmatpush.msra.mxu0 0.0
  %1313 = vmatpush.msra.mxu0 0.0
  %1314 = vmatpush.msra.mxu0 0.0
  %1315 = vmatpush.msra.mxu0 0.0
  %1316 = vmatpush.msra.mxu0 0.0
  %1317 = vmatpush.msra.mxu0 0.0
  %1318 = vmatpush.msra.mxu0 0.0
  %1319 = vmatpush.msra.mxu0 0.0
  %1320 = vmatpush.msra.mxu0 %v1304
  %1321 = vmatpush.msra.mxu0 %v1280
  %1322 = vmatmul.f32.gmra.mxu0 %v1297
  %v1323 = vpop.f32.mrf.mxu0
  %v1324 = vadd.f32 0.0, %v1323
  %1325 = vmatmul.f32.gmra.mxu0 %v1300
  %v1326 = vpop.f32.mrf.mxu0
  %v1327 = vadd.f32 0.0, %v1326
  %1328 = vdwg.mxu0
  %s1329 = scalar_lea.vmem %s6, 16
  %v1330 = vld [vmem:[%s1329] sm:$0xff]
  %v1331 = vld [vmem:[%s1329 + $0x8] sm:$0xff]
  %v1333 = vsel %vm1295, %v1330, 0
  %v1336 = vsel %vm1295, %v1331, 0
  %1338 = vmatpush.msra.mxu0 0.0
  %1339 = vmatpush.msra.mxu0 0.0
  %1340 = vmatpush.msra.mxu0 0.0
  %1341 = vmatpush.msra.mxu0 0.0
  %1342 = vmatpush.msra.mxu0 0.0
  %1343 = vmatpush.msra.mxu0 0.0
  %1344 = vmatpush.msra.mxu0 0.0
  %1345 = vmatpush.msra.mxu0 0.0
  %1346 = vmatpush.msra.mxu0 0.0
  %1347 = vmatpush.msra.mxu0 0.0
  %1348 = vmatpush.msra.mxu0 0.0
  %1349 = vmatpush.msra.mxu0 0.0
  %1350 = vmatpush.msra.mxu0 0.0
  %1351 = vmatpush.msra.mxu0 0.0
  %1352 = vmatpush.msra.mxu0 %v1304
  %1353 = vmatpush.msra.mxu0 %v1280
  %1354 = vmatmul.f32.gmra.mxu0 %v1333
  %v1355 = vpop.f32.mrf.mxu0
  %v1356 = vadd.f32 0.0, %v1355
  %1357 = vmatmul.f32.gmra.mxu0 %v1336
  %v1358 = vpop.f32.mrf.mxu0
  %v1359 = vadd.f32 0.0, %v1358
  %1360 = vdwg.mxu0
  %s1361 = scalar_lea.vmem %s6, 32
  %v1362 = vld [vmem:[%s1361] sm:$0xff]
  %v1363 = vld [vmem:[%s1361 + $0x8] sm:$0xff]
  %v1365 = vsel %vm1295, %v1362, 0
  %v1368 = vsel %vm1295, %v1363, 0
  %1370 = vmatpush.msra.mxu0 0.0
  %1371 = vmatpush.msra.mxu0 0.0
  %1372 = vmatpush.msra.mxu0 0.0
  %1373 = vmatpush.msra.mxu0 0.0
  %1374 = vmatpush.msra.mxu0 0.0
  %1375 = vmatpush.msra.mxu0 0.0
  %1376 = vmatpush.msra.mxu0 0.0
  %1377 = vmatpush.msra.mxu0 0.0
  %1378 = vmatpush.msra.mxu0 0.0
  %1379 = vmatpush.msra.mxu0 0.0
  %1380 = vmatpush.msra.mxu0 0.0
  %1381 = vmatpush.msra.mxu0 0.0
  %1382 = vmatpush.msra.mxu0 0.0
  %1383 = vmatpush.msra.mxu0 0.0
  %1384 = vmatpush.msra.mxu0 %v1304
  %1385 = vmatpush.msra.mxu0 %v1280
  %1386 = vmatmul.f32.gmra.mxu0 %v1365
  %v1387 = vpop.f32.mrf.mxu0
  %v1388 = vadd.f32 0.0, %v1387
  %1389 = vmatmul.f32.gmra.mxu0 %v1368
  %v1390 = vpop.f32.mrf.mxu0
  %v1391 = vadd.f32 0.0, %v1390
  %1392 = vdwg.mxu0
  %v1394 = vsel %vm805, %v1285, 0
  %v1397 = vsel %vm805, %v1286, 0
  %1399 = vmatpush.msra.mxu0 0.0
  %1400 = vmatpush.msra.mxu0 0.0
  %1401 = vmatpush.msra.mxu0 0.0
  %1402 = vmatpush.msra.mxu0 0.0
  %1403 = vmatpush.msra.mxu0 0.0
  %1404 = vmatpush.msra.mxu0 0.0
  %1405 = vmatpush.msra.mxu0 0.0
  %1406 = vmatpush.msra.mxu0 0.0
  %1407 = vmatpush.msra.mxu0 0.0
  %1408 = vmatpush.msra.mxu0 0.0
  %1409 = vmatpush.msra.mxu0 0.0
  %1410 = vmatpush.msra.mxu0 0.0
  %1411 = vmatpush.msra.mxu0 0.0
  %1412 = vmatpush.msra.mxu0 0.0
  %1413 = vmatpush.msra.mxu0 0.0
  %1414 = vmatpush.msra.mxu0 %v1235
  %1415 = vmatmul.f32.gmra.mxu0 %v1394
  %v1416 = vpop.f32.mrf.mxu0
  %v1417 = vadd.f32 %v1324, %v1416
  %1418 = vmatmul.f32.gmra.mxu0 %v1397
  %v1419 = vpop.f32.mrf.mxu0
  %v1420 = vadd.f32 %v1327, %v1419
  %1421 = vdwg.mxu0
  %v1423 = vsel %vm805, %v1288, 0
  %v1426 = vsel %vm805, %v1289, 0
  %1428 = vmatpush.msra.mxu0 0.0
  %1429 = vmatpush.msra.mxu0 0.0
  %1430 = vmatpush.msra.mxu0 0.0
  %1431 = vmatpush.msra.mxu0 0.0
  %1432 = vmatpush.msra.mxu0 0.0
  %1433 = vmatpush.msra.mxu0 0.0
  %1434 = vmatpush.msra.mxu0 0.0
  %1435 = vmatpush.msra.mxu0 0.0
  %1436 = vmatpush.msra.mxu0 0.0
  %1437 = vmatpush.msra.mxu0 0.0
  %1438 = vmatpush.msra.mxu0 0.0
  %1439 = vmatpush.msra.mxu0 0.0
  %1440 = vmatpush.msra.mxu0 0.0
  %1441 = vmatpush.msra.mxu0 0.0
  %1442 = vmatpush.msra.mxu0 0.0
  %1443 = vmatpush.msra.mxu0 %v1235
  %1444 = vmatmul.f32.gmra.mxu0 %v1423
  %v1445 = vpop.f32.mrf.mxu0
  %v1446 = vadd.f32 %v1356, %v1445
  %1447 = vmatmul.f32.gmra.mxu0 %v1426
  %v1448 = vpop.f32.mrf.mxu0
  %v1449 = vadd.f32 %v1359, %v1448
  %1450 = vdwg.mxu0
  %v1452 = vsel %vm805, %v1291, 0
  %v1455 = vsel %vm805, %v1292, 0
  %1457 = vmatpush.msra.mxu0 0.0
  %1458 = vmatpush.msra.mxu0 0.0
  %1459 = vmatpush.msra.mxu0 0.0
  %1460 = vmatpush.msra.mxu0 0.0
  %1461 = vmatpush.msra.mxu0 0.0
  %1462 = vmatpush.msra.mxu0 0.0
  %1463 = vmatpush.msra.mxu0 0.0
  %1464 = vmatpush.msra.mxu0 0.0
  %1465 = vmatpush.msra.mxu0 0.0
  %1466 = vmatpush.msra.mxu0 0.0
  %1467 = vmatpush.msra.mxu0 0.0
  %1468 = vmatpush.msra.mxu0 0.0
  %1469 = vmatpush.msra.mxu0 0.0
  %1470 = vmatpush.msra.mxu0 0.0
  %1471 = vmatpush.msra.mxu0 0.0
  %1472 = vmatpush.msra.mxu0 %v1235
  %1473 = vmatmul.f32.gmra.mxu0 %v1452
  %v1474 = vpop.f32.mrf.mxu0
  %v1475 = vadd.f32 %v1388, %v1474
  %1476 = vmatmul.f32.gmra.mxu0 %v1455
  %v1477 = vpop.f32.mrf.mxu0
  %v1478 = vadd.f32 %v1391, %v1477
  %1479 = vdwg.mxu0
  %vm1480 = vcmask 523264
  %v1482 = vsel %vm1480, %v1417, 0
  %v1485 = vsel %vm1480, %v1420, 0
  %1487 = vmatpush.msra.mxu0 0.0
  %1488 = vmatpush.msra.mxu0 0.0
  %1489 = vmatpush.msra.mxu0 0.0
  %1490 = vmatpush.msra.mxu0 0.0
  %1491 = vmatpush.msra.mxu0 0.0
  %1492 = vmatpush.msra.mxu0 0.0
  %1493 = vmatpush.msra.mxu0 0.0
  %1494 = vmatpush.msra.mxu0 0.0
  %1495 = vmatpush.msra.mxu0 %v264
  %1496 = vmatpush.msra.mxu0 %v262
  %1497 = vmatpush.msra.mxu0 %v260
  %1498 = vmatpush.msra.mxu0 %v258
  %1499 = vmatpush.msra.mxu0 %v256
  %1500 = vmatpush.msra.mxu0 %v254
  %1501 = vmatpush.msra.mxu0 %v252
  %1502 = vmatpush.msra.mxu0 %v250
  %1503 = vmatmul.f32.gmra.mxu0 %v1482
  %v1504 = vpop.f32.mrf.mxu0
  %v1505 = vadd.f32 %v1446, %v1504
  %1506 = vmatmul.f32.gmra.mxu0 %v1485
  %v1507 = vpop.f32.mrf.mxu0
  %v1508 = vadd.f32 %v1449, %v1507
  %1509 = vdwg.mxu0
  %v1511 = vsel %vm1480, %v1475, 0
  %v1514 = vsel %vm1480, %v1478, 0
  %1516 = vmatpush.msra.mxu0 0.0
  %1517 = vmatpush.msra.mxu0 0.0
  %1518 = vmatpush.msra.mxu0 0.0
  %1519 = vmatpush.msra.mxu0 0.0
  %1520 = vmatpush.msra.mxu0 0.0
  %1521 = vmatpush.msra.mxu0 0.0
  %1522 = vmatpush.msra.mxu0 0.0
  %1523 = vmatpush.msra.mxu0 0.0
  %1524 = vmatpush.msra.mxu0 %v474
  %1525 = vmatpush.msra.mxu0 %v472
  %1526 = vmatpush.msra.mxu0 %v470
  %1527 = vmatpush.msra.mxu0 %v468
  %1528 = vmatpush.msra.mxu0 %v466
  %1529 = vmatpush.msra.mxu0 %v464
  %1530 = vmatpush.msra.mxu0 %v462
  %1531 = vmatpush.msra.mxu0 %v460
  %1532 = vmatmul.f32.gmra.mxu0 %v1511
  %v1533 = vpop.f32.mrf.mxu0
  %v1534 = vadd.f32 0.0, %v1533
  %1535 = vmatmul.f32.gmra.mxu0 %v1514
  %v1536 = vpop.f32.mrf.mxu0
  %v1537 = vadd.f32 0.0, %v1536
  %1538 = vdwg.mxu0
  %v1539 = vadd.f32 %v1505, %v1534
  %v1540 = vadd.f32 %v1508, %v1537
  %v1541 = vld [vmem:[%s7] sm:$0xff]
  %v1542 = vld [vmem:[%s7 + $0x8] sm:$0xff]
  %1544 = vset.pattern.permute.xlu0 0
  %1545 = vperm.xlu0 %1544, %v1541
  %v1546 = vpop.permute.xlu0 %1545
  %1549 = vset.pattern.permute.xlu0 0
  %1550 = vperm.xlu0 %1549, %v1542
  %v1551 = vpop.permute.xlu0 %1550
  %v1553 = vadd.f32 %v1539, %v1546
  %v1554 = vadd.f32 %v1540, %v1551
  %v1555 = vmax.f32 %v1553, 0.0
  %v1556 = vmax.f32 %v1554, 0.0
  %v1557 = vmul.u32 %v152, 16
  %vm1558 = vcmp.eq.s32.totalorder %v119, %v1557
  %vm1559 = vcmp.eq.s32.totalorder %v120, %v1557
  %vm1560 = vcmp.eq.s32.totalorder %v121, %v1557
  %vm1561 = vcmp.eq.s32.totalorder %v122, %v1557
  %vm1562 = vcmp.eq.s32.totalorder %v123, %v1557
  %vm1563 = vcmp.eq.s32.totalorder %v124, %v1557
  %vm1564 = vcmp.eq.s32.totalorder %v125, %v1557
  %vm1565 = vcmp.eq.s32.totalorder %v126, %v1557
  %v1566 = vsel %vm1558, 1.0, 0.0
  %v1567 = vsel %vm1559, 1.0, 0.0
  %v1568 = vsel %vm1560, 1.0, 0.0
  %v1569 = vsel %vm1561, 1.0, 0.0
  %v1570 = vsel %vm1562, 1.0, 0.0
  %v1571 = vsel %vm1563, 1.0, 0.0
  %v1572 = vsel %vm1564, 1.0, 0.0
  %v1573 = vsel %vm1565, 1.0, 0.0
  %v1574 = vld [vmem:[%s8] sm:$0xff]
  %v1575 = vld [vmem:[%s8 + $0x8] sm:$0xff]
  %v1576 = vld [vmem:[%s8 + $0x10] sm:$0xf]
  %v1578 = vsel %vm1480, %v1555, 0
  %v1581 = vsel %vm1480, %v1556, 0
  %1583 = vmatpush.msra.mxu0 0.0
  %1584 = vmatpush.msra.mxu0 0.0
  %1585 = vmatpush.msra.mxu0 0.0
  %1586 = vmatpush.msra.mxu0 0.0
  %1587 = vmatpush.msra.mxu0 0.0
  %1588 = vmatpush.msra.mxu0 0.0
  %1589 = vmatpush.msra.mxu0 0.0
  %1590 = vmatpush.msra.mxu0 0.0
  %1591 = vmatpush.msra.mxu0 %v1573
  %1592 = vmatpush.msra.mxu0 %v1572
  %1593 = vmatpush.msra.mxu0 %v1571
  %1594 = vmatpush.msra.mxu0 %v1570
  %1595 = vmatpush.msra.mxu0 %v1569
  %1596 = vmatpush.msra.mxu0 %v1568
  %1597 = vmatpush.msra.mxu0 %v1567
  %1598 = vmatpush.msra.mxu0 %v1566
  %1599 = vmatmul.f32.gmra.mxu0 %v1578
  %v1600 = vpop.f32.mrf.mxu0
  %v1601 = vadd.f32 0.0, %v1600
  %1602 = vmatmul.f32.gmra.mxu0 %v1581
  %v1603 = vpop.f32.mrf.mxu0
  %v1604 = vadd.f32 0.0, %v1603
  %1605 = vdwg.mxu0
  %v1606 = vadd.s32 %v1557, 1
  %vm1607 = vcmp.eq.s32.totalorder %v119, %v1606
  %vm1608 = vcmp.eq.s32.totalorder %v120, %v1606
  %vm1609 = vcmp.eq.s32.totalorder %v121, %v1606
  %vm1610 = vcmp.eq.s32.totalorder %v122, %v1606
  %vm1611 = vcmp.eq.s32.totalorder %v123, %v1606
  %vm1612 = vcmp.eq.s32.totalorder %v124, %v1606
  %vm1613 = vcmp.eq.s32.totalorder %v125, %v1606
  %vm1614 = vcmp.eq.s32.totalorder %v126, %v1606
  %v1615 = vsel %vm1607, 1.0, 0.0
  %v1616 = vsel %vm1608, 1.0, 0.0
  %v1617 = vsel %vm1609, 1.0, 0.0
  %v1618 = vsel %vm1610, 1.0, 0.0
  %v1619 = vsel %vm1611, 1.0, 0.0
  %v1620 = vsel %vm1612, 1.0, 0.0
  %v1621 = vsel %vm1613, 1.0, 0.0
  %v1622 = vsel %vm1614, 1.0, 0.0
  %s1623 = scalar_lea.vmem %s8, 24
  %v1624 = vld [vmem:[%s1623] sm:$0xff]
  %v1625 = vld [vmem:[%s1623 + $0x8] sm:$0xff]
  %v1626 = vld [vmem:[%s1623 + $0x10] sm:$0xf]
  %1627 = vmatpush.msra.mxu0 0.0
  %1628 = vmatpush.msra.mxu0 0.0
  %1629 = vmatpush.msra.mxu0 0.0
  %1630 = vmatpush.msra.mxu0 0.0
  %1631 = vmatpush.msra.mxu0 0.0
  %1632 = vmatpush.msra.mxu0 0.0
  %1633 = vmatpush.msra.mxu0 0.0
  %1634 = vmatpush.msra.mxu0 0.0
  %1635 = vmatpush.msra.mxu0 %v1622
  %1636 = vmatpush.msra.mxu0 %v1621
  %1637 = vmatpush.msra.mxu0 %v1620
  %1638 = vmatpush.msra.mxu0 %v1619
  %1639 = vmatpush.msra.mxu0 %v1618
  %1640 = vmatpush.msra.mxu0 %v1617
  %1641 = vmatpush.msra.mxu0 %v1616
  %1642 = vmatpush.msra.mxu0 %v1615
  %1643 = vmatmul.f32.gmra.mxu0 %v1578
  %v1644 = vpop.f32.mrf.mxu0
  %v1645 = vadd.f32 0.0, %v1644
  %1646 = vmatmul.f32.gmra.mxu0 %v1581
  %v1647 = vpop.f32.mrf.mxu0
  %v1648 = vadd.f32 0.0, %v1647
  %1649 = vdwg.mxu0
  %vm1650 = vcmask 130048
  %v1652 = vsel %vm1650, %v1624, 0
  %v1655 = vsel %vm1650, %v1625, 0
  %v1658 = vsel %vm1650, %v1626, 0
  %1660 = vmatpush.msra.mxu0 0.0
  %1661 = vmatpush.msra.mxu0 0.0
  %1662 = vmatpush.msra.mxu0 0.0
  %1663 = vmatpush.msra.mxu0 0.0
  %1664 = vmatpush.msra.mxu0 0.0
  %1665 = vmatpush.msra.mxu0 0.0
  %1666 = vmatpush.msra.mxu0 0.0
  %1667 = vmatpush.msra.mxu0 0.0
  %1668 = vmatpush.msra.mxu0 0.0
  %1669 = vmatpush.msra.mxu0 0.0
  %1670 = vmatpush.msra.mxu0 0.0
  %1671 = vmatpush.msra.mxu0 0.0
  %1672 = vmatpush.msra.mxu0 0.0
  %1673 = vmatpush.msra.mxu0 0.0
  %1674 = vmatpush.msra.mxu0 %v1648
  %1675 = vmatpush.msra.mxu0 %v1645
  %1676 = vmatmul.f32.gmra.mxu0 %v1652
  %v1677 = vpop.f32.mrf.mxu0
  %v1678 = vadd.f32 0.0, %v1677
  %1679 = vmatmul.f32.gmra.mxu0 %v1655
  %v1680 = vpop.f32.mrf.mxu0
  %v1681 = vadd.f32 0.0, %v1680
  %1682 = vmatmul.f32.gmra.mxu0 %v1658
  %v1683 = vpop.f32.mrf.mxu0
  %v1684 = vadd.f32 0.0, %v1683
  %1685 = vdwg.mxu0
  %v1687 = vsel %vm1650, %v1574, 0
  %v1690 = vsel %vm1650, %v1575, 0
  %v1693 = vsel %vm1650, %v1576, 0
  %1695 = vmatpush.msra.mxu0 0.0
  %1696 = vmatpush.msra.mxu0 0.0
  %1697 = vmatpush.msra.mxu0 0.0
  %1698 = vmatpush.msra.mxu0 0.0
  %1699 = vmatpush.msra.mxu0 0.0
  %1700 = vmatpush.msra.mxu0 0.0
  %1701 = vmatpush.msra.mxu0 0.0
  %1702 = vmatpush.msra.mxu0 0.0
  %1703 = vmatpush.msra.mxu0 0.0
  %1704 = vmatpush.msra.mxu0 0.0
  %1705 = vmatpush.msra.mxu0 0.0
  %1706 = vmatpush.msra.mxu0 0.0
  %1707 = vmatpush.msra.mxu0 0.0
  %1708 = vmatpush.msra.mxu0 0.0
  %1709 = vmatpush.msra.mxu0 %v1604
  %1710 = vmatpush.msra.mxu0 %v1601
  %1711 = vmatmul.f32.gmra.mxu0 %v1687
  %v1712 = vpop.f32.mrf.mxu0
  %v1713 = vadd.f32 %v1678, %v1712
  %1714 = vmatmul.f32.gmra.mxu0 %v1690
  %v1715 = vpop.f32.mrf.mxu0
  %v1716 = vadd.f32 %v1681, %v1715
  %1717 = vmatmul.f32.gmra.mxu0 %v1693
  %v1718 = vpop.f32.mrf.mxu0
  %v1719 = vadd.f32 %v1684, %v1718
  %1720 = vdwg.mxu0
  %v1721 = vadd.s32 %v1557, 2
  %vm1722 = vcmp.eq.s32.totalorder %v119, %v1721
  %vm1723 = vcmp.eq.s32.totalorder %v120, %v1721
  %vm1724 = vcmp.eq.s32.totalorder %v121, %v1721
  %vm1725 = vcmp.eq.s32.totalorder %v122, %v1721
  %vm1726 = vcmp.eq.s32.totalorder %v123, %v1721
  %vm1727 = vcmp.eq.s32.totalorder %v124, %v1721
  %vm1728 = vcmp.eq.s32.totalorder %v125, %v1721
  %vm1729 = vcmp.eq.s32.totalorder %v126, %v1721
  %v1730 = vsel %vm1722, 1.0, 0.0
  %v1731 = vsel %vm1723, 1.0, 0.0
  %v1732 = vsel %vm1724, 1.0, 0.0
  %v1733 = vsel %vm1725, 1.0, 0.0
  %v1734 = vsel %vm1726, 1.0, 0.0
  %v1735 = vsel %vm1727, 1.0, 0.0
  %v1736 = vsel %vm1728, 1.0, 0.0
  %v1737 = vsel %vm1729, 1.0, 0.0
  %s1738 = scalar_lea.vmem %s8, 48
  %v1739 = vld [vmem:[%s1738] sm:$0xff]
  %v1740 = vld [vmem:[%s1738 + $0x8] sm:$0xff]
  %v1741 = vld [vmem:[%s1738 + $0x10] sm:$0xf]
  %1742 = vmatpush.msra.mxu0 0.0
  %1743 = vmatpush.msra.mxu0 0.0
  %1744 = vmatpush.msra.mxu0 0.0
  %1745 = vmatpush.msra.mxu0 0.0
  %1746 = vmatpush.msra.mxu0 0.0
  %1747 = vmatpush.msra.mxu0 0.0
  %1748 = vmatpush.msra.mxu0 0.0
  %1749 = vmatpush.msra.mxu0 0.0
  %1750 = vmatpush.msra.mxu0 %v1737
  %1751 = vmatpush.msra.mxu0 %v1736
  %1752 = vmatpush.msra.mxu0 %v1735
  %1753 = vmatpush.msra.mxu0 %v1734
  %1754 = vmatpush.msra.mxu0 %v1733
  %1755 = vmatpush.msra.mxu0 %v1732
  %1756 = vmatpush.msra.mxu0 %v1731
  %1757 = vmatpush.msra.mxu0 %v1730
  %1758 = vmatmul.f32.gmra.mxu0 %v1578
  %v1759 = vpop.f32.mrf.mxu0
  %v1760 = vadd.f32 0.0, %v1759
  %1761 = vmatmul.f32.gmra.mxu0 %v1581
  %v1762 = vpop.f32.mrf.mxu0
  %v1763 = vadd.f32 0.0, %v1762
  %1764 = vdwg.mxu0
  %v1766 = vsel %vm1650, %v1739, 0
  %v1769 = vsel %vm1650, %v1740, 0
  %v1772 = vsel %vm1650, %v1741, 0
  %1774 = vmatpush.msra.mxu0 0.0
  %1775 = vmatpush.msra.mxu0 0.0
  %1776 = vmatpush.msra.mxu0 0.0
  %1777 = vmatpush.msra.mxu0 0.0
  %1778 = vmatpush.msra.mxu0 0.0
  %1779 = vmatpush.msra.mxu0 0.0
  %1780 = vmatpush.msra.mxu0 0.0
  %1781 = vmatpush.msra.mxu0 0.0
  %1782 = vmatpush.msra.mxu0 0.0
  %1783 = vmatpush.msra.mxu0 0.0
  %1784 = vmatpush.msra.mxu0 0.0
  %1785 = vmatpush.msra.mxu0 0.0
  %1786 = vmatpush.msra.mxu0 0.0
  %1787 = vmatpush.msra.mxu0 0.0
  %1788 = vmatpush.msra.mxu0 %v1763
  %1789 = vmatpush.msra.mxu0 %v1760
  %1790 = vmatmul.f32.gmra.mxu0 %v1766
  %v1791 = vpop.f32.mrf.mxu0
  %v1792 = vadd.f32 0.0, %v1791
  %1793 = vmatmul.f32.gmra.mxu0 %v1769
  %v1794 = vpop.f32.mrf.mxu0
  %v1795 = vadd.f32 0.0, %v1794
  %1796 = vmatmul.f32.gmra.mxu0 %v1772
  %v1797 = vpop.f32.mrf.mxu0
  %v1798 = vadd.f32 0.0, %v1797
  %1799 = vdwg.mxu0
  %v1800 = vadd.f32 %v1713, %v1792
  %v1801 = vadd.f32 %v1716, %v1795
  %v1802 = vadd.f32 %v1719, %v1798
  %v1803 = vadd.s32 %v1557, 3
  %vm1804 = vcmp.eq.s32.totalorder %v119, %v1803
  %vm1805 = vcmp.eq.s32.totalorder %v120, %v1803
  %vm1806 = vcmp.eq.s32.totalorder %v121, %v1803
  %vm1807 = vcmp.eq.s32.totalorder %v122, %v1803
  %vm1808 = vcmp.eq.s32.totalorder %v123, %v1803
  %vm1809 = vcmp.eq.s32.totalorder %v124, %v1803
  %vm1810 = vcmp.eq.s32.totalorder %v125, %v1803
  %vm1811 = vcmp.eq.s32.totalorder %v126, %v1803
  %v1812 = vsel %vm1804, 1.0, 0.0
  %v1813 = vsel %vm1805, 1.0, 0.0
  %v1814 = vsel %vm1806, 1.0, 0.0
  %v1815 = vsel %vm1807, 1.0, 0.0
  %v1816 = vsel %vm1808, 1.0, 0.0
  %v1817 = vsel %vm1809, 1.0, 0.0
  %v1818 = vsel %vm1810, 1.0, 0.0
  %v1819 = vsel %vm1811, 1.0, 0.0
  %s1820 = scalar_lea.vmem %s8, 72
  %v1821 = vld [vmem:[%s1820] sm:$0xff]
  %v1822 = vld [vmem:[%s1820 + $0x8] sm:$0xff]
  %v1823 = vld [vmem:[%s1820 + $0x10] sm:$0xf]
  %1824 = vmatpush.msra.mxu0 0.0
  %1825 = vmatpush.msra.mxu0 0.0
  %1826 = vmatpush.msra.mxu0 0.0
  %1827 = vmatpush.msra.mxu0 0.0
  %1828 = vmatpush.msra.mxu0 0.0
  %1829 = vmatpush.msra.mxu0 0.0
  %1830 = vmatpush.msra.mxu0 0.0
  %1831 = vmatpush.msra.mxu0 0.0
  %1832 = vmatpush.msra.mxu0 %v1819
  %1833 = vmatpush.msra.mxu0 %v1818
  %1834 = vmatpush.msra.mxu0 %v1817
  %1835 = vmatpush.msra.mxu0 %v1816
  %1836 = vmatpush.msra.mxu0 %v1815
  %1837 = vmatpush.msra.mxu0 %v1814
  %1838 = vmatpush.msra.mxu0 %v1813
  %1839 = vmatpush.msra.mxu0 %v1812
  %1840 = vmatmul.f32.gmra.mxu0 %v1578
  %v1841 = vpop.f32.mrf.mxu0
  %v1842 = vadd.f32 0.0, %v1841
  %1843 = vmatmul.f32.gmra.mxu0 %v1581
  %v1844 = vpop.f32.mrf.mxu0
  %v1845 = vadd.f32 0.0, %v1844
  %1846 = vdwg.mxu0
  %v1848 = vsel %vm1650, %v1821, 0
  %v1851 = vsel %vm1650, %v1822, 0
  %v1854 = vsel %vm1650, %v1823, 0
  %1856 = vmatpush.msra.mxu0 0.0
  %1857 = vmatpush.msra.mxu0 0.0
  %1858 = vmatpush.msra.mxu0 0.0
  %1859 = vmatpush.msra.mxu0 0.0
  %1860 = vmatpush.msra.mxu0 0.0
  %1861 = vmatpush.msra.mxu0 0.0
  %1862 = vmatpush.msra.mxu0 0.0
  %1863 = vmatpush.msra.mxu0 0.0
  %1864 = vmatpush.msra.mxu0 0.0
  %1865 = vmatpush.msra.mxu0 0.0
  %1866 = vmatpush.msra.mxu0 0.0
  %1867 = vmatpush.msra.mxu0 0.0
  %1868 = vmatpush.msra.mxu0 0.0
  %1869 = vmatpush.msra.mxu0 0.0
  %1870 = vmatpush.msra.mxu0 %v1845
  %1871 = vmatpush.msra.mxu0 %v1842
  %1872 = vmatmul.f32.gmra.mxu0 %v1848
  %v1873 = vpop.f32.mrf.mxu0
  %v1874 = vadd.f32 0.0, %v1873
  %1875 = vmatmul.f32.gmra.mxu0 %v1851
  %v1876 = vpop.f32.mrf.mxu0
  %v1877 = vadd.f32 0.0, %v1876
  %1878 = vmatmul.f32.gmra.mxu0 %v1854
  %v1879 = vpop.f32.mrf.mxu0
  %v1880 = vadd.f32 0.0, %v1879
  %1881 = vdwg.mxu0
  %v1882 = vadd.f32 %v1800, %v1874
  %v1883 = vadd.f32 %v1801, %v1877
  %v1884 = vadd.f32 %v1802, %v1880
  %v1885 = vld [vmem:[%s9] sm:$0xf]
  %v1886 = vld [vmem:[%s11] sm:$0x1]
  %v1888 = vperm.slane %v1886, 0
  %vm1890 = vcmask 31744
  %v1892 = vsel %vm1890, %v1882, 0
  %v1895 = vsel %vm1890, %v1883, 0
  %v1898 = vsel %vm1890, %v1884, 0
  %v1901 = vsel %vm1302, %v1885, 0
  %1903 = vmatpush.msra.mxu0 0.0
  %1904 = vmatpush.msra.mxu0 0.0
  %1905 = vmatpush.msra.mxu0 0.0
  %1906 = vmatpush.msra.mxu0 0.0
  %1907 = vmatpush.msra.mxu0 0.0
  %1908 = vmatpush.msra.mxu0 0.0
  %1909 = vmatpush.msra.mxu0 0.0
  %1910 = vmatpush.msra.mxu0 0.0
  %1911 = vmatpush.msra.mxu0 0.0
  %1912 = vmatpush.msra.mxu0 0.0
  %1913 = vmatpush.msra.mxu0 0.0
  %1914 = vmatpush.msra.mxu0 0.0
  %1915 = vmatpush.msra.mxu0 0.0
  %1916 = vmatpush.msra.mxu0 0.0
  %1917 = vmatpush.msra.mxu0 0.0
  %1918 = vmatpush.msra.mxu0 %v1901
  %1919 = vmatmul.f32.gmra.mxu0 %v1892
  %v1920 = vpop.f32.mrf.mxu0
  %v1921 = vadd.f32 %v1888, %v1920
  %1922 = vmatmul.f32.gmra.mxu0 %v1895
  %v1923 = vpop.f32.mrf.mxu0
  %v1924 = vadd.f32 %v1888, %v1923
  %1925 = vmatmul.f32.gmra.mxu0 %v1898
  %v1926 = vpop.f32.mrf.mxu0
  %v1927 = vadd.f32 %v1888, %v1926
  %1928 = vdwg.mxu0
  %v1929 = vld [vmem:[%s10] sm:$0xff]
  %v1930 = vld [vmem:[%s10 + $0x8] sm:$0xff]
  %v1932 = vsel %vm1650, 0.0, 0
  %1934 = vmatpush.msra.mxu0 0.0
  %1935 = vmatpush.msra.mxu0 0.0
  %1936 = vmatpush.msra.mxu0 0.0
  %1937 = vmatpush.msra.mxu0 0.0
  %1938 = vmatpush.msra.mxu0 0.0
  %1939 = vmatpush.msra.mxu0 0.0
  %1940 = vmatpush.msra.mxu0 0.0
  %1941 = vmatpush.msra.mxu0 0.0
  %1942 = vmatpush.msra.mxu0 0.0
  %1943 = vmatpush.msra.mxu0 0.0
  %1944 = vmatpush.msra.mxu0 0.0
  %1945 = vmatpush.msra.mxu0 0.0
  %1946 = vmatpush.msra.mxu0 0.0
  %1947 = vmatpush.msra.mxu0 0.0
  %1948 = vmatpush.msra.mxu0 %v1930
  %1949 = vmatpush.msra.mxu0 %v1929
  %1950 = vmatmul.f32.gmra.mxu0 %v1932
  %v1951 = vpop.f32.mrf.mxu0
  %v1952 = vadd.f32 0.0, %v1951
  %1953 = vdwg.mxu0
  %v1954 = vadd.f32 %v1921, %v1952
  %v1955 = vxor.u32 %v1954, 2147483648
  %v1956 = vmul.f32 %v1955, 1.442695
  %v1957 = vpow.pop %v1956
  %v1958 = vadd.f32 %v1957, 1.0
  %v1959 = vrcp.pop %v1958
  %v1960 = vmul.f32 %v1958, %v1959
  %v1961 = vsub.f32 1.0, %v1960
  %v1962 = vmul.f32 %v1959, %v1961
  %v1963 = vadd.f32 %v1959, %v1962
  %vm1964 = vweird.f32 %v1958
  %vm1965 = vweird.f32 %v1959
  %vm1966 = vmor %vm1964, %vm1965
  %v1967 = vsel %vm1966, %v1959, %v1963
  %v1968 = vand.u32 2147483647, %v1958
  %vm1969 = vcmp.eq.f32.partialorder %v1968, 8.507059e+37
  %v1970 = vand.u32 %v1958, 2147483648
  %v1971 = vor.u32 1.1754944e-38, %v1970
  %v1972 = vsel %vm1969, %v1971, %v1967
  %v1973 = vmul.f32 1.0, %v1972
  %v1974 = vtanh.pop %v1954
  %v1975 = vmul.f32 %v1973, 0.0
  %1977 = vrot.lane.b32.xlu0 %v1974, 96
  %v1978 = vpop.permute.xlu0 %1977
  %v1980 = vmul.f32 %v1973, %v1978
  %1982 = vrot.lane.b32.xlu0 %v1980, 16
  %v1983 = vpop.permute.xlu0 %1982
  %v1985 = vadd.f32 %v1975, %v1983
  %v1986 = vtanh.pop %v1985
  %1988 = vrot.lane.b32.xlu0 %v1986, 32
  %v1989 = vpop.permute.xlu0 %1988
  %v1991 = vmul.f32 %v1973, %v1989
  %1993 = vrot.lane.b32.xlu0 %v1991, 80
  %v1994 = vpop.permute.xlu0 %1993
  %v1995 = vsel %vm1650, %v1994, 0
  %1997 = vmatpush.msra.mxu0 0.0
  %1998 = vmatpush.msra.mxu0 0.0
  %1999 = vmatpush.msra.mxu0 0.0
  %2000 = vmatpush.msra.mxu0 0.0
  %2001 = vmatpush.msra.mxu0 0.0
  %2002 = vmatpush.msra.mxu0 0.0
  %2003 = vmatpush.msra.mxu0 0.0
  %2004 = vmatpush.msra.mxu0 0.0
  %2005 = vmatpush.msra.mxu0 0.0
  %2006 = vmatpush.msra.mxu0 0.0
  %2007 = vmatpush.msra.mxu0 0.0
  %2008 = vmatpush.msra.mxu0 0.0
  %2009 = vmatpush.msra.mxu0 0.0
  %2010 = vmatpush.msra.mxu0 0.0
  %2011 = vmatpush.msra.mxu0 %v1930
  %2012 = vmatpush.msra.mxu0 %v1929
  %2013 = vmatmul.f32.gmra.mxu0 %v1995
  %v2014 = vpop.f32.mrf.mxu0
  %v2015 = vadd.f32 0.0, %v2014
  %2016 = vdwg.mxu0
  %v2018 = vrot.slane %v2015, 7
  %v2020 = vadd.f32 %v1921, %v2018
  %v2021 = vxor.u32 %v2020, 2147483648
  %v2022 = vmul.f32 %v2021, 1.442695
  %v2023 = vpow.pop %v2022
  %v2024 = vadd.f32 %v2023, 1.0
  %v2025 = vrcp.pop %v2024
  %v2026 = vmul.f32 %v2024, %v2025
  %v2027 = vsub.f32 1.0, %v2026
  %v2028 = vmul.f32 %v2025, %v2027
  %v2029 = vadd.f32 %v2025, %v2028
  %vm2030 = vweird.f32 %v2024
  %vm2031 = vweird.f32 %v2025
  %vm2032 = vmor %vm2030, %vm2031
  %v2033 = vsel %vm2032, %v2025, %v2029
  %v2034 = vand.u32 2147483647, %v2024
  %vm2035 = vcmp.eq.f32.partialorder %v2034, 8.507059e+37
  %v2036 = vand.u32 %v2024, 2147483648
  %v2037 = vor.u32 1.1754944e-38, %v2036
  %v2038 = vsel %vm2035, %v2037, %v2033
  %v2039 = vmul.f32 1.0, %v2038
  %v2040 = vtanh.pop %v2020
  %v2042 = vrot.slane %v1985, 7
  %v2044 = vmul.f32 %v2039, %v2042
  %2046 = vrot.lane.b32.xlu0 %v2040, 96
  %v2047 = vpop.permute.xlu0 %2046
  %v2049 = vmul.f32 %v2039, %v2047
  %2051 = vrot.lane.b32.xlu0 %v2049, 16
  %v2052 = vpop.permute.xlu0 %2051
  %v2054 = vadd.f32 %v2044, %v2052
  %v2055 = vtanh.pop %v2054
  %2057 = vrot.lane.b32.xlu0 %v2055, 32
  %v2058 = vpop.permute.xlu0 %2057
  %v2060 = vmul.f32 %v2039, %v2058
  %v2062 = vrot.slane %v2060, 1
  %2063 = vrot.lane.b32.xlu0 %v2062, 80
  %v2064 = vpop.permute.xlu0 %2063
  %v2065 = vsel %vm1650, %v2064, 0
  %2067 = vmatpush.msra.mxu0 0.0
  %2068 = vmatpush.msra.mxu0 0.0
  %2069 = vmatpush.msra.mxu0 0.0
  %2070 = vmatpush.msra.mxu0 0.0
  %2071 = vmatpush.msra.mxu0 0.0
  %2072 = vmatpush.msra.mxu0 0.0
  %2073 = vmatpush.msra.mxu0 0.0
  %2074 = vmatpush.msra.mxu0 0.0
  %2075 = vmatpush.msra.mxu0 0.0
  %2076 = vmatpush.msra.mxu0 0.0
  %2077 = vmatpush.msra.mxu0 0.0
  %2078 = vmatpush.msra.mxu0 0.0
  %2079 = vmatpush.msra.mxu0 0.0
  %2080 = vmatpush.msra.mxu0 0.0
  %2081 = vmatpush.msra.mxu0 %v1930
  %2082 = vmatpush.msra.mxu0 %v1929
  %2083 = vmatmul.f32.gmra.mxu0 %v2065
  %v2084 = vpop.f32.mrf.mxu0
  %v2085 = vadd.f32 0.0, %v2084
  %2086 = vdwg.mxu0
  %v2088 = vrot.slane %v2085, 6
  %v2090 = vadd.f32 %v1921, %v2088
  %v2091 = vxor.u32 %v2090, 2147483648
  %v2092 = vmul.f32 %v2091, 1.442695
  %v2093 = vpow.pop %v2092
  %v2094 = vadd.f32 %v2093, 1.0
  %v2095 = vrcp.pop %v2094
  %v2096 = vmul.f32 %v2094, %v2095
  %v2097 = vsub.f32 1.0, %v2096
  %v2098 = vmul.f32 %v2095, %v2097
  %v2099 = vadd.f32 %v2095, %v2098
  %vm2100 = vweird.f32 %v2094
  %vm2101 = vweird.f32 %v2095
  %vm2102 = vmor %vm2100, %vm2101
  %v2103 = vsel %vm2102, %v2095, %v2099
  %v2104 = vand.u32 2147483647, %v2094
  %vm2105 = vcmp.eq.f32.partialorder %v2104, 8.507059e+37
  %v2106 = vand.u32 %v2094, 2147483648
  %v2107 = vor.u32 1.1754944e-38, %v2106
  %v2108 = vsel %vm2105, %v2107, %v2103
  %v2109 = vmul.f32 1.0, %v2108
  %v2110 = vtanh.pop %v2090
  %v2112 = vrot.slane %v2054, 7
  %v2114 = vmul.f32 %v2109, %v2112
  %2116 = vrot.lane.b32.xlu0 %v2110, 96
  %v2117 = vpop.permute.xlu0 %2116
  %v2119 = vmul.f32 %v2109, %v2117
  %2121 = vrot.lane.b32.xlu0 %v2119, 16
  %v2122 = vpop.permute.xlu0 %2121
  %v2124 = vadd.f32 %v2114, %v2122
  %v2125 = vtanh.pop %v2124
  %2127 = vrot.lane.b32.xlu0 %v2125, 32
  %v2128 = vpop.permute.xlu0 %2127
  %v2130 = vmul.f32 %v2109, %v2128
  %v2132 = vrot.slane %v2130, 2
  %2133 = vrot.lane.b32.xlu0 %v2132, 80
  %v2134 = vpop.permute.xlu0 %2133
  %v2135 = vsel %vm1650, %v2134, 0
  %2137 = vmatpush.msra.mxu0 0.0
  %2138 = vmatpush.msra.mxu0 0.0
  %2139 = vmatpush.msra.mxu0 0.0
  %2140 = vmatpush.msra.mxu0 0.0
  %2141 = vmatpush.msra.mxu0 0.0
  %2142 = vmatpush.msra.mxu0 0.0
  %2143 = vmatpush.msra.mxu0 0.0
  %2144 = vmatpush.msra.mxu0 0.0
  %2145 = vmatpush.msra.mxu0 0.0
  %2146 = vmatpush.msra.mxu0 0.0
  %2147 = vmatpush.msra.mxu0 0.0
  %2148 = vmatpush.msra.mxu0 0.0
  %2149 = vmatpush.msra.mxu0 0.0
  %2150 = vmatpush.msra.mxu0 0.0
  %2151 = vmatpush.msra.mxu0 %v1930
  %2152 = vmatpush.msra.mxu0 %v1929
  %2153 = vmatmul.f32.gmra.mxu0 %v2135
  %v2154 = vpop.f32.mrf.mxu0
  %v2155 = vadd.f32 0.0, %v2154
  %2156 = vdwg.mxu0
  %v2158 = vrot.slane %v2155, 5
  %v2160 = vadd.f32 %v1921, %v2158
  %v2161 = vxor.u32 %v2160, 2147483648
  %v2162 = vmul.f32 %v2161, 1.442695
  %v2163 = vpow.pop %v2162
  %v2164 = vadd.f32 %v2163, 1.0
  %v2165 = vrcp.pop %v2164
  %v2166 = vmul.f32 %v2164, %v2165
  %v2167 = vsub.f32 1.0, %v2166
  %v2168 = vmul.f32 %v2165, %v2167
  %v2169 = vadd.f32 %v2165, %v2168
  %vm2170 = vweird.f32 %v2164
  %vm2171 = vweird.f32 %v2165
  %vm2172 = vmor %vm2170, %vm2171
  %v2173 = vsel %vm2172, %v2165, %v2169
  %v2174 = vand.u32 2147483647, %v2164
  %vm2175 = vcmp.eq.f32.partialorder %v2174, 8.507059e+37
  %v2176 = vand.u32 %v2164, 2147483648
  %v2177 = vor.u32 1.1754944e-38, %v2176
  %v2178 = vsel %vm2175, %v2177, %v2173
  %v2179 = vmul.f32 1.0, %v2178
  %v2180 = vtanh.pop %v2160
  %v2182 = vrot.slane %v2124, 7
  %v2184 = vmul.f32 %v2179, %v2182
  %2186 = vrot.lane.b32.xlu0 %v2180, 96
  %v2187 = vpop.permute.xlu0 %2186
  %v2189 = vmul.f32 %v2179, %v2187
  %2191 = vrot.lane.b32.xlu0 %v2189, 16
  %v2192 = vpop.permute.xlu0 %2191
  %v2194 = vadd.f32 %v2184, %v2192
  %v2195 = vtanh.pop %v2194
  %2197 = vrot.lane.b32.xlu0 %v2195, 32
  %v2198 = vpop.permute.xlu0 %2197
  %v2200 = vmul.f32 %v2179, %v2198
  %v2202 = vrot.slane %v2200, 3
  %2203 = vrot.lane.b32.xlu0 %v2202, 80
  %v2204 = vpop.permute.xlu0 %2203
  %v2205 = vsel %vm1650, %v2204, 0
  %2207 = vmatpush.msra.mxu0 0.0
  %2208 = vmatpush.msra.mxu0 0.0
  %2209 = vmatpush.msra.mxu0 0.0
  %2210 = vmatpush.msra.mxu0 0.0
  %2211 = vmatpush.msra.mxu0 0.0
  %2212 = vmatpush.msra.mxu0 0.0
  %2213 = vmatpush.msra.mxu0 0.0
  %2214 = vmatpush.msra.mxu0 0.0
  %2215 = vmatpush.msra.mxu0 0.0
  %2216 = vmatpush.msra.mxu0 0.0
  %2217 = vmatpush.msra.mxu0 0.0
  %2218 = vmatpush.msra.mxu0 0.0
  %2219 = vmatpush.msra.mxu0 0.0
  %2220 = vmatpush.msra.mxu0 0.0
  %2221 = vmatpush.msra.mxu0 %v1930
  %2222 = vmatpush.msra.mxu0 %v1929
  %2223 = vmatmul.f32.gmra.mxu0 %v2205
  %v2224 = vpop.f32.mrf.mxu0
  %v2225 = vadd.f32 0.0, %v2224
  %2226 = vdwg.mxu0
  %v2228 = vrot.slane %v2225, 4
  %v2230 = vadd.f32 %v1921, %v2228
  %v2231 = vxor.u32 %v2230, 2147483648
  %v2232 = vmul.f32 %v2231, 1.442695
  %v2233 = vpow.pop %v2232
  %v2234 = vadd.f32 %v2233, 1.0
  %v2235 = vrcp.pop %v2234
  %v2236 = vmul.f32 %v2234, %v2235
  %v2237 = vsub.f32 1.0, %v2236
  %v2238 = vmul.f32 %v2235, %v2237
  %v2239 = vadd.f32 %v2235, %v2238
  %vm2240 = vweird.f32 %v2234
  %vm2241 = vweird.f32 %v2235
  %vm2242 = vmor %vm2240, %vm2241
  %v2243 = vsel %vm2242, %v2235, %v2239
  %v2244 = vand.u32 2147483647, %v2234
  %vm2245 = vcmp.eq.f32.partialorder %v2244, 8.507059e+37
  %v2246 = vand.u32 %v2234, 2147483648
  %v2247 = vor.u32 1.1754944e-38, %v2246
  %v2248 = vsel %vm2245, %v2247, %v2243
  %v2249 = vmul.f32 1.0, %v2248
  %v2250 = vtanh.pop %v2230
  %v2252 = vrot.slane %v2194, 7
  %v2254 = vmul.f32 %v2249, %v2252
  %2256 = vrot.lane.b32.xlu0 %v2250, 96
  %v2257 = vpop.permute.xlu0 %2256
  %v2259 = vmul.f32 %v2249, %v2257
  %2261 = vrot.lane.b32.xlu0 %v2259, 16
  %v2262 = vpop.permute.xlu0 %2261
  %v2264 = vadd.f32 %v2254, %v2262
  %v2265 = vtanh.pop %v2264
  %2267 = vrot.lane.b32.xlu0 %v2265, 32
  %v2268 = vpop.permute.xlu0 %2267
  %v2270 = vmul.f32 %v2249, %v2268
  %v2272 = vrot.slane %v2270, 4
  %2273 = vrot.lane.b32.xlu0 %v2272, 80
  %v2274 = vpop.permute.xlu0 %2273
  %v2275 = vsel %vm1650, %v2274, 0
  %2277 = vmatpush.msra.mxu0 0.0
  %2278 = vmatpush.msra.mxu0 0.0
  %2279 = vmatpush.msra.mxu0 0.0
  %2280 = vmatpush.msra.mxu0 0.0
  %2281 = vmatpush.msra.mxu0 0.0
  %2282 = vmatpush.msra.mxu0 0.0
  %2283 = vmatpush.msra.mxu0 0.0
  %2284 = vmatpush.msra.mxu0 0.0
  %2285 = vmatpush.msra.mxu0 0.0
  %2286 = vmatpush.msra.mxu0 0.0
  %2287 = vmatpush.msra.mxu0 0.0
  %2288 = vmatpush.msra.mxu0 0.0
  %2289 = vmatpush.msra.mxu0 0.0
  %2290 = vmatpush.msra.mxu0 0.0
  %2291 = vmatpush.msra.mxu0 %v1930
  %2292 = vmatpush.msra.mxu0 %v1929
  %2293 = vmatmul.f32.gmra.mxu0 %v2275
  %v2294 = vpop.f32.mrf.mxu0
  %v2295 = vadd.f32 0.0, %v2294
  %2296 = vdwg.mxu0
  %v2298 = vrot.slane %v2295, 3
  %v2300 = vadd.f32 %v1921, %v2298
  %v2301 = vxor.u32 %v2300, 2147483648
  %v2302 = vmul.f32 %v2301, 1.442695
  %v2303 = vpow.pop %v2302
  %v2304 = vadd.f32 %v2303, 1.0
  %v2305 = vrcp.pop %v2304
  %v2306 = vmul.f32 %v2304, %v2305
  %v2307 = vsub.f32 1.0, %v2306
  %v2308 = vmul.f32 %v2305, %v2307
  %v2309 = vadd.f32 %v2305, %v2308
  %vm2310 = vweird.f32 %v2304
  %vm2311 = vweird.f32 %v2305
  %vm2312 = vmor %vm2310, %vm2311
  %v2313 = vsel %vm2312, %v2305, %v2309
  %v2314 = vand.u32 2147483647, %v2304
  %vm2315 = vcmp.eq.f32.partialorder %v2314, 8.507059e+37
  %v2316 = vand.u32 %v2304, 2147483648
  %v2317 = vor.u32 1.1754944e-38, %v2316
  %v2318 = vsel %vm2315, %v2317, %v2313
  %v2319 = vmul.f32 1.0, %v2318
  %v2320 = vtanh.pop %v2300
  %v2322 = vrot.slane %v2264, 7
  %v2324 = vmul.f32 %v2319, %v2322
  %2326 = vrot.lane.b32.xlu0 %v2320, 96
  %v2327 = vpop.permute.xlu0 %2326
  %v2329 = vmul.f32 %v2319, %v2327
  %2331 = vrot.lane.b32.xlu0 %v2329, 16
  %v2332 = vpop.permute.xlu0 %2331
  %v2334 = vadd.f32 %v2324, %v2332
  %v2335 = vtanh.pop %v2334
  %2337 = vrot.lane.b32.xlu0 %v2335, 32
  %v2338 = vpop.permute.xlu0 %2337
  %v2340 = vmul.f32 %v2319, %v2338
  %v2342 = vrot.slane %v2340, 5
  %2343 = vrot.lane.b32.xlu0 %v2342, 80
  %v2344 = vpop.permute.xlu0 %2343
  %v2345 = vsel %vm1650, %v2344, 0
  %2347 = vmatpush.msra.mxu0 0.0
  %2348 = vmatpush.msra.mxu0 0.0
  %2349 = vmatpush.msra.mxu0 0.0
  %2350 = vmatpush.msra.mxu0 0.0
  %2351 = vmatpush.msra.mxu0 0.0
  %2352 = vmatpush.msra.mxu0 0.0
  %2353 = vmatpush.msra.mxu0 0.0
  %2354 = vmatpush.msra.mxu0 0.0
  %2355 = vmatpush.msra.mxu0 0.0
  %2356 = vmatpush.msra.mxu0 0.0
  %2357 = vmatpush.msra.mxu0 0.0
  %2358 = vmatpush.msra.mxu0 0.0
  %2359 = vmatpush.msra.mxu0 0.0
  %2360 = vmatpush.msra.mxu0 0.0
  %2361 = vmatpush.msra.mxu0 %v1930
  %2362 = vmatpush.msra.mxu0 %v1929
  %2363 = vmatmul.f32.gmra.mxu0 %v2345
  %v2364 = vpop.f32.mrf.mxu0
  %v2365 = vadd.f32 0.0, %v2364
  %2366 = vdwg.mxu0
  %v2368 = vrot.slane %v2365, 2
  %v2370 = vadd.f32 %v1921, %v2368
  %v2371 = vxor.u32 %v2370, 2147483648
  %v2372 = vmul.f32 %v2371, 1.442695
  %v2373 = vpow.pop %v2372
  %v2374 = vadd.f32 %v2373, 1.0
  %v2375 = vrcp.pop %v2374
  %v2376 = vmul.f32 %v2374, %v2375
  %v2377 = vsub.f32 1.0, %v2376
  %v2378 = vmul.f32 %v2375, %v2377
  %v2379 = vadd.f32 %v2375, %v2378
  %vm2380 = vweird.f32 %v2374
  %vm2381 = vweird.f32 %v2375
  %vm2382 = vmor %vm2380, %vm2381
  %v2383 = vsel %vm2382, %v2375, %v2379
  %v2384 = vand.u32 2147483647, %v2374
  %vm2385 = vcmp.eq.f32.partialorder %v2384, 8.507059e+37
  %v2386 = vand.u32 %v2374, 2147483648
  %v2387 = vor.u32 1.1754944e-38, %v2386
  %v2388 = vsel %vm2385, %v2387, %v2383
  %v2389 = vmul.f32 1.0, %v2388
  %v2390 = vtanh.pop %v2370
  %v2392 = vrot.slane %v2334, 7
  %v2394 = vmul.f32 %v2389, %v2392
  %2396 = vrot.lane.b32.xlu0 %v2390, 96
  %v2397 = vpop.permute.xlu0 %2396
  %v2399 = vmul.f32 %v2389, %v2397
  %2401 = vrot.lane.b32.xlu0 %v2399, 16
  %v2402 = vpop.permute.xlu0 %2401
  %v2404 = vadd.f32 %v2394, %v2402
  %v2405 = vtanh.pop %v2404
  %2407 = vrot.lane.b32.xlu0 %v2405, 32
  %v2408 = vpop.permute.xlu0 %2407
  %v2410 = vmul.f32 %v2389, %v2408
  %v2412 = vrot.slane %v2410, 6
  %2413 = vrot.lane.b32.xlu0 %v2412, 80
  %v2414 = vpop.permute.xlu0 %2413
  %v2415 = vsel %vm1650, %v2414, 0
  %2417 = vmatpush.msra.mxu0 0.0
  %2418 = vmatpush.msra.mxu0 0.0
  %2419 = vmatpush.msra.mxu0 0.0
  %2420 = vmatpush.msra.mxu0 0.0
  %2421 = vmatpush.msra.mxu0 0.0
  %2422 = vmatpush.msra.mxu0 0.0
  %2423 = vmatpush.msra.mxu0 0.0
  %2424 = vmatpush.msra.mxu0 0.0
  %2425 = vmatpush.msra.mxu0 0.0
  %2426 = vmatpush.msra.mxu0 0.0
  %2427 = vmatpush.msra.mxu0 0.0
  %2428 = vmatpush.msra.mxu0 0.0
  %2429 = vmatpush.msra.mxu0 0.0
  %2430 = vmatpush.msra.mxu0 0.0
  %2431 = vmatpush.msra.mxu0 %v1930
  %2432 = vmatpush.msra.mxu0 %v1929
  %2433 = vmatmul.f32.gmra.mxu0 %v2415
  %v2434 = vpop.f32.mrf.mxu0
  %v2435 = vadd.f32 0.0, %v2434
  %2436 = vdwg.mxu0
  %v2438 = vrot.slane %v2435, 1
  %v2440 = vadd.f32 %v1921, %v2438
  %v2441 = vxor.u32 %v2440, 2147483648
  %v2442 = vmul.f32 %v2441, 1.442695
  %v2443 = vpow.pop %v2442
  %v2444 = vadd.f32 %v2443, 1.0
  %v2445 = vrcp.pop %v2444
  %v2446 = vmul.f32 %v2444, %v2445
  %v2447 = vsub.f32 1.0, %v2446
  %v2448 = vmul.f32 %v2445, %v2447
  %v2449 = vadd.f32 %v2445, %v2448
  %vm2450 = vweird.f32 %v2444
  %vm2451 = vweird.f32 %v2445
  %vm2452 = vmor %vm2450, %vm2451
  %v2453 = vsel %vm2452, %v2445, %v2449
  %v2454 = vand.u32 2147483647, %v2444
  %vm2455 = vcmp.eq.f32.partialorder %v2454, 8.507059e+37
  %v2456 = vand.u32 %v2444, 2147483648
  %v2457 = vor.u32 1.1754944e-38, %v2456
  %v2458 = vsel %vm2455, %v2457, %v2453
  %v2459 = vmul.f32 1.0, %v2458
  %v2460 = vtanh.pop %v2440
  %v2462 = vrot.slane %v2404, 7
  %v2464 = vmul.f32 %v2459, %v2462
  %2466 = vrot.lane.b32.xlu0 %v2460, 96
  %v2467 = vpop.permute.xlu0 %2466
  %v2469 = vmul.f32 %v2459, %v2467
  %2471 = vrot.lane.b32.xlu0 %v2469, 16
  %v2472 = vpop.permute.xlu0 %2471
  %v2474 = vadd.f32 %v2464, %v2472
  %v2475 = vtanh.pop %v2474
  %2477 = vrot.lane.b32.xlu0 %v2475, 32
  %v2478 = vpop.permute.xlu0 %2477
  %v2480 = vmul.f32 %v2459, %v2478
  %v2482 = vrot.slane %v2480, 7
  %2483 = vrot.lane.b32.xlu0 %v2482, 80
  %v2484 = vpop.permute.xlu0 %2483
  %v2485 = vsel %vm1650, %v2484, 0
  %2487 = vmatpush.msra.mxu0 0.0
  %2488 = vmatpush.msra.mxu0 0.0
  %2489 = vmatpush.msra.mxu0 0.0
  %2490 = vmatpush.msra.mxu0 0.0
  %2491 = vmatpush.msra.mxu0 0.0
  %2492 = vmatpush.msra.mxu0 0.0
  %2493 = vmatpush.msra.mxu0 0.0
  %2494 = vmatpush.msra.mxu0 0.0
  %2495 = vmatpush.msra.mxu0 0.0
  %2496 = vmatpush.msra.mxu0 0.0
  %2497 = vmatpush.msra.mxu0 0.0
  %2498 = vmatpush.msra.mxu0 0.0
  %2499 = vmatpush.msra.mxu0 0.0
  %2500 = vmatpush.msra.mxu0 0.0
  %2501 = vmatpush.msra.mxu0 %v1930
  %2502 = vmatpush.msra.mxu0 %v1929
  %2503 = vmatmul.f32.gmra.mxu0 %v2485
  %v2504 = vpop.f32.mrf.mxu0
  %v2505 = vadd.f32 0.0, %v2504
  %2506 = vdwg.mxu0
  %v2507 = vadd.f32 %v1924, %v2505
  %v2508 = vxor.u32 %v2507, 2147483648
  %v2509 = vmul.f32 %v2508, 1.442695
  %v2510 = vpow.pop %v2509
  %v2511 = vadd.f32 %v2510, 1.0
  %v2512 = vrcp.pop %v2511
  %v2513 = vmul.f32 %v2511, %v2512
  %v2514 = vsub.f32 1.0, %v2513
  %v2515 = vmul.f32 %v2512, %v2514
  %v2516 = vadd.f32 %v2512, %v2515
  %vm2517 = vweird.f32 %v2511
  %vm2518 = vweird.f32 %v2512
  %vm2519 = vmor %vm2517, %vm2518
  %v2520 = vsel %vm2519, %v2512, %v2516
  %v2521 = vand.u32 2147483647, %v2511
  %vm2522 = vcmp.eq.f32.partialorder %v2521, 8.507059e+37
  %v2523 = vand.u32 %v2511, 2147483648
  %v2524 = vor.u32 1.1754944e-38, %v2523
  %v2525 = vsel %vm2522, %v2524, %v2520
  %v2526 = vmul.f32 1.0, %v2525
  %v2527 = vtanh.pop %v2507
  %v2529 = vrot.slane %v2474, 7
  %v2531 = vmul.f32 %v2526, %v2529
  %2533 = vrot.lane.b32.xlu0 %v2527, 96
  %v2534 = vpop.permute.xlu0 %2533
  %v2536 = vmul.f32 %v2526, %v2534
  %2538 = vrot.lane.b32.xlu0 %v2536, 16
  %v2539 = vpop.permute.xlu0 %2538
  %v2541 = vadd.f32 %v2531, %v2539
  %v2542 = vtanh.pop %v2541
  %2544 = vrot.lane.b32.xlu0 %v2542, 32
  %v2545 = vpop.permute.xlu0 %2544
  %v2547 = vmul.f32 %v2526, %v2545
  %2549 = vrot.lane.b32.xlu0 %v2547, 80
  %v2550 = vpop.permute.xlu0 %2549
  %v2551 = vsel %vm1650, %v2550, 0
  %2553 = vmatpush.msra.mxu0 0.0
  %2554 = vmatpush.msra.mxu0 0.0
  %2555 = vmatpush.msra.mxu0 0.0
  %2556 = vmatpush.msra.mxu0 0.0
  %2557 = vmatpush.msra.mxu0 0.0
  %2558 = vmatpush.msra.mxu0 0.0
  %2559 = vmatpush.msra.mxu0 0.0
  %2560 = vmatpush.msra.mxu0 0.0
  %2561 = vmatpush.msra.mxu0 0.0
  %2562 = vmatpush.msra.mxu0 0.0
  %2563 = vmatpush.msra.mxu0 0.0
  %2564 = vmatpush.msra.mxu0 0.0
  %2565 = vmatpush.msra.mxu0 0.0
  %2566 = vmatpush.msra.mxu0 0.0
  %2567 = vmatpush.msra.mxu0 %v1930
  %2568 = vmatpush.msra.mxu0 %v1929
  %2569 = vmatmul.f32.gmra.mxu0 %v2551
  %v2570 = vpop.f32.mrf.mxu0
  %v2571 = vadd.f32 0.0, %v2570
  %2572 = vdwg.mxu0
  %v2574 = vrot.slane %v2571, 7
  %v2576 = vadd.f32 %v1924, %v2574
  %v2577 = vxor.u32 %v2576, 2147483648
  %v2578 = vmul.f32 %v2577, 1.442695
  %v2579 = vpow.pop %v2578
  %v2580 = vadd.f32 %v2579, 1.0
  %v2581 = vrcp.pop %v2580
  %v2582 = vmul.f32 %v2580, %v2581
  %v2583 = vsub.f32 1.0, %v2582
  %v2584 = vmul.f32 %v2581, %v2583
  %v2585 = vadd.f32 %v2581, %v2584
  %vm2586 = vweird.f32 %v2580
  %vm2587 = vweird.f32 %v2581
  %vm2588 = vmor %vm2586, %vm2587
  %v2589 = vsel %vm2588, %v2581, %v2585
  %v2590 = vand.u32 2147483647, %v2580
  %vm2591 = vcmp.eq.f32.partialorder %v2590, 8.507059e+37
  %v2592 = vand.u32 %v2580, 2147483648
  %v2593 = vor.u32 1.1754944e-38, %v2592
  %v2594 = vsel %vm2591, %v2593, %v2589
  %v2595 = vmul.f32 1.0, %v2594
  %v2596 = vtanh.pop %v2576
  %v2598 = vrot.slane %v2541, 7
  %v2600 = vmul.f32 %v2595, %v2598
  %2602 = vrot.lane.b32.xlu0 %v2596, 96
  %v2603 = vpop.permute.xlu0 %2602
  %v2605 = vmul.f32 %v2595, %v2603
  %2607 = vrot.lane.b32.xlu0 %v2605, 16
  %v2608 = vpop.permute.xlu0 %2607
  %v2610 = vadd.f32 %v2600, %v2608
  %v2611 = vtanh.pop %v2610
  %2613 = vrot.lane.b32.xlu0 %v2611, 32
  %v2614 = vpop.permute.xlu0 %2613
  %v2616 = vmul.f32 %v2595, %v2614
  %v2618 = vrot.slane %v2616, 1
  %2619 = vrot.lane.b32.xlu0 %v2618, 80
  %v2620 = vpop.permute.xlu0 %2619
  %v2621 = vsel %vm1650, %v2620, 0
  %2623 = vmatpush.msra.mxu0 0.0
  %2624 = vmatpush.msra.mxu0 0.0
  %2625 = vmatpush.msra.mxu0 0.0
  %2626 = vmatpush.msra.mxu0 0.0
  %2627 = vmatpush.msra.mxu0 0.0
  %2628 = vmatpush.msra.mxu0 0.0
  %2629 = vmatpush.msra.mxu0 0.0
  %2630 = vmatpush.msra.mxu0 0.0
  %2631 = vmatpush.msra.mxu0 0.0
  %2632 = vmatpush.msra.mxu0 0.0
  %2633 = vmatpush.msra.mxu0 0.0
  %2634 = vmatpush.msra.mxu0 0.0
  %2635 = vmatpush.msra.mxu0 0.0
  %2636 = vmatpush.msra.mxu0 0.0
  %2637 = vmatpush.msra.mxu0 %v1930
  %2638 = vmatpush.msra.mxu0 %v1929
  %2639 = vmatmul.f32.gmra.mxu0 %v2621
  %v2640 = vpop.f32.mrf.mxu0
  %v2641 = vadd.f32 0.0, %v2640
  %2642 = vdwg.mxu0
  %v2644 = vrot.slane %v2641, 6
  %v2646 = vadd.f32 %v1924, %v2644
  %v2647 = vxor.u32 %v2646, 2147483648
  %v2648 = vmul.f32 %v2647, 1.442695
  %v2649 = vpow.pop %v2648
  %v2650 = vadd.f32 %v2649, 1.0
  %v2651 = vrcp.pop %v2650
  %v2652 = vmul.f32 %v2650, %v2651
  %v2653 = vsub.f32 1.0, %v2652
  %v2654 = vmul.f32 %v2651, %v2653
  %v2655 = vadd.f32 %v2651, %v2654
  %vm2656 = vweird.f32 %v2650
  %vm2657 = vweird.f32 %v2651
  %vm2658 = vmor %vm2656, %vm2657
  %v2659 = vsel %vm2658, %v2651, %v2655
  %v2660 = vand.u32 2147483647, %v2650
  %vm2661 = vcmp.eq.f32.partialorder %v2660, 8.507059e+37
  %v2662 = vand.u32 %v2650, 2147483648
  %v2663 = vor.u32 1.1754944e-38, %v2662
  %v2664 = vsel %vm2661, %v2663, %v2659
  %v2665 = vmul.f32 1.0, %v2664
  %v2666 = vtanh.pop %v2646
  %v2668 = vrot.slane %v2610, 7
  %v2670 = vmul.f32 %v2665, %v2668
  %2672 = vrot.lane.b32.xlu0 %v2666, 96
  %v2673 = vpop.permute.xlu0 %2672
  %v2675 = vmul.f32 %v2665, %v2673
  %2677 = vrot.lane.b32.xlu0 %v2675, 16
  %v2678 = vpop.permute.xlu0 %2677
  %v2680 = vadd.f32 %v2670, %v2678
  %v2681 = vtanh.pop %v2680
  %2683 = vrot.lane.b32.xlu0 %v2681, 32
  %v2684 = vpop.permute.xlu0 %2683
  %v2686 = vmul.f32 %v2665, %v2684
  %v2688 = vrot.slane %v2686, 2
  %2689 = vrot.lane.b32.xlu0 %v2688, 80
  %v2690 = vpop.permute.xlu0 %2689
  %v2691 = vsel %vm1650, %v2690, 0
  %2693 = vmatpush.msra.mxu0 0.0
  %2694 = vmatpush.msra.mxu0 0.0
  %2695 = vmatpush.msra.mxu0 0.0
  %2696 = vmatpush.msra.mxu0 0.0
  %2697 = vmatpush.msra.mxu0 0.0
  %2698 = vmatpush.msra.mxu0 0.0
  %2699 = vmatpush.msra.mxu0 0.0
  %2700 = vmatpush.msra.mxu0 0.0
  %2701 = vmatpush.msra.mxu0 0.0
  %2702 = vmatpush.msra.mxu0 0.0
  %2703 = vmatpush.msra.mxu0 0.0
  %2704 = vmatpush.msra.mxu0 0.0
  %2705 = vmatpush.msra.mxu0 0.0
  %2706 = vmatpush.msra.mxu0 0.0
  %2707 = vmatpush.msra.mxu0 %v1930
  %2708 = vmatpush.msra.mxu0 %v1929
  %2709 = vmatmul.f32.gmra.mxu0 %v2691
  %v2710 = vpop.f32.mrf.mxu0
  %v2711 = vadd.f32 0.0, %v2710
  %2712 = vdwg.mxu0
  %v2714 = vrot.slane %v2711, 5
  %v2716 = vadd.f32 %v1924, %v2714
  %v2717 = vxor.u32 %v2716, 2147483648
  %v2718 = vmul.f32 %v2717, 1.442695
  %v2719 = vpow.pop %v2718
  %v2720 = vadd.f32 %v2719, 1.0
  %v2721 = vrcp.pop %v2720
  %v2722 = vmul.f32 %v2720, %v2721
  %v2723 = vsub.f32 1.0, %v2722
  %v2724 = vmul.f32 %v2721, %v2723
  %v2725 = vadd.f32 %v2721, %v2724
  %vm2726 = vweird.f32 %v2720
  %vm2727 = vweird.f32 %v2721
  %vm2728 = vmor %vm2726, %vm2727
  %v2729 = vsel %vm2728, %v2721, %v2725
  %v2730 = vand.u32 2147483647, %v2720
  %vm2731 = vcmp.eq.f32.partialorder %v2730, 8.507059e+37
  %v2732 = vand.u32 %v2720, 2147483648
  %v2733 = vor.u32 1.1754944e-38, %v2732
  %v2734 = vsel %vm2731, %v2733, %v2729
  %v2735 = vmul.f32 1.0, %v2734
  %v2736 = vtanh.pop %v2716
  %v2738 = vrot.slane %v2680, 7
  %v2740 = vmul.f32 %v2735, %v2738
  %2742 = vrot.lane.b32.xlu0 %v2736, 96
  %v2743 = vpop.permute.xlu0 %2742
  %v2745 = vmul.f32 %v2735, %v2743
  %2747 = vrot.lane.b32.xlu0 %v2745, 16
  %v2748 = vpop.permute.xlu0 %2747
  %v2750 = vadd.f32 %v2740, %v2748
  %v2751 = vtanh.pop %v2750
  %2753 = vrot.lane.b32.xlu0 %v2751, 32
  %v2754 = vpop.permute.xlu0 %2753
  %v2756 = vmul.f32 %v2735, %v2754
  %v2758 = vrot.slane %v2756, 3
  %2759 = vrot.lane.b32.xlu0 %v2758, 80
  %v2760 = vpop.permute.xlu0 %2759
  %v2761 = vsel %vm1650, %v2760, 0
  %2763 = vmatpush.msra.mxu0 0.0
  %2764 = vmatpush.msra.mxu0 0.0
  %2765 = vmatpush.msra.mxu0 0.0
  %2766 = vmatpush.msra.mxu0 0.0
  %2767 = vmatpush.msra.mxu0 0.0
  %2768 = vmatpush.msra.mxu0 0.0
  %2769 = vmatpush.msra.mxu0 0.0
  %2770 = vmatpush.msra.mxu0 0.0
  %2771 = vmatpush.msra.mxu0 0.0
  %2772 = vmatpush.msra.mxu0 0.0
  %2773 = vmatpush.msra.mxu0 0.0
  %2774 = vmatpush.msra.mxu0 0.0
  %2775 = vmatpush.msra.mxu0 0.0
  %2776 = vmatpush.msra.mxu0 0.0
  %2777 = vmatpush.msra.mxu0 %v1930
  %2778 = vmatpush.msra.mxu0 %v1929
  %2779 = vmatmul.f32.gmra.mxu0 %v2761
  %v2780 = vpop.f32.mrf.mxu0
  %v2781 = vadd.f32 0.0, %v2780
  %2782 = vdwg.mxu0
  %v2784 = vrot.slane %v2781, 4
  %v2786 = vadd.f32 %v1924, %v2784
  %v2787 = vxor.u32 %v2786, 2147483648
  %v2788 = vmul.f32 %v2787, 1.442695
  %v2789 = vpow.pop %v2788
  %v2790 = vadd.f32 %v2789, 1.0
  %v2791 = vrcp.pop %v2790
  %v2792 = vmul.f32 %v2790, %v2791
  %v2793 = vsub.f32 1.0, %v2792
  %v2794 = vmul.f32 %v2791, %v2793
  %v2795 = vadd.f32 %v2791, %v2794
  %vm2796 = vweird.f32 %v2790
  %vm2797 = vweird.f32 %v2791
  %vm2798 = vmor %vm2796, %vm2797
  %v2799 = vsel %vm2798, %v2791, %v2795
  %v2800 = vand.u32 2147483647, %v2790
  %vm2801 = vcmp.eq.f32.partialorder %v2800, 8.507059e+37
  %v2802 = vand.u32 %v2790, 2147483648
  %v2803 = vor.u32 1.1754944e-38, %v2802
  %v2804 = vsel %vm2801, %v2803, %v2799
  %v2805 = vmul.f32 1.0, %v2804
  %v2806 = vtanh.pop %v2786
  %v2808 = vrot.slane %v2750, 7
  %v2810 = vmul.f32 %v2805, %v2808
  %2812 = vrot.lane.b32.xlu0 %v2806, 96
  %v2813 = vpop.permute.xlu0 %2812
  %v2815 = vmul.f32 %v2805, %v2813
  %2817 = vrot.lane.b32.xlu0 %v2815, 16
  %v2818 = vpop.permute.xlu0 %2817
  %v2820 = vadd.f32 %v2810, %v2818
  %v2821 = vtanh.pop %v2820
  %2823 = vrot.lane.b32.xlu0 %v2821, 32
  %v2824 = vpop.permute.xlu0 %2823
  %v2826 = vmul.f32 %v2805, %v2824
  %v2828 = vrot.slane %v2826, 4
  %2829 = vrot.lane.b32.xlu0 %v2828, 80
  %v2830 = vpop.permute.xlu0 %2829
  %v2831 = vsel %vm1650, %v2830, 0
  %2833 = vmatpush.msra.mxu0 0.0
  %2834 = vmatpush.msra.mxu0 0.0
  %2835 = vmatpush.msra.mxu0 0.0
  %2836 = vmatpush.msra.mxu0 0.0
  %2837 = vmatpush.msra.mxu0 0.0
  %2838 = vmatpush.msra.mxu0 0.0
  %2839 = vmatpush.msra.mxu0 0.0
  %2840 = vmatpush.msra.mxu0 0.0
  %2841 = vmatpush.msra.mxu0 0.0
  %2842 = vmatpush.msra.mxu0 0.0
  %2843 = vmatpush.msra.mxu0 0.0
  %2844 = vmatpush.msra.mxu0 0.0
  %2845 = vmatpush.msra.mxu0 0.0
  %2846 = vmatpush.msra.mxu0 0.0
  %2847 = vmatpush.msra.mxu0 %v1930
  %2848 = vmatpush.msra.mxu0 %v1929
  %2849 = vmatmul.f32.gmra.mxu0 %v2831
  %v2850 = vpop.f32.mrf.mxu0
  %v2851 = vadd.f32 0.0, %v2850
  %2852 = vdwg.mxu0
  %v2854 = vrot.slane %v2851, 3
  %v2856 = vadd.f32 %v1924, %v2854
  %v2857 = vxor.u32 %v2856, 2147483648
  %v2858 = vmul.f32 %v2857, 1.442695
  %v2859 = vpow.pop %v2858
  %v2860 = vadd.f32 %v2859, 1.0
  %v2861 = vrcp.pop %v2860
  %v2862 = vmul.f32 %v2860, %v2861
  %v2863 = vsub.f32 1.0, %v2862
  %v2864 = vmul.f32 %v2861, %v2863
  %v2865 = vadd.f32 %v2861, %v2864
  %vm2866 = vweird.f32 %v2860
  %vm2867 = vweird.f32 %v2861
  %vm2868 = vmor %vm2866, %vm2867
  %v2869 = vsel %vm2868, %v2861, %v2865
  %v2870 = vand.u32 2147483647, %v2860
  %vm2871 = vcmp.eq.f32.partialorder %v2870, 8.507059e+37
  %v2872 = vand.u32 %v2860, 2147483648
  %v2873 = vor.u32 1.1754944e-38, %v2872
  %v2874 = vsel %vm2871, %v2873, %v2869
  %v2875 = vmul.f32 1.0, %v2874
  %v2876 = vtanh.pop %v2856
  %v2878 = vrot.slane %v2820, 7
  %v2880 = vmul.f32 %v2875, %v2878
  %2882 = vrot.lane.b32.xlu0 %v2876, 96
  %v2883 = vpop.permute.xlu0 %2882
  %v2885 = vmul.f32 %v2875, %v2883
  %2887 = vrot.lane.b32.xlu0 %v2885, 16
  %v2888 = vpop.permute.xlu0 %2887
  %v2890 = vadd.f32 %v2880, %v2888
  %v2891 = vtanh.pop %v2890
  %2893 = vrot.lane.b32.xlu0 %v2891, 32
  %v2894 = vpop.permute.xlu0 %2893
  %v2896 = vmul.f32 %v2875, %v2894
  %v2898 = vrot.slane %v2896, 5
  %2899 = vrot.lane.b32.xlu0 %v2898, 80
  %v2900 = vpop.permute.xlu0 %2899
  %v2901 = vsel %vm1650, %v2900, 0
  %2903 = vmatpush.msra.mxu0 0.0
  %2904 = vmatpush.msra.mxu0 0.0
  %2905 = vmatpush.msra.mxu0 0.0
  %2906 = vmatpush.msra.mxu0 0.0
  %2907 = vmatpush.msra.mxu0 0.0
  %2908 = vmatpush.msra.mxu0 0.0
  %2909 = vmatpush.msra.mxu0 0.0
  %2910 = vmatpush.msra.mxu0 0.0
  %2911 = vmatpush.msra.mxu0 0.0
  %2912 = vmatpush.msra.mxu0 0.0
  %2913 = vmatpush.msra.mxu0 0.0
  %2914 = vmatpush.msra.mxu0 0.0
  %2915 = vmatpush.msra.mxu0 0.0
  %2916 = vmatpush.msra.mxu0 0.0
  %2917 = vmatpush.msra.mxu0 %v1930
  %2918 = vmatpush.msra.mxu0 %v1929
  %2919 = vmatmul.f32.gmra.mxu0 %v2901
  %v2920 = vpop.f32.mrf.mxu0
  %v2921 = vadd.f32 0.0, %v2920
  %2922 = vdwg.mxu0
  %v2924 = vrot.slane %v2921, 2
  %v2926 = vadd.f32 %v1924, %v2924
  %v2927 = vxor.u32 %v2926, 2147483648
  %v2928 = vmul.f32 %v2927, 1.442695
  %v2929 = vpow.pop %v2928
  %v2930 = vadd.f32 %v2929, 1.0
  %v2931 = vrcp.pop %v2930
  %v2932 = vmul.f32 %v2930, %v2931
  %v2933 = vsub.f32 1.0, %v2932
  %v2934 = vmul.f32 %v2931, %v2933
  %v2935 = vadd.f32 %v2931, %v2934
  %vm2936 = vweird.f32 %v2930
  %vm2937 = vweird.f32 %v2931
  %vm2938 = vmor %vm2936, %vm2937
  %v2939 = vsel %vm2938, %v2931, %v2935
  %v2940 = vand.u32 2147483647, %v2930
  %vm2941 = vcmp.eq.f32.partialorder %v2940, 8.507059e+37
  %v2942 = vand.u32 %v2930, 2147483648
  %v2943 = vor.u32 1.1754944e-38, %v2942
  %v2944 = vsel %vm2941, %v2943, %v2939
  %v2945 = vmul.f32 1.0, %v2944
  %v2946 = vtanh.pop %v2926
  %v2948 = vrot.slane %v2890, 7
  %v2950 = vmul.f32 %v2945, %v2948
  %2952 = vrot.lane.b32.xlu0 %v2946, 96
  %v2953 = vpop.permute.xlu0 %2952
  %v2955 = vmul.f32 %v2945, %v2953
  %2957 = vrot.lane.b32.xlu0 %v2955, 16
  %v2958 = vpop.permute.xlu0 %2957
  %v2960 = vadd.f32 %v2950, %v2958
  %v2961 = vtanh.pop %v2960
  %2963 = vrot.lane.b32.xlu0 %v2961, 32
  %v2964 = vpop.permute.xlu0 %2963
  %v2966 = vmul.f32 %v2945, %v2964
  %v2968 = vrot.slane %v2966, 6
  %2969 = vrot.lane.b32.xlu0 %v2968, 80
  %v2970 = vpop.permute.xlu0 %2969
  %v2971 = vsel %vm1650, %v2970, 0
  %2973 = vmatpush.msra.mxu0 0.0
  %2974 = vmatpush.msra.mxu0 0.0
  %2975 = vmatpush.msra.mxu0 0.0
  %2976 = vmatpush.msra.mxu0 0.0
  %2977 = vmatpush.msra.mxu0 0.0
  %2978 = vmatpush.msra.mxu0 0.0
  %2979 = vmatpush.msra.mxu0 0.0
  %2980 = vmatpush.msra.mxu0 0.0
  %2981 = vmatpush.msra.mxu0 0.0
  %2982 = vmatpush.msra.mxu0 0.0
  %2983 = vmatpush.msra.mxu0 0.0
  %2984 = vmatpush.msra.mxu0 0.0
  %2985 = vmatpush.msra.mxu0 0.0
  %2986 = vmatpush.msra.mxu0 0.0
  %2987 = vmatpush.msra.mxu0 %v1930
  %2988 = vmatpush.msra.mxu0 %v1929
  %2989 = vmatmul.f32.gmra.mxu0 %v2971
  %v2990 = vpop.f32.mrf.mxu0
  %v2991 = vadd.f32 0.0, %v2990
  %2992 = vdwg.mxu0
  %v2994 = vrot.slane %v2991, 1
  %v2996 = vadd.f32 %v1924, %v2994
  %v2997 = vxor.u32 %v2996, 2147483648
  %v2998 = vmul.f32 %v2997, 1.442695
  %v2999 = vpow.pop %v2998
  %v3000 = vadd.f32 %v2999, 1.0
  %v3001 = vrcp.pop %v3000
  %v3002 = vmul.f32 %v3000, %v3001
  %v3003 = vsub.f32 1.0, %v3002
  %v3004 = vmul.f32 %v3001, %v3003
  %v3005 = vadd.f32 %v3001, %v3004
  %vm3006 = vweird.f32 %v3000
  %vm3007 = vweird.f32 %v3001
  %vm3008 = vmor %vm3006, %vm3007
  %v3009 = vsel %vm3008, %v3001, %v3005
  %v3010 = vand.u32 2147483647, %v3000
  %vm3011 = vcmp.eq.f32.partialorder %v3010, 8.507059e+37
  %v3012 = vand.u32 %v3000, 2147483648
  %v3013 = vor.u32 1.1754944e-38, %v3012
  %v3014 = vsel %vm3011, %v3013, %v3009
  %v3015 = vmul.f32 1.0, %v3014
  %v3016 = vtanh.pop %v2996
  %v3018 = vrot.slane %v2960, 7
  %v3020 = vmul.f32 %v3015, %v3018
  %3022 = vrot.lane.b32.xlu0 %v3016, 96
  %v3023 = vpop.permute.xlu0 %3022
  %v3025 = vmul.f32 %v3015, %v3023
  %3027 = vrot.lane.b32.xlu0 %v3025, 16
  %v3028 = vpop.permute.xlu0 %3027
  %v3030 = vadd.f32 %v3020, %v3028
  %v3031 = vtanh.pop %v3030
  %3033 = vrot.lane.b32.xlu0 %v3031, 32
  %v3034 = vpop.permute.xlu0 %3033
  %v3036 = vmul.f32 %v3015, %v3034
  %v3038 = vrot.slane %v3036, 7
  %3039 = vrot.lane.b32.xlu0 %v3038, 80
  %v3040 = vpop.permute.xlu0 %3039
  %v3041 = vsel %vm1650, %v3040, 0
  %3043 = vmatpush.msra.mxu0 0.0
  %3044 = vmatpush.msra.mxu0 0.0
  %3045 = vmatpush.msra.mxu0 0.0
  %3046 = vmatpush.msra.mxu0 0.0
  %3047 = vmatpush.msra.mxu0 0.0
  %3048 = vmatpush.msra.mxu0 0.0
  %3049 = vmatpush.msra.mxu0 0.0
  %3050 = vmatpush.msra.mxu0 0.0
  %3051 = vmatpush.msra.mxu0 0.0
  %3052 = vmatpush.msra.mxu0 0.0
  %3053 = vmatpush.msra.mxu0 0.0
  %3054 = vmatpush.msra.mxu0 0.0
  %3055 = vmatpush.msra.mxu0 0.0
  %3056 = vmatpush.msra.mxu0 0.0
  %3057 = vmatpush.msra.mxu0 %v1930
  %3058 = vmatpush.msra.mxu0 %v1929
  %3059 = vmatmul.f32.gmra.mxu0 %v3041
  %v3060 = vpop.f32.mrf.mxu0
  %v3061 = vadd.f32 0.0, %v3060
  %3062 = vdwg.mxu0
  %v3063 = vadd.f32 %v1927, %v3061
  %v3064 = vxor.u32 %v3063, 2147483648
  %v3065 = vmul.f32 %v3064, 1.442695
  %v3066 = vpow.pop %v3065
  %v3067 = vadd.f32 %v3066, 1.0
  %v3068 = vrcp.pop %v3067
  %v3069 = vmul.f32 %v3067, %v3068
  %v3070 = vsub.f32 1.0, %v3069
  %v3071 = vmul.f32 %v3068, %v3070
  %v3072 = vadd.f32 %v3068, %v3071
  %vm3073 = vweird.f32 %v3067
  %vm3074 = vweird.f32 %v3068
  %vm3075 = vmor %vm3073, %vm3074
  %v3076 = vsel %vm3075, %v3068, %v3072
  %v3077 = vand.u32 2147483647, %v3067
  %vm3078 = vcmp.eq.f32.partialorder %v3077, 8.507059e+37
  %v3079 = vand.u32 %v3067, 2147483648
  %v3080 = vor.u32 1.1754944e-38, %v3079
  %v3081 = vsel %vm3078, %v3080, %v3076
  %v3082 = vmul.f32 1.0, %v3081
  %v3083 = vtanh.pop %v3063
  %v3085 = vrot.slane %v3030, 7
  %v3087 = vmul.f32 %v3082, %v3085
  %3089 = vrot.lane.b32.xlu0 %v3083, 96
  %v3090 = vpop.permute.xlu0 %3089
  %v3092 = vmul.f32 %v3082, %v3090
  %3094 = vrot.lane.b32.xlu0 %v3092, 16
  %v3095 = vpop.permute.xlu0 %3094
  %v3097 = vadd.f32 %v3087, %v3095
  %v3098 = vtanh.pop %v3097
  %3100 = vrot.lane.b32.xlu0 %v3098, 32
  %v3101 = vpop.permute.xlu0 %3100
  %v3103 = vmul.f32 %v3082, %v3101
  %3105 = vrot.lane.b32.xlu0 %v3103, 80
  %v3106 = vpop.permute.xlu0 %3105
  %v3107 = vsel %vm1650, %v3106, 0
  %3109 = vmatpush.msra.mxu0 0.0
  %3110 = vmatpush.msra.mxu0 0.0
  %3111 = vmatpush.msra.mxu0 0.0
  %3112 = vmatpush.msra.mxu0 0.0
  %3113 = vmatpush.msra.mxu0 0.0
  %3114 = vmatpush.msra.mxu0 0.0
  %3115 = vmatpush.msra.mxu0 0.0
  %3116 = vmatpush.msra.mxu0 0.0
  %3117 = vmatpush.msra.mxu0 0.0
  %3118 = vmatpush.msra.mxu0 0.0
  %3119 = vmatpush.msra.mxu0 0.0
  %3120 = vmatpush.msra.mxu0 0.0
  %3121 = vmatpush.msra.mxu0 0.0
  %3122 = vmatpush.msra.mxu0 0.0
  %3123 = vmatpush.msra.mxu0 %v1930
  %3124 = vmatpush.msra.mxu0 %v1929
  %3125 = vmatmul.f32.gmra.mxu0 %v3107
  %v3126 = vpop.f32.mrf.mxu0
  %v3127 = vadd.f32 0.0, %v3126
  %3128 = vdwg.mxu0
  %v3130 = vrot.slane %v3127, 7
  %v3132 = vadd.f32 %v1927, %v3130
  %v3133 = vxor.u32 %v3132, 2147483648
  %v3134 = vmul.f32 %v3133, 1.442695
  %v3135 = vpow.pop %v3134
  %v3136 = vadd.f32 %v3135, 1.0
  %v3137 = vrcp.pop %v3136
  %v3138 = vmul.f32 %v3136, %v3137
  %v3139 = vsub.f32 1.0, %v3138
  %v3140 = vmul.f32 %v3137, %v3139
  %v3141 = vadd.f32 %v3137, %v3140
  %vm3142 = vweird.f32 %v3136
  %vm3143 = vweird.f32 %v3137
  %vm3144 = vmor %vm3142, %vm3143
  %v3145 = vsel %vm3144, %v3137, %v3141
  %v3146 = vand.u32 2147483647, %v3136
  %vm3147 = vcmp.eq.f32.partialorder %v3146, 8.507059e+37
  %v3148 = vand.u32 %v3136, 2147483648
  %v3149 = vor.u32 1.1754944e-38, %v3148
  %v3150 = vsel %vm3147, %v3149, %v3145
  %v3151 = vmul.f32 1.0, %v3150
  %v3152 = vtanh.pop %v3132
  %v3154 = vrot.slane %v3097, 7
  %v3156 = vmul.f32 %v3151, %v3154
  %3158 = vrot.lane.b32.xlu0 %v3152, 96
  %v3159 = vpop.permute.xlu0 %3158
  %v3161 = vmul.f32 %v3151, %v3159
  %3163 = vrot.lane.b32.xlu0 %v3161, 16
  %v3164 = vpop.permute.xlu0 %3163
  %v3166 = vadd.f32 %v3156, %v3164
  %v3167 = vtanh.pop %v3166
  %3169 = vrot.lane.b32.xlu0 %v3167, 32
  %v3170 = vpop.permute.xlu0 %3169
  %v3172 = vmul.f32 %v3151, %v3170
  %v3174 = vrot.slane %v3172, 1
  %3175 = vrot.lane.b32.xlu0 %v3174, 80
  %v3176 = vpop.permute.xlu0 %3175
  %v3177 = vsel %vm1650, %v3176, 0
  %3179 = vmatpush.msra.mxu0 0.0
  %3180 = vmatpush.msra.mxu0 0.0
  %3181 = vmatpush.msra.mxu0 0.0
  %3182 = vmatpush.msra.mxu0 0.0
  %3183 = vmatpush.msra.mxu0 0.0
  %3184 = vmatpush.msra.mxu0 0.0
  %3185 = vmatpush.msra.mxu0 0.0
  %3186 = vmatpush.msra.mxu0 0.0
  %3187 = vmatpush.msra.mxu0 0.0
  %3188 = vmatpush.msra.mxu0 0.0
  %3189 = vmatpush.msra.mxu0 0.0
  %3190 = vmatpush.msra.mxu0 0.0
  %3191 = vmatpush.msra.mxu0 0.0
  %3192 = vmatpush.msra.mxu0 0.0
  %3193 = vmatpush.msra.mxu0 %v1930
  %3194 = vmatpush.msra.mxu0 %v1929
  %3195 = vmatmul.f32.gmra.mxu0 %v3177
  %v3196 = vpop.f32.mrf.mxu0
  %v3197 = vadd.f32 0.0, %v3196
  %3198 = vdwg.mxu0
  %v3200 = vrot.slane %v3197, 6
  %v3202 = vadd.f32 %v1927, %v3200
  %v3203 = vxor.u32 %v3202, 2147483648
  %v3204 = vmul.f32 %v3203, 1.442695
  %v3205 = vpow.pop %v3204
  %v3206 = vadd.f32 %v3205, 1.0
  %v3207 = vrcp.pop %v3206
  %v3208 = vmul.f32 %v3206, %v3207
  %v3209 = vsub.f32 1.0, %v3208
  %v3210 = vmul.f32 %v3207, %v3209
  %v3211 = vadd.f32 %v3207, %v3210
  %vm3212 = vweird.f32 %v3206
  %vm3213 = vweird.f32 %v3207
  %vm3214 = vmor %vm3212, %vm3213
  %v3215 = vsel %vm3214, %v3207, %v3211
  %v3216 = vand.u32 2147483647, %v3206
  %vm3217 = vcmp.eq.f32.partialorder %v3216, 8.507059e+37
  %v3218 = vand.u32 %v3206, 2147483648
  %v3219 = vor.u32 1.1754944e-38, %v3218
  %v3220 = vsel %vm3217, %v3219, %v3215
  %v3221 = vmul.f32 1.0, %v3220
  %v3222 = vtanh.pop %v3202
  %v3224 = vrot.slane %v3166, 7
  %v3226 = vmul.f32 %v3221, %v3224
  %3228 = vrot.lane.b32.xlu0 %v3222, 96
  %v3229 = vpop.permute.xlu0 %3228
  %v3231 = vmul.f32 %v3221, %v3229
  %3233 = vrot.lane.b32.xlu0 %v3231, 16
  %v3234 = vpop.permute.xlu0 %3233
  %v3236 = vadd.f32 %v3226, %v3234
  %v3237 = vtanh.pop %v3236
  %3239 = vrot.lane.b32.xlu0 %v3237, 32
  %v3240 = vpop.permute.xlu0 %3239
  %v3242 = vmul.f32 %v3221, %v3240
  %v3244 = vrot.slane %v3242, 2
  %3245 = vrot.lane.b32.xlu0 %v3244, 80
  %v3246 = vpop.permute.xlu0 %3245
  %v3247 = vsel %vm1650, %v3246, 0
  %3249 = vmatpush.msra.mxu0 0.0
  %3250 = vmatpush.msra.mxu0 0.0
  %3251 = vmatpush.msra.mxu0 0.0
  %3252 = vmatpush.msra.mxu0 0.0
  %3253 = vmatpush.msra.mxu0 0.0
  %3254 = vmatpush.msra.mxu0 0.0
  %3255 = vmatpush.msra.mxu0 0.0
  %3256 = vmatpush.msra.mxu0 0.0
  %3257 = vmatpush.msra.mxu0 0.0
  %3258 = vmatpush.msra.mxu0 0.0
  %3259 = vmatpush.msra.mxu0 0.0
  %3260 = vmatpush.msra.mxu0 0.0
  %3261 = vmatpush.msra.mxu0 0.0
  %3262 = vmatpush.msra.mxu0 0.0
  %3263 = vmatpush.msra.mxu0 %v1930
  %3264 = vmatpush.msra.mxu0 %v1929
  %3265 = vmatmul.f32.gmra.mxu0 %v3247
  %v3266 = vpop.f32.mrf.mxu0
  %v3267 = vadd.f32 0.0, %v3266
  %3268 = vdwg.mxu0
  %v3270 = vrot.slane %v3267, 5
  %v3272 = vadd.f32 %v1927, %v3270
  %v3273 = vxor.u32 %v3272, 2147483648
  %v3274 = vmul.f32 %v3273, 1.442695
  %v3275 = vpow.pop %v3274
  %v3276 = vadd.f32 %v3275, 1.0
  %v3277 = vrcp.pop %v3276
  %v3278 = vmul.f32 %v3276, %v3277
  %v3279 = vsub.f32 1.0, %v3278
  %v3280 = vmul.f32 %v3277, %v3279
  %v3281 = vadd.f32 %v3277, %v3280
  %vm3282 = vweird.f32 %v3276
  %vm3283 = vweird.f32 %v3277
  %vm3284 = vmor %vm3282, %vm3283
  %v3285 = vsel %vm3284, %v3277, %v3281
  %v3286 = vand.u32 2147483647, %v3276
  %vm3287 = vcmp.eq.f32.partialorder %v3286, 8.507059e+37
  %v3288 = vand.u32 %v3276, 2147483648
  %v3289 = vor.u32 1.1754944e-38, %v3288
  %v3290 = vsel %vm3287, %v3289, %v3285
  %v3291 = vmul.f32 1.0, %v3290
  %v3292 = vtanh.pop %v3272
  %v3294 = vrot.slane %v3236, 7
  %v3296 = vmul.f32 %v3291, %v3294
  %3298 = vrot.lane.b32.xlu0 %v3292, 96
  %v3299 = vpop.permute.xlu0 %3298
  %v3301 = vmul.f32 %v3291, %v3299
  %3303 = vrot.lane.b32.xlu0 %v3301, 16
  %v3304 = vpop.permute.xlu0 %3303
  %v3306 = vadd.f32 %v3296, %v3304
  %v3307 = vtanh.pop %v3306
  %3309 = vrot.lane.b32.xlu0 %v3307, 32
  %v3310 = vpop.permute.xlu0 %3309
  %v3312 = vmul.f32 %v3291, %v3310
  %vm3313 = vcmp.eq.s32.totalorder %v119, 0
  %vm3314 = vcmp.eq.s32.totalorder %v120, 0
  %vm3315 = vcmp.eq.s32.totalorder %v121, 0
  %v3316 = vperm.slane %v1991, 0
  %v3317 = vsel %vm3313, %v3316, 0.0
  %v3318 = vsel %vm3314, %v3316, 0.0
  %v3319 = vsel %vm3315, %v3316, 0.0
  %v3320 = vadd.f32 %v3317, 0.0
  %v3321 = vadd.f32 %v3318, 0.0
  %v3322 = vadd.f32 %v3319, 0.0
  %vm3323 = vcmp.eq.s32.totalorder %v119, 1
  %vm3324 = vcmp.eq.s32.totalorder %v120, 1
  %vm3325 = vcmp.eq.s32.totalorder %v121, 1
  %v3326 = vperm.slane %v2060, 1
  %v3327 = vsel %vm3323, %v3326, 0.0
  %v3328 = vsel %vm3324, %v3326, 0.0
  %v3329 = vsel %vm3325, %v3326, 0.0
  %v3330 = vadd.f32 %v3320, %v3327
  %v3331 = vadd.f32 %v3321, %v3328
  %v3332 = vadd.f32 %v3322, %v3329
  %vm3333 = vcmp.eq.s32.totalorder %v119, 2
  %vm3334 = vcmp.eq.s32.totalorder %v120, 2
  %vm3335 = vcmp.eq.s32.totalorder %v121, 2
  %v3336 = vperm.slane %v2130, 2
  %v3337 = vsel %vm3333, %v3336, 0.0
  %v3338 = vsel %vm3334, %v3336, 0.0
  %v3339 = vsel %vm3335, %v3336, 0.0
  %v3340 = vadd.f32 %v3330, %v3337
  %v3341 = vadd.f32 %v3331, %v3338
  %v3342 = vadd.f32 %v3332, %v3339
  %vm3343 = vcmp.eq.s32.totalorder %v119, 3
  %vm3344 = vcmp.eq.s32.totalorder %v120, 3
  %vm3345 = vcmp.eq.s32.totalorder %v121, 3
  %v3346 = vperm.slane %v2200, 3
  %v3347 = vsel %vm3343, %v3346, 0.0
  %v3348 = vsel %vm3344, %v3346, 0.0
  %v3349 = vsel %vm3345, %v3346, 0.0
  %v3350 = vadd.f32 %v3340, %v3347
  %v3351 = vadd.f32 %v3341, %v3348
  %v3352 = vadd.f32 %v3342, %v3349
  %vm3353 = vcmp.eq.s32.totalorder %v119, 4
  %vm3354 = vcmp.eq.s32.totalorder %v120, 4
  %vm3355 = vcmp.eq.s32.totalorder %v121, 4
  %v3356 = vperm.slane %v2270, 4
  %v3357 = vsel %vm3353, %v3356, 0.0
  %v3358 = vsel %vm3354, %v3356, 0.0
  %v3359 = vsel %vm3355, %v3356, 0.0
  %v3360 = vadd.f32 %v3350, %v3357
  %v3361 = vadd.f32 %v3351, %v3358
  %v3362 = vadd.f32 %v3352, %v3359
  %vm3363 = vcmp.eq.s32.totalorder %v119, 5
  %vm3364 = vcmp.eq.s32.totalorder %v120, 5
  %vm3365 = vcmp.eq.s32.totalorder %v121, 5
  %v3366 = vperm.slane %v2340, 5
  %v3367 = vsel %vm3363, %v3366, 0.0
  %v3368 = vsel %vm3364, %v3366, 0.0
  %v3369 = vsel %vm3365, %v3366, 0.0
  %v3370 = vadd.f32 %v3360, %v3367
  %v3371 = vadd.f32 %v3361, %v3368
  %v3372 = vadd.f32 %v3362, %v3369
  %vm3373 = vcmp.eq.s32.totalorder %v119, 6
  %vm3374 = vcmp.eq.s32.totalorder %v120, 6
  %vm3375 = vcmp.eq.s32.totalorder %v121, 6
  %v3376 = vperm.slane %v2410, 6
  %v3377 = vsel %vm3373, %v3376, 0.0
  %v3378 = vsel %vm3374, %v3376, 0.0
  %v3379 = vsel %vm3375, %v3376, 0.0
  %v3380 = vadd.f32 %v3370, %v3377
  %v3381 = vadd.f32 %v3371, %v3378
  %v3382 = vadd.f32 %v3372, %v3379
  %vm3383 = vcmp.eq.s32.totalorder %v119, 7
  %vm3384 = vcmp.eq.s32.totalorder %v120, 7
  %vm3385 = vcmp.eq.s32.totalorder %v121, 7
  %v3386 = vperm.slane %v2480, 7
  %v3387 = vsel %vm3383, %v3386, 0.0
  %v3388 = vsel %vm3384, %v3386, 0.0
  %v3389 = vsel %vm3385, %v3386, 0.0
  %v3390 = vadd.f32 %v3380, %v3387
  %v3391 = vadd.f32 %v3381, %v3388
  %v3392 = vadd.f32 %v3382, %v3389
  %vm3393 = vcmp.eq.s32.totalorder %v119, 8
  %vm3394 = vcmp.eq.s32.totalorder %v120, 8
  %vm3395 = vcmp.eq.s32.totalorder %v121, 8
  %v3396 = vperm.slane %v2547, 0
  %v3397 = vsel %vm3393, %v3396, 0.0
  %v3398 = vsel %vm3394, %v3396, 0.0
  %v3399 = vsel %vm3395, %v3396, 0.0
  %v3400 = vadd.f32 %v3390, %v3397
  %v3401 = vadd.f32 %v3391, %v3398
  %v3402 = vadd.f32 %v3392, %v3399
  %vm3403 = vcmp.eq.s32.totalorder %v119, 9
  %vm3404 = vcmp.eq.s32.totalorder %v120, 9
  %vm3405 = vcmp.eq.s32.totalorder %v121, 9
  %v3406 = vperm.slane %v2616, 1
  %v3407 = vsel %vm3403, %v3406, 0.0
  %v3408 = vsel %vm3404, %v3406, 0.0
  %v3409 = vsel %vm3405, %v3406, 0.0
  %v3410 = vadd.f32 %v3400, %v3407
  %v3411 = vadd.f32 %v3401, %v3408
  %v3412 = vadd.f32 %v3402, %v3409
  %vm3413 = vcmp.eq.s32.totalorder %v119, 10
  %vm3414 = vcmp.eq.s32.totalorder %v120, 10
  %vm3415 = vcmp.eq.s32.totalorder %v121, 10
  %v3416 = vperm.slane %v2686, 2
  %v3417 = vsel %vm3413, %v3416, 0.0
  %v3418 = vsel %vm3414, %v3416, 0.0
  %v3419 = vsel %vm3415, %v3416, 0.0
  %v3420 = vadd.f32 %v3410, %v3417
  %v3421 = vadd.f32 %v3411, %v3418
  %v3422 = vadd.f32 %v3412, %v3419
  %vm3423 = vcmp.eq.s32.totalorder %v119, 11
  %vm3424 = vcmp.eq.s32.totalorder %v120, 11
  %vm3425 = vcmp.eq.s32.totalorder %v121, 11
  %v3426 = vperm.slane %v2756, 3
  %v3427 = vsel %vm3423, %v3426, 0.0
  %v3428 = vsel %vm3424, %v3426, 0.0
  %v3429 = vsel %vm3425, %v3426, 0.0
  %v3430 = vadd.f32 %v3420, %v3427
  %v3431 = vadd.f32 %v3421, %v3428
  %v3432 = vadd.f32 %v3422, %v3429
  %vm3433 = vcmp.eq.s32.totalorder %v119, 12
  %vm3434 = vcmp.eq.s32.totalorder %v120, 12
  %vm3435 = vcmp.eq.s32.totalorder %v121, 12
  %v3436 = vperm.slane %v2826, 4
  %v3437 = vsel %vm3433, %v3436, 0.0
  %v3438 = vsel %vm3434, %v3436, 0.0
  %v3439 = vsel %vm3435, %v3436, 0.0
  %v3440 = vadd.f32 %v3430, %v3437
  %v3441 = vadd.f32 %v3431, %v3438
  %v3442 = vadd.f32 %v3432, %v3439
  %vm3443 = vcmp.eq.s32.totalorder %v119, 13
  %vm3444 = vcmp.eq.s32.totalorder %v120, 13
  %vm3445 = vcmp.eq.s32.totalorder %v121, 13
  %v3446 = vperm.slane %v2896, 5
  %v3447 = vsel %vm3443, %v3446, 0.0
  %v3448 = vsel %vm3444, %v3446, 0.0
  %v3449 = vsel %vm3445, %v3446, 0.0
  %v3450 = vadd.f32 %v3440, %v3447
  %v3451 = vadd.f32 %v3441, %v3448
  %v3452 = vadd.f32 %v3442, %v3449
  %vm3453 = vcmp.eq.s32.totalorder %v119, 14
  %vm3454 = vcmp.eq.s32.totalorder %v120, 14
  %vm3455 = vcmp.eq.s32.totalorder %v121, 14
  %v3456 = vperm.slane %v2966, 6
  %v3457 = vsel %vm3453, %v3456, 0.0
  %v3458 = vsel %vm3454, %v3456, 0.0
  %v3459 = vsel %vm3455, %v3456, 0.0
  %v3460 = vadd.f32 %v3450, %v3457
  %v3461 = vadd.f32 %v3451, %v3458
  %v3462 = vadd.f32 %v3452, %v3459
  %vm3463 = vcmp.eq.s32.totalorder %v119, 15
  %vm3464 = vcmp.eq.s32.totalorder %v120, 15
  %vm3465 = vcmp.eq.s32.totalorder %v121, 15
  %v3466 = vperm.slane %v3036, 7
  %v3467 = vsel %vm3463, %v3466, 0.0
  %v3468 = vsel %vm3464, %v3466, 0.0
  %v3469 = vsel %vm3465, %v3466, 0.0
  %v3470 = vadd.f32 %v3460, %v3467
  %v3471 = vadd.f32 %v3461, %v3468
  %v3472 = vadd.f32 %v3462, %v3469
  %vm3473 = vcmp.eq.s32.totalorder %v119, 16
  %vm3474 = vcmp.eq.s32.totalorder %v120, 16
  %vm3475 = vcmp.eq.s32.totalorder %v121, 16
  %v3476 = vperm.slane %v3103, 0
  %v3477 = vsel %vm3473, %v3476, 0.0
  %v3478 = vsel %vm3474, %v3476, 0.0
  %v3479 = vsel %vm3475, %v3476, 0.0
  %v3480 = vadd.f32 %v3470, %v3477
  %v3481 = vadd.f32 %v3471, %v3478
  %v3482 = vadd.f32 %v3472, %v3479
  %vm3483 = vcmp.eq.s32.totalorder %v119, 17
  %vm3484 = vcmp.eq.s32.totalorder %v120, 17
  %vm3485 = vcmp.eq.s32.totalorder %v121, 17
  %v3486 = vperm.slane %v3172, 1
  %v3487 = vsel %vm3483, %v3486, 0.0
  %v3488 = vsel %vm3484, %v3486, 0.0
  %v3489 = vsel %vm3485, %v3486, 0.0
  %v3490 = vadd.f32 %v3480, %v3487
  %v3491 = vadd.f32 %v3481, %v3488
  %v3492 = vadd.f32 %v3482, %v3489
  %vm3493 = vcmp.eq.s32.totalorder %v119, 18
  %vm3494 = vcmp.eq.s32.totalorder %v120, 18
  %vm3495 = vcmp.eq.s32.totalorder %v121, 18
  %v3496 = vperm.slane %v3242, 2
  %v3497 = vsel %vm3493, %v3496, 0.0
  %v3498 = vsel %vm3494, %v3496, 0.0
  %v3499 = vsel %vm3495, %v3496, 0.0
  %v3500 = vadd.f32 %v3490, %v3497
  %v3501 = vadd.f32 %v3491, %v3498
  %v3502 = vadd.f32 %v3492, %v3499
  %vm3503 = vcmp.eq.s32.totalorder %v119, 19
  %vm3504 = vcmp.eq.s32.totalorder %v120, 19
  %vm3505 = vcmp.eq.s32.totalorder %v121, 19
  %v3506 = vperm.slane %v3312, 3
  %v3507 = vsel %vm3503, %v3506, 0.0
  %v3508 = vsel %vm3504, %v3506, 0.0
  %v3509 = vsel %vm3505, %v3506, 0.0
  %v3510 = vadd.f32 %v3500, %v3507
  %v3511 = vadd.f32 %v3501, %v3508
  %v3512 = vadd.f32 %v3502, %v3509
  %v3513 = vmul.u32 %v119, 64
  %v3514 = vmul.u32 %v120, 64
  %v3515 = vmul.u32 %v121, 64
  %v3516 = vmul.u32 %v122, 64
  %v3517 = vmul.u32 %v123, 64
  %v3518 = vmul.u32 %v124, 64
  %v3519 = vmul.u32 %v125, 64
  %v3520 = vmul.u32 %v126, 64
  %v3521 = vmul.u32 %v127, 64
  %v3522 = vmul.u32 %v128, 64
  %v3523 = vmul.u32 %v129, 64
  %v3524 = vmul.u32 %v130, 64
  %v3525 = vmul.u32 %v131, 64
  %v3526 = vmul.u32 %v132, 64
  %v3527 = vmul.u32 %v133, 64
  %v3528 = vmul.u32 %v134, 64
  %v3529 = vmul.u32 %v135, 64
  %v3530 = vmul.u32 %v136, 64
  %v3531 = vmul.u32 %v137, 64
  %v3532 = vmul.u32 %v138, 64
  %v3533 = vmul.u32 %v139, 64
  %v3534 = vmul.u32 %v140, 64
  %v3535 = vmul.u32 %v141, 64
  %v3536 = vmul.u32 %v142, 64
  %v3537 = vmul.u32 %v143, 64
  %v3538 = vmul.u32 %v144, 64
  %v3539 = vmul.u32 %v145, 64
  %v3540 = vmul.u32 %v146, 64
  %v3541 = vmul.u32 %v147, 64
  %v3542 = vmul.u32 %v148, 64
  %v3543 = vmul.u32 %v149, 64
  %v3544 = vmul.u32 %v150, 64
  %vm3545 = vcmp.le.s32.totalorder %v3513, %v995
  %vm3546 = vcmp.le.s32.totalorder %v3514, %v995
  %vm3547 = vcmp.le.s32.totalorder %v3515, %v995
  %vm3548 = vcmp.le.s32.totalorder %v3516, %v995
  %vm3549 = vcmp.le.s32.totalorder %v3517, %v995
  %vm3550 = vcmp.le.s32.totalorder %v3518, %v995
  %vm3551 = vcmp.le.s32.totalorder %v3519, %v995
  %vm3552 = vcmp.le.s32.totalorder %v3520, %v995
  %vm3553 = vcmp.le.s32.totalorder %v3521, %v995
  %vm3554 = vcmp.le.s32.totalorder %v3522, %v995
  %vm3555 = vcmp.le.s32.totalorder %v3523, %v995
  %vm3556 = vcmp.le.s32.totalorder %v3524, %v995
  %vm3557 = vcmp.le.s32.totalorder %v3525, %v995
  %vm3558 = vcmp.le.s32.totalorder %v3526, %v995
  %vm3559 = vcmp.le.s32.totalorder %v3527, %v995
  %vm3560 = vcmp.le.s32.totalorder %v3528, %v995
  %vm3561 = vcmp.le.s32.totalorder %v3529, %v995
  %vm3562 = vcmp.le.s32.totalorder %v3530, %v995
  %vm3563 = vcmp.le.s32.totalorder %v3531, %v995
  %vm3564 = vcmp.le.s32.totalorder %v3532, %v995
  %vm3565 = vcmp.le.s32.totalorder %v3533, %v995
  %vm3566 = vcmp.le.s32.totalorder %v3534, %v995
  %vm3567 = vcmp.le.s32.totalorder %v3535, %v995
  %vm3568 = vcmp.le.s32.totalorder %v3536, %v995
  %vm3569 = vcmp.le.s32.totalorder %v3537, %v995
  %vm3570 = vcmp.le.s32.totalorder %v3538, %v995
  %vm3571 = vcmp.le.s32.totalorder %v3539, %v995
  %vm3572 = vcmp.le.s32.totalorder %v3540, %v995
  %vm3573 = vcmp.le.s32.totalorder %v3541, %v995
  %vm3574 = vcmp.le.s32.totalorder %v3542, %v995
  %vm3575 = vcmp.le.s32.totalorder %v3543, %v995
  %vm3576 = vcmp.le.s32.totalorder %v3544, %v995
  %v3577 = vmul.u32 %v154, 64
  %v3578 = vmul.u32 %v155, 64
  %v3579 = vmul.u32 %v156, 64
  %v3580 = vmul.u32 %v157, 64
  %v3581 = vmul.u32 %v158, 64
  %v3582 = vmul.u32 %v159, 64
  %v3583 = vmul.u32 %v160, 64
  %v3584 = vmul.u32 %v161, 64
  %v3585 = vmul.u32 %v162, 64
  %v3586 = vmul.u32 %v163, 64
  %v3587 = vmul.u32 %v164, 64
  %v3588 = vmul.u32 %v165, 64
  %v3589 = vmul.u32 %v166, 64
  %v3590 = vmul.u32 %v167, 64
  %v3591 = vmul.u32 %v168, 64
  %v3592 = vmul.u32 %v169, 64
  %v3593 = vmul.u32 %v170, 64
  %v3594 = vmul.u32 %v171, 64
  %v3595 = vmul.u32 %v172, 64
  %v3596 = vmul.u32 %v173, 64
  %v3597 = vmul.u32 %v174, 64
  %v3598 = vmul.u32 %v175, 64
  %v3599 = vmul.u32 %v176, 64
  %v3600 = vmul.u32 %v177, 64
  %v3601 = vmul.u32 %v178, 64
  %v3602 = vmul.u32 %v179, 64
  %v3603 = vmul.u32 %v180, 64
  %v3604 = vmul.u32 %v181, 64
  %v3605 = vmul.u32 %v182, 64
  %v3606 = vmul.u32 %v183, 64
  %v3607 = vmul.u32 %v184, 64
  %v3608 = vmul.u32 %v185, 64
  %vm3609 = vcmp.lt.s32.totalorder %v995, %v3577
  %vm3610 = vcmp.lt.s32.totalorder %v995, %v3578
  %vm3611 = vcmp.lt.s32.totalorder %v995, %v3579
  %vm3612 = vcmp.lt.s32.totalorder %v995, %v3580
  %vm3613 = vcmp.lt.s32.totalorder %v995, %v3581
  %vm3614 = vcmp.lt.s32.totalorder %v995, %v3582
  %vm3615 = vcmp.lt.s32.totalorder %v995, %v3583
  %vm3616 = vcmp.lt.s32.totalorder %v995, %v3584
  %vm3617 = vcmp.lt.s32.totalorder %v995, %v3585
  %vm3618 = vcmp.lt.s32.totalorder %v995, %v3586
  %vm3619 = vcmp.lt.s32.totalorder %v995, %v3587
  %vm3620 = vcmp.lt.s32.totalorder %v995, %v3588
  %vm3621 = vcmp.lt.s32.totalorder %v995, %v3589
  %vm3622 = vcmp.lt.s32.totalorder %v995, %v3590
  %vm3623 = vcmp.lt.s32.totalorder %v995, %v3591
  %vm3624 = vcmp.lt.s32.totalorder %v995, %v3592
  %vm3625 = vcmp.lt.s32.totalorder %v995, %v3593
  %vm3626 = vcmp.lt.s32.totalorder %v995, %v3594
  %vm3627 = vcmp.lt.s32.totalorder %v995, %v3595
  %vm3628 = vcmp.lt.s32.totalorder %v995, %v3596
  %vm3629 = vcmp.lt.s32.totalorder %v995, %v3597
  %vm3630 = vcmp.lt.s32.totalorder %v995, %v3598
  %vm3631 = vcmp.lt.s32.totalorder %v995, %v3599
  %vm3632 = vcmp.lt.s32.totalorder %v995, %v3600
  %vm3633 = vcmp.lt.s32.totalorder %v995, %v3601
  %vm3634 = vcmp.lt.s32.totalorder %v995, %v3602
  %vm3635 = vcmp.lt.s32.totalorder %v995, %v3603
  %vm3636 = vcmp.lt.s32.totalorder %v995, %v3604
  %vm3637 = vcmp.lt.s32.totalorder %v995, %v3605
  %vm3638 = vcmp.lt.s32.totalorder %v995, %v3606
  %vm3639 = vcmp.lt.s32.totalorder %v995, %v3607
  %vm3640 = vcmp.lt.s32.totalorder %v995, %v3608
  %vm3641 = vmand %vm3545, %vm3609
  %vm3642 = vmand %vm3546, %vm3610
  %vm3643 = vmand %vm3547, %vm3611
  %vm3644 = vmand %vm3548, %vm3612
  %vm3645 = vmand %vm3549, %vm3613
  %vm3646 = vmand %vm3550, %vm3614
  %vm3647 = vmand %vm3551, %vm3615
  %vm3648 = vmand %vm3552, %vm3616
  %vm3649 = vmand %vm3553, %vm3617
  %vm3650 = vmand %vm3554, %vm3618
  %vm3651 = vmand %vm3555, %vm3619
  %vm3652 = vmand %vm3556, %vm3620
  %vm3653 = vmand %vm3557, %vm3621
  %vm3654 = vmand %vm3558, %vm3622
  %vm3655 = vmand %vm3559, %vm3623
  %vm3656 = vmand %vm3560, %vm3624
  %vm3657 = vmand %vm3561, %vm3625
  %vm3658 = vmand %vm3562, %vm3626
  %vm3659 = vmand %vm3563, %vm3627
  %vm3660 = vmand %vm3564, %vm3628
  %vm3661 = vmand %vm3565, %vm3629
  %vm3662 = vmand %vm3566, %vm3630
  %vm3663 = vmand %vm3567, %vm3631
  %vm3664 = vmand %vm3568, %vm3632
  %vm3665 = vmand %vm3569, %vm3633
  %vm3666 = vmand %vm3570, %vm3634
  %vm3667 = vmand %vm3571, %vm3635
  %vm3668 = vmand %vm3572, %vm3636
  %vm3669 = vmand %vm3573, %vm3637
  %vm3670 = vmand %vm3574, %vm3638
  %vm3671 = vmand %vm3575, %vm3639
  %vm3672 = vmand %vm3576, %vm3640
  %v3673 = vsel %vm3641, 1.0, 0.0
  %v3674 = vsel %vm3642, 1.0, 0.0
  %v3675 = vsel %vm3643, 1.0, 0.0
  %v3676 = vsel %vm3644, 1.0, 0.0
  %v3677 = vsel %vm3645, 1.0, 0.0
  %v3678 = vsel %vm3646, 1.0, 0.0
  %v3679 = vsel %vm3647, 1.0, 0.0
  %v3680 = vsel %vm3648, 1.0, 0.0
  %v3681 = vsel %vm3649, 1.0, 0.0
  %v3682 = vsel %vm3650, 1.0, 0.0
  %v3683 = vsel %vm3651, 1.0, 0.0
  %v3684 = vsel %vm3652, 1.0, 0.0
  %v3685 = vsel %vm3653, 1.0, 0.0
  %v3686 = vsel %vm3654, 1.0, 0.0
  %v3687 = vsel %vm3655, 1.0, 0.0
  %v3688 = vsel %vm3656, 1.0, 0.0
  %v3689 = vsel %vm3657, 1.0, 0.0
  %v3690 = vsel %vm3658, 1.0, 0.0
  %v3691 = vsel %vm3659, 1.0, 0.0
  %v3692 = vsel %vm3660, 1.0, 0.0
  %v3693 = vsel %vm3661, 1.0, 0.0
  %v3694 = vsel %vm3662, 1.0, 0.0
  %v3695 = vsel %vm3663, 1.0, 0.0
  %v3696 = vsel %vm3664, 1.0, 0.0
  %v3697 = vsel %vm3665, 1.0, 0.0
  %v3698 = vsel %vm3666, 1.0, 0.0
  %v3699 = vsel %vm3667, 1.0, 0.0
  %v3700 = vsel %vm3668, 1.0, 0.0
  %v3701 = vsel %vm3669, 1.0, 0.0
  %v3702 = vsel %vm3670, 1.0, 0.0
  %v3703 = vsel %vm3671, 1.0, 0.0
  %v3704 = vsel %vm3672, 1.0, 0.0
  %3705 = vmatpush.msra.mxu0 %v3688
  %3706 = vmatpush.msra.mxu0 %v3687
  %3707 = vmatpush.msra.mxu0 %v3686
  %3708 = vmatpush.msra.mxu0 %v3685
  %3709 = vmatpush.msra.mxu0 %v3684
  %3710 = vmatpush.msra.mxu0 %v3683
  %3711 = vmatpush.msra.mxu0 %v3682
  %3712 = vmatpush.msra.mxu0 %v3681
  %3713 = vmatpush.msra.mxu0 %v3680
  %3714 = vmatpush.msra.mxu0 %v3679
  %3715 = vmatpush.msra.mxu0 %v3678
  %3716 = vmatpush.msra.mxu0 %v3677
  %3717 = vmatpush.msra.mxu0 %v3676
  %3718 = vmatpush.msra.mxu0 %v3675
  %3719 = vmatpush.msra.mxu0 %v3674
  %3720 = vmatpush.msra.mxu0 %v3673
  %3721 = vmatmul.f32.gmra.mxu0 %v614
  %v3722 = vpop.f32.mrf.mxu0
  %v3723 = vadd.f32 0.0, %v3722
  %3724 = vdwg.mxu0
  %3725 = vmatpush.msra.mxu0 %v3704
  %3726 = vmatpush.msra.mxu0 %v3703
  %3727 = vmatpush.msra.mxu0 %v3702
  %3728 = vmatpush.msra.mxu0 %v3701
  %3729 = vmatpush.msra.mxu0 %v3700
  %3730 = vmatpush.msra.mxu0 %v3699
  %3731 = vmatpush.msra.mxu0 %v3698
  %3732 = vmatpush.msra.mxu0 %v3697
  %3733 = vmatpush.msra.mxu0 %v3696
  %3734 = vmatpush.msra.mxu0 %v3695
  %3735 = vmatpush.msra.mxu0 %v3694
  %3736 = vmatpush.msra.mxu0 %v3693
  %3737 = vmatpush.msra.mxu0 %v3692
  %3738 = vmatpush.msra.mxu0 %v3691
  %3739 = vmatpush.msra.mxu0 %v3690
  %3740 = vmatpush.msra.mxu0 %v3689
  %3741 = vmatmul.f32.gmra.mxu0 %v615
  %v3742 = vpop.f32.mrf.mxu0
  %v3743 = vadd.f32 %v3723, %v3742
  %3744 = vdwg.mxu0
  %v3745 = vmul.u32 %v152, 64
  %vm3746 = vcmp.le.s32.totalorder %v963, %v3745
  %vm3747 = vcmp.le.s32.totalorder %v964, %v3745
  %vm3748 = vcmp.le.s32.totalorder %v965, %v3745
  %vm3749 = vcmp.le.s32.totalorder %v966, %v3745
  %vm3750 = vcmp.le.s32.totalorder %v967, %v3745
  %vm3751 = vcmp.le.s32.totalorder %v968, %v3745
  %vm3752 = vcmp.le.s32.totalorder %v969, %v3745
  %vm3753 = vcmp.le.s32.totalorder %v970, %v3745
  %vm3754 = vcmp.lt.s32.totalorder %v3745, %v1028
  %vm3755 = vcmp.lt.s32.totalorder %v3745, %v1029
  %vm3756 = vcmp.lt.s32.totalorder %v3745, %v1030
  %vm3757 = vcmp.lt.s32.totalorder %v3745, %v1031
  %vm3758 = vcmp.lt.s32.totalorder %v3745, %v1032
  %vm3759 = vcmp.lt.s32.totalorder %v3745, %v1033
  %vm3760 = vcmp.lt.s32.totalorder %v3745, %v1034
  %vm3761 = vcmp.lt.s32.totalorder %v3745, %v1035
  %vm3762 = vmand %vm3746, %vm3754
  %vm3763 = vmand %vm3747, %vm3755
  %vm3764 = vmand %vm3748, %vm3756
  %vm3765 = vmand %vm3749, %vm3757
  %vm3766 = vmand %vm3750, %vm3758
  %vm3767 = vmand %vm3751, %vm3759
  %vm3768 = vmand %vm3752, %vm3760
  %vm3769 = vmand %vm3753, %vm3761
  %v3770 = vsel %vm3762, 1.0, 0.0
  %v3771 = vsel %vm3763, 1.0, 0.0
  %v3772 = vsel %vm3764, 1.0, 0.0
  %v3773 = vsel %vm3765, 1.0, 0.0
  %v3774 = vsel %vm3766, 1.0, 0.0
  %v3775 = vsel %vm3767, 1.0, 0.0
  %v3776 = vsel %vm3768, 1.0, 0.0
  %v3777 = vsel %vm3769, 1.0, 0.0
  %v3779 = vsel %vm1480, %v3743, 0
  %3781 = vmatpush.msra.mxu0 0.0
  %3782 = vmatpush.msra.mxu0 0.0
  %3783 = vmatpush.msra.mxu0 0.0
  %3784 = vmatpush.msra.mxu0 0.0
  %3785 = vmatpush.msra.mxu0 0.0
  %3786 = vmatpush.msra.mxu0 0.0
  %3787 = vmatpush.msra.mxu0 0.0
  %3788 = vmatpush.msra.mxu0 0.0
  %3789 = vmatpush.msra.mxu0 %v3777
  %3790 = vmatpush.msra.mxu0 %v3776
  %3791 = vmatpush.msra.mxu0 %v3775
  %3792 = vmatpush.msra.mxu0 %v3774
  %3793 = vmatpush.msra.mxu0 %v3773
  %3794 = vmatpush.msra.mxu0 %v3772
  %3795 = vmatpush.msra.mxu0 %v3771
  %3796 = vmatpush.msra.mxu0 %v3770
  %3797 = vmatmul.f32.gmra.mxu0 %v3779
  %v3798 = vpop.f32.mrf.mxu0
  %v3799 = vadd.f32 0.0, %v3798
  %3800 = vdwg.mxu0
  %v3801 = vmul.u32 %v152, 128
  %vm3802 = vcmp.le.s32.totalorder %v3513, %v3801
  %vm3803 = vcmp.le.s32.totalorder %v3514, %v3801
  %vm3804 = vcmp.le.s32.totalorder %v3515, %v3801
  %vm3805 = vcmp.le.s32.totalorder %v3516, %v3801
  %vm3806 = vcmp.le.s32.totalorder %v3517, %v3801
  %vm3807 = vcmp.le.s32.totalorder %v3518, %v3801
  %vm3808 = vcmp.le.s32.totalorder %v3519, %v3801
  %vm3809 = vcmp.le.s32.totalorder %v3520, %v3801
  %vm3810 = vcmp.le.s32.totalorder %v3521, %v3801
  %vm3811 = vcmp.le.s32.totalorder %v3522, %v3801
  %vm3812 = vcmp.le.s32.totalorder %v3523, %v3801
  %vm3813 = vcmp.le.s32.totalorder %v3524, %v3801
  %vm3814 = vcmp.le.s32.totalorder %v3525, %v3801
  %vm3815 = vcmp.le.s32.totalorder %v3526, %v3801
  %vm3816 = vcmp.le.s32.totalorder %v3527, %v3801
  %vm3817 = vcmp.le.s32.totalorder %v3528, %v3801
  %vm3818 = vcmp.lt.s32.totalorder %v3801, %v3577
  %vm3819 = vcmp.lt.s32.totalorder %v3801, %v3578
  %vm3820 = vcmp.lt.s32.totalorder %v3801, %v3579
  %vm3821 = vcmp.lt.s32.totalorder %v3801, %v3580
  %vm3822 = vcmp.lt.s32.totalorder %v3801, %v3581
  %vm3823 = vcmp.lt.s32.totalorder %v3801, %v3582
  %vm3824 = vcmp.lt.s32.totalorder %v3801, %v3583
  %vm3825 = vcmp.lt.s32.totalorder %v3801, %v3584
  %vm3826 = vcmp.lt.s32.totalorder %v3801, %v3585
  %vm3827 = vcmp.lt.s32.totalorder %v3801, %v3586
  %vm3828 = vcmp.lt.s32.totalorder %v3801, %v3587
  %vm3829 = vcmp.lt.s32.totalorder %v3801, %v3588
  %vm3830 = vcmp.lt.s32.totalorder %v3801, %v3589
  %vm3831 = vcmp.lt.s32.totalorder %v3801, %v3590
  %vm3832 = vcmp.lt.s32.totalorder %v3801, %v3591
  %vm3833 = vcmp.lt.s32.totalorder %v3801, %v3592
  %vm3834 = vmand %vm3802, %vm3818
  %vm3835 = vmand %vm3803, %vm3819
  %vm3836 = vmand %vm3804, %vm3820
  %vm3837 = vmand %vm3805, %vm3821
  %vm3838 = vmand %vm3806, %vm3822
  %vm3839 = vmand %vm3807, %vm3823
  %vm3840 = vmand %vm3808, %vm3824
  %vm3841 = vmand %vm3809, %vm3825
  %vm3842 = vmand %vm3810, %vm3826
  %vm3843 = vmand %vm3811, %vm3827
  %vm3844 = vmand %vm3812, %vm3828
  %vm3845 = vmand %vm3813, %vm3829
  %vm3846 = vmand %vm3814, %vm3830
  %vm3847 = vmand %vm3815, %vm3831
  %vm3848 = vmand %vm3816, %vm3832
  %vm3849 = vmand %vm3817, %vm3833
  %v3850 = vsel %vm3834, 1.0, 0.0
  %v3851 = vsel %vm3835, 1.0, 0.0
  %v3852 = vsel %vm3836, 1.0, 0.0
  %v3853 = vsel %vm3837, 1.0, 0.0
  %v3854 = vsel %vm3838, 1.0, 0.0
  %v3855 = vsel %vm3839, 1.0, 0.0
  %v3856 = vsel %vm3840, 1.0, 0.0
  %v3857 = vsel %vm3841, 1.0, 0.0
  %v3858 = vsel %vm3842, 1.0, 0.0
  %v3859 = vsel %vm3843, 1.0, 0.0
  %v3860 = vsel %vm3844, 1.0, 0.0
  %v3861 = vsel %vm3845, 1.0, 0.0
  %v3862 = vsel %vm3846, 1.0, 0.0
  %v3863 = vsel %vm3847, 1.0, 0.0
  %v3864 = vsel %vm3848, 1.0, 0.0
  %v3865 = vsel %vm3849, 1.0, 0.0
  %3866 = vmatpush.msra.mxu0 %v3865
  %3867 = vmatpush.msra.mxu0 %v3864
  %3868 = vmatpush.msra.mxu0 %v3863
  %3869 = vmatpush.msra.mxu0 %v3862
  %3870 = vmatpush.msra.mxu0 %v3861
  %3871 = vmatpush.msra.mxu0 %v3860
  %3872 = vmatpush.msra.mxu0 %v3859
  %3873 = vmatpush.msra.mxu0 %v3858
  %3874 = vmatpush.msra.mxu0 %v3857
  %3875 = vmatpush.msra.mxu0 %v3856
  %3876 = vmatpush.msra.mxu0 %v3855
  %3877 = vmatpush.msra.mxu0 %v3854
  %3878 = vmatpush.msra.mxu0 %v3853
  %3879 = vmatpush.msra.mxu0 %v3852
  %3880 = vmatpush.msra.mxu0 %v3851
  %3881 = vmatpush.msra.mxu0 %v3850
  %3882 = vmatmul.f32.gmra.mxu0 %v961
  %v3883 = vpop.f32.mrf.mxu0
  %v3884 = vadd.f32 0.0, %v3883
  %3885 = vmatmul.f32.gmra.mxu0 %v962
  %v3886 = vpop.f32.mrf.mxu0
  %v3887 = vadd.f32 0.0, %v3886
  %3888 = vdwg.mxu0
  %v3890 = vsel %vm1480, %v3884, 0
  %v3893 = vsel %vm1480, %v3887, 0
  %3895 = vmatpush.msra.mxu0 0.0
  %3896 = vmatpush.msra.mxu0 0.0
  %3897 = vmatpush.msra.mxu0 0.0
  %3898 = vmatpush.msra.mxu0 0.0
  %3899 = vmatpush.msra.mxu0 0.0
  %3900 = vmatpush.msra.mxu0 0.0
  %3901 = vmatpush.msra.mxu0 0.0
  %3902 = vmatpush.msra.mxu0 0.0
  %3903 = vmatpush.msra.mxu0 %v3777
  %3904 = vmatpush.msra.mxu0 %v3776
  %3905 = vmatpush.msra.mxu0 %v3775
  %3906 = vmatpush.msra.mxu0 %v3774
  %3907 = vmatpush.msra.mxu0 %v3773
  %3908 = vmatpush.msra.mxu0 %v3772
  %3909 = vmatpush.msra.mxu0 %v3771
  %3910 = vmatpush.msra.mxu0 %v3770
  %3911 = vmatmul.f32.gmra.mxu0 %v3890
  %v3912 = vpop.f32.mrf.mxu0
  %v3913 = vadd.f32 0.0, %v3912
  %3914 = vmatmul.f32.gmra.mxu0 %v3893
  %v3915 = vpop.f32.mrf.mxu0
  %v3916 = vadd.f32 0.0, %v3915
  %3917 = vdwg.mxu0
  %3918 = vmatpush.msra.mxu0 0.0
  %3919 = vmatpush.msra.mxu0 0.0
  %3920 = vmatpush.msra.mxu0 0.0
  %3921 = vmatpush.msra.mxu0 0.0
  %3922 = vmatpush.msra.mxu0 0.0
  %3923 = vmatpush.msra.mxu0 0.0
  %3924 = vmatpush.msra.mxu0 0.0
  %3925 = vmatpush.msra.mxu0 0.0
  %3926 = vmatpush.msra.mxu0 %v3777
  %3927 = vmatpush.msra.mxu0 %v3776
  %3928 = vmatpush.msra.mxu0 %v3775
  %3929 = vmatpush.msra.mxu0 %v3774
  %3930 = vmatpush.msra.mxu0 %v3773
  %3931 = vmatpush.msra.mxu0 %v3772
  %3932 = vmatpush.msra.mxu0 %v3771
  %3933 = vmatpush.msra.mxu0 %v3770
  %3934 = vmatmul.f32.gmra.mxu0 %v1578
  %v3935 = vpop.f32.mrf.mxu0
  %v3936 = vadd.f32 0.0, %v3935
  %3937 = vmatmul.f32.gmra.mxu0 %v1581
  %v3938 = vpop.f32.mrf.mxu0
  %v3939 = vadd.f32 0.0, %v3938
  %3940 = vdwg.mxu0
  %vm3941 = vcmp.le.s32.totalorder %v3513, %v1557
  %vm3942 = vcmp.le.s32.totalorder %v3514, %v1557
  %vm3943 = vcmp.lt.s32.totalorder %v1557, %v3577
  %vm3944 = vcmp.lt.s32.totalorder %v1557, %v3578
  %vm3945 = vmand %vm3941, %vm3943
  %vm3946 = vmand %vm3942, %vm3944
  %v3947 = vsel %vm3945, 1.0, 0.0
  %v3948 = vsel %vm3946, 1.0, 0.0
  %3952 = vrot.lane.b32.xlu0 %v3510, 80
  %v3953 = vpop.permute.xlu0 %3952
  %3954 = vrot.lane.b32.xlu0 %v3511, 80
  %v3955 = vpop.permute.xlu0 %3954
  %3956 = vrot.lane.b32.xlu0 %v3512, 80
  %v3957 = vpop.permute.xlu0 %3956
  %v3958 = vsel %vm1650, %v3953, 0
  %v3960 = vsel %vm1650, %v3955, 0
  %v3962 = vsel %vm1650, %v3957, 0
  %3964 = vmatpush.msra.mxu0 0.0
  %3965 = vmatpush.msra.mxu0 0.0
  %3966 = vmatpush.msra.mxu0 0.0
  %3967 = vmatpush.msra.mxu0 0.0
  %3968 = vmatpush.msra.mxu0 0.0
  %3969 = vmatpush.msra.mxu0 0.0
  %3970 = vmatpush.msra.mxu0 0.0
  %3971 = vmatpush.msra.mxu0 0.0
  %3972 = vmatpush.msra.mxu0 0.0
  %3973 = vmatpush.msra.mxu0 0.0
  %3974 = vmatpush.msra.mxu0 0.0
  %3975 = vmatpush.msra.mxu0 0.0
  %3976 = vmatpush.msra.mxu0 0.0
  %3977 = vmatpush.msra.mxu0 0.0
  %3978 = vmatpush.msra.mxu0 %v3948
  %3979 = vmatpush.msra.mxu0 %v3947
  %3980 = vmatmul.f32.gmra.mxu0 %v3958
  %v3981 = vpop.f32.mrf.mxu0
  %v3982 = vadd.f32 0.0, %v3981
  %3983 = vmatmul.f32.gmra.mxu0 %v3960
  %v3984 = vpop.f32.mrf.mxu0
  %v3985 = vadd.f32 0.0, %v3984
  %3986 = vmatmul.f32.gmra.mxu0 %v3962
  %v3987 = vpop.f32.mrf.mxu0
  %v3988 = vadd.f32 0.0, %v3987
  %3989 = vdwg.mxu0
  %v3991 = vsel %vm1480, %v3982, 0
  %v3994 = vsel %vm1480, %v3985, 0
  %v3997 = vsel %vm1480, %v3988, 0
  %3999 = vmatpush.msra.mxu0 0.0
  %4000 = vmatpush.msra.mxu0 0.0
  %4001 = vmatpush.msra.mxu0 0.0
  %4002 = vmatpush.msra.mxu0 0.0
  %4003 = vmatpush.msra.mxu0 0.0
  %4004 = vmatpush.msra.mxu0 0.0
  %4005 = vmatpush.msra.mxu0 0.0
  %4006 = vmatpush.msra.mxu0 0.0
  %4007 = vmatpush.msra.mxu0 %v3777
  %4008 = vmatpush.msra.mxu0 %v3776
  %4009 = vmatpush.msra.mxu0 %v3775
  %4010 = vmatpush.msra.mxu0 %v3774
  %4011 = vmatpush.msra.mxu0 %v3773
  %4012 = vmatpush.msra.mxu0 %v3772
  %4013 = vmatpush.msra.mxu0 %v3771
  %4014 = vmatpush.msra.mxu0 %v3770
  %4015 = vmatmul.f32.gmra.mxu0 %v3991
  %v4016 = vpop.f32.mrf.mxu0
  %v4017 = vadd.f32 0.0, %v4016
  %4018 = vmatmul.f32.gmra.mxu0 %v3994
  %v4019 = vpop.f32.mrf.mxu0
  %v4020 = vadd.f32 0.0, %v4019
  %4021 = vmatmul.f32.gmra.mxu0 %v3997
  %v4022 = vpop.f32.mrf.mxu0
  %v4023 = vadd.f32 0.0, %v4022
  %4024 = vdwg.mxu0
  %v4025 = vld [vmem:[%s12] sm:$0xff]
  %v4026 = vld [vmem:[%s12 + $0x8] sm:$0xf]
  %s4027 = scalar_lea.vmem %s12, 16
  %v4028 = vld [vmem:[%s4027] sm:$0xff]
  %v4029 = vld [vmem:[%s4027 + $0x8] sm:$0xf]
  %s4030 = scalar_lea.vmem %s12, 32
  %v4031 = vld [vmem:[%s4030] sm:$0xff]
  %v4032 = vld [vmem:[%s4030 + $0x8] sm:$0xf]
  %v4033 = vld [vmem:[%s13] sm:$0xff]
  %v4034 = vld [vmem:[%s13 + $0x8] sm:$0xf]
  %v4036 = vsel %vm1295, %v4033, 0
  %v4039 = vsel %vm1295, %v4034, 0
  %v4042 = vsel %vm1302, %v3916, 0
  %4044 = vmatpush.msra.mxu0 0.0
  %4045 = vmatpush.msra.mxu0 0.0
  %4046 = vmatpush.msra.mxu0 0.0
  %4047 = vmatpush.msra.mxu0 0.0
  %4048 = vmatpush.msra.mxu0 0.0
  %4049 = vmatpush.msra.mxu0 0.0
  %4050 = vmatpush.msra.mxu0 0.0
  %4051 = vmatpush.msra.mxu0 0.0
  %4052 = vmatpush.msra.mxu0 0.0
  %4053 = vmatpush.msra.mxu0 0.0
  %4054 = vmatpush.msra.mxu0 0.0
  %4055 = vmatpush.msra.mxu0 0.0
  %4056 = vmatpush.msra.mxu0 0.0
  %4057 = vmatpush.msra.mxu0 0.0
  %4058 = vmatpush.msra.mxu0 %v4042
  %4059 = vmatpush.msra.mxu0 %v3913
  %4060 = vmatmul.f32.gmra.mxu0 %v4036
  %v4061 = vpop.f32.mrf.mxu0
  %v4062 = vadd.f32 0.0, %v4061
  %4063 = vmatmul.f32.gmra.mxu0 %v4039
  %v4064 = vpop.f32.mrf.mxu0
  %v4065 = vadd.f32 0.0, %v4064
  %4066 = vdwg.mxu0
  %s4067 = scalar_lea.vmem %s13, 16
  %v4068 = vld [vmem:[%s4067] sm:$0xff]
  %v4069 = vld [vmem:[%s4067 + $0x8] sm:$0xf]
  %v4071 = vsel %vm1295, %v4068, 0
  %v4074 = vsel %vm1295, %v4069, 0
  %4076 = vmatpush.msra.mxu0 0.0
  %4077 = vmatpush.msra.mxu0 0.0
  %4078 = vmatpush.msra.mxu0 0.0
  %4079 = vmatpush.msra.mxu0 0.0
  %4080 = vmatpush.msra.mxu0 0.0
  %4081 = vmatpush.msra.mxu0 0.0
  %4082 = vmatpush.msra.mxu0 0.0
  %4083 = vmatpush.msra.mxu0 0.0
  %4084 = vmatpush.msra.mxu0 0.0
  %4085 = vmatpush.msra.mxu0 0.0
  %4086 = vmatpush.msra.mxu0 0.0
  %4087 = vmatpush.msra.mxu0 0.0
  %4088 = vmatpush.msra.mxu0 0.0
  %4089 = vmatpush.msra.mxu0 0.0
  %4090 = vmatpush.msra.mxu0 %v4042
  %4091 = vmatpush.msra.mxu0 %v3913
  %4092 = vmatmul.f32.gmra.mxu0 %v4071
  %v4093 = vpop.f32.mrf.mxu0
  %v4094 = vadd.f32 0.0, %v4093
  %4095 = vmatmul.f32.gmra.mxu0 %v4074
  %v4096 = vpop.f32.mrf.mxu0
  %v4097 = vadd.f32 0.0, %v4096
  %4098 = vdwg.mxu0
  %s4099 = scalar_lea.vmem %s13, 32
  %v4100 = vld [vmem:[%s4099] sm:$0xff]
  %v4101 = vld [vmem:[%s4099 + $0x8] sm:$0xf]
  %v4103 = vsel %vm1295, %v4100, 0
  %v4106 = vsel %vm1295, %v4101, 0
  %4108 = vmatpush.msra.mxu0 0.0
  %4109 = vmatpush.msra.mxu0 0.0
  %4110 = vmatpush.msra.mxu0 0.0
  %4111 = vmatpush.msra.mxu0 0.0
  %4112 = vmatpush.msra.mxu0 0.0
  %4113 = vmatpush.msra.mxu0 0.0
  %4114 = vmatpush.msra.mxu0 0.0
  %4115 = vmatpush.msra.mxu0 0.0
  %4116 = vmatpush.msra.mxu0 0.0
  %4117 = vmatpush.msra.mxu0 0.0
  %4118 = vmatpush.msra.mxu0 0.0
  %4119 = vmatpush.msra.mxu0 0.0
  %4120 = vmatpush.msra.mxu0 0.0
  %4121 = vmatpush.msra.mxu0 0.0
  %4122 = vmatpush.msra.mxu0 %v4042
  %4123 = vmatpush.msra.mxu0 %v3913
  %4124 = vmatmul.f32.gmra.mxu0 %v4103
  %v4125 = vpop.f32.mrf.mxu0
  %v4126 = vadd.f32 0.0, %v4125
  %4127 = vmatmul.f32.gmra.mxu0 %v4106
  %v4128 = vpop.f32.mrf.mxu0
  %v4129 = vadd.f32 0.0, %v4128
  %4130 = vdwg.mxu0
  %v4132 = vsel %vm805, %v4025, 0
  %v4135 = vsel %vm805, %v4026, 0
  %4137 = vmatpush.msra.mxu0 0.0
  %4138 = vmatpush.msra.mxu0 0.0
  %4139 = vmatpush.msra.mxu0 0.0
  %4140 = vmatpush.msra.mxu0 0.0
  %4141 = vmatpush.msra.mxu0 0.0
  %4142 = vmatpush.msra.mxu0 0.0
  %4143 = vmatpush.msra.mxu0 0.0
  %4144 = vmatpush.msra.mxu0 0.0
  %4145 = vmatpush.msra.mxu0 0.0
  %4146 = vmatpush.msra.mxu0 0.0
  %4147 = vmatpush.msra.mxu0 0.0
  %4148 = vmatpush.msra.mxu0 0.0
  %4149 = vmatpush.msra.mxu0 0.0
  %4150 = vmatpush.msra.mxu0 0.0
  %4151 = vmatpush.msra.mxu0 0.0
  %4152 = vmatpush.msra.mxu0 %v3799
  %4153 = vmatmul.f32.gmra.mxu0 %v4132
  %v4154 = vpop.f32.mrf.mxu0
  %v4155 = vadd.f32 %v4062, %v4154
  %4156 = vmatmul.f32.gmra.mxu0 %v4135
  %v4157 = vpop.f32.mrf.mxu0
  %v4158 = vadd.f32 %v4065, %v4157
  %4159 = vdwg.mxu0
  %v4161 = vsel %vm805, %v4028, 0
  %v4164 = vsel %vm805, %v4029, 0
  %4166 = vmatpush.msra.mxu0 0.0
  %4167 = vmatpush.msra.mxu0 0.0
  %4168 = vmatpush.msra.mxu0 0.0
  %4169 = vmatpush.msra.mxu0 0.0
  %4170 = vmatpush.msra.mxu0 0.0
  %4171 = vmatpush.msra.mxu0 0.0
  %4172 = vmatpush.msra.mxu0 0.0
  %4173 = vmatpush.msra.mxu0 0.0
  %4174 = vmatpush.msra.mxu0 0.0
  %4175 = vmatpush.msra.mxu0 0.0
  %4176 = vmatpush.msra.mxu0 0.0
  %4177 = vmatpush.msra.mxu0 0.0
  %4178 = vmatpush.msra.mxu0 0.0
  %4179 = vmatpush.msra.mxu0 0.0
  %4180 = vmatpush.msra.mxu0 0.0
  %4181 = vmatpush.msra.mxu0 %v3799
  %4182 = vmatmul.f32.gmra.mxu0 %v4161
  %v4183 = vpop.f32.mrf.mxu0
  %v4184 = vadd.f32 %v4094, %v4183
  %4185 = vmatmul.f32.gmra.mxu0 %v4164
  %v4186 = vpop.f32.mrf.mxu0
  %v4187 = vadd.f32 %v4097, %v4186
  %4188 = vdwg.mxu0
  %v4190 = vsel %vm805, %v4031, 0
  %v4193 = vsel %vm805, %v4032, 0
  %4195 = vmatpush.msra.mxu0 0.0
  %4196 = vmatpush.msra.mxu0 0.0
  %4197 = vmatpush.msra.mxu0 0.0
  %4198 = vmatpush.msra.mxu0 0.0
  %4199 = vmatpush.msra.mxu0 0.0
  %4200 = vmatpush.msra.mxu0 0.0
  %4201 = vmatpush.msra.mxu0 0.0
  %4202 = vmatpush.msra.mxu0 0.0
  %4203 = vmatpush.msra.mxu0 0.0
  %4204 = vmatpush.msra.mxu0 0.0
  %4205 = vmatpush.msra.mxu0 0.0
  %4206 = vmatpush.msra.mxu0 0.0
  %4207 = vmatpush.msra.mxu0 0.0
  %4208 = vmatpush.msra.mxu0 0.0
  %4209 = vmatpush.msra.mxu0 0.0
  %4210 = vmatpush.msra.mxu0 %v3799
  %4211 = vmatmul.f32.gmra.mxu0 %v4190
  %v4212 = vpop.f32.mrf.mxu0
  %v4213 = vadd.f32 %v4126, %v4212
  %4214 = vmatmul.f32.gmra.mxu0 %v4193
  %v4215 = vpop.f32.mrf.mxu0
  %v4216 = vadd.f32 %v4129, %v4215
  %4217 = vdwg.mxu0
  %v4218 = vld [vmem:[%s14] sm:$0xff]
  %v4219 = vld [vmem:[%s14 + $0x8] sm:$0xf]
  %v4221 = vsel %vm1650, %v4218, 0
  %v4224 = vsel %vm1650, %v4219, 0
  %4226 = vmatpush.msra.mxu0 0.0
  %4227 = vmatpush.msra.mxu0 0.0
  %4228 = vmatpush.msra.mxu0 0.0
  %4229 = vmatpush.msra.mxu0 0.0
  %4230 = vmatpush.msra.mxu0 0.0
  %4231 = vmatpush.msra.mxu0 0.0
  %4232 = vmatpush.msra.mxu0 0.0
  %4233 = vmatpush.msra.mxu0 0.0
  %4234 = vmatpush.msra.mxu0 0.0
  %4235 = vmatpush.msra.mxu0 0.0
  %4236 = vmatpush.msra.mxu0 0.0
  %4237 = vmatpush.msra.mxu0 0.0
  %4238 = vmatpush.msra.mxu0 0.0
  %4239 = vmatpush.msra.mxu0 0.0
  %4240 = vmatpush.msra.mxu0 %v3939
  %4241 = vmatpush.msra.mxu0 %v3936
  %4242 = vmatmul.f32.gmra.mxu0 %v4221
  %v4243 = vpop.f32.mrf.mxu0
  %v4244 = vadd.f32 0.0, %v4243
  %4245 = vmatmul.f32.gmra.mxu0 %v4224
  %v4246 = vpop.f32.mrf.mxu0
  %v4247 = vadd.f32 0.0, %v4246
  %4248 = vdwg.mxu0
  %s4249 = scalar_lea.vmem %s14, 16
  %v4250 = vld [vmem:[%s4249] sm:$0xff]
  %v4251 = vld [vmem:[%s4249 + $0x8] sm:$0xf]
  %v4253 = vsel %vm1650, %v4250, 0
  %v4256 = vsel %vm1650, %v4251, 0
  %4258 = vmatpush.msra.mxu0 0.0
  %4259 = vmatpush.msra.mxu0 0.0
  %4260 = vmatpush.msra.mxu0 0.0
  %4261 = vmatpush.msra.mxu0 0.0
  %4262 = vmatpush.msra.mxu0 0.0
  %4263 = vmatpush.msra.mxu0 0.0
  %4264 = vmatpush.msra.mxu0 0.0
  %4265 = vmatpush.msra.mxu0 0.0
  %4266 = vmatpush.msra.mxu0 0.0
  %4267 = vmatpush.msra.mxu0 0.0
  %4268 = vmatpush.msra.mxu0 0.0
  %4269 = vmatpush.msra.mxu0 0.0
  %4270 = vmatpush.msra.mxu0 0.0
  %4271 = vmatpush.msra.mxu0 0.0
  %4272 = vmatpush.msra.mxu0 %v3939
  %4273 = vmatpush.msra.mxu0 %v3936
  %4274 = vmatmul.f32.gmra.mxu0 %v4253
  %v4275 = vpop.f32.mrf.mxu0
  %v4276 = vadd.f32 0.0, %v4275
  %4277 = vmatmul.f32.gmra.mxu0 %v4256
  %v4278 = vpop.f32.mrf.mxu0
  %v4279 = vadd.f32 0.0, %v4278
  %4280 = vdwg.mxu0
  %s4281 = scalar_lea.vmem %s14, 32
  %v4282 = vld [vmem:[%s4281] sm:$0xff]
  %v4283 = vld [vmem:[%s4281 + $0x8] sm:$0xf]
  %v4285 = vsel %vm1650, %v4282, 0
  %v4288 = vsel %vm1650, %v4283, 0
  %4290 = vmatpush.msra.mxu0 0.0
  %4291 = vmatpush.msra.mxu0 0.0
  %4292 = vmatpush.msra.mxu0 0.0
  %4293 = vmatpush.msra.mxu0 0.0
  %4294 = vmatpush.msra.mxu0 0.0
  %4295 = vmatpush.msra.mxu0 0.0
  %4296 = vmatpush.msra.mxu0 0.0
  %4297 = vmatpush.msra.mxu0 0.0
  %4298 = vmatpush.msra.mxu0 0.0
  %4299 = vmatpush.msra.mxu0 0.0
  %4300 = vmatpush.msra.mxu0 0.0
  %4301 = vmatpush.msra.mxu0 0.0
  %4302 = vmatpush.msra.mxu0 0.0
  %4303 = vmatpush.msra.mxu0 0.0
  %4304 = vmatpush.msra.mxu0 %v3939
  %4305 = vmatpush.msra.mxu0 %v3936
  %4306 = vmatmul.f32.gmra.mxu0 %v4285
  %v4307 = vpop.f32.mrf.mxu0
  %v4308 = vadd.f32 0.0, %v4307
  %4309 = vmatmul.f32.gmra.mxu0 %v4288
  %v4310 = vpop.f32.mrf.mxu0
  %v4311 = vadd.f32 0.0, %v4310
  %4312 = vdwg.mxu0
  %v4313 = vadd.f32 %v4155, %v4244
  %v4314 = vadd.f32 %v4158, %v4247
  %v4315 = vadd.f32 %v4184, %v4276
  %v4316 = vadd.f32 %v4187, %v4279
  %v4317 = vadd.f32 %v4213, %v4308
  %v4318 = vadd.f32 %v4216, %v4311
  %v4319 = vld [vmem:[%s15] sm:$0xff]
  %v4320 = vld [vmem:[%s15 + $0x8] sm:$0xf]
  %vm4321 = vcmask 162816
  %v4323 = vsel %vm4321, %v4319, 0
  %v4326 = vsel %vm4321, %v4320, 0
  %v4329 = vsel %vm1302, %v4023, 0
  %4331 = vmatpush.msra.mxu0 0.0
  %4332 = vmatpush.msra.mxu0 0.0
  %4333 = vmatpush.msra.mxu0 0.0
  %4334 = vmatpush.msra.mxu0 0.0
  %4335 = vmatpush.msra.mxu0 0.0
  %4336 = vmatpush.msra.mxu0 0.0
  %4337 = vmatpush.msra.mxu0 0.0
  %4338 = vmatpush.msra.mxu0 0.0
  %4339 = vmatpush.msra.mxu0 0.0
  %4340 = vmatpush.msra.mxu0 0.0
  %4341 = vmatpush.msra.mxu0 0.0
  %4342 = vmatpush.msra.mxu0 0.0
  %4343 = vmatpush.msra.mxu0 0.0
  %4344 = vmatpush.msra.mxu0 %v4329
  %4345 = vmatpush.msra.mxu0 %v4020
  %4346 = vmatpush.msra.mxu0 %v4017
  %4347 = vmatmul.f32.gmra.mxu0 %v4323
  %v4348 = vpop.f32.mrf.mxu0
  %v4349 = vadd.f32 0.0, %v4348
  %4350 = vmatmul.f32.gmra.mxu0 %v4326
  %v4351 = vpop.f32.mrf.mxu0
  %v4352 = vadd.f32 0.0, %v4351
  %4353 = vdwg.mxu0
  %s4354 = scalar_lea.vmem %s15, 16
  %v4355 = vld [vmem:[%s4354] sm:$0xff]
  %v4356 = vld [vmem:[%s4354 + $0x8] sm:$0xf]
  %v4358 = vsel %vm4321, %v4355, 0
  %v4361 = vsel %vm4321, %v4356, 0
  %4363 = vmatpush.msra.mxu0 0.0
  %4364 = vmatpush.msra.mxu0 0.0
  %4365 = vmatpush.msra.mxu0 0.0
  %4366 = vmatpush.msra.mxu0 0.0
  %4367 = vmatpush.msra.mxu0 0.0
  %4368 = vmatpush.msra.mxu0 0.0
  %4369 = vmatpush.msra.mxu0 0.0
  %4370 = vmatpush.msra.mxu0 0.0
  %4371 = vmatpush.msra.mxu0 0.0
  %4372 = vmatpush.msra.mxu0 0.0
  %4373 = vmatpush.msra.mxu0 0.0
  %4374 = vmatpush.msra.mxu0 0.0
  %4375 = vmatpush.msra.mxu0 0.0
  %4376 = vmatpush.msra.mxu0 %v4329
  %4377 = vmatpush.msra.mxu0 %v4020
  %4378 = vmatpush.msra.mxu0 %v4017
  %4379 = vmatmul.f32.gmra.mxu0 %v4358
  %v4380 = vpop.f32.mrf.mxu0
  %v4381 = vadd.f32 0.0, %v4380
  %4382 = vmatmul.f32.gmra.mxu0 %v4361
  %v4383 = vpop.f32.mrf.mxu0
  %v4384 = vadd.f32 0.0, %v4383
  %4385 = vdwg.mxu0
  %s4386 = scalar_lea.vmem %s15, 32
  %v4387 = vld [vmem:[%s4386] sm:$0xff]
  %v4388 = vld [vmem:[%s4386 + $0x8] sm:$0xf]
  %v4390 = vsel %vm4321, %v4387, 0
  %v4393 = vsel %vm4321, %v4388, 0
  %4395 = vmatpush.msra.mxu0 0.0
  %4396 = vmatpush.msra.mxu0 0.0
  %4397 = vmatpush.msra.mxu0 0.0
  %4398 = vmatpush.msra.mxu0 0.0
  %4399 = vmatpush.msra.mxu0 0.0
  %4400 = vmatpush.msra.mxu0 0.0
  %4401 = vmatpush.msra.mxu0 0.0
  %4402 = vmatpush.msra.mxu0 0.0
  %4403 = vmatpush.msra.mxu0 0.0
  %4404 = vmatpush.msra.mxu0 0.0
  %4405 = vmatpush.msra.mxu0 0.0
  %4406 = vmatpush.msra.mxu0 0.0
  %4407 = vmatpush.msra.mxu0 0.0
  %4408 = vmatpush.msra.mxu0 %v4329
  %4409 = vmatpush.msra.mxu0 %v4020
  %4410 = vmatpush.msra.mxu0 %v4017
  %4411 = vmatmul.f32.gmra.mxu0 %v4390
  %v4412 = vpop.f32.mrf.mxu0
  %v4413 = vadd.f32 0.0, %v4412
  %4414 = vmatmul.f32.gmra.mxu0 %v4393
  %v4415 = vpop.f32.mrf.mxu0
  %v4416 = vadd.f32 0.0, %v4415
  %4417 = vdwg.mxu0
  %v4418 = vadd.f32 %v4313, %v4349
  %v4419 = vadd.f32 %v4314, %v4352
  %v4420 = vadd.f32 %v4315, %v4381
  %v4421 = vadd.f32 %v4316, %v4384
  %v4422 = vadd.f32 %v4317, %v4413
  %v4423 = vadd.f32 %v4318, %v4416
  %4424 = vmatpush.msra.mxu0 %v280
  %4425 = vmatpush.msra.mxu0 %v278
  %4426 = vmatpush.msra.mxu0 %v276
  %4427 = vmatpush.msra.mxu0 %v274
  %4428 = vmatpush.msra.mxu0 %v272
  %4429 = vmatpush.msra.mxu0 %v270
  %4430 = vmatpush.msra.mxu0 %v268
  %4431 = vmatpush.msra.mxu0 %v266
  %4432 = vmatpush.msra.mxu0 %v264
  %4433 = vmatpush.msra.mxu0 %v262
  %4434 = vmatpush.msra.mxu0 %v260
  %4435 = vmatpush.msra.mxu0 %v258
  %4436 = vmatpush.msra.mxu0 %v256
  %4437 = vmatpush.msra.mxu0 %v254
  %4438 = vmatpush.msra.mxu0 %v252
  %4439 = vmatpush.msra.mxu0 %v250
  %4440 = vmatmul.f32.gmra.mxu0 %v4418
  %v4441 = vpop.f32.mrf.mxu0
  %v4442 = vadd.f32 %v4420, %v4441
  %4443 = vmatmul.f32.gmra.mxu0 %v4419
  %v4444 = vpop.f32.mrf.mxu0
  %v4445 = vadd.f32 %v4421, %v4444
  %4446 = vdwg.mxu0
  %4447 = vmatpush.msra.mxu0 %v490
  %4448 = vmatpush.msra.mxu0 %v488
  %4449 = vmatpush.msra.mxu0 %v486
  %4450 = vmatpush.msra.mxu0 %v484
  %4451 = vmatpush.msra.mxu0 %v482
  %4452 = vmatpush.msra.mxu0 %v480
  %4453 = vmatpush.msra.mxu0 %v478
  %4454 = vmatpush.msra.mxu0 %v476
  %4455 = vmatpush.msra.mxu0 %v474
  %4456 = vmatpush.msra.mxu0 %v472
  %4457 = vmatpush.msra.mxu0 %v470
  %4458 = vmatpush.msra.mxu0 %v468
  %4459 = vmatpush.msra.mxu0 %v466
  %4460 = vmatpush.msra.mxu0 %v464
  %4461 = vmatpush.msra.mxu0 %v462
  %4462 = vmatpush.msra.mxu0 %v460
  %4463 = vmatmul.f32.gmra.mxu0 %v4422
  %v4464 = vpop.f32.mrf.mxu0
  %v4465 = vadd.f32 0.0, %v4464
  %4466 = vmatmul.f32.gmra.mxu0 %v4423
  %v4467 = vpop.f32.mrf.mxu0
  %v4468 = vadd.f32 0.0, %v4467
  %4469 = vdwg.mxu0
  %v4470 = vadd.f32 %v4442, %v4465
  %v4471 = vadd.f32 %v4445, %v4468
  %v4472 = vld [vmem:[%s16] sm:$0xff]
  %v4473 = vld [vmem:[%s16 + $0x8] sm:$0xf]
  %4475 = vset.pattern.permute.xlu0 0
  %4476 = vperm.xlu0 %4475, %v4472
  %v4477 = vpop.permute.xlu0 %4476
  %4480 = vset.pattern.permute.xlu0 0
  %4481 = vperm.xlu0 %4480, %v4473
  %v4482 = vpop.permute.xlu0 %4481
  %v4484 = vadd.f32 %v4470, %v4477
  %v4485 = vadd.f32 %v4471, %v4482
  %v4486 = vmax.f32 %v4484, 0.0
  %v4487 = vmax.f32 %v4485, 0.0
  %vm4488 = vcmp.le.s32.totalorder %v963, %v1557
  %vm4489 = vcmp.le.s32.totalorder %v964, %v1557
  %vm4490 = vcmp.lt.s32.totalorder %v1557, %v1028
  %vm4491 = vcmp.lt.s32.totalorder %v1557, %v1029
  %vm4492 = vmand %vm4488, %vm4490
  %vm4493 = vmand %vm4489, %vm4491
  %v4494 = vsel %vm4492, 1.0, 0.0
  %v4495 = vsel %vm4493, 1.0, 0.0
  %4496 = vmatpush.msra.mxu0 0.0
  %4497 = vmatpush.msra.mxu0 0.0
  %4498 = vmatpush.msra.mxu0 0.0
  %4499 = vmatpush.msra.mxu0 0.0
  %4500 = vmatpush.msra.mxu0 0.0
  %4501 = vmatpush.msra.mxu0 0.0
  %4502 = vmatpush.msra.mxu0 0.0
  %4503 = vmatpush.msra.mxu0 0.0
  %4504 = vmatpush.msra.mxu0 0.0
  %4505 = vmatpush.msra.mxu0 0.0
  %4506 = vmatpush.msra.mxu0 0.0
  %4507 = vmatpush.msra.mxu0 0.0
  %4508 = vmatpush.msra.mxu0 0.0
  %4509 = vmatpush.msra.mxu0 0.0
  %4510 = vmatpush.msra.mxu0 %v4495
  %4511 = vmatpush.msra.mxu0 %v4494
  %4512 = vmatmul.f32.gmra.mxu0 %v3958
  %v4513 = vpop.f32.mrf.mxu0
  %v4514 = vadd.f32 0.0, %v4513
  %4515 = vmatmul.f32.gmra.mxu0 %v3960
  %v4516 = vpop.f32.mrf.mxu0
  %v4517 = vadd.f32 0.0, %v4516
  %4518 = vmatmul.f32.gmra.mxu0 %v3962
  %v4519 = vpop.f32.mrf.mxu0
  %v4520 = vadd.f32 0.0, %v4519
  %4521 = vdwg.mxu0
  %v4522 = vld [vmem:[%s17] sm:$0xff]
  %v4523 = vld [vmem:[%s17 + $0x8] sm:$0xff]
  %v4524 = vld [vmem:[%s17 + $0x10] sm:$0xff]
  %v4525 = vld [vmem:[%s17 + $0x18] sm:$0xff]
  %v4526 = vld [vmem:[%s17 + $0x20] sm:$0xff]
  %v4527 = vld [vmem:[%s17 + $0x28] sm:$0xff]
  %v4528 = vld [vmem:[%s17 + $0x30] sm:$0xff]
  %v4529 = vld [vmem:[%s17 + $0x38] sm:$0xff]
  %v4530 = vld [vmem:[%s17 + $0x40] sm:$0xf]
  %s4531 = scalar_lea.vmem %s17, 72
  %v4532 = vld [vmem:[%s4531] sm:$0xff]
  %v4533 = vld [vmem:[%s4531 + $0x8] sm:$0xff]
  %v4534 = vld [vmem:[%s4531 + $0x10] sm:$0xff]
  %v4535 = vld [vmem:[%s4531 + $0x18] sm:$0xff]
  %v4536 = vld [vmem:[%s4531 + $0x20] sm:$0xff]
  %v4537 = vld [vmem:[%s4531 + $0x28] sm:$0xff]
  %v4538 = vld [vmem:[%s4531 + $0x30] sm:$0xff]
  %v4539 = vld [vmem:[%s4531 + $0x38] sm:$0xff]
  %v4540 = vld [vmem:[%s4531 + $0x40] sm:$0xf]
  %s4541 = scalar_lea.vmem %s17, 144
  %v4542 = vld [vmem:[%s4541] sm:$0xff]
  %v4543 = vld [vmem:[%s4541 + $0x8] sm:$0xff]
  %v4544 = vld [vmem:[%s4541 + $0x10] sm:$0xff]
  %v4545 = vld [vmem:[%s4541 + $0x18] sm:$0xff]
  %v4546 = vld [vmem:[%s4541 + $0x20] sm:$0xff]
  %v4547 = vld [vmem:[%s4541 + $0x28] sm:$0xff]
  %v4548 = vld [vmem:[%s4541 + $0x30] sm:$0xff]
  %v4549 = vld [vmem:[%s4541 + $0x38] sm:$0xff]
  %v4550 = vld [vmem:[%s4541 + $0x40] sm:$0xf]
  %v4551 = vld [vmem:[%s18] sm:$0xff]
  %v4552 = vld [vmem:[%s18 + $0x8] sm:$0xff]
  %v4553 = vld [vmem:[%s18 + $0x10] sm:$0xff]
  %v4554 = vld [vmem:[%s18 + $0x18] sm:$0xff]
  %v4555 = vld [vmem:[%s18 + $0x20] sm:$0xff]
  %v4556 = vld [vmem:[%s18 + $0x28] sm:$0xff]
  %v4557 = vld [vmem:[%s18 + $0x30] sm:$0xff]
  %v4558 = vld [vmem:[%s18 + $0x38] sm:$0xff]
  %v4559 = vld [vmem:[%s18 + $0x40] sm:$0xf]
  %v4561 = vsel %vm1295, %v4551, 0
  %v4564 = vsel %vm1295, %v4552, 0
  %v4567 = vsel %vm1295, %v4553, 0
  %v4570 = vsel %vm1295, %v4554, 0
  %v4573 = vsel %vm1295, %v4555, 0
  %v4576 = vsel %vm1295, %v4556, 0
  %v4579 = vsel %vm1295, %v4557, 0
  %v4582 = vsel %vm1295, %v4558, 0
  %v4585 = vsel %vm1295, %v4559, 0
  %v4588 = vsel %vm1302, %v962, 0
  %4590 = vmatpush.msra.mxu0 0.0
  %4591 = vmatpush.msra.mxu0 0.0
  %4592 = vmatpush.msra.mxu0 0.0
  %4593 = vmatpush.msra.mxu0 0.0
  %4594 = vmatpush.msra.mxu0 0.0
  %4595 = vmatpush.msra.mxu0 0.0
  %4596 = vmatpush.msra.mxu0 0.0
  %4597 = vmatpush.msra.mxu0 0.0
  %4598 = vmatpush.msra.mxu0 0.0
  %4599 = vmatpush.msra.mxu0 0.0
  %4600 = vmatpush.msra.mxu0 0.0
  %4601 = vmatpush.msra.mxu0 0.0
  %4602 = vmatpush.msra.mxu0 0.0
  %4603 = vmatpush.msra.mxu0 0.0
  %4604 = vmatpush.msra.mxu0 %v4588
  %4605 = vmatpush.msra.mxu0 %v961
  %4606 = vmatmul.f32.gmra.mxu0 %v4561
  %v4607 = vpop.f32.mrf.mxu0
  %v4608 = vadd.f32 0.0, %v4607
  %4609 = vmatmul.f32.gmra.mxu0 %v4564
  %v4610 = vpop.f32.mrf.mxu0
  %v4611 = vadd.f32 0.0, %v4610
  %4612 = vmatmul.f32.gmra.mxu0 %v4567
  %v4613 = vpop.f32.mrf.mxu0
  %v4614 = vadd.f32 0.0, %v4613
  %4615 = vmatmul.f32.gmra.mxu0 %v4570
  %v4616 = vpop.f32.mrf.mxu0
  %v4617 = vadd.f32 0.0, %v4616
  %4618 = vmatmul.f32.gmra.mxu0 %v4573
  %v4619 = vpop.f32.mrf.mxu0
  %v4620 = vadd.f32 0.0, %v4619
  %4621 = vmatmul.f32.gmra.mxu0 %v4576
  %v4622 = vpop.f32.mrf.mxu0
  %v4623 = vadd.f32 0.0, %v4622
  %4624 = vmatmul.f32.gmra.mxu0 %v4579
  %v4625 = vpop.f32.mrf.mxu0
  %v4626 = vadd.f32 0.0, %v4625
  %4627 = vmatmul.f32.gmra.mxu0 %v4582
  %v4628 = vpop.f32.mrf.mxu0
  %v4629 = vadd.f32 0.0, %v4628
  %4630 = vmatmul.f32.gmra.mxu0 %v4585
  %v4631 = vpop.f32.mrf.mxu0
  %v4632 = vadd.f32 0.0, %v4631
  %4633 = vdwg.mxu0
  %s4634 = scalar_lea.vmem %s18, 72
  %v4635 = vld [vmem:[%s4634] sm:$0xff]
  %v4636 = vld [vmem:[%s4634 + $0x8] sm:$0xff]
  %v4637 = vld [vmem:[%s4634 + $0x10] sm:$0xff]
  %v4638 = vld [vmem:[%s4634 + $0x18] sm:$0xff]
  %v4639 = vld [vmem:[%s4634 + $0x20] sm:$0xff]
  %v4640 = vld [vmem:[%s4634 + $0x28] sm:$0xff]
  %v4641 = vld [vmem:[%s4634 + $0x30] sm:$0xff]
  %v4642 = vld [vmem:[%s4634 + $0x38] sm:$0xff]
  %v4643 = vld [vmem:[%s4634 + $0x40] sm:$0xf]
  %v4645 = vsel %vm1295, %v4635, 0
  %v4648 = vsel %vm1295, %v4636, 0
  %v4651 = vsel %vm1295, %v4637, 0
  %v4654 = vsel %vm1295, %v4638, 0
  %v4657 = vsel %vm1295, %v4639, 0
  %v4660 = vsel %vm1295, %v4640, 0
  %v4663 = vsel %vm1295, %v4641, 0
  %v4666 = vsel %vm1295, %v4642, 0
  %v4669 = vsel %vm1295, %v4643, 0
  %4671 = vmatpush.msra.mxu0 0.0
  %4672 = vmatpush.msra.mxu0 0.0
  %4673 = vmatpush.msra.mxu0 0.0
  %4674 = vmatpush.msra.mxu0 0.0
  %4675 = vmatpush.msra.mxu0 0.0
  %4676 = vmatpush.msra.mxu0 0.0
  %4677 = vmatpush.msra.mxu0 0.0
  %4678 = vmatpush.msra.mxu0 0.0
  %4679 = vmatpush.msra.mxu0 0.0
  %4680 = vmatpush.msra.mxu0 0.0
  %4681 = vmatpush.msra.mxu0 0.0
  %4682 = vmatpush.msra.mxu0 0.0
  %4683 = vmatpush.msra.mxu0 0.0
  %4684 = vmatpush.msra.mxu0 0.0
  %4685 = vmatpush.msra.mxu0 %v4588
  %4686 = vmatpush.msra.mxu0 %v961
  %4687 = vmatmul.f32.gmra.mxu0 %v4645
  %v4688 = vpop.f32.mrf.mxu0
  %v4689 = vadd.f32 0.0, %v4688
  %4690 = vmatmul.f32.gmra.mxu0 %v4648
  %v4691 = vpop.f32.mrf.mxu0
  %v4692 = vadd.f32 0.0, %v4691
  %4693 = vmatmul.f32.gmra.mxu0 %v4651
  %v4694 = vpop.f32.mrf.mxu0
  %v4695 = vadd.f32 0.0, %v4694
  %4696 = vmatmul.f32.gmra.mxu0 %v4654
  %v4697 = vpop.f32.mrf.mxu0
  %v4698 = vadd.f32 0.0, %v4697
  %4699 = vmatmul.f32.gmra.mxu0 %v4657
  %v4700 = vpop.f32.mrf.mxu0
  %v4701 = vadd.f32 0.0, %v4700
  %4702 = vmatmul.f32.gmra.mxu0 %v4660
  %v4703 = vpop.f32.mrf.mxu0
  %v4704 = vadd.f32 0.0, %v4703
  %4705 = vmatmul.f32.gmra.mxu0 %v4663
  %v4706 = vpop.f32.mrf.mxu0
  %v4707 = vadd.f32 0.0, %v4706
  %4708 = vmatmul.f32.gmra.mxu0 %v4666
  %v4709 = vpop.f32.mrf.mxu0
  %v4710 = vadd.f32 0.0, %v4709
  %4711 = vmatmul.f32.gmra.mxu0 %v4669
  %v4712 = vpop.f32.mrf.mxu0
  %v4713 = vadd.f32 0.0, %v4712
  %4714 = vdwg.mxu0
  %s4715 = scalar_lea.vmem %s18, 144
  %v4716 = vld [vmem:[%s4715] sm:$0xff]
  %v4717 = vld [vmem:[%s4715 + $0x8] sm:$0xff]
  %v4718 = vld [vmem:[%s4715 + $0x10] sm:$0xff]
  %v4719 = vld [vmem:[%s4715 + $0x18] sm:$0xff]
  %v4720 = vld [vmem:[%s4715 + $0x20] sm:$0xff]
  %v4721 = vld [vmem:[%s4715 + $0x28] sm:$0xff]
  %v4722 = vld [vmem:[%s4715 + $0x30] sm:$0xff]
  %v4723 = vld [vmem:[%s4715 + $0x38] sm:$0xff]
  %v4724 = vld [vmem:[%s4715 + $0x40] sm:$0xf]
  %v4726 = vsel %vm1295, %v4716, 0
  %v4729 = vsel %vm1295, %v4717, 0
  %v4732 = vsel %vm1295, %v4718, 0
  %v4735 = vsel %vm1295, %v4719, 0
  %v4738 = vsel %vm1295, %v4720, 0
  %v4741 = vsel %vm1295, %v4721, 0
  %v4744 = vsel %vm1295, %v4722, 0
  %v4747 = vsel %vm1295, %v4723, 0
  %v4750 = vsel %vm1295, %v4724, 0
  %4752 = vmatpush.msra.mxu0 0.0
  %4753 = vmatpush.msra.mxu0 0.0
  %4754 = vmatpush.msra.mxu0 0.0
  %4755 = vmatpush.msra.mxu0 0.0
  %4756 = vmatpush.msra.mxu0 0.0
  %4757 = vmatpush.msra.mxu0 0.0
  %4758 = vmatpush.msra.mxu0 0.0
  %4759 = vmatpush.msra.mxu0 0.0
  %4760 = vmatpush.msra.mxu0 0.0
  %4761 = vmatpush.msra.mxu0 0.0
  %4762 = vmatpush.msra.mxu0 0.0
  %4763 = vmatpush.msra.mxu0 0.0
  %4764 = vmatpush.msra.mxu0 0.0
  %4765 = vmatpush.msra.mxu0 0.0
  %4766 = vmatpush.msra.mxu0 %v4588
  %4767 = vmatpush.msra.mxu0 %v961
  %4768 = vmatmul.f32.gmra.mxu0 %v4726
  %v4769 = vpop.f32.mrf.mxu0
  %v4770 = vadd.f32 0.0, %v4769
  %4771 = vmatmul.f32.gmra.mxu0 %v4729
  %v4772 = vpop.f32.mrf.mxu0
  %v4773 = vadd.f32 0.0, %v4772
  %4774 = vmatmul.f32.gmra.mxu0 %v4732
  %v4775 = vpop.f32.mrf.mxu0
  %v4776 = vadd.f32 0.0, %v4775
  %4777 = vmatmul.f32.gmra.mxu0 %v4735
  %v4778 = vpop.f32.mrf.mxu0
  %v4779 = vadd.f32 0.0, %v4778
  %4780 = vmatmul.f32.gmra.mxu0 %v4738
  %v4781 = vpop.f32.mrf.mxu0
  %v4782 = vadd.f32 0.0, %v4781
  %4783 = vmatmul.f32.gmra.mxu0 %v4741
  %v4784 = vpop.f32.mrf.mxu0
  %v4785 = vadd.f32 0.0, %v4784
  %4786 = vmatmul.f32.gmra.mxu0 %v4744
  %v4787 = vpop.f32.mrf.mxu0
  %v4788 = vadd.f32 0.0, %v4787
  %4789 = vmatmul.f32.gmra.mxu0 %v4747
  %v4790 = vpop.f32.mrf.mxu0
  %v4791 = vadd.f32 0.0, %v4790
  %4792 = vmatmul.f32.gmra.mxu0 %v4750
  %v4793 = vpop.f32.mrf.mxu0
  %v4794 = vadd.f32 0.0, %v4793
  %4795 = vdwg.mxu0
  %v4797 = vsel %vm805, %v4522, 0
  %v4800 = vsel %vm805, %v4523, 0
  %v4803 = vsel %vm805, %v4524, 0
  %v4806 = vsel %vm805, %v4525, 0
  %v4809 = vsel %vm805, %v4526, 0
  %v4812 = vsel %vm805, %v4527, 0
  %v4815 = vsel %vm805, %v4528, 0
  %v4818 = vsel %vm805, %v4529, 0
  %v4821 = vsel %vm805, %v4530, 0
  %4823 = vmatpush.msra.mxu0 0.0
  %4824 = vmatpush.msra.mxu0 0.0
  %4825 = vmatpush.msra.mxu0 0.0
  %4826 = vmatpush.msra.mxu0 0.0
  %4827 = vmatpush.msra.mxu0 0.0
  %4828 = vmatpush.msra.mxu0 0.0
  %4829 = vmatpush.msra.mxu0 0.0
  %4830 = vmatpush.msra.mxu0 0.0
  %4831 = vmatpush.msra.mxu0 0.0
  %4832 = vmatpush.msra.mxu0 0.0
  %4833 = vmatpush.msra.mxu0 0.0
  %4834 = vmatpush.msra.mxu0 0.0
  %4835 = vmatpush.msra.mxu0 0.0
  %4836 = vmatpush.msra.mxu0 0.0
  %4837 = vmatpush.msra.mxu0 0.0
  %4838 = vmatpush.msra.mxu0 %v1194
  %4839 = vmatmul.f32.gmra.mxu0 %v4797
  %v4840 = vpop.f32.mrf.mxu0
  %v4841 = vadd.f32 %v4608, %v4840
  %4842 = vmatmul.f32.gmra.mxu0 %v4800
  %v4843 = vpop.f32.mrf.mxu0
  %v4844 = vadd.f32 %v4611, %v4843
  %4845 = vmatmul.f32.gmra.mxu0 %v4803
  %v4846 = vpop.f32.mrf.mxu0
  %v4847 = vadd.f32 %v4614, %v4846
  %4848 = vmatmul.f32.gmra.mxu0 %v4806
  %v4849 = vpop.f32.mrf.mxu0
  %v4850 = vadd.f32 %v4617, %v4849
  %4851 = vmatmul.f32.gmra.mxu0 %v4809
  %v4852 = vpop.f32.mrf.mxu0
  %v4853 = vadd.f32 %v4620, %v4852
  %4854 = vmatmul.f32.gmra.mxu0 %v4812
  %v4855 = vpop.f32.mrf.mxu0
  %v4856 = vadd.f32 %v4623, %v4855
  %4857 = vmatmul.f32.gmra.mxu0 %v4815
  %v4858 = vpop.f32.mrf.mxu0
  %v4859 = vadd.f32 %v4626, %v4858
  %4860 = vmatmul.f32.gmra.mxu0 %v4818
  %v4861 = vpop.f32.mrf.mxu0
  %v4862 = vadd.f32 %v4629, %v4861
  %4863 = vmatmul.f32.gmra.mxu0 %v4821
  %v4864 = vpop.f32.mrf.mxu0
  %v4865 = vadd.f32 %v4632, %v4864
  %4866 = vdwg.mxu0
  %v4868 = vsel %vm805, %v4532, 0
  %v4871 = vsel %vm805, %v4533, 0
  %v4874 = vsel %vm805, %v4534, 0
  %v4877 = vsel %vm805, %v4535, 0
  %v4880 = vsel %vm805, %v4536, 0
  %v4883 = vsel %vm805, %v4537, 0
  %v4886 = vsel %vm805, %v4538, 0
  %v4889 = vsel %vm805, %v4539, 0
  %v4892 = vsel %vm805, %v4540, 0
  %4894 = vmatpush.msra.mxu0 0.0
  %4895 = vmatpush.msra.mxu0 0.0
  %4896 = vmatpush.msra.mxu0 0.0
  %4897 = vmatpush.msra.mxu0 0.0
  %4898 = vmatpush.msra.mxu0 0.0
  %4899 = vmatpush.msra.mxu0 0.0
  %4900 = vmatpush.msra.mxu0 0.0
  %4901 = vmatpush.msra.mxu0 0.0
  %4902 = vmatpush.msra.mxu0 0.0
  %4903 = vmatpush.msra.mxu0 0.0
  %4904 = vmatpush.msra.mxu0 0.0
  %4905 = vmatpush.msra.mxu0 0.0
  %4906 = vmatpush.msra.mxu0 0.0
  %4907 = vmatpush.msra.mxu0 0.0
  %4908 = vmatpush.msra.mxu0 0.0
  %4909 = vmatpush.msra.mxu0 %v1194
  %4910 = vmatmul.f32.gmra.mxu0 %v4868
  %v4911 = vpop.f32.mrf.mxu0
  %v4912 = vadd.f32 %v4689, %v4911
  %4913 = vmatmul.f32.gmra.mxu0 %v4871
  %v4914 = vpop.f32.mrf.mxu0
  %v4915 = vadd.f32 %v4692, %v4914
  %4916 = vmatmul.f32.gmra.mxu0 %v4874
  %v4917 = vpop.f32.mrf.mxu0
  %v4918 = vadd.f32 %v4695, %v4917
  %4919 = vmatmul.f32.gmra.mxu0 %v4877
  %v4920 = vpop.f32.mrf.mxu0
  %v4921 = vadd.f32 %v4698, %v4920
  %4922 = vmatmul.f32.gmra.mxu0 %v4880
  %v4923 = vpop.f32.mrf.mxu0
  %v4924 = vadd.f32 %v4701, %v4923
  %4925 = vmatmul.f32.gmra.mxu0 %v4883
  %v4926 = vpop.f32.mrf.mxu0
  %v4927 = vadd.f32 %v4704, %v4926
  %4928 = vmatmul.f32.gmra.mxu0 %v4886
  %v4929 = vpop.f32.mrf.mxu0
  %v4930 = vadd.f32 %v4707, %v4929
  %4931 = vmatmul.f32.gmra.mxu0 %v4889
  %v4932 = vpop.f32.mrf.mxu0
  %v4933 = vadd.f32 %v4710, %v4932
  %4934 = vmatmul.f32.gmra.mxu0 %v4892
  %v4935 = vpop.f32.mrf.mxu0
  %v4936 = vadd.f32 %v4713, %v4935
  %4937 = vdwg.mxu0
  %v4939 = vsel %vm805, %v4542, 0
  %v4942 = vsel %vm805, %v4543, 0
  %v4945 = vsel %vm805, %v4544, 0
  %v4948 = vsel %vm805, %v4545, 0
  %v4951 = vsel %vm805, %v4546, 0
  %v4954 = vsel %vm805, %v4547, 0
  %v4957 = vsel %vm805, %v4548, 0
  %v4960 = vsel %vm805, %v4549, 0
  %v4963 = vsel %vm805, %v4550, 0
  %4965 = vmatpush.msra.mxu0 0.0
  %4966 = vmatpush.msra.mxu0 0.0
  %4967 = vmatpush.msra.mxu0 0.0
  %4968 = vmatpush.msra.mxu0 0.0
  %4969 = vmatpush.msra.mxu0 0.0
  %4970 = vmatpush.msra.mxu0 0.0
  %4971 = vmatpush.msra.mxu0 0.0
  %4972 = vmatpush.msra.mxu0 0.0
  %4973 = vmatpush.msra.mxu0 0.0
  %4974 = vmatpush.msra.mxu0 0.0
  %4975 = vmatpush.msra.mxu0 0.0
  %4976 = vmatpush.msra.mxu0 0.0
  %4977 = vmatpush.msra.mxu0 0.0
  %4978 = vmatpush.msra.mxu0 0.0
  %4979 = vmatpush.msra.mxu0 0.0
  %4980 = vmatpush.msra.mxu0 %v1194
  %4981 = vmatmul.f32.gmra.mxu0 %v4939
  %v4982 = vpop.f32.mrf.mxu0
  %v4983 = vadd.f32 %v4770, %v4982
  %4984 = vmatmul.f32.gmra.mxu0 %v4942
  %v4985 = vpop.f32.mrf.mxu0
  %v4986 = vadd.f32 %v4773, %v4985
  %4987 = vmatmul.f32.gmra.mxu0 %v4945
  %v4988 = vpop.f32.mrf.mxu0
  %v4989 = vadd.f32 %v4776, %v4988
  %4990 = vmatmul.f32.gmra.mxu0 %v4948
  %v4991 = vpop.f32.mrf.mxu0
  %v4992 = vadd.f32 %v4779, %v4991
  %4993 = vmatmul.f32.gmra.mxu0 %v4951
  %v4994 = vpop.f32.mrf.mxu0
  %v4995 = vadd.f32 %v4782, %v4994
  %4996 = vmatmul.f32.gmra.mxu0 %v4954
  %v4997 = vpop.f32.mrf.mxu0
  %v4998 = vadd.f32 %v4785, %v4997
  %4999 = vmatmul.f32.gmra.mxu0 %v4957
  %v5000 = vpop.f32.mrf.mxu0
  %v5001 = vadd.f32 %v4788, %v5000
  %5002 = vmatmul.f32.gmra.mxu0 %v4960
  %v5003 = vpop.f32.mrf.mxu0
  %v5004 = vadd.f32 %v4791, %v5003
  %5005 = vmatmul.f32.gmra.mxu0 %v4963
  %v5006 = vpop.f32.mrf.mxu0
  %v5007 = vadd.f32 %v4794, %v5006
  %5008 = vdwg.mxu0
  %v5009 = vld [vmem:[%s19] sm:$0xff]
  %v5010 = vld [vmem:[%s19 + $0x8] sm:$0xff]
  %v5011 = vld [vmem:[%s19 + $0x10] sm:$0xff]
  %v5012 = vld [vmem:[%s19 + $0x18] sm:$0xff]
  %v5013 = vld [vmem:[%s19 + $0x20] sm:$0xff]
  %v5014 = vld [vmem:[%s19 + $0x28] sm:$0xff]
  %v5015 = vld [vmem:[%s19 + $0x30] sm:$0xff]
  %v5016 = vld [vmem:[%s19 + $0x38] sm:$0xff]
  %v5017 = vld [vmem:[%s19 + $0x40] sm:$0xf]
  %v5019 = vsel %vm1650, %v5009, 0
  %v5022 = vsel %vm1650, %v5010, 0
  %v5025 = vsel %vm1650, %v5011, 0
  %v5028 = vsel %vm1650, %v5012, 0
  %v5031 = vsel %vm1650, %v5013, 0
  %v5034 = vsel %vm1650, %v5014, 0
  %v5037 = vsel %vm1650, %v5015, 0
  %v5040 = vsel %vm1650, %v5016, 0
  %v5043 = vsel %vm1650, %v5017, 0
  %5045 = vmatpush.msra.mxu0 0.0
  %5046 = vmatpush.msra.mxu0 0.0
  %5047 = vmatpush.msra.mxu0 0.0
  %5048 = vmatpush.msra.mxu0 0.0
  %5049 = vmatpush.msra.mxu0 0.0
  %5050 = vmatpush.msra.mxu0 0.0
  %5051 = vmatpush.msra.mxu0 0.0
  %5052 = vmatpush.msra.mxu0 0.0
  %5053 = vmatpush.msra.mxu0 0.0
  %5054 = vmatpush.msra.mxu0 0.0
  %5055 = vmatpush.msra.mxu0 0.0
  %5056 = vmatpush.msra.mxu0 0.0
  %5057 = vmatpush.msra.mxu0 0.0
  %5058 = vmatpush.msra.mxu0 0.0
  %5059 = vmatpush.msra.mxu0 %v3939
  %5060 = vmatpush.msra.mxu0 %v3936
  %5061 = vmatmul.f32.gmra.mxu0 %v5019
  %v5062 = vpop.f32.mrf.mxu0
  %v5063 = vadd.f32 0.0, %v5062
  %5064 = vmatmul.f32.gmra.mxu0 %v5022
  %v5065 = vpop.f32.mrf.mxu0
  %v5066 = vadd.f32 0.0, %v5065
  %5067 = vmatmul.f32.gmra.mxu0 %v5025
  %v5068 = vpop.f32.mrf.mxu0
  %v5069 = vadd.f32 0.0, %v5068
  %5070 = vmatmul.f32.gmra.mxu0 %v5028
  %v5071 = vpop.f32.mrf.mxu0
  %v5072 = vadd.f32 0.0, %v5071
  %5073 = vmatmul.f32.gmra.mxu0 %v5031
  %v5074 = vpop.f32.mrf.mxu0
  %v5075 = vadd.f32 0.0, %v5074
  %5076 = vmatmul.f32.gmra.mxu0 %v5034
  %v5077 = vpop.f32.mrf.mxu0
  %v5078 = vadd.f32 0.0, %v5077
  %5079 = vmatmul.f32.gmra.mxu0 %v5037
  %v5080 = vpop.f32.mrf.mxu0
  %v5081 = vadd.f32 0.0, %v5080
  %5082 = vmatmul.f32.gmra.mxu0 %v5040
  %v5083 = vpop.f32.mrf.mxu0
  %v5084 = vadd.f32 0.0, %v5083
  %5085 = vmatmul.f32.gmra.mxu0 %v5043
  %v5086 = vpop.f32.mrf.mxu0
  %v5087 = vadd.f32 0.0, %v5086
  %5088 = vdwg.mxu0
  %s5089 = scalar_lea.vmem %s19, 72
  %v5090 = vld [vmem:[%s5089] sm:$0xff]
  %v5091 = vld [vmem:[%s5089 + $0x8] sm:$0xff]
  %v5092 = vld [vmem:[%s5089 + $0x10] sm:$0xff]
  %v5093 = vld [vmem:[%s5089 + $0x18] sm:$0xff]
  %v5094 = vld [vmem:[%s5089 + $0x20] sm:$0xff]
  %v5095 = vld [vmem:[%s5089 + $0x28] sm:$0xff]
  %v5096 = vld [vmem:[%s5089 + $0x30] sm:$0xff]
  %v5097 = vld [vmem:[%s5089 + $0x38] sm:$0xff]
  %v5098 = vld [vmem:[%s5089 + $0x40] sm:$0xf]
  %v5100 = vsel %vm1650, %v5090, 0
  %v5103 = vsel %vm1650, %v5091, 0
  %v5106 = vsel %vm1650, %v5092, 0
  %v5109 = vsel %vm1650, %v5093, 0
  %v5112 = vsel %vm1650, %v5094, 0
  %v5115 = vsel %vm1650, %v5095, 0
  %v5118 = vsel %vm1650, %v5096, 0
  %v5121 = vsel %vm1650, %v5097, 0
  %v5124 = vsel %vm1650, %v5098, 0
  %5126 = vmatpush.msra.mxu0 0.0
  %5127 = vmatpush.msra.mxu0 0.0
  %5128 = vmatpush.msra.mxu0 0.0
  %5129 = vmatpush.msra.mxu0 0.0
  %5130 = vmatpush.msra.mxu0 0.0
  %5131 = vmatpush.msra.mxu0 0.0
  %5132 = vmatpush.msra.mxu0 0.0
  %5133 = vmatpush.msra.mxu0 0.0
  %5134 = vmatpush.msra.mxu0 0.0
  %5135 = vmatpush.msra.mxu0 0.0
  %5136 = vmatpush.msra.mxu0 0.0
  %5137 = vmatpush.msra.mxu0 0.0
  %5138 = vmatpush.msra.mxu0 0.0
  %5139 = vmatpush.msra.mxu0 0.0
  %5140 = vmatpush.msra.mxu0 %v3939
  %5141 = vmatpush.msra.mxu0 %v3936
  %5142 = vmatmul.f32.gmra.mxu0 %v5100
  %v5143 = vpop.f32.mrf.mxu0
  %v5144 = vadd.f32 0.0, %v5143
  %5145 = vmatmul.f32.gmra.mxu0 %v5103
  %v5146 = vpop.f32.mrf.mxu0
  %v5147 = vadd.f32 0.0, %v5146
  %5148 = vmatmul.f32.gmra.mxu0 %v5106
  %v5149 = vpop.f32.mrf.mxu0
  %v5150 = vadd.f32 0.0, %v5149
  %5151 = vmatmul.f32.gmra.mxu0 %v5109
  %v5152 = vpop.f32.mrf.mxu0
  %v5153 = vadd.f32 0.0, %v5152
  %5154 = vmatmul.f32.gmra.mxu0 %v5112
  %v5155 = vpop.f32.mrf.mxu0
  %v5156 = vadd.f32 0.0, %v5155
  %5157 = vmatmul.f32.gmra.mxu0 %v5115
  %v5158 = vpop.f32.mrf.mxu0
  %v5159 = vadd.f32 0.0, %v5158
  %5160 = vmatmul.f32.gmra.mxu0 %v5118
  %v5161 = vpop.f32.mrf.mxu0
  %v5162 = vadd.f32 0.0, %v5161
  %5163 = vmatmul.f32.gmra.mxu0 %v5121
  %v5164 = vpop.f32.mrf.mxu0
  %v5165 = vadd.f32 0.0, %v5164
  %5166 = vmatmul.f32.gmra.mxu0 %v5124
  %v5167 = vpop.f32.mrf.mxu0
  %v5168 = vadd.f32 0.0, %v5167
  %5169 = vdwg.mxu0
  %s5170 = scalar_lea.vmem %s19, 144
  %v5171 = vld [vmem:[%s5170] sm:$0xff]
  %v5172 = vld [vmem:[%s5170 + $0x8] sm:$0xff]
  %v5173 = vld [vmem:[%s5170 + $0x10] sm:$0xff]
  %v5174 = vld [vmem:[%s5170 + $0x18] sm:$0xff]
  %v5175 = vld [vmem:[%s5170 + $0x20] sm:$0xff]
  %v5176 = vld [vmem:[%s5170 + $0x28] sm:$0xff]
  %v5177 = vld [vmem:[%s5170 + $0x30] sm:$0xff]
  %v5178 = vld [vmem:[%s5170 + $0x38] sm:$0xff]
  %v5179 = vld [vmem:[%s5170 + $0x40] sm:$0xf]
  %v5181 = vsel %vm1650, %v5171, 0
  %v5184 = vsel %vm1650, %v5172, 0
  %v5187 = vsel %vm1650, %v5173, 0
  %v5190 = vsel %vm1650, %v5174, 0
  %v5193 = vsel %vm1650, %v5175, 0
  %v5196 = vsel %vm1650, %v5176, 0
  %v5199 = vsel %vm1650, %v5177, 0
  %v5202 = vsel %vm1650, %v5178, 0
  %v5205 = vsel %vm1650, %v5179, 0
  %5207 = vmatpush.msra.mxu0 0.0
  %5208 = vmatpush.msra.mxu0 0.0
  %5209 = vmatpush.msra.mxu0 0.0
  %5210 = vmatpush.msra.mxu0 0.0
  %5211 = vmatpush.msra.mxu0 0.0
  %5212 = vmatpush.msra.mxu0 0.0
  %5213 = vmatpush.msra.mxu0 0.0
  %5214 = vmatpush.msra.mxu0 0.0
  %5215 = vmatpush.msra.mxu0 0.0
  %5216 = vmatpush.msra.mxu0 0.0
  %5217 = vmatpush.msra.mxu0 0.0
  %5218 = vmatpush.msra.mxu0 0.0
  %5219 = vmatpush.msra.mxu0 0.0
  %5220 = vmatpush.msra.mxu0 0.0
  %5221 = vmatpush.msra.mxu0 %v3939
  %5222 = vmatpush.msra.mxu0 %v3936
  %5223 = vmatmul.f32.gmra.mxu0 %v5181
  %v5224 = vpop.f32.mrf.mxu0
  %v5225 = vadd.f32 0.0, %v5224
  %5226 = vmatmul.f32.gmra.mxu0 %v5184
  %v5227 = vpop.f32.mrf.mxu0
  %v5228 = vadd.f32 0.0, %v5227
  %5229 = vmatmul.f32.gmra.mxu0 %v5187
  %v5230 = vpop.f32.mrf.mxu0
  %v5231 = vadd.f32 0.0, %v5230
  %5232 = vmatmul.f32.gmra.mxu0 %v5190
  %v5233 = vpop.f32.mrf.mxu0
  %v5234 = vadd.f32 0.0, %v5233
  %5235 = vmatmul.f32.gmra.mxu0 %v5193
  %v5236 = vpop.f32.mrf.mxu0
  %v5237 = vadd.f32 0.0, %v5236
  %5238 = vmatmul.f32.gmra.mxu0 %v5196
  %v5239 = vpop.f32.mrf.mxu0
  %v5240 = vadd.f32 0.0, %v5239
  %5241 = vmatmul.f32.gmra.mxu0 %v5199
  %v5242 = vpop.f32.mrf.mxu0
  %v5243 = vadd.f32 0.0, %v5242
  %5244 = vmatmul.f32.gmra.mxu0 %v5202
  %v5245 = vpop.f32.mrf.mxu0
  %v5246 = vadd.f32 0.0, %v5245
  %5247 = vmatmul.f32.gmra.mxu0 %v5205
  %v5248 = vpop.f32.mrf.mxu0
  %v5249 = vadd.f32 0.0, %v5248
  %5250 = vdwg.mxu0
  %v5251 = vadd.f32 %v4841, %v5063
  %v5252 = vadd.f32 %v4844, %v5066
  %v5253 = vadd.f32 %v4847, %v5069
  %v5254 = vadd.f32 %v4850, %v5072
  %v5255 = vadd.f32 %v4853, %v5075
  %v5256 = vadd.f32 %v4856, %v5078
  %v5257 = vadd.f32 %v4859, %v5081
  %v5258 = vadd.f32 %v4862, %v5084
  %v5259 = vadd.f32 %v4865, %v5087
  %v5260 = vadd.f32 %v4912, %v5144
  %v5261 = vadd.f32 %v4915, %v5147
  %v5262 = vadd.f32 %v4918, %v5150
  %v5263 = vadd.f32 %v4921, %v5153
  %v5264 = vadd.f32 %v4924, %v5156
  %v5265 = vadd.f32 %v4927, %v5159
  %v5266 = vadd.f32 %v4930, %v5162
  %v5267 = vadd.f32 %v4933, %v5165
  %v5268 = vadd.f32 %v4936, %v5168
  %v5269 = vadd.f32 %v4983, %v5225
  %v5270 = vadd.f32 %v4986, %v5228
  %v5271 = vadd.f32 %v4989, %v5231
  %v5272 = vadd.f32 %v4992, %v5234
  %v5273 = vadd.f32 %v4995, %v5237
  %v5274 = vadd.f32 %v4998, %v5240
  %v5275 = vadd.f32 %v5001, %v5243
  %v5276 = vadd.f32 %v5004, %v5246
  %v5277 = vadd.f32 %v5007, %v5249
  %v5278 = vld [vmem:[%s20] sm:$0xff]
  %v5279 = vld [vmem:[%s20 + $0x8] sm:$0xff]
  %v5280 = vld [vmem:[%s20 + $0x10] sm:$0xff]
  %v5281 = vld [vmem:[%s20 + $0x18] sm:$0xff]
  %v5282 = vld [vmem:[%s20 + $0x20] sm:$0xff]
  %v5283 = vld [vmem:[%s20 + $0x28] sm:$0xff]
  %v5284 = vld [vmem:[%s20 + $0x30] sm:$0xff]
  %v5285 = vld [vmem:[%s20 + $0x38] sm:$0xff]
  %v5286 = vld [vmem:[%s20 + $0x40] sm:$0xf]
  %v5288 = vsel %vm4321, %v5278, 0
  %v5291 = vsel %vm4321, %v5279, 0
  %v5294 = vsel %vm4321, %v5280, 0
  %v5297 = vsel %vm4321, %v5281, 0
  %v5300 = vsel %vm4321, %v5282, 0
  %v5303 = vsel %vm4321, %v5283, 0
  %v5306 = vsel %vm4321, %v5284, 0
  %v5309 = vsel %vm4321, %v5285, 0
  %v5312 = vsel %vm4321, %v5286, 0
  %v5315 = vsel %vm1302, %v4520, 0
  %5317 = vmatpush.msra.mxu0 0.0
  %5318 = vmatpush.msra.mxu0 0.0
  %5319 = vmatpush.msra.mxu0 0.0
  %5320 = vmatpush.msra.mxu0 0.0
  %5321 = vmatpush.msra.mxu0 0.0
  %5322 = vmatpush.msra.mxu0 0.0
  %5323 = vmatpush.msra.mxu0 0.0
  %5324 = vmatpush.msra.mxu0 0.0
  %5325 = vmatpush.msra.mxu0 0.0
  %5326 = vmatpush.msra.mxu0 0.0
  %5327 = vmatpush.msra.mxu0 0.0
  %5328 = vmatpush.msra.mxu0 0.0
  %5329 = vmatpush.msra.mxu0 0.0
  %5330 = vmatpush.msra.mxu0 %v5315
  %5331 = vmatpush.msra.mxu0 %v4517
  %5332 = vmatpush.msra.mxu0 %v4514
  %5333 = vmatmul.f32.gmra.mxu0 %v5288
  %v5334 = vpop.f32.mrf.mxu0
  %v5335 = vadd.f32 0.0, %v5334
  %5336 = vmatmul.f32.gmra.mxu0 %v5291
  %v5337 = vpop.f32.mrf.mxu0
  %v5338 = vadd.f32 0.0, %v5337
  %5339 = vmatmul.f32.gmra.mxu0 %v5294
  %v5340 = vpop.f32.mrf.mxu0
  %v5341 = vadd.f32 0.0, %v5340
  %5342 = vmatmul.f32.gmra.mxu0 %v5297
  %v5343 = vpop.f32.mrf.mxu0
  %v5344 = vadd.f32 0.0, %v5343
  %5345 = vmatmul.f32.gmra.mxu0 %v5300
  %v5346 = vpop.f32.mrf.mxu0
  %v5347 = vadd.f32 0.0, %v5346
  %5348 = vmatmul.f32.gmra.mxu0 %v5303
  %v5349 = vpop.f32.mrf.mxu0
  %v5350 = vadd.f32 0.0, %v5349
  %5351 = vmatmul.f32.gmra.mxu0 %v5306
  %v5352 = vpop.f32.mrf.mxu0
  %v5353 = vadd.f32 0.0, %v5352
  %5354 = vmatmul.f32.gmra.mxu0 %v5309
  %v5355 = vpop.f32.mrf.mxu0
  %v5356 = vadd.f32 0.0, %v5355
  %5357 = vmatmul.f32.gmra.mxu0 %v5312
  %v5358 = vpop.f32.mrf.mxu0
  %v5359 = vadd.f32 0.0, %v5358
  %5360 = vdwg.mxu0
  %s5361 = scalar_lea.vmem %s20, 72
  %v5362 = vld [vmem:[%s5361] sm:$0xff]
  %v5363 = vld [vmem:[%s5361 + $0x8] sm:$0xff]
  %v5364 = vld [vmem:[%s5361 + $0x10] sm:$0xff]
  %v5365 = vld [vmem:[%s5361 + $0x18] sm:$0xff]
  %v5366 = vld [vmem:[%s5361 + $0x20] sm:$0xff]
  %v5367 = vld [vmem:[%s5361 + $0x28] sm:$0xff]
  %v5368 = vld [vmem:[%s5361 + $0x30] sm:$0xff]
  %v5369 = vld [vmem:[%s5361 + $0x38] sm:$0xff]
  %v5370 = vld [vmem:[%s5361 + $0x40] sm:$0xf]
  %v5372 = vsel %vm4321, %v5362, 0
  %v5375 = vsel %vm4321, %v5363, 0
  %v5378 = vsel %vm4321, %v5364, 0
  %v5381 = vsel %vm4321, %v5365, 0
  %v5384 = vsel %vm4321, %v5366, 0
  %v5387 = vsel %vm4321, %v5367, 0
  %v5390 = vsel %vm4321, %v5368, 0
  %v5393 = vsel %vm4321, %v5369, 0
  %v5396 = vsel %vm4321, %v5370, 0
  %5398 = vmatpush.msra.mxu0 0.0
  %5399 = vmatpush.msra.mxu0 0.0
  %5400 = vmatpush.msra.mxu0 0.0
  %5401 = vmatpush.msra.mxu0 0.0
  %5402 = vmatpush.msra.mxu0 0.0
  %5403 = vmatpush.msra.mxu0 0.0
  %5404 = vmatpush.msra.mxu0 0.0
  %5405 = vmatpush.msra.mxu0 0.0
  %5406 = vmatpush.msra.mxu0 0.0
  %5407 = vmatpush.msra.mxu0 0.0
  %5408 = vmatpush.msra.mxu0 0.0
  %5409 = vmatpush.msra.mxu0 0.0
  %5410 = vmatpush.msra.mxu0 0.0
  %5411 = vmatpush.msra.mxu0 %v5315
  %5412 = vmatpush.msra.mxu0 %v4517
  %5413 = vmatpush.msra.mxu0 %v4514
  %5414 = vmatmul.f32.gmra.mxu0 %v5372
  %v5415 = vpop.f32.mrf.mxu0
  %v5416 = vadd.f32 0.0, %v5415
  %5417 = vmatmul.f32.gmra.mxu0 %v5375
  %v5418 = vpop.f32.mrf.mxu0
  %v5419 = vadd.f32 0.0, %v5418
  %5420 = vmatmul.f32.gmra.mxu0 %v5378
  %v5421 = vpop.f32.mrf.mxu0
  %v5422 = vadd.f32 0.0, %v5421
  %5423 = vmatmul.f32.gmra.mxu0 %v5381
  %v5424 = vpop.f32.mrf.mxu0
  %v5425 = vadd.f32 0.0, %v5424
  %5426 = vmatmul.f32.gmra.mxu0 %v5384
  %v5427 = vpop.f32.mrf.mxu0
  %v5428 = vadd.f32 0.0, %v5427
  %5429 = vmatmul.f32.gmra.mxu0 %v5387
  %v5430 = vpop.f32.mrf.mxu0
  %v5431 = vadd.f32 0.0, %v5430
  %5432 = vmatmul.f32.gmra.mxu0 %v5390
  %v5433 = vpop.f32.mrf.mxu0
  %v5434 = vadd.f32 0.0, %v5433
  %5435 = vmatmul.f32.gmra.mxu0 %v5393
  %v5436 = vpop.f32.mrf.mxu0
  %v5437 = vadd.f32 0.0, %v5436
  %5438 = vmatmul.f32.gmra.mxu0 %v5396
  %v5439 = vpop.f32.mrf.mxu0
  %v5440 = vadd.f32 0.0, %v5439
  %5441 = vdwg.mxu0
  %s5442 = scalar_lea.vmem %s20, 144
  %v5443 = vld [vmem:[%s5442] sm:$0xff]
  %v5444 = vld [vmem:[%s5442 + $0x8] sm:$0xff]
  %v5445 = vld [vmem:[%s5442 + $0x10] sm:$0xff]
  %v5446 = vld [vmem:[%s5442 + $0x18] sm:$0xff]
  %v5447 = vld [vmem:[%s5442 + $0x20] sm:$0xff]
  %v5448 = vld [vmem:[%s5442 + $0x28] sm:$0xff]
  %v5449 = vld [vmem:[%s5442 + $0x30] sm:$0xff]
  %v5450 = vld [vmem:[%s5442 + $0x38] sm:$0xff]
  %v5451 = vld [vmem:[%s5442 + $0x40] sm:$0xf]
  %v5453 = vsel %vm4321, %v5443, 0
  %v5456 = vsel %vm4321, %v5444, 0
  %v5459 = vsel %vm4321, %v5445, 0
  %v5462 = vsel %vm4321, %v5446, 0
  %v5465 = vsel %vm4321, %v5447, 0
  %v5468 = vsel %vm4321, %v5448, 0
  %v5471 = vsel %vm4321, %v5449, 0
  %v5474 = vsel %vm4321, %v5450, 0
  %v5477 = vsel %vm4321, %v5451, 0
  %5479 = vmatpush.msra.mxu0 0.0
  %5480 = vmatpush.msra.mxu0 0.0
  %5481 = vmatpush.msra.mxu0 0.0
  %5482 = vmatpush.msra.mxu0 0.0
  %5483 = vmatpush.msra.mxu0 0.0
  %5484 = vmatpush.msra.mxu0 0.0
  %5485 = vmatpush.msra.mxu0 0.0
  %5486 = vmatpush.msra.mxu0 0.0
  %5487 = vmatpush.msra.mxu0 0.0
  %5488 = vmatpush.msra.mxu0 0.0
  %5489 = vmatpush.msra.mxu0 0.0
  %5490 = vmatpush.msra.mxu0 0.0
  %5491 = vmatpush.msra.mxu0 0.0
  %5492 = vmatpush.msra.mxu0 %v5315
  %5493 = vmatpush.msra.mxu0 %v4517
  %5494 = vmatpush.msra.mxu0 %v4514
  %5495 = vmatmul.f32.gmra.mxu0 %v5453
  %v5496 = vpop.f32.mrf.mxu0
  %v5497 = vadd.f32 0.0, %v5496
  %5498 = vmatmul.f32.gmra.mxu0 %v5456
  %v5499 = vpop.f32.mrf.mxu0
  %v5500 = vadd.f32 0.0, %v5499
  %5501 = vmatmul.f32.gmra.mxu0 %v5459
  %v5502 = vpop.f32.mrf.mxu0
  %v5503 = vadd.f32 0.0, %v5502
  %5504 = vmatmul.f32.gmra.mxu0 %v5462
  %v5505 = vpop.f32.mrf.mxu0
  %v5506 = vadd.f32 0.0, %v5505
  %5507 = vmatmul.f32.gmra.mxu0 %v5465
  %v5508 = vpop.f32.mrf.mxu0
  %v5509 = vadd.f32 0.0, %v5508
  %5510 = vmatmul.f32.gmra.mxu0 %v5468
  %v5511 = vpop.f32.mrf.mxu0
  %v5512 = vadd.f32 0.0, %v5511
  %5513 = vmatmul.f32.gmra.mxu0 %v5471
  %v5514 = vpop.f32.mrf.mxu0
  %v5515 = vadd.f32 0.0, %v5514
  %5516 = vmatmul.f32.gmra.mxu0 %v5474
  %v5517 = vpop.f32.mrf.mxu0
  %v5518 = vadd.f32 0.0, %v5517
  %5519 = vmatmul.f32.gmra.mxu0 %v5477
  %v5520 = vpop.f32.mrf.mxu0
  %v5521 = vadd.f32 0.0, %v5520
  %5522 = vdwg.mxu0
  %v5523 = vadd.f32 %v5251, %v5335
  %v5524 = vadd.f32 %v5252, %v5338
  %v5525 = vadd.f32 %v5253, %v5341
  %v5526 = vadd.f32 %v5254, %v5344
  %v5527 = vadd.f32 %v5255, %v5347
  %v5528 = vadd.f32 %v5256, %v5350
  %v5529 = vadd.f32 %v5257, %v5353
  %v5530 = vadd.f32 %v5258, %v5356
  %v5531 = vadd.f32 %v5259, %v5359
  %v5532 = vadd.f32 %v5260, %v5416
  %v5533 = vadd.f32 %v5261, %v5419
  %v5534 = vadd.f32 %v5262, %v5422
  %v5535 = vadd.f32 %v5263, %v5425
  %v5536 = vadd.f32 %v5264, %v5428
  %v5537 = vadd.f32 %v5265, %v5431
  %v5538 = vadd.f32 %v5266, %v5434
  %v5539 = vadd.f32 %v5267, %v5437
  %v5540 = vadd.f32 %v5268, %v5440
  %v5541 = vadd.f32 %v5269, %v5497
  %v5542 = vadd.f32 %v5270, %v5500
  %v5543 = vadd.f32 %v5271, %v5503
  %v5544 = vadd.f32 %v5272, %v5506
  %v5545 = vadd.f32 %v5273, %v5509
  %v5546 = vadd.f32 %v5274, %v5512
  %v5547 = vadd.f32 %v5275, %v5515
  %v5548 = vadd.f32 %v5276, %v5518
  %v5549 = vadd.f32 %v5277, %v5521
  %v5550 = vld [vmem:[%s21] sm:$0xff]
  %v5551 = vld [vmem:[%s21 + $0x8] sm:$0xff]
  %v5552 = vld [vmem:[%s21 + $0x10] sm:$0xff]
  %v5553 = vld [vmem:[%s21 + $0x18] sm:$0xff]
  %v5554 = vld [vmem:[%s21 + $0x20] sm:$0xff]
  %v5555 = vld [vmem:[%s21 + $0x28] sm:$0xff]
  %v5556 = vld [vmem:[%s21 + $0x30] sm:$0xff]
  %v5557 = vld [vmem:[%s21 + $0x38] sm:$0xff]
  %v5558 = vld [vmem:[%s21 + $0x40] sm:$0xf]
  %v5560 = vsel %vm1295, %v5550, 0
  %v5563 = vsel %vm1295, %v5551, 0
  %v5566 = vsel %vm1295, %v5552, 0
  %v5569 = vsel %vm1295, %v5553, 0
  %v5572 = vsel %vm1295, %v5554, 0
  %v5575 = vsel %vm1295, %v5555, 0
  %v5578 = vsel %vm1295, %v5556, 0
  %v5581 = vsel %vm1295, %v5557, 0
  %v5584 = vsel %vm1295, %v5558, 0
  %v5587 = vsel %vm1302, %v4487, 0
  %5589 = vmatpush.msra.mxu0 0.0
  %5590 = vmatpush.msra.mxu0 0.0
  %5591 = vmatpush.msra.mxu0 0.0
  %5592 = vmatpush.msra.mxu0 0.0
  %5593 = vmatpush.msra.mxu0 0.0
  %5594 = vmatpush.msra.mxu0 0.0
  %5595 = vmatpush.msra.mxu0 0.0
  %5596 = vmatpush.msra.mxu0 0.0
  %5597 = vmatpush.msra.mxu0 0.0
  %5598 = vmatpush.msra.mxu0 0.0
  %5599 = vmatpush.msra.mxu0 0.0
  %5600 = vmatpush.msra.mxu0 0.0
  %5601 = vmatpush.msra.mxu0 0.0
  %5602 = vmatpush.msra.mxu0 0.0
  %5603 = vmatpush.msra.mxu0 %v5587
  %5604 = vmatpush.msra.mxu0 %v4486
  %5605 = vmatmul.f32.gmra.mxu0 %v5560
  %v5606 = vpop.f32.mrf.mxu0
  %v5607 = vadd.f32 0.0, %v5606
  %5608 = vmatmul.f32.gmra.mxu0 %v5563
  %v5609 = vpop.f32.mrf.mxu0
  %v5610 = vadd.f32 0.0, %v5609
  %5611 = vmatmul.f32.gmra.mxu0 %v5566
  %v5612 = vpop.f32.mrf.mxu0
  %v5613 = vadd.f32 0.0, %v5612
  %5614 = vmatmul.f32.gmra.mxu0 %v5569
  %v5615 = vpop.f32.mrf.mxu0
  %v5616 = vadd.f32 0.0, %v5615
  %5617 = vmatmul.f32.gmra.mxu0 %v5572
  %v5618 = vpop.f32.mrf.mxu0
  %v5619 = vadd.f32 0.0, %v5618
  %5620 = vmatmul.f32.gmra.mxu0 %v5575
  %v5621 = vpop.f32.mrf.mxu0
  %v5622 = vadd.f32 0.0, %v5621
  %5623 = vmatmul.f32.gmra.mxu0 %v5578
  %v5624 = vpop.f32.mrf.mxu0
  %v5625 = vadd.f32 0.0, %v5624
  %5626 = vmatmul.f32.gmra.mxu0 %v5581
  %v5627 = vpop.f32.mrf.mxu0
  %v5628 = vadd.f32 0.0, %v5627
  %5629 = vmatmul.f32.gmra.mxu0 %v5584
  %v5630 = vpop.f32.mrf.mxu0
  %v5631 = vadd.f32 0.0, %v5630
  %5632 = vdwg.mxu0
  %s5633 = scalar_lea.vmem %s21, 72
  %v5634 = vld [vmem:[%s5633] sm:$0xff]
  %v5635 = vld [vmem:[%s5633 + $0x8] sm:$0xff]
  %v5636 = vld [vmem:[%s5633 + $0x10] sm:$0xff]
  %v5637 = vld [vmem:[%s5633 + $0x18] sm:$0xff]
  %v5638 = vld [vmem:[%s5633 + $0x20] sm:$0xff]
  %v5639 = vld [vmem:[%s5633 + $0x28] sm:$0xff]
  %v5640 = vld [vmem:[%s5633 + $0x30] sm:$0xff]
  %v5641 = vld [vmem:[%s5633 + $0x38] sm:$0xff]
  %v5642 = vld [vmem:[%s5633 + $0x40] sm:$0xf]
  %v5644 = vsel %vm1295, %v5634, 0
  %v5647 = vsel %vm1295, %v5635, 0
  %v5650 = vsel %vm1295, %v5636, 0
  %v5653 = vsel %vm1295, %v5637, 0
  %v5656 = vsel %vm1295, %v5638, 0
  %v5659 = vsel %vm1295, %v5639, 0
  %v5662 = vsel %vm1295, %v5640, 0
  %v5665 = vsel %vm1295, %v5641, 0
  %v5668 = vsel %vm1295, %v5642, 0
  %5670 = vmatpush.msra.mxu0 0.0
  %5671 = vmatpush.msra.mxu0 0.0
  %5672 = vmatpush.msra.mxu0 0.0
  %5673 = vmatpush.msra.mxu0 0.0
  %5674 = vmatpush.msra.mxu0 0.0
  %5675 = vmatpush.msra.mxu0 0.0
  %5676 = vmatpush.msra.mxu0 0.0
  %5677 = vmatpush.msra.mxu0 0.0
  %5678 = vmatpush.msra.mxu0 0.0
  %5679 = vmatpush.msra.mxu0 0.0
  %5680 = vmatpush.msra.mxu0 0.0
  %5681 = vmatpush.msra.mxu0 0.0
  %5682 = vmatpush.msra.mxu0 0.0
  %5683 = vmatpush.msra.mxu0 0.0
  %5684 = vmatpush.msra.mxu0 %v5587
  %5685 = vmatpush.msra.mxu0 %v4486
  %5686 = vmatmul.f32.gmra.mxu0 %v5644
  %v5687 = vpop.f32.mrf.mxu0
  %v5688 = vadd.f32 0.0, %v5687
  %5689 = vmatmul.f32.gmra.mxu0 %v5647
  %v5690 = vpop.f32.mrf.mxu0
  %v5691 = vadd.f32 0.0, %v5690
  %5692 = vmatmul.f32.gmra.mxu0 %v5650
  %v5693 = vpop.f32.mrf.mxu0
  %v5694 = vadd.f32 0.0, %v5693
  %5695 = vmatmul.f32.gmra.mxu0 %v5653
  %v5696 = vpop.f32.mrf.mxu0
  %v5697 = vadd.f32 0.0, %v5696
  %5698 = vmatmul.f32.gmra.mxu0 %v5656
  %v5699 = vpop.f32.mrf.mxu0
  %v5700 = vadd.f32 0.0, %v5699
  %5701 = vmatmul.f32.gmra.mxu0 %v5659
  %v5702 = vpop.f32.mrf.mxu0
  %v5703 = vadd.f32 0.0, %v5702
  %5704 = vmatmul.f32.gmra.mxu0 %v5662
  %v5705 = vpop.f32.mrf.mxu0
  %v5706 = vadd.f32 0.0, %v5705
  %5707 = vmatmul.f32.gmra.mxu0 %v5665
  %v5708 = vpop.f32.mrf.mxu0
  %v5709 = vadd.f32 0.0, %v5708
  %5710 = vmatmul.f32.gmra.mxu0 %v5668
  %v5711 = vpop.f32.mrf.mxu0
  %v5712 = vadd.f32 0.0, %v5711
  %5713 = vdwg.mxu0
  %s5714 = scalar_lea.vmem %s21, 144
  %v5715 = vld [vmem:[%s5714] sm:$0xff]
  %v5716 = vld [vmem:[%s5714 + $0x8] sm:$0xff]
  %v5717 = vld [vmem:[%s5714 + $0x10] sm:$0xff]
  %v5718 = vld [vmem:[%s5714 + $0x18] sm:$0xff]
  %v5719 = vld [vmem:[%s5714 + $0x20] sm:$0xff]
  %v5720 = vld [vmem:[%s5714 + $0x28] sm:$0xff]
  %v5721 = vld [vmem:[%s5714 + $0x30] sm:$0xff]
  %v5722 = vld [vmem:[%s5714 + $0x38] sm:$0xff]
  %v5723 = vld [vmem:[%s5714 + $0x40] sm:$0xf]
  %v5725 = vsel %vm1295, %v5715, 0
  %v5728 = vsel %vm1295, %v5716, 0
  %v5731 = vsel %vm1295, %v5717, 0
  %v5734 = vsel %vm1295, %v5718, 0
  %v5737 = vsel %vm1295, %v5719, 0
  %v5740 = vsel %vm1295, %v5720, 0
  %v5743 = vsel %vm1295, %v5721, 0
  %v5746 = vsel %vm1295, %v5722, 0
  %v5749 = vsel %vm1295, %v5723, 0
  %5751 = vmatpush.msra.mxu0 0.0
  %5752 = vmatpush.msra.mxu0 0.0
  %5753 = vmatpush.msra.mxu0 0.0
  %5754 = vmatpush.msra.mxu0 0.0
  %5755 = vmatpush.msra.mxu0 0.0
  %5756 = vmatpush.msra.mxu0 0.0
  %5757 = vmatpush.msra.mxu0 0.0
  %5758 = vmatpush.msra.mxu0 0.0
  %5759 = vmatpush.msra.mxu0 0.0
  %5760 = vmatpush.msra.mxu0 0.0
  %5761 = vmatpush.msra.mxu0 0.0
  %5762 = vmatpush.msra.mxu0 0.0
  %5763 = vmatpush.msra.mxu0 0.0
  %5764 = vmatpush.msra.mxu0 0.0
  %5765 = vmatpush.msra.mxu0 %v5587
  %5766 = vmatpush.msra.mxu0 %v4486
  %5767 = vmatmul.f32.gmra.mxu0 %v5725
  %v5768 = vpop.f32.mrf.mxu0
  %v5769 = vadd.f32 0.0, %v5768
  %5770 = vmatmul.f32.gmra.mxu0 %v5728
  %v5771 = vpop.f32.mrf.mxu0
  %v5772 = vadd.f32 0.0, %v5771
  %5773 = vmatmul.f32.gmra.mxu0 %v5731
  %v5774 = vpop.f32.mrf.mxu0
  %v5775 = vadd.f32 0.0, %v5774
  %5776 = vmatmul.f32.gmra.mxu0 %v5734
  %v5777 = vpop.f32.mrf.mxu0
  %v5778 = vadd.f32 0.0, %v5777
  %5779 = vmatmul.f32.gmra.mxu0 %v5737
  %v5780 = vpop.f32.mrf.mxu0
  %v5781 = vadd.f32 0.0, %v5780
  %5782 = vmatmul.f32.gmra.mxu0 %v5740
  %v5783 = vpop.f32.mrf.mxu0
  %v5784 = vadd.f32 0.0, %v5783
  %5785 = vmatmul.f32.gmra.mxu0 %v5743
  %v5786 = vpop.f32.mrf.mxu0
  %v5787 = vadd.f32 0.0, %v5786
  %5788 = vmatmul.f32.gmra.mxu0 %v5746
  %v5789 = vpop.f32.mrf.mxu0
  %v5790 = vadd.f32 0.0, %v5789
  %5791 = vmatmul.f32.gmra.mxu0 %v5749
  %v5792 = vpop.f32.mrf.mxu0
  %v5793 = vadd.f32 0.0, %v5792
  %5794 = vdwg.mxu0
  %v5795 = vadd.f32 %v5523, %v5607
  %v5796 = vadd.f32 %v5524, %v5610
  %v5797 = vadd.f32 %v5525, %v5613
  %v5798 = vadd.f32 %v5526, %v5616
  %v5799 = vadd.f32 %v5527, %v5619
  %v5800 = vadd.f32 %v5528, %v5622
  %v5801 = vadd.f32 %v5529, %v5625
  %v5802 = vadd.f32 %v5530, %v5628
  %v5803 = vadd.f32 %v5531, %v5631
  %v5804 = vadd.f32 %v5532, %v5688
  %v5805 = vadd.f32 %v5533, %v5691
  %v5806 = vadd.f32 %v5534, %v5694
  %v5807 = vadd.f32 %v5535, %v5697
  %v5808 = vadd.f32 %v5536, %v5700
  %v5809 = vadd.f32 %v5537, %v5703
  %v5810 = vadd.f32 %v5538, %v5706
  %v5811 = vadd.f32 %v5539, %v5709
  %v5812 = vadd.f32 %v5540, %v5712
  %v5813 = vadd.f32 %v5541, %v5769
  %v5814 = vadd.f32 %v5542, %v5772
  %v5815 = vadd.f32 %v5543, %v5775
  %v5816 = vadd.f32 %v5544, %v5778
  %v5817 = vadd.f32 %v5545, %v5781
  %v5818 = vadd.f32 %v5546, %v5784
  %v5819 = vadd.f32 %v5547, %v5787
  %v5820 = vadd.f32 %v5548, %v5790
  %v5821 = vadd.f32 %v5549, %v5793
  %5822 = vmatpush.msra.mxu0 %v280
  %5823 = vmatpush.msra.mxu0 %v278
  %5824 = vmatpush.msra.mxu0 %v276
  %5825 = vmatpush.msra.mxu0 %v274
  %5826 = vmatpush.msra.mxu0 %v272
  %5827 = vmatpush.msra.mxu0 %v270
  %5828 = vmatpush.msra.mxu0 %v268
  %5829 = vmatpush.msra.mxu0 %v266
  %5830 = vmatpush.msra.mxu0 %v264
  %5831 = vmatpush.msra.mxu0 %v262
  %5832 = vmatpush.msra.mxu0 %v260
  %5833 = vmatpush.msra.mxu0 %v258
  %5834 = vmatpush.msra.mxu0 %v256
  %5835 = vmatpush.msra.mxu0 %v254
  %5836 = vmatpush.msra.mxu0 %v252
  %5837 = vmatpush.msra.mxu0 %v250
  %5838 = vmatmul.f32.gmra.mxu0 %v5795
  %v5839 = vpop.f32.mrf.mxu0
  %v5840 = vadd.f32 %v5804, %v5839
  %5841 = vmatmul.f32.gmra.mxu0 %v5796
  %v5842 = vpop.f32.mrf.mxu0
  %v5843 = vadd.f32 %v5805, %v5842
  %5844 = vmatmul.f32.gmra.mxu0 %v5797
  %v5845 = vpop.f32.mrf.mxu0
  %v5846 = vadd.f32 %v5806, %v5845
  %5847 = vmatmul.f32.gmra.mxu0 %v5798
  %v5848 = vpop.f32.mrf.mxu0
  %v5849 = vadd.f32 %v5807, %v5848
  %5850 = vmatmul.f32.gmra.mxu0 %v5799
  %v5851 = vpop.f32.mrf.mxu0
  %v5852 = vadd.f32 %v5808, %v5851
  %5853 = vmatmul.f32.gmra.mxu0 %v5800
  %v5854 = vpop.f32.mrf.mxu0
  %v5855 = vadd.f32 %v5809, %v5854
  %5856 = vmatmul.f32.gmra.mxu0 %v5801
  %v5857 = vpop.f32.mrf.mxu0
  %v5858 = vadd.f32 %v5810, %v5857
  %5859 = vmatmul.f32.gmra.mxu0 %v5802
  %v5860 = vpop.f32.mrf.mxu0
  %v5861 = vadd.f32 %v5811, %v5860
  %5862 = vmatmul.f32.gmra.mxu0 %v5803
  %v5863 = vpop.f32.mrf.mxu0
  %v5864 = vadd.f32 %v5812, %v5863
  %5865 = vdwg.mxu0
  %5866 = vmatpush.msra.mxu0 %v490
  %5867 = vmatpush.msra.mxu0 %v488
  %5868 = vmatpush.msra.mxu0 %v486
  %5869 = vmatpush.msra.mxu0 %v484
  %5870 = vmatpush.msra.mxu0 %v482
  %5871 = vmatpush.msra.mxu0 %v480
  %5872 = vmatpush.msra.mxu0 %v478
  %5873 = vmatpush.msra.mxu0 %v476
  %5874 = vmatpush.msra.mxu0 %v474
  %5875 = vmatpush.msra.mxu0 %v472
  %5876 = vmatpush.msra.mxu0 %v470
  %5877 = vmatpush.msra.mxu0 %v468
  %5878 = vmatpush.msra.mxu0 %v466
  %5879 = vmatpush.msra.mxu0 %v464
  %5880 = vmatpush.msra.mxu0 %v462
  %5881 = vmatpush.msra.mxu0 %v460
  %5882 = vmatmul.f32.gmra.mxu0 %v5813
  %v5883 = vpop.f32.mrf.mxu0
  %v5884 = vadd.f32 0.0, %v5883
  %5885 = vmatmul.f32.gmra.mxu0 %v5814
  %v5886 = vpop.f32.mrf.mxu0
  %v5887 = vadd.f32 0.0, %v5886
  %5888 = vmatmul.f32.gmra.mxu0 %v5815
  %v5889 = vpop.f32.mrf.mxu0
  %v5890 = vadd.f32 0.0, %v5889
  %5891 = vmatmul.f32.gmra.mxu0 %v5816
  %v5892 = vpop.f32.mrf.mxu0
  %v5893 = vadd.f32 0.0, %v5892
  %5894 = vmatmul.f32.gmra.mxu0 %v5817
  %v5895 = vpop.f32.mrf.mxu0
  %v5896 = vadd.f32 0.0, %v5895
  %5897 = vmatmul.f32.gmra.mxu0 %v5818
  %v5898 = vpop.f32.mrf.mxu0
  %v5899 = vadd.f32 0.0, %v5898
  %5900 = vmatmul.f32.gmra.mxu0 %v5819
  %v5901 = vpop.f32.mrf.mxu0
  %v5902 = vadd.f32 0.0, %v5901
  %5903 = vmatmul.f32.gmra.mxu0 %v5820
  %v5904 = vpop.f32.mrf.mxu0
  %v5905 = vadd.f32 0.0, %v5904
  %5906 = vmatmul.f32.gmra.mxu0 %v5821
  %v5907 = vpop.f32.mrf.mxu0
  %v5908 = vadd.f32 0.0, %v5907
  %5909 = vdwg.mxu0
  %v5910 = vadd.f32 %v5840, %v5884
  %v5911 = vadd.f32 %v5843, %v5887
  %v5912 = vadd.f32 %v5846, %v5890
  %v5913 = vadd.f32 %v5849, %v5893
  %v5914 = vadd.f32 %v5852, %v5896
  %v5915 = vadd.f32 %v5855, %v5899
  %v5916 = vadd.f32 %v5858, %v5902
  %v5917 = vadd.f32 %v5861, %v5905
  %v5918 = vadd.f32 %v5864, %v5908
  %v5919 = vld [vmem:[%s22] sm:$0xff]
  %v5920 = vld [vmem:[%s22 + $0x8] sm:$0xff]
  %v5921 = vld [vmem:[%s22 + $0x10] sm:$0xff]
  %v5922 = vld [vmem:[%s22 + $0x18] sm:$0xff]
  %v5923 = vld [vmem:[%s22 + $0x20] sm:$0xff]
  %v5924 = vld [vmem:[%s22 + $0x28] sm:$0xff]
  %v5925 = vld [vmem:[%s22 + $0x30] sm:$0xff]
  %v5926 = vld [vmem:[%s22 + $0x38] sm:$0xff]
  %v5927 = vld [vmem:[%s22 + $0x40] sm:$0xf]
  %5929 = vset.pattern.permute.xlu0 0
  %5930 = vperm.xlu0 %5929, %v5919
  %v5931 = vpop.permute.xlu0 %5930
  %5934 = vset.pattern.permute.xlu0 0
  %5935 = vperm.xlu0 %5934, %v5920
  %v5936 = vpop.permute.xlu0 %5935
  %5939 = vset.pattern.permute.xlu0 0
  %5940 = vperm.xlu0 %5939, %v5921
  %v5941 = vpop.permute.xlu0 %5940
  %5944 = vset.pattern.permute.xlu0 0
  %5945 = vperm.xlu0 %5944, %v5922
  %v5946 = vpop.permute.xlu0 %5945
  %5949 = vset.pattern.permute.xlu0 0
  %5950 = vperm.xlu0 %5949, %v5923
  %v5951 = vpop.permute.xlu0 %5950
  %5954 = vset.pattern.permute.xlu0 0
  %5955 = vperm.xlu0 %5954, %v5924
  %v5956 = vpop.permute.xlu0 %5955
  %5959 = vset.pattern.permute.xlu0 0
  %5960 = vperm.xlu0 %5959, %v5925
  %v5961 = vpop.permute.xlu0 %5960
  %5964 = vset.pattern.permute.xlu0 0
  %5965 = vperm.xlu0 %5964, %v5926
  %v5966 = vpop.permute.xlu0 %5965
  %5969 = vset.pattern.permute.xlu0 0
  %5970 = vperm.xlu0 %5969, %v5927
  %v5971 = vpop.permute.xlu0 %5970
  %v5973 = vadd.f32 %v5910, %v5931
  %v5974 = vadd.f32 %v5911, %v5936
  %v5975 = vadd.f32 %v5912, %v5941
  %v5976 = vadd.f32 %v5913, %v5946
  %v5977 = vadd.f32 %v5914, %v5951
  %v5978 = vadd.f32 %v5915, %v5956
  %v5979 = vadd.f32 %v5916, %v5961
  %v5980 = vadd.f32 %v5917, %v5966
  %v5981 = vadd.f32 %v5918, %v5971
  %v5982 = vmax.f32 %v5973, 0.0
  %v5983 = vmax.f32 %v5974, 0.0
  %v5984 = vmax.f32 %v5975, 0.0
  %v5985 = vmax.f32 %v5976, 0.0
  %v5986 = vmax.f32 %v5977, 0.0
  %v5987 = vmax.f32 %v5978, 0.0
  %v5988 = vmax.f32 %v5979, 0.0
  %v5989 = vmax.f32 %v5980, 0.0
  %v5990 = vmax.f32 %v5981, 0.0
  %v5991 = vld [vmem:[%s23] sm:$0xff]
  %v5992 = vld [vmem:[%s23 + $0x8] sm:$0xff]
  %v5993 = vld [vmem:[%s23 + $0x10] sm:$0xff]
  %v5994 = vld [vmem:[%s23 + $0x18] sm:$0xff]
  %v5995 = vld [vmem:[%s23 + $0x20] sm:$0xff]
  %v5996 = vld [vmem:[%s23 + $0x28] sm:$0xff]
  %v5997 = vld [vmem:[%s23 + $0x30] sm:$0xff]
  %v5998 = vld [vmem:[%s23 + $0x38] sm:$0xff]
  %v5999 = vld [vmem:[%s23 + $0x40] sm:$0xf]
  %vm6000 = vcmask 556032
  %v6002 = vsel %vm6000, %v5991, 0
  %v6005 = vsel %vm6000, %v5992, 0
  %v6008 = vsel %vm6000, %v5993, 0
  %v6011 = vsel %vm6000, %v5994, 0
  %v6014 = vsel %vm6000, %v5995, 0
  %v6017 = vsel %vm6000, %v5996, 0
  %v6020 = vsel %vm6000, %v5997, 0
  %v6023 = vsel %vm6000, %v5998, 0
  %v6026 = vsel %vm6000, %v5999, 0
  %v6029 = vsel %vm1302, %v5990, 0
  %6031 = vmatpush.msra.mxu0 0.0
  %6032 = vmatpush.msra.mxu0 0.0
  %6033 = vmatpush.msra.mxu0 0.0
  %6034 = vmatpush.msra.mxu0 0.0
  %6035 = vmatpush.msra.mxu0 0.0
  %6036 = vmatpush.msra.mxu0 0.0
  %6037 = vmatpush.msra.mxu0 0.0
  %6038 = vmatpush.msra.mxu0 %v6029
  %6039 = vmatpush.msra.mxu0 %v5989
  %6040 = vmatpush.msra.mxu0 %v5988
  %6041 = vmatpush.msra.mxu0 %v5987
  %6042 = vmatpush.msra.mxu0 %v5986
  %6043 = vmatpush.msra.mxu0 %v5985
  %6044 = vmatpush.msra.mxu0 %v5984
  %6045 = vmatpush.msra.mxu0 %v5983
  %6046 = vmatpush.msra.mxu0 %v5982
  %6047 = vmatmul.f32.gmra.mxu0 %v6002
  %v6048 = vpop.f32.mrf.mxu0
  %v6049 = vadd.f32 0.0, %v6048
  %6050 = vmatmul.f32.gmra.mxu0 %v6005
  %v6051 = vpop.f32.mrf.mxu0
  %v6052 = vadd.f32 0.0, %v6051
  %6053 = vmatmul.f32.gmra.mxu0 %v6008
  %v6054 = vpop.f32.mrf.mxu0
  %v6055 = vadd.f32 0.0, %v6054
  %6056 = vmatmul.f32.gmra.mxu0 %v6011
  %v6057 = vpop.f32.mrf.mxu0
  %v6058 = vadd.f32 0.0, %v6057
  %6059 = vmatmul.f32.gmra.mxu0 %v6014
  %v6060 = vpop.f32.mrf.mxu0
  %v6061 = vadd.f32 0.0, %v6060
  %6062 = vmatmul.f32.gmra.mxu0 %v6017
  %v6063 = vpop.f32.mrf.mxu0
  %v6064 = vadd.f32 0.0, %v6063
  %6065 = vmatmul.f32.gmra.mxu0 %v6020
  %v6066 = vpop.f32.mrf.mxu0
  %v6067 = vadd.f32 0.0, %v6066
  %6068 = vmatmul.f32.gmra.mxu0 %v6023
  %v6069 = vpop.f32.mrf.mxu0
  %v6070 = vadd.f32 0.0, %v6069
  %6071 = vmatmul.f32.gmra.mxu0 %v6026
  %v6072 = vpop.f32.mrf.mxu0
  %v6073 = vadd.f32 0.0, %v6072
  %6074 = vdwg.mxu0
  %s6075 = scalar_lea.vmem %s23, 72
  %v6076 = vld [vmem:[%s6075] sm:$0xff]
  %v6077 = vld [vmem:[%s6075 + $0x8] sm:$0xff]
  %v6078 = vld [vmem:[%s6075 + $0x10] sm:$0xff]
  %v6079 = vld [vmem:[%s6075 + $0x18] sm:$0xff]
  %v6080 = vld [vmem:[%s6075 + $0x20] sm:$0xff]
  %v6081 = vld [vmem:[%s6075 + $0x28] sm:$0xff]
  %v6082 = vld [vmem:[%s6075 + $0x30] sm:$0xff]
  %v6083 = vld [vmem:[%s6075 + $0x38] sm:$0xff]
  %v6084 = vld [vmem:[%s6075 + $0x40] sm:$0xf]
  %v6086 = vsel %vm6000, %v6076, 0
  %v6089 = vsel %vm6000, %v6077, 0
  %v6092 = vsel %vm6000, %v6078, 0
  %v6095 = vsel %vm6000, %v6079, 0
  %v6098 = vsel %vm6000, %v6080, 0
  %v6101 = vsel %vm6000, %v6081, 0
  %v6104 = vsel %vm6000, %v6082, 0
  %v6107 = vsel %vm6000, %v6083, 0
  %v6110 = vsel %vm6000, %v6084, 0
  %6112 = vmatpush.msra.mxu0 0.0
  %6113 = vmatpush.msra.mxu0 0.0
  %6114 = vmatpush.msra.mxu0 0.0
  %6115 = vmatpush.msra.mxu0 0.0
  %6116 = vmatpush.msra.mxu0 0.0
  %6117 = vmatpush.msra.mxu0 0.0
  %6118 = vmatpush.msra.mxu0 0.0
  %6119 = vmatpush.msra.mxu0 %v6029
  %6120 = vmatpush.msra.mxu0 %v5989
  %6121 = vmatpush.msra.mxu0 %v5988
  %6122 = vmatpush.msra.mxu0 %v5987
  %6123 = vmatpush.msra.mxu0 %v5986
  %6124 = vmatpush.msra.mxu0 %v5985
  %6125 = vmatpush.msra.mxu0 %v5984
  %6126 = vmatpush.msra.mxu0 %v5983
  %6127 = vmatpush.msra.mxu0 %v5982
  %6128 = vmatmul.f32.gmra.mxu0 %v6086
  %v6129 = vpop.f32.mrf.mxu0
  %v6130 = vadd.f32 0.0, %v6129
  %6131 = vmatmul.f32.gmra.mxu0 %v6089
  %v6132 = vpop.f32.mrf.mxu0
  %v6133 = vadd.f32 0.0, %v6132
  %6134 = vmatmul.f32.gmra.mxu0 %v6092
  %v6135 = vpop.f32.mrf.mxu0
  %v6136 = vadd.f32 0.0, %v6135
  %6137 = vmatmul.f32.gmra.mxu0 %v6095
  %v6138 = vpop.f32.mrf.mxu0
  %v6139 = vadd.f32 0.0, %v6138
  %6140 = vmatmul.f32.gmra.mxu0 %v6098
  %v6141 = vpop.f32.mrf.mxu0
  %v6142 = vadd.f32 0.0, %v6141
  %6143 = vmatmul.f32.gmra.mxu0 %v6101
  %v6144 = vpop.f32.mrf.mxu0
  %v6145 = vadd.f32 0.0, %v6144
  %6146 = vmatmul.f32.gmra.mxu0 %v6104
  %v6147 = vpop.f32.mrf.mxu0
  %v6148 = vadd.f32 0.0, %v6147
  %6149 = vmatmul.f32.gmra.mxu0 %v6107
  %v6150 = vpop.f32.mrf.mxu0
  %v6151 = vadd.f32 0.0, %v6150
  %6152 = vmatmul.f32.gmra.mxu0 %v6110
  %v6153 = vpop.f32.mrf.mxu0
  %v6154 = vadd.f32 0.0, %v6153
  %6155 = vdwg.mxu0
  %s6156 = scalar_lea.vmem %s23, 144
  %v6157 = vld [vmem:[%s6156] sm:$0xff]
  %v6158 = vld [vmem:[%s6156 + $0x8] sm:$0xff]
  %v6159 = vld [vmem:[%s6156 + $0x10] sm:$0xff]
  %v6160 = vld [vmem:[%s6156 + $0x18] sm:$0xff]
  %v6161 = vld [vmem:[%s6156 + $0x20] sm:$0xff]
  %v6162 = vld [vmem:[%s6156 + $0x28] sm:$0xff]
  %v6163 = vld [vmem:[%s6156 + $0x30] sm:$0xff]
  %v6164 = vld [vmem:[%s6156 + $0x38] sm:$0xff]
  %v6165 = vld [vmem:[%s6156 + $0x40] sm:$0xf]
  %v6167 = vsel %vm6000, %v6157, 0
  %v6170 = vsel %vm6000, %v6158, 0
  %v6173 = vsel %vm6000, %v6159, 0
  %v6176 = vsel %vm6000, %v6160, 0
  %v6179 = vsel %vm6000, %v6161, 0
  %v6182 = vsel %vm6000, %v6162, 0
  %v6185 = vsel %vm6000, %v6163, 0
  %v6188 = vsel %vm6000, %v6164, 0
  %v6191 = vsel %vm6000, %v6165, 0
  %6193 = vmatpush.msra.mxu0 0.0
  %6194 = vmatpush.msra.mxu0 0.0
  %6195 = vmatpush.msra.mxu0 0.0
  %6196 = vmatpush.msra.mxu0 0.0
  %6197 = vmatpush.msra.mxu0 0.0
  %6198 = vmatpush.msra.mxu0 0.0
  %6199 = vmatpush.msra.mxu0 0.0
  %6200 = vmatpush.msra.mxu0 %v6029
  %6201 = vmatpush.msra.mxu0 %v5989
  %6202 = vmatpush.msra.mxu0 %v5988
  %6203 = vmatpush.msra.mxu0 %v5987
  %6204 = vmatpush.msra.mxu0 %v5986
  %6205 = vmatpush.msra.mxu0 %v5985
  %6206 = vmatpush.msra.mxu0 %v5984
  %6207 = vmatpush.msra.mxu0 %v5983
  %6208 = vmatpush.msra.mxu0 %v5982
  %6209 = vmatmul.f32.gmra.mxu0 %v6167
  %v6210 = vpop.f32.mrf.mxu0
  %v6211 = vadd.f32 0.0, %v6210
  %6212 = vmatmul.f32.gmra.mxu0 %v6170
  %v6213 = vpop.f32.mrf.mxu0
  %v6214 = vadd.f32 0.0, %v6213
  %6215 = vmatmul.f32.gmra.mxu0 %v6173
  %v6216 = vpop.f32.mrf.mxu0
  %v6217 = vadd.f32 0.0, %v6216
  %6218 = vmatmul.f32.gmra.mxu0 %v6176
  %v6219 = vpop.f32.mrf.mxu0
  %v6220 = vadd.f32 0.0, %v6219
  %6221 = vmatmul.f32.gmra.mxu0 %v6179
  %v6222 = vpop.f32.mrf.mxu0
  %v6223 = vadd.f32 0.0, %v6222
  %6224 = vmatmul.f32.gmra.mxu0 %v6182
  %v6225 = vpop.f32.mrf.mxu0
  %v6226 = vadd.f32 0.0, %v6225
  %6227 = vmatmul.f32.gmra.mxu0 %v6185
  %v6228 = vpop.f32.mrf.mxu0
  %v6229 = vadd.f32 0.0, %v6228
  %6230 = vmatmul.f32.gmra.mxu0 %v6188
  %v6231 = vpop.f32.mrf.mxu0
  %v6232 = vadd.f32 0.0, %v6231
  %6233 = vmatmul.f32.gmra.mxu0 %v6191
  %v6234 = vpop.f32.mrf.mxu0
  %v6235 = vadd.f32 0.0, %v6234
  %6236 = vdwg.mxu0
  %6237 = vmatpush.msra.mxu0 %v280
  %6238 = vmatpush.msra.mxu0 %v278
  %6239 = vmatpush.msra.mxu0 %v276
  %6240 = vmatpush.msra.mxu0 %v274
  %6241 = vmatpush.msra.mxu0 %v272
  %6242 = vmatpush.msra.mxu0 %v270
  %6243 = vmatpush.msra.mxu0 %v268
  %6244 = vmatpush.msra.mxu0 %v266
  %6245 = vmatpush.msra.mxu0 %v264
  %6246 = vmatpush.msra.mxu0 %v262
  %6247 = vmatpush.msra.mxu0 %v260
  %6248 = vmatpush.msra.mxu0 %v258
  %6249 = vmatpush.msra.mxu0 %v256
  %6250 = vmatpush.msra.mxu0 %v254
  %6251 = vmatpush.msra.mxu0 %v252
  %6252 = vmatpush.msra.mxu0 %v250
  %6253 = vmatmul.f32.gmra.mxu0 %v6049
  %v6254 = vpop.f32.mrf.mxu0
  %v6255 = vadd.f32 %v6130, %v6254
  %6256 = vmatmul.f32.gmra.mxu0 %v6052
  %v6257 = vpop.f32.mrf.mxu0
  %v6258 = vadd.f32 %v6133, %v6257
  %6259 = vmatmul.f32.gmra.mxu0 %v6055
  %v6260 = vpop.f32.mrf.mxu0
  %v6261 = vadd.f32 %v6136, %v6260
  %6262 = vmatmul.f32.gmra.mxu0 %v6058
  %v6263 = vpop.f32.mrf.mxu0
  %v6264 = vadd.f32 %v6139, %v6263
  %6265 = vmatmul.f32.gmra.mxu0 %v6061
  %v6266 = vpop.f32.mrf.mxu0
  %v6267 = vadd.f32 %v6142, %v6266
  %6268 = vmatmul.f32.gmra.mxu0 %v6064
  %v6269 = vpop.f32.mrf.mxu0
  %v6270 = vadd.f32 %v6145, %v6269
  %6271 = vmatmul.f32.gmra.mxu0 %v6067
  %v6272 = vpop.f32.mrf.mxu0
  %v6273 = vadd.f32 %v6148, %v6272
  %6274 = vmatmul.f32.gmra.mxu0 %v6070
  %v6275 = vpop.f32.mrf.mxu0
  %v6276 = vadd.f32 %v6151, %v6275
  %6277 = vmatmul.f32.gmra.mxu0 %v6073
  %v6278 = vpop.f32.mrf.mxu0
  %v6279 = vadd.f32 %v6154, %v6278
  %6280 = vdwg.mxu0
  %6281 = vmatpush.msra.mxu0 %v490
  %6282 = vmatpush.msra.mxu0 %v488
  %6283 = vmatpush.msra.mxu0 %v486
  %6284 = vmatpush.msra.mxu0 %v484
  %6285 = vmatpush.msra.mxu0 %v482
  %6286 = vmatpush.msra.mxu0 %v480
  %6287 = vmatpush.msra.mxu0 %v478
  %6288 = vmatpush.msra.mxu0 %v476
  %6289 = vmatpush.msra.mxu0 %v474
  %6290 = vmatpush.msra.mxu0 %v472
  %6291 = vmatpush.msra.mxu0 %v470
  %6292 = vmatpush.msra.mxu0 %v468
  %6293 = vmatpush.msra.mxu0 %v466
  %6294 = vmatpush.msra.mxu0 %v464
  %6295 = vmatpush.msra.mxu0 %v462
  %6296 = vmatpush.msra.mxu0 %v460
  %6297 = vmatmul.f32.gmra.mxu0 %v6211
  %v6298 = vpop.f32.mrf.mxu0
  %v6299 = vadd.f32 0.0, %v6298
  %6300 = vmatmul.f32.gmra.mxu0 %v6214
  %v6301 = vpop.f32.mrf.mxu0
  %v6302 = vadd.f32 0.0, %v6301
  %6303 = vmatmul.f32.gmra.mxu0 %v6217
  %v6304 = vpop.f32.mrf.mxu0
  %v6305 = vadd.f32 0.0, %v6304
  %6306 = vmatmul.f32.gmra.mxu0 %v6220
  %v6307 = vpop.f32.mrf.mxu0
  %v6308 = vadd.f32 0.0, %v6307
  %6309 = vmatmul.f32.gmra.mxu0 %v6223
  %v6310 = vpop.f32.mrf.mxu0
  %v6311 = vadd.f32 0.0, %v6310
  %6312 = vmatmul.f32.gmra.mxu0 %v6226
  %v6313 = vpop.f32.mrf.mxu0
  %v6314 = vadd.f32 0.0, %v6313
  %6315 = vmatmul.f32.gmra.mxu0 %v6229
  %v6316 = vpop.f32.mrf.mxu0
  %v6317 = vadd.f32 0.0, %v6316
  %6318 = vmatmul.f32.gmra.mxu0 %v6232
  %v6319 = vpop.f32.mrf.mxu0
  %v6320 = vadd.f32 0.0, %v6319
  %6321 = vmatmul.f32.gmra.mxu0 %v6235
  %v6322 = vpop.f32.mrf.mxu0
  %v6323 = vadd.f32 0.0, %v6322
  %6324 = vdwg.mxu0
  %v6325 = vadd.f32 %v6255, %v6299
  %v6326 = vadd.f32 %v6258, %v6302
  %v6327 = vadd.f32 %v6261, %v6305
  %v6328 = vadd.f32 %v6264, %v6308
  %v6329 = vadd.f32 %v6267, %v6311
  %v6330 = vadd.f32 %v6270, %v6314
  %v6331 = vadd.f32 %v6273, %v6317
  %v6332 = vadd.f32 %v6276, %v6320
  %v6333 = vadd.f32 %v6279, %v6323
  %v6334 = vld [vmem:[%s24] sm:$0xff]
  %v6335 = vld [vmem:[%s24 + $0x8] sm:$0xff]
  %v6336 = vld [vmem:[%s24 + $0x10] sm:$0xff]
  %v6337 = vld [vmem:[%s24 + $0x18] sm:$0xff]
  %v6338 = vld [vmem:[%s24 + $0x20] sm:$0xff]
  %v6339 = vld [vmem:[%s24 + $0x28] sm:$0xff]
  %v6340 = vld [vmem:[%s24 + $0x30] sm:$0xff]
  %v6341 = vld [vmem:[%s24 + $0x38] sm:$0xff]
  %v6342 = vld [vmem:[%s24 + $0x40] sm:$0xf]
  %6344 = vset.pattern.permute.xlu0 0
  %6345 = vperm.xlu0 %6344, %v6334
  %v6346 = vpop.permute.xlu0 %6345
  %6349 = vset.pattern.permute.xlu0 0
  %6350 = vperm.xlu0 %6349, %v6335
  %v6351 = vpop.permute.xlu0 %6350
  %6354 = vset.pattern.permute.xlu0 0
  %6355 = vperm.xlu0 %6354, %v6336
  %v6356 = vpop.permute.xlu0 %6355
  %6359 = vset.pattern.permute.xlu0 0
  %6360 = vperm.xlu0 %6359, %v6337
  %v6361 = vpop.permute.xlu0 %6360
  %6364 = vset.pattern.permute.xlu0 0
  %6365 = vperm.xlu0 %6364, %v6338
  %v6366 = vpop.permute.xlu0 %6365
  %6369 = vset.pattern.permute.xlu0 0
  %6370 = vperm.xlu0 %6369, %v6339
  %v6371 = vpop.permute.xlu0 %6370
  %6374 = vset.pattern.permute.xlu0 0
  %6375 = vperm.xlu0 %6374, %v6340
  %v6376 = vpop.permute.xlu0 %6375
  %6379 = vset.pattern.permute.xlu0 0
  %6380 = vperm.xlu0 %6379, %v6341
  %v6381 = vpop.permute.xlu0 %6380
  %6384 = vset.pattern.permute.xlu0 0
  %6385 = vperm.xlu0 %6384, %v6342
  %v6386 = vpop.permute.xlu0 %6385
  %v6388 = vadd.f32 %v6325, %v6346
  %v6389 = vadd.f32 %v6326, %v6351
  %v6390 = vadd.f32 %v6327, %v6356
  %v6391 = vadd.f32 %v6328, %v6361
  %v6392 = vadd.f32 %v6329, %v6366
  %v6393 = vadd.f32 %v6330, %v6371
  %v6394 = vadd.f32 %v6331, %v6376
  %v6395 = vadd.f32 %v6332, %v6381
  %v6396 = vadd.f32 %v6333, %v6386
  %v6397 = vmax.f32 %v6388, 0.0
  %v6398 = vmax.f32 %v6389, 0.0
  %v6399 = vmax.f32 %v6390, 0.0
  %v6400 = vmax.f32 %v6391, 0.0
  %v6401 = vmax.f32 %v6392, 0.0
  %v6402 = vmax.f32 %v6393, 0.0
  %v6403 = vmax.f32 %v6394, 0.0
  %v6404 = vmax.f32 %v6395, 0.0
  %v6405 = vmax.f32 %v6396, 0.0
  %v6406 = vld [vmem:[%s25] sm:$0xff]
  %v6407 = vld [vmem:[%s26] sm:$0xff]
  %6409 = vset.pattern.permute.xlu0 0
  %6410 = vperm.xlu0 %6409, %v6407
  %v6411 = vpop.permute.xlu0 %6410
  %v6414 = vsel %vm6000, %v6406, 0
  %v6417 = vsel %vm1302, %v6405, 0
  %6419 = vmatpush.msra.mxu0 0.0
  %6420 = vmatpush.msra.mxu0 0.0
  %6421 = vmatpush.msra.mxu0 0.0
  %6422 = vmatpush.msra.mxu0 0.0
  %6423 = vmatpush.msra.mxu0 0.0
  %6424 = vmatpush.msra.mxu0 0.0
  %6425 = vmatpush.msra.mxu0 0.0
  %6426 = vmatpush.msra.mxu0 %v6417
  %6427 = vmatpush.msra.mxu0 %v6404
  %6428 = vmatpush.msra.mxu0 %v6403
  %6429 = vmatpush.msra.mxu0 %v6402
  %6430 = vmatpush.msra.mxu0 %v6401
  %6431 = vmatpush.msra.mxu0 %v6400
  %6432 = vmatpush.msra.mxu0 %v6399
  %6433 = vmatpush.msra.mxu0 %v6398
  %6434 = vmatpush.msra.mxu0 %v6397
  %6435 = vmatmul.f32.gmra.mxu0 %v6414
  %v6436 = vpop.f32.mrf.mxu0
  %v6437 = vadd.f32 %v6411, %v6436
  %6438 = vdwg.mxu0
  %6439 = vst [vmem:[%s27] sm:$0xff] %v6437
  // Predicated region
  $region110: #{clarification_dense_lstm_forward.1} parent=0 // pred_check
    _
  $region111: #{clarification_dense_lstm_forward.1} parent=0 // pred_check_branch
    %6441 = sbr.rel (0) target = $region113
  $region112: #{clarification_dense_lstm_forward.1} parent=0 // pred_region
    _
  $region113: #{clarification_dense_lstm_forward.1} parent=0 // pred_fallthru
    _
  // Predicated region
  $region114: #{clarification_dense_lstm_forward.1} parent=0 // pred_check
    _
  $region115: #{clarification_dense_lstm_forward.1} parent=0 // pred_check_branch
    %6443 = sbr.rel (0) target = $region117
  $region116: #{clarification_dense_lstm_forward.1} parent=0 // pred_region
    _
  $region117: #{clarification_dense_lstm_forward.1} parent=0 // pred_fallthru
    _

</llo_original>
